<compile_context>
chip_gen: v6e
topology: v6e:2x2x1
jax: 0.10.0
libtpu: 0.0.40
codegen_flags: <defaults>
</compile_context>

<pallas_src>
import math

import jax
import jax.numpy as jnp
import numpy as np
from jax.experimental import pallas as pl
from jax.experimental.pallas import tpu as pltpu


def _round_up(x, m):
    return (x + m - 1) // m * m


def _adaptive_bins(in_size, out_size):
    # PyTorch AdaptiveAvgPool2d bin boundaries.
    return [(int(math.floor(i * in_size / out_size)),
             int(math.ceil((i + 1) * in_size / out_size)))
            for i in range(out_size)]


# -----------------------------------------------------------------------------
# Parameter setup (deterministic, PyTorch layouts)
# -----------------------------------------------------------------------------
def init_params_torch_layout(key):
    ks = jax.random.split(key, 8)

    def u(k, shape, fan_in):
        bound = 1.0 / math.sqrt(fan_in)
        return jax.random.uniform(k, shape, jnp.float32, -bound, bound)

    w1 = u(ks[0], (64, 1, 3, 3), 1 * 9)    # (cout, cin, kh, kw)
    b1 = u(ks[1], (64,), 1 * 9)
    w2 = u(ks[2], (64, 64, 3, 3), 64 * 9)
    b2 = u(ks[3], (64,), 64 * 9)
    w3 = u(ks[4], (32, 64, 3, 3), 64 * 9)
    b3 = u(ks[5], (32,), 64 * 9)
    wfc = u(ks[6], (10, 32 * 4 * 4), 512)  # (out_features, in_features)
    bfc = u(ks[7], (10,), 512)
    return (w1, b1, w2, b2, w3, b3, wfc, bfc)


# -----------------------------------------------------------------------------
# Pallas kernel + wrapper
# -----------------------------------------------------------------------------
def cnn_forward(x_nchw, torch_params, *, block_b=16):
    """x_nchw: (N, 1, H, W) float32 -> logits (N, 10)."""
    w1, b1, w2, b2, w3, b3, wfc, bfc = torch_params
    N, cin, H0, W0 = x_nchw.shape
    assert cin == 1, "CNNModel expects a single input channel"
    H3, W3 = H0 - 6, W0 - 6                 # spatial size after 3 valid 3x3 convs
    assert H3 >= 1 and W3 >= 1, "spatial dims must be >= 7"

    f32, bf16 = jnp.float32, jnp.bfloat16
    S = H0 * W0
    C1, C2, C3 = 64, 64, 32
    K2 = 9 * C1                             # im2col contraction depth (576)

    # Images per grid step: keep >= 2 grid steps whenever possible so the
    # "parallel" axis actually shards across v7x's two TensorCores.
    Bb = max(1, min(block_b, pl.cdiv(N, 2)))
    G = pl.cdiv(N, Bb)
    Np = G * Bb
    M = Bb * S                              # flat activation rows per grid step
    assert M % 8 == 0, "Bb*H0*W0 must be a multiple of 8 (sublane constraint)"
    PAD = _round_up(2 * W0 + 2, 8)          # margin so all 9 tap slices stay in-bounds

    # ---- parameters in kernel layout ----------------------------------------
    def conv_flat(w):  # (cout,cin,kh,kw) -> (kh*kw*cin, cout), row = (dy*3+dx)*cin+ci
        return jnp.transpose(w, (2, 3, 1, 0)).reshape(-1, w.shape[0])

    w1k = conv_flat(w1).astype(f32)                      # (9, 64)   f32 (tiny)
    w2k = conv_flat(w2).astype(bf16)                     # (576, 64) bf16
    w3k = conv_flat(w3).astype(bf16)                     # (576, 32) bf16
    b1k = b1.reshape(1, -1).astype(f32)
    b2k = b2.reshape(1, -1).astype(f32)
    b3k = b3.reshape(1, -1).astype(f32)
    # Kernel feature order is (bin_i, bin_j, channel); PyTorch flatten(1) on
    # (N, 32, 4, 4) is (c, i, j) — reorder, then pad out dim to 128 lanes.
    wfc_k = jnp.transpose(wfc.reshape(10, C3, 4, 4), (2, 3, 1, 0)).reshape(16 * C3, 10)
    wfc_k = jnp.pad(wfc_k, ((0, 0), (0, 128 - 10))).astype(bf16)     # (512, 128)
    bfc_k = jnp.pad(bfc.reshape(1, -1), ((0, 0), (0, 128 - 10))).astype(f32)

    # ---- AdaptiveAvgPool2d((4,4)) as a matmul: block-diagonal, bin-major rows
    bins_h = _adaptive_bins(H3, 4)
    bins_w = _adaptive_bins(W3, 4)
    PT = np.zeros((16, S), np.float32)
    for i, (hs, he) in enumerate(bins_h):
        for j, (ws, we) in enumerate(bins_w):
            v = 1.0 / float((he - hs) * (we - ws))
            for h in range(hs, he):
                PT[i * 4 + j, h * W0 + ws: h * W0 + we] = v
    Pblk = np.zeros((16 * Bb, Bb * S), np.float32)       # row = bin*Bb + b
    for p in range(16):
        for b in range(Bb):
            Pblk[p * Bb + b, b * S:(b + 1) * S] = PT[p]
    pool_mat = jnp.asarray(Pblk, dtype=bf16)

    # ---- conv1 im2col prepacked in the wrapper: lane-dense (Np*S, 9) input ---
    x = x_nchw.reshape(N, H0, W0).astype(f32)
    xp = jnp.pad(x, ((0, Np - N), (0, 2), (0, 2)))       # pad batch + bottom/right
    x9 = jnp.stack([xp[:, dy:dy + H0, dx:dx + W0]
                    for dy in range(3) for dx in range(3)],
                   axis=-1).reshape(Np * S, 9)

    taps = [dy * W0 + dx for dy in range(3) for dx in range(3)]

    def kernel(x_ref, w1_ref, b1_ref, w2_ref, b2_ref, w3_ref, b3_ref,
               pool_ref, wfc_ref, bfc_ref, o_ref, act_ref, patch_ref, feat_ref):
        # Zero the bottom margin of the activation scratch (tap slices may read
        # it; garbage there never reaches needed outputs, zeros keep it finite).
        act_ref[pl.ds(M, PAD), :] = jnp.zeros((PAD, C1), f32)

        # ---- conv1 + ReLU: one small (M,9)x(9,64) f32 dot --------------------
        a1 = jnp.dot(x_ref[...], w1_ref[...], preferred_element_type=f32)
        act_ref[pl.ds(0, M), :] = jnp.maximum(a1 + b1_ref[...], 0.0)

        def build_patch():
            # im2col: 9 constant-offset row windows of the activation scratch,
            # cast to bf16 at the store; patch scratch is shared by conv2/conv3.
            for k, off in enumerate(taps):
                patch_ref[:, k * C1:(k + 1) * C1] = (
                    act_ref[pl.ds(off, M), :].astype(bf16))

        # ---- conv2 + ReLU: one (M,576)x(576,64) bf16 MXU dot, f32 accumulate -
        build_patch()
        a2 = jnp.dot(patch_ref[...], w2_ref[...], preferred_element_type=f32)
        act_ref[pl.ds(0, M), :] = jnp.maximum(a2 + b2_ref[...], 0.0)

        # ---- conv3 + ReLU: same shared patch scratch -------------------------
        build_patch()
        a3 = jnp.maximum(
            jnp.dot(patch_ref[...], w3_ref[...], preferred_element_type=f32)
            + b3_ref[...], 0.0)                                     # (M, 32) f32

        # ---- AdaptiveAvgPool2d((4,4)) as one bf16 MXU dot --------------------
        pooled = jnp.dot(pool_ref[...], a3.astype(bf16),
                         preferred_element_type=f32)                # (16*Bb, 32)
        for p in range(16):   # bin-major rows -> lane-dense (Bb, 512) features
            feat_ref[:, p * C3:(p + 1) * C3] = (
                pooled[p * Bb:(p + 1) * Bb, :].astype(bf16))

        # ---- classifier: (Bb,512)x(512,128-padded) bf16 dot, lane-dense store
        o_ref[0, :, :] = (jnp.dot(feat_ref[...], wfc_ref[...],
                                  preferred_element_type=f32) + bfc_ref[...])

    out = pl.pallas_call(
        kernel,
        out_shape=jax.ShapeDtypeStruct((G, Bb, 128), f32),
        grid=(G,),
        in_specs=[
            pl.BlockSpec((M, 9), lambda n: (n, 0)),
            pl.BlockSpec(w1k.shape, lambda n: (0, 0)),
            pl.BlockSpec(b1k.shape, lambda n: (0, 0)),
            pl.BlockSpec(w2k.shape, lambda n: (0, 0)),
            pl.BlockSpec(b2k.shape, lambda n: (0, 0)),
            pl.BlockSpec(w3k.shape, lambda n: (0, 0)),
            pl.BlockSpec(b3k.shape, lambda n: (0, 0)),
            pl.BlockSpec(pool_mat.shape, lambda n: (0, 0)),
            pl.BlockSpec(wfc_k.shape, lambda n: (0, 0)),
            pl.BlockSpec(bfc_k.shape, lambda n: (0, 0)),
        ],
        out_specs=pl.BlockSpec((1, Bb, 128), lambda n: (n, 0, 0)),
        scratch_shapes=[
            pltpu.VMEM((M + PAD, C1), f32),    # shared a1/a2 activation grid
            pltpu.VMEM((M, K2), bf16),         # shared im2col patch (conv2/conv3)
            pltpu.VMEM((Bb, 16 * C3), bf16),   # pooled feature block
        ],
        compiler_params=pltpu.CompilerParams(
            dimension_semantics=("parallel",),
            vmem_limit_bytes=32 * 1024 * 1024),
    )(x9, w1k, b1k, w2k, b2k, w3k, b3k, pool_mat, wfc_k, bfc_k)

    return out.reshape(Np, 128)[:N, :10]


# -----------------------------------------------------------------------------
# Pure-JAX reference (mirrors the PyTorch forward exactly) for a sanity check
# -----------------------------------------------------------------------------
def cnn_reference(x_nchw, tp):
    w1, b1, w2, b2, w3, b3, wfc, bfc = tp

    def conv_relu(x, w, b):
        y = jax.lax.conv_general_dilated(
            x, w, (1, 1), 'VALID', dimension_numbers=('NCHW', 'OIHW', 'NCHW'))
        return jnp.maximum(y + b.reshape(1, -1, 1, 1), 0.0)

    h = conv_relu(x_nchw, w1, b1)
    h = conv_relu(h, w2, b2)
    h = conv_relu(h, w3, b3)
    N, C, H, W = h.shape
    bins_h = _adaptive_bins(H, 4)
    bins_w = _adaptive_bins(W, 4)
    pooled = jnp.stack(
        [jnp.stack([h[:, :, hs:he, ws:we].mean(axis=(2, 3)) for (ws, we) in bins_w],
                   axis=-1)
         for (hs, he) in bins_h], axis=-2)                 # (N, C, 4, 4)
    feat = pooled.reshape(N, -1)
    return feat @ wfc.T + bfc


if __name__ == "__main__":
    key = jax.random.PRNGKey(0)
    pkey, xkey = jax.random.split(key)

    torch_params = init_params_torch_layout(pkey)
    x = jax.random.normal(xkey, (2, 1, 16, 16), jnp.float32)   # NCHW like PyTorch

    out = cnn_forward(x, torch_params)
    out = jax.block_until_ready(out)

    ref = cnn_reference(x, torch_params)
    # bf16 MXU operands (f32 accumulation) -> slightly looser tolerance.
    np.testing.assert_allclose(np.asarray(out), np.asarray(ref), rtol=1e-2, atol=1e-2)

    print("KERNEL_OK")
</pallas_src>

<mosaic_0001>
module attributes {stable_mosaic.version = 11 : i64} {
  func.func @kernel(%arg0: i32, %arg1: memref<256x9xf32, #tpu.memory_space<vmem>>, %arg2: memref<9x64xf32, #tpu.memory_space<vmem>>, %arg3: memref<1x64xf32, #tpu.memory_space<vmem>>, %arg4: memref<576x64xbf16, #tpu.memory_space<vmem>>, %arg5: memref<1x64xf32, #tpu.memory_space<vmem>>, %arg6: memref<576x32xbf16, #tpu.memory_space<vmem>>, %arg7: memref<1x32xf32, #tpu.memory_space<vmem>>, %arg8: memref<16x256xbf16, #tpu.memory_space<vmem>>, %arg9: memref<512x128xbf16, #tpu.memory_space<vmem>>, %arg10: memref<1x128xf32, #tpu.memory_space<vmem>>, %arg11: memref<1x1x128xf32, #tpu.memory_space<vmem>>, %arg12: memref<296x64xf32, #tpu.memory_space<vmem>>, %arg13: memref<256x576xbf16, #tpu.memory_space<vmem>>, %arg14: memref<1x512xbf16, #tpu.memory_space<vmem>>) attributes {dimension_semantics = [#tpu.dimension_semantics<parallel>], iteration_bounds = array<i64: 2>, scalar_prefetch = 0 : i64, scratch_operands = 3 : i64, tpu.core_type = #tpu.core_type<tc>, window_params = [{transform_indices = @transform_0, window_bounds = array<i64: 256, 9>}, {pipeline_mode = #tpu.pipeline_mode<synchronous>, transform_indices = @transform_1, window_bounds = array<i64: 9, 64>}, {pipeline_mode = #tpu.pipeline_mode<synchronous>, transform_indices = @transform_2, window_bounds = array<i64: 1, 64>}, {pipeline_mode = #tpu.pipeline_mode<synchronous>, transform_indices = @transform_3, window_bounds = array<i64: 576, 64>}, {pipeline_mode = #tpu.pipeline_mode<synchronous>, transform_indices = @transform_4, window_bounds = array<i64: 1, 64>}, {pipeline_mode = #tpu.pipeline_mode<synchronous>, transform_indices = @transform_5, window_bounds = array<i64: 576, 32>}, {pipeline_mode = #tpu.pipeline_mode<synchronous>, transform_indices = @transform_6, window_bounds = array<i64: 1, 32>}, {pipeline_mode = #tpu.pipeline_mode<synchronous>, transform_indices = @transform_7, window_bounds = array<i64: 16, 256>}, {pipeline_mode = #tpu.pipeline_mode<synchronous>, transform_indices = @transform_8, window_bounds = array<i64: 512, 128>}, {pipeline_mode = #tpu.pipeline_mode<synchronous>, transform_indices = @transform_9, window_bounds = array<i64: 1, 128>}, {transform_indices = @transform_10, window_bounds = array<i64: 1, 1, 128>}]} {
    %cst = arith.constant 0.000000e+00 : f32
    %0 = vector.broadcast %cst : f32 to vector<40x64xf32>
    %c256 = arith.constant 256 : index
    %c0 = arith.constant 0 : index
    %1 = vector.load %arg12[%c256, %c0] : memref<296x64xf32, #tpu.memory_space<vmem>>, vector<40x64xf32>
    tpu.vector_store %arg12[%c256, %c0], %0 {strides = array<i32>} : memref<296x64xf32, #tpu.memory_space<vmem>>, vector<40x64xf32>,
    %c0_0 = arith.constant 0 : index
    %c0_1 = arith.constant 0 : index
    %2 = vector.load %arg1[%c0_0, %c0_1] : memref<256x9xf32, #tpu.memory_space<vmem>>, vector<256x9xf32>
    %c0_2 = arith.constant 0 : index
    %c0_3 = arith.constant 0 : index
    %3 = vector.load %arg2[%c0_2, %c0_3] : memref<9x64xf32, #tpu.memory_space<vmem>>, vector<9x64xf32>
    %cst_4 = arith.constant dense<0.000000e+00> : vector<256x64xf32>
    %4 = tpu.matmul %2, %3, %cst_4 {dimension_numbers = #tpu.dot_dimension_numbers<[1], [0], [0], [1], [0, 0, 1, 1], [], []>} : vector<256x9xf32>, vector<9x64xf32>, vector<256x64xf32> -> vector<256x64xf32>
    %c0_5 = arith.constant 0 : index
    %c0_6 = arith.constant 0 : index
    %5 = vector.load %arg3[%c0_5, %c0_6] : memref<1x64xf32, #tpu.memory_space<vmem>>, vector<1x64xf32>
    %6 = vector.broadcast %5 : vector<1x64xf32> to vector<256x64xf32>
    %7 = arith.addf %4, %6 : vector<256x64xf32>
    %cst_7 = arith.constant 0.000000e+00 : f32
    %8 = vector.broadcast %cst_7 : f32 to vector<256x64xf32>
    %9 = arith.maximumf %7, %8 : vector<256x64xf32>
    %c0_8 = arith.constant 0 : index
    %c0_9 = arith.constant 0 : index
    %10 = vector.load %arg12[%c0_8, %c0_9] : memref<296x64xf32, #tpu.memory_space<vmem>>, vector<256x64xf32>
    tpu.vector_store %arg12[%c0_8, %c0_9], %9 {strides = array<i32>} : memref<296x64xf32, #tpu.memory_space<vmem>>, vector<256x64xf32>,
    %c0_10 = arith.constant 0 : index
    %c0_11 = arith.constant 0 : index
    %11 = vector.load %arg12[%c0_10, %c0_11] : memref<296x64xf32, #tpu.memory_space<vmem>>, vector<256x64xf32>
    %12 = arith.truncf %11 : vector<256x64xf32> to vector<256x64xbf16>
    %c0_12 = arith.constant 0 : index
    %c0_13 = arith.constant 0 : index
    %13 = vector.load %arg13[%c0_12, %c0_13] : memref<256x576xbf16, #tpu.memory_space<vmem>>, vector<256x64xbf16>
    tpu.vector_store %arg13[%c0_12, %c0_13], %12 {strides = array<i32>} : memref<256x576xbf16, #tpu.memory_space<vmem>>, vector<256x64xbf16>,
    %c1 = arith.constant 1 : index
    %c0_14 = arith.constant 0 : index
    %14 = vector.load %arg12[%c1, %c0_14] : memref<296x64xf32, #tpu.memory_space<vmem>>, vector<256x64xf32>
    %15 = arith.truncf %14 : vector<256x64xf32> to vector<256x64xbf16>
    %c0_15 = arith.constant 0 : index
    %c64 = arith.constant 64 : index
    %16 = vector.load %arg13[%c0_15, %c64] : memref<256x576xbf16, #tpu.memory_space<vmem>>, vector<256x64xbf16>
    tpu.vector_store %arg13[%c0_15, %c64], %15 {strides = array<i32>} : memref<256x576xbf16, #tpu.memory_space<vmem>>, vector<256x64xbf16>,
    %c2 = arith.constant 2 : index
    %c0_16 = arith.constant 0 : index
    %17 = vector.load %arg12[%c2, %c0_16] : memref<296x64xf32, #tpu.memory_space<vmem>>, vector<256x64xf32>
    %18 = arith.truncf %17 : vector<256x64xf32> to vector<256x64xbf16>
    %c0_17 = arith.constant 0 : index
    %c128 = arith.constant 128 : index
    %19 = vector.load %arg13[%c0_17, %c128] : memref<256x576xbf16, #tpu.memory_space<vmem>>, vector<256x64xbf16>
    tpu.vector_store %arg13[%c0_17, %c128], %18 {strides = array<i32>} : memref<256x576xbf16, #tpu.memory_space<vmem>>, vector<256x64xbf16>,
    %c16 = arith.constant 16 : index
    %c0_18 = arith.constant 0 : index
    %20 = vector.load %arg12[%c16, %c0_18] : memref<296x64xf32, #tpu.memory_space<vmem>>, vector<256x64xf32>
    %21 = arith.truncf %20 : vector<256x64xf32> to vector<256x64xbf16>
    %c0_19 = arith.constant 0 : index
    %c192 = arith.constant 192 : index
    %22 = vector.load %arg13[%c0_19, %c192] : memref<256x576xbf16, #tpu.memory_space<vmem>>, vector<256x64xbf16>
    tpu.vector_store %arg13[%c0_19, %c192], %21 {strides = array<i32>} : memref<256x576xbf16, #tpu.memory_space<vmem>>, vector<256x64xbf16>,
    %c17 = arith.constant 17 : index
    %c0_20 = arith.constant 0 : index
    %23 = vector.load %arg12[%c17, %c0_20] : memref<296x64xf32, #tpu.memory_space<vmem>>, vector<256x64xf32>
    %24 = arith.truncf %23 : vector<256x64xf32> to vector<256x64xbf16>
    %c0_21 = arith.constant 0 : index
    %c256_22 = arith.constant 256 : index
    %25 = vector.load %arg13[%c0_21, %c256_22] : memref<256x576xbf16, #tpu.memory_space<vmem>>, vector<256x64xbf16>
    tpu.vector_store %arg13[%c0_21, %c256_22], %24 {strides = array<i32>} : memref<256x576xbf16, #tpu.memory_space<vmem>>, vector<256x64xbf16>,
    %c18 = arith.constant 18 : index
    %c0_23 = arith.constant 0 : index
    %26 = vector.load %arg12[%c18, %c0_23] : memref<296x64xf32, #tpu.memory_space<vmem>>, vector<256x64xf32>
    %27 = arith.truncf %26 : vector<256x64xf32> to vector<256x64xbf16>
    %c0_24 = arith.constant 0 : index
    %c320 = arith.constant 320 : index
    %28 = vector.load %arg13[%c0_24, %c320] : memref<256x576xbf16, #tpu.memory_space<vmem>>, vector<256x64xbf16>
    tpu.vector_store %arg13[%c0_24, %c320], %27 {strides = array<i32>} : memref<256x576xbf16, #tpu.memory_space<vmem>>, vector<256x64xbf16>,
    %c32 = arith.constant 32 : index
    %c0_25 = arith.constant 0 : index
    %29 = vector.load %arg12[%c32, %c0_25] : memref<296x64xf32, #tpu.memory_space<vmem>>, vector<256x64xf32>
    %30 = arith.truncf %29 : vector<256x64xf32> to vector<256x64xbf16>
    %c0_26 = arith.constant 0 : index
    %c384 = arith.constant 384 : index
    %31 = vector.load %arg13[%c0_26, %c384] : memref<256x576xbf16, #tpu.memory_space<vmem>>, vector<256x64xbf16>
    tpu.vector_store %arg13[%c0_26, %c384], %30 {strides = array<i32>} : memref<256x576xbf16, #tpu.memory_space<vmem>>, vector<256x64xbf16>,
    %c33 = arith.constant 33 : index
    %c0_27 = arith.constant 0 : index
    %32 = vector.load %arg12[%c33, %c0_27] : memref<296x64xf32, #tpu.memory_space<vmem>>, vector<256x64xf32>
    %33 = arith.truncf %32 : vector<256x64xf32> to vector<256x64xbf16>
    %c0_28 = arith.constant 0 : index
    %c448 = arith.constant 448 : index
    %34 = vector.load %arg13[%c0_28, %c448] : memref<256x576xbf16, #tpu.memory_space<vmem>>, vector<256x64xbf16>
    tpu.vector_store %arg13[%c0_28, %c448], %33 {strides = array<i32>} : memref<256x576xbf16, #tpu.memory_space<vmem>>, vector<256x64xbf16>,
    %c34 = arith.constant 34 : index
    %c0_29 = arith.constant 0 : index
    %35 = vector.load %arg12[%c34, %c0_29] : memref<296x64xf32, #tpu.memory_space<vmem>>, vector<256x64xf32>
    %36 = arith.truncf %35 : vector<256x64xf32> to vector<256x64xbf16>
    %c0_30 = arith.constant 0 : index
    %c512 = arith.constant 512 : index
    %37 = vector.load %arg13[%c0_30, %c512] : memref<256x576xbf16, #tpu.memory_space<vmem>>, vector<256x64xbf16>
    tpu.vector_store %arg13[%c0_30, %c512], %36 {strides = array<i32>} : memref<256x576xbf16, #tpu.memory_space<vmem>>, vector<256x64xbf16>,
    %c0_31 = arith.constant 0 : index
    %c0_32 = arith.constant 0 : index
    %38 = vector.load %arg13[%c0_31, %c0_32] : memref<256x576xbf16, #tpu.memory_space<vmem>>, vector<256x576xbf16>
    %c0_33 = arith.constant 0 : index
    %c0_34 = arith.constant 0 : index
    %39 = vector.load %arg4[%c0_33, %c0_34] : memref<576x64xbf16, #tpu.memory_space<vmem>>, vector<576x64xbf16>
    %cst_35 = arith.constant dense<0.000000e+00> : vector<256x64xf32>
    %40 = tpu.matmul %38, %39, %cst_35 {dimension_numbers = #tpu.dot_dimension_numbers<[1], [0], [0], [1], [0, 0, 1, 1], [], []>} : vector<256x576xbf16>, vector<576x64xbf16>, vector<256x64xf32> -> vector<256x64xf32>
    %c0_36 = arith.constant 0 : index
    %c0_37 = arith.constant 0 : index
    %41 = vector.load %arg5[%c0_36, %c0_37] : memref<1x64xf32, #tpu.memory_space<vmem>>, vector<1x64xf32>
    %42 = vector.broadcast %41 : vector<1x64xf32> to vector<256x64xf32>
    %43 = arith.addf %40, %42 : vector<256x64xf32>
    %cst_38 = arith.constant 0.000000e+00 : f32
    %44 = vector.broadcast %cst_38 : f32 to vector<256x64xf32>
    %45 = arith.maximumf %43, %44 : vector<256x64xf32>
    %c0_39 = arith.constant 0 : index
    %c0_40 = arith.constant 0 : index
    %46 = vector.load %arg12[%c0_39, %c0_40] : memref<296x64xf32, #tpu.memory_space<vmem>>, vector<256x64xf32>
    tpu.vector_store %arg12[%c0_39, %c0_40], %45 {strides = array<i32>} : memref<296x64xf32, #tpu.memory_space<vmem>>, vector<256x64xf32>,
    %c0_41 = arith.constant 0 : index
    %c0_42 = arith.constant 0 : index
    %47 = vector.load %arg12[%c0_41, %c0_42] : memref<296x64xf32, #tpu.memory_space<vmem>>, vector<256x64xf32>
    %48 = arith.truncf %47 : vector<256x64xf32> to vector<256x64xbf16>
    %c0_43 = arith.constant 0 : index
    %c0_44 = arith.constant 0 : index
    %49 = vector.load %arg13[%c0_43, %c0_44] : memref<256x576xbf16, #tpu.memory_space<vmem>>, vector<256x64xbf16>
    tpu.vector_store %arg13[%c0_43, %c0_44], %48 {strides = array<i32>} : memref<256x576xbf16, #tpu.memory_space<vmem>>, vector<256x64xbf16>,
    %c1_45 = arith.constant 1 : index
    %c0_46 = arith.constant 0 : index
    %50 = vector.load %arg12[%c1_45, %c0_46] : memref<296x64xf32, #tpu.memory_space<vmem>>, vector<256x64xf32>
    %51 = arith.truncf %50 : vector<256x64xf32> to vector<256x64xbf16>
    %c0_47 = arith.constant 0 : index
    %c64_48 = arith.constant 64 : index
    %52 = vector.load %arg13[%c0_47, %c64_48] : memref<256x576xbf16, #tpu.memory_space<vmem>>, vector<256x64xbf16>
    tpu.vector_store %arg13[%c0_47, %c64_48], %51 {strides = array<i32>} : memref<256x576xbf16, #tpu.memory_space<vmem>>, vector<256x64xbf16>,
    %c2_49 = arith.constant 2 : index
    %c0_50 = arith.constant 0 : index
    %53 = vector.load %arg12[%c2_49, %c0_50] : memref<296x64xf32, #tpu.memory_space<vmem>>, vector<256x64xf32>
    %54 = arith.truncf %53 : vector<256x64xf32> to vector<256x64xbf16>
    %c0_51 = arith.constant 0 : index
    %c128_52 = arith.constant 128 : index
    %55 = vector.load %arg13[%c0_51, %c128_52] : memref<256x576xbf16, #tpu.memory_space<vmem>>, vector<256x64xbf16>
    tpu.vector_store %arg13[%c0_51, %c128_52], %54 {strides = array<i32>} : memref<256x576xbf16, #tpu.memory_space<vmem>>, vector<256x64xbf16>,
    %c16_53 = arith.constant 16 : index
    %c0_54 = arith.constant 0 : index
    %56 = vector.load %arg12[%c16_53, %c0_54] : memref<296x64xf32, #tpu.memory_space<vmem>>, vector<256x64xf32>
    %57 = arith.truncf %56 : vector<256x64xf32> to vector<256x64xbf16>
    %c0_55 = arith.constant 0 : index
    %c192_56 = arith.constant 192 : index
    %58 = vector.load %arg13[%c0_55, %c192_56] : memref<256x576xbf16, #tpu.memory_space<vmem>>, vector<256x64xbf16>
    tpu.vector_store %arg13[%c0_55, %c192_56], %57 {strides = array<i32>} : memref<256x576xbf16, #tpu.memory_space<vmem>>, vector<256x64xbf16>,
    %c17_57 = arith.constant 17 : index
    %c0_58 = arith.constant 0 : index
    %59 = vector.load %arg12[%c17_57, %c0_58] : memref<296x64xf32, #tpu.memory_space<vmem>>, vector<256x64xf32>
    %60 = arith.truncf %59 : vector<256x64xf32> to vector<256x64xbf16>
    %c0_59 = arith.constant 0 : index
    %c256_60 = arith.constant 256 : index
    %61 = vector.load %arg13[%c0_59, %c256_60] : memref<256x576xbf16, #tpu.memory_space<vmem>>, vector<256x64xbf16>
    tpu.vector_store %arg13[%c0_59, %c256_60], %60 {strides = array<i32>} : memref<256x576xbf16, #tpu.memory_space<vmem>>, vector<256x64xbf16>,
    %c18_61 = arith.constant 18 : index
    %c0_62 = arith.constant 0 : index
    %62 = vector.load %arg12[%c18_61, %c0_62] : memref<296x64xf32, #tpu.memory_space<vmem>>, vector<256x64xf32>
    %63 = arith.truncf %62 : vector<256x64xf32> to vector<256x64xbf16>
    %c0_63 = arith.constant 0 : index
    %c320_64 = arith.constant 320 : index
    %64 = vector.load %arg13[%c0_63, %c320_64] : memref<256x576xbf16, #tpu.memory_space<vmem>>, vector<256x64xbf16>
    tpu.vector_store %arg13[%c0_63, %c320_64], %63 {strides = array<i32>} : memref<256x576xbf16, #tpu.memory_space<vmem>>, vector<256x64xbf16>,
    %c32_65 = arith.constant 32 : index
    %c0_66 = arith.constant 0 : index
    %65 = vector.load %arg12[%c32_65, %c0_66] : memref<296x64xf32, #tpu.memory_space<vmem>>, vector<256x64xf32>
    %66 = arith.truncf %65 : vector<256x64xf32> to vector<256x64xbf16>
    %c0_67 = arith.constant 0 : index
    %c384_68 = arith.constant 384 : index
    %67 = vector.load %arg13[%c0_67, %c384_68] : memref<256x576xbf16, #tpu.memory_space<vmem>>, vector<256x64xbf16>
    tpu.vector_store %arg13[%c0_67, %c384_68], %66 {strides = array<i32>} : memref<256x576xbf16, #tpu.memory_space<vmem>>, vector<256x64xbf16>,
    %c33_69 = arith.constant 33 : index
    %c0_70 = arith.constant 0 : index
    %68 = vector.load %arg12[%c33_69, %c0_70] : memref<296x64xf32, #tpu.memory_space<vmem>>, vector<256x64xf32>
    %69 = arith.truncf %68 : vector<256x64xf32> to vector<256x64xbf16>
    %c0_71 = arith.constant 0 : index
    %c448_72 = arith.constant 448 : index
    %70 = vector.load %arg13[%c0_71, %c448_72] : memref<256x576xbf16, #tpu.memory_space<vmem>>, vector<256x64xbf16>
    tpu.vector_store %arg13[%c0_71, %c448_72], %69 {strides = array<i32>} : memref<256x576xbf16, #tpu.memory_space<vmem>>, vector<256x64xbf16>,
    %c34_73 = arith.constant 34 : index
    %c0_74 = arith.constant 0 : index
    %71 = vector.load %arg12[%c34_73, %c0_74] : memref<296x64xf32, #tpu.memory_space<vmem>>, vector<256x64xf32>
    %72 = arith.truncf %71 : vector<256x64xf32> to vector<256x64xbf16>
    %c0_75 = arith.constant 0 : index
    %c512_76 = arith.constant 512 : index
    %73 = vector.load %arg13[%c0_75, %c512_76] : memref<256x576xbf16, #tpu.memory_space<vmem>>, vector<256x64xbf16>
    tpu.vector_store %arg13[%c0_75, %c512_76], %72 {strides = array<i32>} : memref<256x576xbf16, #tpu.memory_space<vmem>>, vector<256x64xbf16>,
    %c0_77 = arith.constant 0 : index
    %c0_78 = arith.constant 0 : index
    %74 = vector.load %arg13[%c0_77, %c0_78] : memref<256x576xbf16, #tpu.memory_space<vmem>>, vector<256x576xbf16>
    %c0_79 = arith.constant 0 : index
    %c0_80 = arith.constant 0 : index
    %75 = vector.load %arg6[%c0_79, %c0_80] : memref<576x32xbf16, #tpu.memory_space<vmem>>, vector<576x32xbf16>
    %cst_81 = arith.constant dense<0.000000e+00> : vector<256x32xf32>
    %76 = tpu.matmul %74, %75, %cst_81 {dimension_numbers = #tpu.dot_dimension_numbers<[1], [0], [0], [1], [0, 0, 1, 1], [], []>} : vector<256x576xbf16>, vector<576x32xbf16>, vector<256x32xf32> -> vector<256x32xf32>
    %c0_82 = arith.constant 0 : index
    %c0_83 = arith.constant 0 : index
    %77 = vector.load %arg7[%c0_82, %c0_83] : memref<1x32xf32, #tpu.memory_space<vmem>>, vector<1x32xf32>
    %78 = vector.broadcast %77 : vector<1x32xf32> to vector<256x32xf32>
    %79 = arith.addf %76, %78 : vector<256x32xf32>
    %cst_84 = arith.constant 0.000000e+00 : f32
    %80 = vector.broadcast %cst_84 : f32 to vector<256x32xf32>
    %81 = arith.maximumf %79, %80 : vector<256x32xf32>
    %c0_85 = arith.constant 0 : index
    %c0_86 = arith.constant 0 : index
    %82 = vector.load %arg8[%c0_85, %c0_86] : memref<16x256xbf16, #tpu.memory_space<vmem>>, vector<16x256xbf16>
    %83 = arith.truncf %81 : vector<256x32xf32> to vector<256x32xbf16>
    %cst_87 = arith.constant dense<0.000000e+00> : vector<16x32xf32>
    %84 = tpu.matmul %82, %83, %cst_87 {dimension_numbers = #tpu.dot_dimension_numbers<[1], [0], [0], [1], [0, 0, 1, 1], [], []>} : vector<16x256xbf16>, vector<256x32xbf16>, vector<16x32xf32> -> vector<16x32xf32>
    %85 = vector.extract_strided_slice %84 {offsets = [0, 0], sizes = [1, 32], strides = [1, 1]} : vector<16x32xf32> to vector<1x32xf32>
    %86 = arith.truncf %85 : vector<1x32xf32> to vector<1x32xbf16>
    %c0_88 = arith.constant 0 : index
    %c0_89 = arith.constant 0 : index
    %87 = vector.load %arg14[%c0_88, %c0_89] : memref<1x512xbf16, #tpu.memory_space<vmem>>, vector<1x32xbf16>
    tpu.vector_store %arg14[%c0_88, %c0_89], %86 {strides = array<i32>} : memref<1x512xbf16, #tpu.memory_space<vmem>>, vector<1x32xbf16>,
    %88 = vector.extract_strided_slice %84 {offsets = [1, 0], sizes = [1, 32], strides = [1, 1]} : vector<16x32xf32> to vector<1x32xf32>
    %89 = arith.truncf %88 : vector<1x32xf32> to vector<1x32xbf16>
    %c0_90 = arith.constant 0 : index
    %c32_91 = arith.constant 32 : index
    %90 = vector.load %arg14[%c0_90, %c32_91] : memref<1x512xbf16, #tpu.memory_space<vmem>>, vector<1x32xbf16>
    tpu.vector_store %arg14[%c0_90, %c32_91], %89 {strides = array<i32>} : memref<1x512xbf16, #tpu.memory_space<vmem>>, vector<1x32xbf16>,
    %91 = vector.extract_strided_slice %84 {offsets = [2, 0], sizes = [1, 32], strides = [1, 1]} : vector<16x32xf32> to vector<1x32xf32>
    %92 = arith.truncf %91 : vector<1x32xf32> to vector<1x32xbf16>
    %c0_92 = arith.constant 0 : index
    %c64_93 = arith.constant 64 : index
    %93 = vector.load %arg14[%c0_92, %c64_93] : memref<1x512xbf16, #tpu.memory_space<vmem>>, vector<1x32xbf16>
    tpu.vector_store %arg14[%c0_92, %c64_93], %92 {strides = array<i32>} : memref<1x512xbf16, #tpu.memory_space<vmem>>, vector<1x32xbf16>,
    %94 = vector.extract_strided_slice %84 {offsets = [3, 0], sizes = [1, 32], strides = [1, 1]} : vector<16x32xf32> to vector<1x32xf32>
    %95 = arith.truncf %94 : vector<1x32xf32> to vector<1x32xbf16>
    %c0_94 = arith.constant 0 : index
    %c96 = arith.constant 96 : index
    %96 = vector.load %arg14[%c0_94, %c96] : memref<1x512xbf16, #tpu.memory_space<vmem>>, vector<1x32xbf16>
    tpu.vector_store %arg14[%c0_94, %c96], %95 {strides = array<i32>} : memref<1x512xbf16, #tpu.memory_space<vmem>>, vector<1x32xbf16>,
    %97 = vector.extract_strided_slice %84 {offsets = [4, 0], sizes = [1, 32], strides = [1, 1]} : vector<16x32xf32> to vector<1x32xf32>
    %98 = arith.truncf %97 : vector<1x32xf32> to vector<1x32xbf16>
    %c0_95 = arith.constant 0 : index
    %c128_96 = arith.constant 128 : index
    %99 = vector.load %arg14[%c0_95, %c128_96] : memref<1x512xbf16, #tpu.memory_space<vmem>>, vector<1x32xbf16>
    tpu.vector_store %arg14[%c0_95, %c128_96], %98 {strides = array<i32>} : memref<1x512xbf16, #tpu.memory_space<vmem>>, vector<1x32xbf16>,
    %100 = vector.extract_strided_slice %84 {offsets = [5, 0], sizes = [1, 32], strides = [1, 1]} : vector<16x32xf32> to vector<1x32xf32>
    %101 = arith.truncf %100 : vector<1x32xf32> to vector<1x32xbf16>
    %c0_97 = arith.constant 0 : index
    %c160 = arith.constant 160 : index
    %102 = vector.load %arg14[%c0_97, %c160] : memref<1x512xbf16, #tpu.memory_space<vmem>>, vector<1x32xbf16>
    tpu.vector_store %arg14[%c0_97, %c160], %101 {strides = array<i32>} : memref<1x512xbf16, #tpu.memory_space<vmem>>, vector<1x32xbf16>,
    %103 = vector.extract_strided_slice %84 {offsets = [6, 0], sizes = [1, 32], strides = [1, 1]} : vector<16x32xf32> to vector<1x32xf32>
    %104 = arith.truncf %103 : vector<1x32xf32> to vector<1x32xbf16>
    %c0_98 = arith.constant 0 : index
    %c192_99 = arith.constant 192 : index
    %105 = vector.load %arg14[%c0_98, %c192_99] : memref<1x512xbf16, #tpu.memory_space<vmem>>, vector<1x32xbf16>
    tpu.vector_store %arg14[%c0_98, %c192_99], %104 {strides = array<i32>} : memref<1x512xbf16, #tpu.memory_space<vmem>>, vector<1x32xbf16>,
    %106 = vector.extract_strided_slice %84 {offsets = [7, 0], sizes = [1, 32], strides = [1, 1]} : vector<16x32xf32> to vector<1x32xf32>
    %107 = arith.truncf %106 : vector<1x32xf32> to vector<1x32xbf16>
    %c0_100 = arith.constant 0 : index
    %c224 = arith.constant 224 : index
    %108 = vector.load %arg14[%c0_100, %c224] : memref<1x512xbf16, #tpu.memory_space<vmem>>, vector<1x32xbf16>
    tpu.vector_store %arg14[%c0_100, %c224], %107 {strides = array<i32>} : memref<1x512xbf16, #tpu.memory_space<vmem>>, vector<1x32xbf16>,
    %109 = vector.extract_strided_slice %84 {offsets = [8, 0], sizes = [1, 32], strides = [1, 1]} : vector<16x32xf32> to vector<1x32xf32>
    %110 = arith.truncf %109 : vector<1x32xf32> to vector<1x32xbf16>
    %c0_101 = arith.constant 0 : index
    %c256_102 = arith.constant 256 : index
    %111 = vector.load %arg14[%c0_101, %c256_102] : memref<1x512xbf16, #tpu.memory_space<vmem>>, vector<1x32xbf16>
    tpu.vector_store %arg14[%c0_101, %c256_102], %110 {strides = array<i32>} : memref<1x512xbf16, #tpu.memory_space<vmem>>, vector<1x32xbf16>,
    %112 = vector.extract_strided_slice %84 {offsets = [9, 0], sizes = [1, 32], strides = [1, 1]} : vector<16x32xf32> to vector<1x32xf32>
    %113 = arith.truncf %112 : vector<1x32xf32> to vector<1x32xbf16>
    %c0_103 = arith.constant 0 : index
    %c288 = arith.constant 288 : index
    %114 = vector.load %arg14[%c0_103, %c288] : memref<1x512xbf16, #tpu.memory_space<vmem>>, vector<1x32xbf16>
    tpu.vector_store %arg14[%c0_103, %c288], %113 {strides = array<i32>} : memref<1x512xbf16, #tpu.memory_space<vmem>>, vector<1x32xbf16>,
    %115 = vector.extract_strided_slice %84 {offsets = [10, 0], sizes = [1, 32], strides = [1, 1]} : vector<16x32xf32> to vector<1x32xf32>
    %116 = arith.truncf %115 : vector<1x32xf32> to vector<1x32xbf16>
    %c0_104 = arith.constant 0 : index
    %c320_105 = arith.constant 320 : index
    %117 = vector.load %arg14[%c0_104, %c320_105] : memref<1x512xbf16, #tpu.memory_space<vmem>>, vector<1x32xbf16>
    tpu.vector_store %arg14[%c0_104, %c320_105], %116 {strides = array<i32>} : memref<1x512xbf16, #tpu.memory_space<vmem>>, vector<1x32xbf16>,
    %118 = vector.extract_strided_slice %84 {offsets = [11, 0], sizes = [1, 32], strides = [1, 1]} : vector<16x32xf32> to vector<1x32xf32>
    %119 = arith.truncf %118 : vector<1x32xf32> to vector<1x32xbf16>
    %c0_106 = arith.constant 0 : index
    %c352 = arith.constant 352 : index
    %120 = vector.load %arg14[%c0_106, %c352] : memref<1x512xbf16, #tpu.memory_space<vmem>>, vector<1x32xbf16>
    tpu.vector_store %arg14[%c0_106, %c352], %119 {strides = array<i32>} : memref<1x512xbf16, #tpu.memory_space<vmem>>, vector<1x32xbf16>,
    %121 = vector.extract_strided_slice %84 {offsets = [12, 0], sizes = [1, 32], strides = [1, 1]} : vector<16x32xf32> to vector<1x32xf32>
    %122 = arith.truncf %121 : vector<1x32xf32> to vector<1x32xbf16>
    %c0_107 = arith.constant 0 : index
    %c384_108 = arith.constant 384 : index
    %123 = vector.load %arg14[%c0_107, %c384_108] : memref<1x512xbf16, #tpu.memory_space<vmem>>, vector<1x32xbf16>
    tpu.vector_store %arg14[%c0_107, %c384_108], %122 {strides = array<i32>} : memref<1x512xbf16, #tpu.memory_space<vmem>>, vector<1x32xbf16>,
    %124 = vector.extract_strided_slice %84 {offsets = [13, 0], sizes = [1, 32], strides = [1, 1]} : vector<16x32xf32> to vector<1x32xf32>
    %125 = arith.truncf %124 : vector<1x32xf32> to vector<1x32xbf16>
    %c0_109 = arith.constant 0 : index
    %c416 = arith.constant 416 : index
    %126 = vector.load %arg14[%c0_109, %c416] : memref<1x512xbf16, #tpu.memory_space<vmem>>, vector<1x32xbf16>
    tpu.vector_store %arg14[%c0_109, %c416], %125 {strides = array<i32>} : memref<1x512xbf16, #tpu.memory_space<vmem>>, vector<1x32xbf16>,
    %127 = vector.extract_strided_slice %84 {offsets = [14, 0], sizes = [1, 32], strides = [1, 1]} : vector<16x32xf32> to vector<1x32xf32>
    %128 = arith.truncf %127 : vector<1x32xf32> to vector<1x32xbf16>
    %c0_110 = arith.constant 0 : index
    %c448_111 = arith.constant 448 : index
    %129 = vector.load %arg14[%c0_110, %c448_111] : memref<1x512xbf16, #tpu.memory_space<vmem>>, vector<1x32xbf16>
    tpu.vector_store %arg14[%c0_110, %c448_111], %128 {strides = array<i32>} : memref<1x512xbf16, #tpu.memory_space<vmem>>, vector<1x32xbf16>,
    %130 = vector.extract_strided_slice %84 {offsets = [15, 0], sizes = [1, 32], strides = [1, 1]} : vector<16x32xf32> to vector<1x32xf32>
    %131 = arith.truncf %130 : vector<1x32xf32> to vector<1x32xbf16>
    %c0_112 = arith.constant 0 : index
    %c480 = arith.constant 480 : index
    %132 = vector.load %arg14[%c0_112, %c480] : memref<1x512xbf16, #tpu.memory_space<vmem>>, vector<1x32xbf16>
    tpu.vector_store %arg14[%c0_112, %c480], %131 {strides = array<i32>} : memref<1x512xbf16, #tpu.memory_space<vmem>>, vector<1x32xbf16>,
    %c0_113 = arith.constant 0 : index
    %c0_114 = arith.constant 0 : index
    %133 = vector.load %arg14[%c0_113, %c0_114] : memref<1x512xbf16, #tpu.memory_space<vmem>>, vector<1x512xbf16>
    %c0_115 = arith.constant 0 : index
    %c0_116 = arith.constant 0 : index
    %134 = vector.load %arg9[%c0_115, %c0_116] : memref<512x128xbf16, #tpu.memory_space<vmem>>, vector<512x128xbf16>
    %cst_117 = arith.constant dense<0.000000e+00> : vector<1x128xf32>
    %135 = tpu.matmul %133, %134, %cst_117 {dimension_numbers = #tpu.dot_dimension_numbers<[1], [0], [0], [1], [0, 0, 1, 1], [], []>} : vector<1x512xbf16>, vector<512x128xbf16>, vector<1x128xf32> -> vector<1x128xf32>
    %c0_118 = arith.constant 0 : index
    %c0_119 = arith.constant 0 : index
    %136 = vector.load %arg10[%c0_118, %c0_119] : memref<1x128xf32, #tpu.memory_space<vmem>>, vector<1x128xf32>
    %137 = arith.addf %135, %136 : vector<1x128xf32>
    %c0_120 = arith.constant 0 : index
    %c0_121 = arith.constant 0 : index
    %c0_122 = arith.constant 0 : index
    %138 = vector.load %arg11[%c0_120, %c0_121, %c0_122] : memref<1x1x128xf32, #tpu.memory_space<vmem>>, vector<1x1x128xf32>
    %139 = vector.shape_cast %138 : vector<1x1x128xf32> to vector<1x128xf32>
    %140 = vector.shape_cast %137 : vector<1x128xf32> to vector<1x1x128xf32>
    tpu.vector_store %arg11[%c0_120, %c0_121, %c0_122], %140 {strides = array<i32>} : memref<1x1x128xf32, #tpu.memory_space<vmem>>, vector<1x1x128xf32>,
    return
  }
  func.func @transform_0(%arg0: i32) -> (i32, i32) {
    %c0_i32 = arith.constant 0 : i32
    %c0_i32_0 = arith.constant 0 : i32
    return %arg0, %c0_i32 : i32, i32
  }
  func.func @transform_1(%arg0: i32) -> (i32, i32) {
    %c0_i32 = arith.constant 0 : i32
    %c0_i32_0 = arith.constant 0 : i32
    %c0_i32_1 = arith.constant 0 : i32
    return %c0_i32, %c0_i32_0 : i32, i32
  }
  func.func @transform_2(%arg0: i32) -> (i32, i32) {
    %c0_i32 = arith.constant 0 : i32
    %c0_i32_0 = arith.constant 0 : i32
    %c0_i32_1 = arith.constant 0 : i32
    return %c0_i32, %c0_i32_0 : i32, i32
  }
  func.func @transform_3(%arg0: i32) -> (i32, i32) {
    %c0_i32 = arith.constant 0 : i32
    %c0_i32_0 = arith.constant 0 : i32
    %c0_i32_1 = arith.constant 0 : i32
    return %c0_i32, %c0_i32_0 : i32, i32
  }
  func.func @transform_4(%arg0: i32) -> (i32, i32) {
    %c0_i32 = arith.constant 0 : i32
    %c0_i32_0 = arith.constant 0 : i32
    %c0_i32_1 = arith.constant 0 : i32
    return %c0_i32, %c0_i32_0 : i32, i32
  }
  func.func @transform_5(%arg0: i32) -> (i32, i32) {
    %c0_i32 = arith.constant 0 : i32
    %c0_i32_0 = arith.constant 0 : i32
    %c0_i32_1 = arith.constant 0 : i32
    return %c0_i32, %c0_i32_0 : i32, i32
  }
  func.func @transform_6(%arg0: i32) -> (i32, i32) {
    %c0_i32 = arith.constant 0 : i32
    %c0_i32_0 = arith.constant 0 : i32
    %c0_i32_1 = arith.constant 0 : i32
    return %c0_i32, %c0_i32_0 : i32, i32
  }
  func.func @transform_7(%arg0: i32) -> (i32, i32) {
    %c0_i32 = arith.constant 0 : i32
    %c0_i32_0 = arith.constant 0 : i32
    %c0_i32_1 = arith.constant 0 : i32
    return %c0_i32, %c0_i32_0 : i32, i32
  }
  func.func @transform_8(%arg0: i32) -> (i32, i32) {
    %c0_i32 = arith.constant 0 : i32
    %c0_i32_0 = arith.constant 0 : i32
    %c0_i32_1 = arith.constant 0 : i32
    return %c0_i32, %c0_i32_0 : i32, i32
  }
  func.func @transform_9(%arg0: i32) -> (i32, i32) {
    %c0_i32 = arith.constant 0 : i32
    %c0_i32_0 = arith.constant 0 : i32
    %c0_i32_1 = arith.constant 0 : i32
    return %c0_i32, %c0_i32_0 : i32, i32
  }
  func.func @transform_10(%arg0: i32) -> (i32, i32, i32) {
    %c0_i32 = arith.constant 0 : i32
    %c0_i32_0 = arith.constant 0 : i32
    %c0_i32_1 = arith.constant 0 : i32
    return %arg0, %c0_i32, %c0_i32_0 : i32, i32, i32
  }
}

</mosaic_0001>

<llo_original>
// kernel: tpu_custom_call.1
$region0: #{tpu_custom_call.1}
  #allocation0 [shape = 'u32[]', space=smem, size = 0x4, offset = 0x4, fixed_abs, tag = 'smem constant byte address 0x4 - core index']
  #allocation1 [shape = 'u32[144,128]{1,0:T(1,128)}', space=vmem, size = 0x12000, scoped, tag = 'internal scratch']
  #allocation2 [shape = 'f32[296,64]{1,0:T(8,128)}', space=vmem, size = 0x25000, scoped, tag = 'scratch operand']
  #allocation3 [shape = 'bf16[256,576]{1,0:T(8,128)(2,1)}', space=vmem, size = 0x50000, scoped, tag = 'scratch operand']
  #allocation4 [shape = 'bf16[1,512]{1,0:T(2,128)(2,1)}', space=vmem, size = 0x800, scoped, tag = 'scratch operand']
  %s0 = inlined_call_operand.vmem [shape: f32[512,9], index: 0, kind: input, shape index: {}]
  %s1 = inlined_call_operand.vmem [shape: f32[9,64], index: 1, kind: input, shape index: {}]
  %s2 = inlined_call_operand.vmem [shape: f32[1,64], index: 2, kind: input, shape index: {}]
  %s3 = inlined_call_operand.vmem [shape: bf16[576,64], index: 3, kind: input, shape index: {}]
  %s4 = inlined_call_operand.vmem [shape: f32[1,64], index: 4, kind: input, shape index: {}]
  %s5 = inlined_call_operand.vmem [shape: bf16[576,32], index: 5, kind: input, shape index: {}]
  %s6 = inlined_call_operand.vmem [shape: f32[1,32], index: 6, kind: input, shape index: {}]
  %s7 = inlined_call_operand.vmem [shape: bf16[16,256], index: 7, kind: input, shape index: {}]
  %s8 = inlined_call_operand.vmem [shape: bf16[512,128], index: 8, kind: input, shape index: {}]
  %s9 = inlined_call_operand.vmem [shape: f32[1,128], index: 9, kind: input, shape index: {}]
  %s10 = inlined_call_operand.hbm [shape: f32[2,1,128], index: 10, kind: output, shape index: {}]
  %s11 = sld [smem:[#allocation0]]
  $region73: #{tpu_custom_call.1} parent=0
    _
  %s13 = ssub.s32 1, %s11
  %s14 = scalar_select 0, %s13, %s11
  $region1: #{tpu_custom_call.1} parent=0
    #allocation5 [shape = 'u8[1024]{0}', space=vmem, size = 0x400, scoped, tag = 'output window, operand 0']
    #allocation6 [shape = 's32[2]{0}', space=sflag, size = 0x8, scoped, tag = 'scoped memory for tpu_custom_call.1']
    %15 = vsyncpa [#allocation6], 0
    %s16 = scalar_lea.sflag [#allocation6], 1
    %17 = vsyncpa %s16, 0
    loop: start=0, step=1, limit=4
    $region2: #{tpu_custom_call.1} parent=1 // loop_pre_header
      _
    $region3: #{tpu_custom_call.1} parent=1 // loop_header
      %s19 = sphi 0, %s23
      %p20 = scmp.ge.s32.totalorder %s19, 4
      %s29 = sphi 0, %s31
      %s32 = sphi 0, %s29
      %s33 = sphi 0, %s32
      %s49 = sphi 0, %s33
      %s53 = sphi 0, %s53
      %s55 = sphi 0, %s53
      %s56 = sphi 0, %s55
      %s70 = sphi 0, %s56
      %s74 = sphi 0, %s74
      %s76 = sphi 0, %s74
      %s77 = sphi 0, %s76
      %s91 = sphi 0, %s77
      %s95 = sphi 0, %s95
      %s97 = sphi 0, %s95
      %s98 = sphi 0, %s97
      %s112 = sphi 0, %s98
      %s116 = sphi 0, %s116
      %s118 = sphi 0, %s116
      %s119 = sphi 0, %s118
      %s133 = sphi 0, %s119
      %s137 = sphi 0, %s137
      %s139 = sphi 0, %s137
      %s140 = sphi 0, %s139
      %s154 = sphi 0, %s140
      %s158 = sphi 0, %s158
      %s160 = sphi 0, %s158
      %s161 = sphi 0, %s160
      %s175 = sphi 0, %s161
      %s179 = sphi 0, %s179
      %s181 = sphi 0, %s179
      %s182 = sphi 0, %s181
      %s196 = sphi 0, %s182
      %s200 = sphi 0, %s200
      %s202 = sphi 0, %s200
      %s203 = sphi 0, %s202
      %s217 = sphi 0, %s203
      %s221 = sphi 0, %s221
      %s223 = sphi 0, %s221
      %s224 = sphi 0, %s223
      %s238 = sphi 0, %s224
      %s244 = sphi 0, %s246
      %s247 = sphi 0, %s244
      %s248 = sphi 0, %s247
      %s264 = sphi 0, %s248
    $region4: #{tpu_custom_call.1} parent=1 // loop_header_branch
      %22 = sbr.rel (%p20) target = $region8
    $region5: #{tpu_custom_call.1} parent=1 // loop_body
      %s24 = ssub.s32 %s19, 1
      %s25 = ssub.s32 %s19, 2
      %s26 = sadd.s32 %s19, 1
      %s27 = ssub.s32 %s19, %s26
      %p28 = scmp.eq.s32.totalorder %s27, 0
      %s30 = sadd.s32 %s29, 1
      %s31 = scalar_select %p28, %s29, %s30
      %p34 = pneg %p28
      %p35 = scmp.eq.s32.totalorder %s19, 1
      %p36 = por %p34, %p35
      %p37 = scmp.ne.s32.totalorder %s29, %s32
      %p38 = scmp.eq.s32.totalorder %s19, 0
      %p39 = por %p37, %p38
      %p40 = scmp.ne.s32.totalorder %s29, %s32
      %p41 = scmp.eq.s32.totalorder %s24, 1
      %p42 = por %p40, %p41
      %p43 = scmp.ne.s32.totalorder %s32, %s33
      %p44 = scmp.eq.s32.totalorder %s24, 0
      %p45 = por %p43, %p44
      %p46 = scmp.ne.s32.totalorder %s32, %s33
      %p47 = scmp.eq.s32.totalorder %s25, 1
      %p48 = por %p46, %p47
      %p50 = scmp.ne.s32.totalorder %s33, %s49
      %p51 = scmp.eq.s32.totalorder %s25, 0
      %p52 = por %p50, %p51
      %s54 = sadd.s32 %s53, 1
      %p57 = scmp.eq.s32.totalorder %s19, 1
      %p58 = scmp.ne.s32.totalorder %s53, %s55
      %p59 = scmp.eq.s32.totalorder %s19, 0
      %p60 = por %p58, %p59
      %p61 = scmp.ne.s32.totalorder %s53, %s55
      %p62 = scmp.eq.s32.totalorder %s24, 1
      %p63 = por %p61, %p62
      %p64 = scmp.ne.s32.totalorder %s55, %s56
      %p65 = scmp.eq.s32.totalorder %s24, 0
      %p66 = por %p64, %p65
      %p67 = scmp.ne.s32.totalorder %s55, %s56
      %p68 = scmp.eq.s32.totalorder %s25, 1
      %p69 = por %p67, %p68
      %p71 = scmp.ne.s32.totalorder %s56, %s70
      %p72 = scmp.eq.s32.totalorder %s25, 0
      %p73 = por %p71, %p72
      %s75 = sadd.s32 %s74, 1
      %p78 = scmp.eq.s32.totalorder %s19, 1
      %p79 = scmp.ne.s32.totalorder %s74, %s76
      %p80 = scmp.eq.s32.totalorder %s19, 0
      %p81 = por %p79, %p80
      %p82 = scmp.ne.s32.totalorder %s74, %s76
      %p83 = scmp.eq.s32.totalorder %s24, 1
      %p84 = por %p82, %p83
      %p85 = scmp.ne.s32.totalorder %s76, %s77
      %p86 = scmp.eq.s32.totalorder %s24, 0
      %p87 = por %p85, %p86
      %p88 = scmp.ne.s32.totalorder %s76, %s77
      %p89 = scmp.eq.s32.totalorder %s25, 1
      %p90 = por %p88, %p89
      %p92 = scmp.ne.s32.totalorder %s77, %s91
      %p93 = scmp.eq.s32.totalorder %s25, 0
      %p94 = por %p92, %p93
      %s96 = sadd.s32 %s95, 1
      %p99 = scmp.eq.s32.totalorder %s19, 1
      %p100 = scmp.ne.s32.totalorder %s95, %s97
      %p101 = scmp.eq.s32.totalorder %s19, 0
      %p102 = por %p100, %p101
      %p103 = scmp.ne.s32.totalorder %s95, %s97
      %p104 = scmp.eq.s32.totalorder %s24, 1
      %p105 = por %p103, %p104
      %p106 = scmp.ne.s32.totalorder %s97, %s98
      %p107 = scmp.eq.s32.totalorder %s24, 0
      %p108 = por %p106, %p107
      %p109 = scmp.ne.s32.totalorder %s97, %s98
      %p110 = scmp.eq.s32.totalorder %s25, 1
      %p111 = por %p109, %p110
      %p113 = scmp.ne.s32.totalorder %s98, %s112
      %p114 = scmp.eq.s32.totalorder %s25, 0
      %p115 = por %p113, %p114
      %s117 = sadd.s32 %s116, 1
      %p120 = scmp.eq.s32.totalorder %s19, 1
      %p121 = scmp.ne.s32.totalorder %s116, %s118
      %p122 = scmp.eq.s32.totalorder %s19, 0
      %p123 = por %p121, %p122
      %p124 = scmp.ne.s32.totalorder %s116, %s118
      %p125 = scmp.eq.s32.totalorder %s24, 1
      %p126 = por %p124, %p125
      %p127 = scmp.ne.s32.totalorder %s118, %s119
      %p128 = scmp.eq.s32.totalorder %s24, 0
      %p129 = por %p127, %p128
      %p130 = scmp.ne.s32.totalorder %s118, %s119
      %p131 = scmp.eq.s32.totalorder %s25, 1
      %p132 = por %p130, %p131
      %p134 = scmp.ne.s32.totalorder %s119, %s133
      %p135 = scmp.eq.s32.totalorder %s25, 0
      %p136 = por %p134, %p135
      %s138 = sadd.s32 %s137, 1
      %p141 = scmp.eq.s32.totalorder %s19, 1
      %p142 = scmp.ne.s32.totalorder %s137, %s139
      %p143 = scmp.eq.s32.totalorder %s19, 0
      %p144 = por %p142, %p143
      %p145 = scmp.ne.s32.totalorder %s137, %s139
      %p146 = scmp.eq.s32.totalorder %s24, 1
      %p147 = por %p145, %p146
      %p148 = scmp.ne.s32.totalorder %s139, %s140
      %p149 = scmp.eq.s32.totalorder %s24, 0
      %p150 = por %p148, %p149
      %p151 = scmp.ne.s32.totalorder %s139, %s140
      %p152 = scmp.eq.s32.totalorder %s25, 1
      %p153 = por %p151, %p152
      %p155 = scmp.ne.s32.totalorder %s140, %s154
      %p156 = scmp.eq.s32.totalorder %s25, 0
      %p157 = por %p155, %p156
      %s159 = sadd.s32 %s158, 1
      %p162 = scmp.eq.s32.totalorder %s19, 1
      %p163 = scmp.ne.s32.totalorder %s158, %s160
      %p164 = scmp.eq.s32.totalorder %s19, 0
      %p165 = por %p163, %p164
      %p166 = scmp.ne.s32.totalorder %s158, %s160
      %p167 = scmp.eq.s32.totalorder %s24, 1
      %p168 = por %p166, %p167
      %p169 = scmp.ne.s32.totalorder %s160, %s161
      %p170 = scmp.eq.s32.totalorder %s24, 0
      %p171 = por %p169, %p170
      %p172 = scmp.ne.s32.totalorder %s160, %s161
      %p173 = scmp.eq.s32.totalorder %s25, 1
      %p174 = por %p172, %p173
      %p176 = scmp.ne.s32.totalorder %s161, %s175
      %p177 = scmp.eq.s32.totalorder %s25, 0
      %p178 = por %p176, %p177
      %s180 = sadd.s32 %s179, 1
      %p183 = scmp.eq.s32.totalorder %s19, 1
      %p184 = scmp.ne.s32.totalorder %s179, %s181
      %p185 = scmp.eq.s32.totalorder %s19, 0
      %p186 = por %p184, %p185
      %p187 = scmp.ne.s32.totalorder %s179, %s181
      %p188 = scmp.eq.s32.totalorder %s24, 1
      %p189 = por %p187, %p188
      %p190 = scmp.ne.s32.totalorder %s181, %s182
      %p191 = scmp.eq.s32.totalorder %s24, 0
      %p192 = por %p190, %p191
      %p193 = scmp.ne.s32.totalorder %s181, %s182
      %p194 = scmp.eq.s32.totalorder %s25, 1
      %p195 = por %p193, %p194
      %p197 = scmp.ne.s32.totalorder %s182, %s196
      %p198 = scmp.eq.s32.totalorder %s25, 0
      %p199 = por %p197, %p198
      %s201 = sadd.s32 %s200, 1
      %p204 = scmp.eq.s32.totalorder %s19, 1
      %p205 = scmp.ne.s32.totalorder %s200, %s202
      %p206 = scmp.eq.s32.totalorder %s19, 0
      %p207 = por %p205, %p206
      %p208 = scmp.ne.s32.totalorder %s200, %s202
      %p209 = scmp.eq.s32.totalorder %s24, 1
      %p210 = por %p208, %p209
      %p211 = scmp.ne.s32.totalorder %s202, %s203
      %p212 = scmp.eq.s32.totalorder %s24, 0
      %p213 = por %p211, %p212
      %p214 = scmp.ne.s32.totalorder %s202, %s203
      %p215 = scmp.eq.s32.totalorder %s25, 1
      %p216 = por %p214, %p215
      %p218 = scmp.ne.s32.totalorder %s203, %s217
      %p219 = scmp.eq.s32.totalorder %s25, 0
      %p220 = por %p218, %p219
      %s222 = sadd.s32 %s221, 1
      %p225 = scmp.eq.s32.totalorder %s19, 1
      %p226 = scmp.ne.s32.totalorder %s221, %s223
      %p227 = scmp.eq.s32.totalorder %s19, 0
      %p228 = por %p226, %p227
      %p229 = scmp.ne.s32.totalorder %s221, %s223
      %p230 = scmp.eq.s32.totalorder %s24, 1
      %p231 = por %p229, %p230
      %p232 = scmp.ne.s32.totalorder %s223, %s224
      %p233 = scmp.eq.s32.totalorder %s24, 0
      %p234 = por %p232, %p233
      %p235 = scmp.ne.s32.totalorder %s223, %s224
      %p236 = scmp.eq.s32.totalorder %s25, 1
      %p237 = por %p235, %p236
      %p239 = scmp.ne.s32.totalorder %s224, %s238
      %p240 = scmp.eq.s32.totalorder %s25, 0
      %p241 = por %p239, %p240
      %s242 = ssub.s32 %s19, %s26
      %p243 = scmp.eq.s32.totalorder %s242, 0
      %s245 = sadd.s32 %s244, 1
      %s246 = scalar_select %p243, %s244, %s245
      %p249 = pneg %p243
      %p250 = scmp.eq.s32.totalorder %s19, 1
      %p251 = por %p249, %p250
      %p252 = scmp.ne.s32.totalorder %s244, %s247
      %p253 = scmp.eq.s32.totalorder %s19, 0
      %p254 = por %p252, %p253
      %p255 = scmp.ne.s32.totalorder %s244, %s247
      %p256 = scmp.eq.s32.totalorder %s24, 1
      %p257 = por %p255, %p256
      %p258 = scmp.ne.s32.totalorder %s247, %s248
      %p259 = scmp.eq.s32.totalorder %s24, 0
      %p260 = por %p258, %p259
      %p261 = scmp.ne.s32.totalorder %s247, %s248
      %p262 = scmp.eq.s32.totalorder %s25, 1
      %p263 = por %p261, %p262
      %p265 = scmp.ne.s32.totalorder %s248, %s264
      %p266 = scmp.eq.s32.totalorder %s25, 0
      %p267 = por %p265, %p266
      %p268 = scmp.le.s32.totalorder 1, %s19
      %p269 = scmp.lt.s32.totalorder %s19, 3
      %p270 = pnand %p268, %p269
      %p271 = pneg %p270
      // Predicated region
      $region9: #{tpu_custom_call.1} parent=5 // pred_check
        _
      $region10: #{tpu_custom_call.1} parent=5 // pred_check_branch
        %273 = sbr.rel (%p270) target = $region12
      $region11: #{tpu_custom_call.1} parent=5 // pred_region
        %s274 = ssub.s32 %s19, 1
        // Predicated region
        $region13: #{tpu_custom_call.1} parent=11 // pred_check
          %p275 = pneg %p66
        $region14: #{tpu_custom_call.1} parent=11 // pred_check_branch
          %277 = sbr.rel (%p275) target = $region16
        $region15: #{tpu_custom_call.1} parent=11 // pred_region
          _
        $region16: #{tpu_custom_call.1} parent=11 // pred_fallthru
          _
        // Predicated region
        $region17: #{tpu_custom_call.1} parent=11 // pred_check
          %p278 = pneg %p87
        $region18: #{tpu_custom_call.1} parent=11 // pred_check_branch
          %280 = sbr.rel (%p278) target = $region20
        $region19: #{tpu_custom_call.1} parent=11 // pred_region
          _
        $region20: #{tpu_custom_call.1} parent=11 // pred_fallthru
          _
        // Predicated region
        $region21: #{tpu_custom_call.1} parent=11 // pred_check
          %p281 = pneg %p108
        $region22: #{tpu_custom_call.1} parent=11 // pred_check_branch
          %283 = sbr.rel (%p281) target = $region24
        $region23: #{tpu_custom_call.1} parent=11 // pred_region
          _
        $region24: #{tpu_custom_call.1} parent=11 // pred_fallthru
          _
        // Predicated region
        $region25: #{tpu_custom_call.1} parent=11 // pred_check
          %p284 = pneg %p129
        $region26: #{tpu_custom_call.1} parent=11 // pred_check_branch
          %286 = sbr.rel (%p284) target = $region28
        $region27: #{tpu_custom_call.1} parent=11 // pred_region
          _
        $region28: #{tpu_custom_call.1} parent=11 // pred_fallthru
          _
        // Predicated region
        $region29: #{tpu_custom_call.1} parent=11 // pred_check
          %p287 = pneg %p150
        $region30: #{tpu_custom_call.1} parent=11 // pred_check_branch
          %289 = sbr.rel (%p287) target = $region32
        $region31: #{tpu_custom_call.1} parent=11 // pred_region
          _
        $region32: #{tpu_custom_call.1} parent=11 // pred_fallthru
          _
        // Predicated region
        $region33: #{tpu_custom_call.1} parent=11 // pred_check
          %p290 = pneg %p171
        $region34: #{tpu_custom_call.1} parent=11 // pred_check_branch
          %292 = sbr.rel (%p290) target = $region36
        $region35: #{tpu_custom_call.1} parent=11 // pred_region
          _
        $region36: #{tpu_custom_call.1} parent=11 // pred_fallthru
          _
        // Predicated region
        $region37: #{tpu_custom_call.1} parent=11 // pred_check
          %p293 = pneg %p192
        $region38: #{tpu_custom_call.1} parent=11 // pred_check_branch
          %295 = sbr.rel (%p293) target = $region40
        $region39: #{tpu_custom_call.1} parent=11 // pred_region
          _
        $region40: #{tpu_custom_call.1} parent=11 // pred_fallthru
          _
        // Predicated region
        $region41: #{tpu_custom_call.1} parent=11 // pred_check
          %p296 = pneg %p213
        $region42: #{tpu_custom_call.1} parent=11 // pred_check_branch
          %298 = sbr.rel (%p296) target = $region44
        $region43: #{tpu_custom_call.1} parent=11 // pred_region
          _
        $region44: #{tpu_custom_call.1} parent=11 // pred_fallthru
          _
        // Predicated region
        $region45: #{tpu_custom_call.1} parent=11 // pred_check
          %p299 = pneg %p234
        $region46: #{tpu_custom_call.1} parent=11 // pred_check_branch
          %301 = sbr.rel (%p299) target = $region48
        $region47: #{tpu_custom_call.1} parent=11 // pred_region
          _
        $region48: #{tpu_custom_call.1} parent=11 // pred_fallthru
          _
      $region12: #{tpu_custom_call.1} parent=5 // pred_fallthru
        _
      %p302 = scmp.lt.s32.totalorder %s19, 2
      // Predicated region
      $region49: #{tpu_custom_call.1} parent=5 // pred_check
        %p303 = pneg %p302
      $region50: #{tpu_custom_call.1} parent=5 // pred_check_branch
        %305 = sbr.rel (%p303) target = $region52
      $region51: #{tpu_custom_call.1} parent=5 // pred_region
        // Predicated region
        $region53: #{tpu_custom_call.1} parent=51 // pred_check
          %p306 = pneg %p39
        $region54: #{tpu_custom_call.1} parent=51 // pred_check_branch
          %308 = sbr.rel (%p306) target = $region56
        $region55: #{tpu_custom_call.1} parent=51 // pred_region
          %s309 = smul.u32 32, %s19
          %p310 = scmp.lt.s32.totalorder %s309, 63
          %s311 = scalar_select %p310, %s309, 63
          %s312 = smul.addr %s311, 8
          %s313 = scalar_lea.vmem %s0, %s312
          %s314 = smul.u32 32, %s19
        $region56: #{tpu_custom_call.1} parent=51 // pred_fallthru
          _
      $region52: #{tpu_custom_call.1} parent=5 // pred_fallthru
        _
      %p315 = scmp.le.s32.totalorder 1, %s19
      %p316 = scmp.lt.s32.totalorder %s19, 3
      %p317 = pnand %p315, %p316
      %p318 = pneg %p317
      // Predicated region
      $region57: #{tpu_custom_call.1} parent=5 // pred_check
        _
      $region58: #{tpu_custom_call.1} parent=5 // pred_check_branch
        %320 = sbr.rel (%p317) target = $region60
      $region59: #{tpu_custom_call.1} parent=5 // pred_region
        %s321 = ssub.s32 %s19, 1
        %s322 = smul.u32 32, %s24
        %p323 = scmp.lt.s32.totalorder %s322, 63
        %s324 = scalar_select %p323, %s322, 63
        %s325 = smul.addr %s324, 8
        %s326 = scalar_lea.vmem %s0, %s325
        %p327 = pneg %p45
        %p328 = pneg %p42
        %p329 = pneg %p66
        %p330 = pneg %p63
        %p331 = pneg %p87
        %p332 = pneg %p84
        %p333 = pneg %p108
        %p334 = pneg %p105
        %p335 = pneg %p129
        %p336 = pneg %p126
        %p337 = pneg %p150
        %p338 = pneg %p147
        %p339 = pneg %p171
        %p340 = pneg %p168
        %p341 = pneg %p192
        %p342 = pneg %p189
        %p343 = pneg %p213
        %p344 = pneg %p210
        %p345 = pneg %p234
        %p346 = pneg %p231
        %p347 = pneg %p260
        %p348 = pneg %p257
        %s349 = sand.u32 %s247, 1
        %s350 = scalar_lea.sflag [#allocation6], %s349
        %s351 = sand.u32 %s247, 1
        %s352 = scalar_lea.vmem [#allocation5], %s351
        %s353 = smul.u32 32, %s24
        %p354 = scmp.lt.s32.totalorder %s353, 63
        %s355 = scalar_select %p354, %s353, 63
        %s356 = smul.addr %s355, 8
        %s357 = scalar_lea.vmem %s0, %s356
        %s358 = smul.u32 32, %s24
        %vm360 = vcmask 523264
        %361 = vst.msk [vmem:[#allocation2 + $0x100] sm:$0xff] %vm360, 0.0
        %362 = vst.msk [vmem:[#allocation2 + $0x108] sm:$0xff] %vm360, 0.0
        %363 = vst.msk [vmem:[#allocation2 + $0x110] sm:$0xff] %vm360, 0.0
        %364 = vst.msk [vmem:[#allocation2 + $0x118] sm:$0xff] %vm360, 0.0
        %365 = vst.msk [vmem:[#allocation2 + $0x120] sm:$0xff] %vm360, 0.0
        %v366 = vld [vmem:[%s357] sm:$0xff]
        %v367 = vld [vmem:[%s357 + $0x8] sm:$0xff]
        %v368 = vld [vmem:[%s357 + $0x10] sm:$0xff]
        %v369 = vld [vmem:[%s357 + $0x18] sm:$0xff]
        %v370 = vld [vmem:[%s357 + $0x20] sm:$0xff]
        %v371 = vld [vmem:[%s357 + $0x28] sm:$0xff]
        %v372 = vld [vmem:[%s357 + $0x30] sm:$0xff]
        %v373 = vld [vmem:[%s357 + $0x38] sm:$0xff]
        %v374 = vld [vmem:[%s357 + $0x40] sm:$0xff]
        %v375 = vld [vmem:[%s357 + $0x48] sm:$0xff]
        %v376 = vld [vmem:[%s357 + $0x50] sm:$0xff]
        %v377 = vld [vmem:[%s357 + $0x58] sm:$0xff]
        %v378 = vld [vmem:[%s357 + $0x60] sm:$0xff]
        %v379 = vld [vmem:[%s357 + $0x68] sm:$0xff]
        %v380 = vld [vmem:[%s357 + $0x70] sm:$0xff]
        %v381 = vld [vmem:[%s357 + $0x78] sm:$0xff]
        %v382 = vld [vmem:[%s357 + $0x80] sm:$0xff]
        %v383 = vld [vmem:[%s357 + $0x88] sm:$0xff]
        %v384 = vld [vmem:[%s357 + $0x90] sm:$0xff]
        %v385 = vld [vmem:[%s357 + $0x98] sm:$0xff]
        %v386 = vld [vmem:[%s357 + $0xa0] sm:$0xff]
        %v387 = vld [vmem:[%s357 + $0xa8] sm:$0xff]
        %v388 = vld [vmem:[%s357 + $0xb0] sm:$0xff]
        %v389 = vld [vmem:[%s357 + $0xb8] sm:$0xff]
        %v390 = vld [vmem:[%s357 + $0xc0] sm:$0xff]
        %v391 = vld [vmem:[%s357 + $0xc8] sm:$0xff]
        %v392 = vld [vmem:[%s357 + $0xd0] sm:$0xff]
        %v393 = vld [vmem:[%s357 + $0xd8] sm:$0xff]
        %v394 = vld [vmem:[%s357 + $0xe0] sm:$0xff]
        %v395 = vld [vmem:[%s357 + $0xe8] sm:$0xff]
        %v396 = vld [vmem:[%s357 + $0xf0] sm:$0xff]
        %v397 = vld [vmem:[%s357 + $0xf8] sm:$0xff]
        %v398 = vld [vmem:[%s1] sm:$0xff]
        %v399 = vld [vmem:[%s1 + $0x8] sm:$0x1]
        %v400 = vld [vmem:[%s2] sm:$0x1]
        %v402 = vlaneseq
        %v403 = vshrl.u32 %v402, 7
        %v404 = vsub.s32 0, %v403
        %v405 = vrot.slane %v400, %v404
        %vm407 = vcmask 72704
        %v409 = vsel %vm407, %v366, 0
        %v412 = vsel %vm407, %v367, 0
        %v415 = vsel %vm407, %v368, 0
        %v418 = vsel %vm407, %v369, 0
        %v421 = vsel %vm407, %v370, 0
        %v424 = vsel %vm407, %v371, 0
        %v427 = vsel %vm407, %v372, 0
        %v430 = vsel %vm407, %v373, 0
        %v433 = vsel %vm407, %v374, 0
        %v436 = vsel %vm407, %v375, 0
        %v439 = vsel %vm407, %v376, 0
        %v442 = vsel %vm407, %v377, 0
        %v445 = vsel %vm407, %v378, 0
        %v448 = vsel %vm407, %v379, 0
        %v451 = vsel %vm407, %v380, 0
        %v454 = vsel %vm407, %v381, 0
        %v457 = vsel %vm407, %v382, 0
        %v460 = vsel %vm407, %v383, 0
        %v463 = vsel %vm407, %v384, 0
        %v466 = vsel %vm407, %v385, 0
        %v469 = vsel %vm407, %v386, 0
        %v472 = vsel %vm407, %v387, 0
        %v475 = vsel %vm407, %v388, 0
        %v478 = vsel %vm407, %v389, 0
        %v481 = vsel %vm407, %v390, 0
        %v484 = vsel %vm407, %v391, 0
        %v487 = vsel %vm407, %v392, 0
        %v490 = vsel %vm407, %v393, 0
        %v493 = vsel %vm407, %v394, 0
        %v496 = vsel %vm407, %v395, 0
        %v499 = vsel %vm407, %v396, 0
        %v502 = vsel %vm407, %v397, 0
        %vm504 = vcmask 1040384
        %v506 = vsel %vm504, %v399, 0
        %508 = vmatprep.subr.mxu0 0.0
        %509 = vmatpush1.msra.mxu0 0.0
        %510 = vmatprep.subr.mxu0 0.0
        %511 = vmatpush1.msra.mxu0 0.0
        %512 = vmatprep.subr.mxu0 0.0
        %513 = vmatpush1.msra.mxu0 0.0
        %514 = vmatprep.subr.mxu0 0.0
        %515 = vmatpush1.msra.mxu0 0.0
        %516 = vmatprep.subr.mxu0 0.0
        %517 = vmatpush1.msra.mxu0 0.0
        %518 = vmatprep.subr.mxu0 0.0
        %519 = vmatpush1.msra.mxu0 0.0
        %520 = vmatprep.subr.mxu0 0.0
        %521 = vmatpush1.msra.mxu0 0.0
        %522 = vmatprep.subr.mxu0 0.0
        %523 = vmatpush1.msra.mxu0 0.0
        %524 = vmatprep.subr.mxu0 0.0
        %525 = vmatpush1.msra.mxu0 0.0
        %526 = vmatprep.subr.mxu0 0.0
        %527 = vmatpush1.msra.mxu0 0.0
        %528 = vmatprep.subr.mxu0 0.0
        %529 = vmatpush1.msra.mxu0 0.0
        %530 = vmatprep.subr.mxu0 0.0
        %531 = vmatpush1.msra.mxu0 0.0
        %532 = vmatprep.subr.mxu0 0.0
        %533 = vmatpush1.msra.mxu0 0.0
        %534 = vmatprep.subr.mxu0 0.0
        %535 = vmatpush1.msra.mxu0 0.0
        %536 = vmatprep.subr.mxu0 0.0
        %537 = vmatpush1.msra.mxu0 %v506
        %538 = vmatprep.subr.mxu0 0.0
        %539 = vmatpush1.msra.mxu0 %v398
        %540 = vmatprep.subr.mxu0 0.0
        %541 = vmatpush2.msra.mxu0 0.0
        %542 = vmatprep.subr.mxu0 0.0
        %543 = vmatpush2.msra.mxu0 0.0
        %544 = vmatprep.subr.mxu0 0.0
        %545 = vmatpush2.msra.mxu0 0.0
        %546 = vmatprep.subr.mxu0 0.0
        %547 = vmatpush2.msra.mxu0 0.0
        %548 = vmatprep.subr.mxu0 0.0
        %549 = vmatpush2.msra.mxu0 0.0
        %550 = vmatprep.subr.mxu0 0.0
        %551 = vmatpush2.msra.mxu0 0.0
        %552 = vmatprep.subr.mxu0 0.0
        %553 = vmatpush2.msra.mxu0 0.0
        %554 = vmatprep.subr.mxu0 0.0
        %555 = vmatpush2.msra.mxu0 0.0
        %556 = vmatprep.subr.mxu0 0.0
        %557 = vmatpush2.msra.mxu0 0.0
        %558 = vmatprep.subr.mxu0 0.0
        %559 = vmatpush2.msra.mxu0 0.0
        %560 = vmatprep.subr.mxu0 0.0
        %561 = vmatpush2.msra.mxu0 0.0
        %562 = vmatprep.subr.mxu0 0.0
        %563 = vmatpush2.msra.mxu0 0.0
        %564 = vmatprep.subr.mxu0 0.0
        %565 = vmatpush2.msra.mxu0 0.0
        %566 = vmatprep.subr.mxu0 0.0
        %567 = vmatpush2.msra.mxu0 0.0
        %568 = vmatprep.subr.mxu0 0.0
        %569 = vmatpush2.msra.mxu0 0.0
        %570 = vmatprep.subr.mxu0 0.0
        %571 = vmatpush2.msra.mxu0 0.0
        %572 = vmatprep.mubr.f32.mxu0 0.0
        %573 = vmatmul.mubr.f32.gmra.mxu0 %v409
        %v574 = vpop.f32.mrf.mxu0
        %v575 = vadd.f32 %v405, %v574
        %v576 = vpop.f32.mrf.mxu0
        %577 = vmatprep.mubr.f32.mxu0 0.0
        %578 = vmatmul.mubr.f32.gmra.mxu0 %v412
        %v579 = vpop.f32.mrf.mxu0
        %v580 = vadd.f32 %v405, %v579
        %v581 = vpop.f32.mrf.mxu0
        %582 = vmatprep.mubr.f32.mxu0 0.0
        %583 = vmatmul.mubr.f32.gmra.mxu0 %v415
        %v584 = vpop.f32.mrf.mxu0
        %v585 = vadd.f32 %v405, %v584
        %v586 = vpop.f32.mrf.mxu0
        %587 = vmatprep.mubr.f32.mxu0 0.0
        %588 = vmatmul.mubr.f32.gmra.mxu0 %v418
        %v589 = vpop.f32.mrf.mxu0
        %v590 = vadd.f32 %v405, %v589
        %v591 = vpop.f32.mrf.mxu0
        %592 = vmatprep.mubr.f32.mxu0 0.0
        %593 = vmatmul.mubr.f32.gmra.mxu0 %v421
        %v594 = vpop.f32.mrf.mxu0
        %v595 = vadd.f32 %v405, %v594
        %v596 = vpop.f32.mrf.mxu0
        %597 = vmatprep.mubr.f32.mxu0 0.0
        %598 = vmatmul.mubr.f32.gmra.mxu0 %v424
        %v599 = vpop.f32.mrf.mxu0
        %v600 = vadd.f32 %v405, %v599
        %v601 = vpop.f32.mrf.mxu0
        %602 = vmatprep.mubr.f32.mxu0 0.0
        %603 = vmatmul.mubr.f32.gmra.mxu0 %v427
        %v604 = vpop.f32.mrf.mxu0
        %v605 = vadd.f32 %v405, %v604
        %v606 = vpop.f32.mrf.mxu0
        %607 = vmatprep.mubr.f32.mxu0 0.0
        %608 = vmatmul.mubr.f32.gmra.mxu0 %v430
        %v609 = vpop.f32.mrf.mxu0
        %v610 = vadd.f32 %v405, %v609
        %v611 = vpop.f32.mrf.mxu0
        %612 = vmatprep.mubr.f32.mxu0 0.0
        %613 = vmatmul.mubr.f32.gmra.mxu0 %v433
        %v614 = vpop.f32.mrf.mxu0
        %v615 = vadd.f32 %v405, %v614
        %v616 = vpop.f32.mrf.mxu0
        %617 = vmatprep.mubr.f32.mxu0 0.0
        %618 = vmatmul.mubr.f32.gmra.mxu0 %v436
        %v619 = vpop.f32.mrf.mxu0
        %v620 = vadd.f32 %v405, %v619
        %v621 = vpop.f32.mrf.mxu0
        %622 = vmatprep.mubr.f32.mxu0 0.0
        %623 = vmatmul.mubr.f32.gmra.mxu0 %v439
        %v624 = vpop.f32.mrf.mxu0
        %v625 = vadd.f32 %v405, %v624
        %v626 = vpop.f32.mrf.mxu0
        %627 = vmatprep.mubr.f32.mxu0 0.0
        %628 = vmatmul.mubr.f32.gmra.mxu0 %v442
        %v629 = vpop.f32.mrf.mxu0
        %v630 = vadd.f32 %v405, %v629
        %v631 = vpop.f32.mrf.mxu0
        %632 = vmatprep.mubr.f32.mxu0 0.0
        %633 = vmatmul.mubr.f32.gmra.mxu0 %v445
        %v634 = vpop.f32.mrf.mxu0
        %v635 = vadd.f32 %v405, %v634
        %v636 = vpop.f32.mrf.mxu0
        %637 = vmatprep.mubr.f32.mxu0 0.0
        %638 = vmatmul.mubr.f32.gmra.mxu0 %v448
        %v639 = vpop.f32.mrf.mxu0
        %v640 = vadd.f32 %v405, %v639
        %v641 = vpop.f32.mrf.mxu0
        %642 = vmatprep.mubr.f32.mxu0 0.0
        %643 = vmatmul.mubr.f32.gmra.mxu0 %v451
        %v644 = vpop.f32.mrf.mxu0
        %v645 = vadd.f32 %v405, %v644
        %v646 = vpop.f32.mrf.mxu0
        %647 = vmatprep.mubr.f32.mxu0 0.0
        %648 = vmatmul.mubr.f32.gmra.mxu0 %v454
        %v649 = vpop.f32.mrf.mxu0
        %v650 = vadd.f32 %v405, %v649
        %v651 = vpop.f32.mrf.mxu0
        %652 = vmatprep.mubr.f32.mxu0 0.0
        %653 = vmatmul.mubr.f32.gmra.mxu0 %v457
        %v654 = vpop.f32.mrf.mxu0
        %v655 = vadd.f32 %v405, %v654
        %v656 = vpop.f32.mrf.mxu0
        %657 = vmatprep.mubr.f32.mxu0 0.0
        %658 = vmatmul.mubr.f32.gmra.mxu0 %v460
        %v659 = vpop.f32.mrf.mxu0
        %v660 = vadd.f32 %v405, %v659
        %v661 = vpop.f32.mrf.mxu0
        %662 = vmatprep.mubr.f32.mxu0 0.0
        %663 = vmatmul.mubr.f32.gmra.mxu0 %v463
        %v664 = vpop.f32.mrf.mxu0
        %v665 = vadd.f32 %v405, %v664
        %v666 = vpop.f32.mrf.mxu0
        %667 = vmatprep.mubr.f32.mxu0 0.0
        %668 = vmatmul.mubr.f32.gmra.mxu0 %v466
        %v669 = vpop.f32.mrf.mxu0
        %v670 = vadd.f32 %v405, %v669
        %v671 = vpop.f32.mrf.mxu0
        %672 = vmatprep.mubr.f32.mxu0 0.0
        %673 = vmatmul.mubr.f32.gmra.mxu0 %v469
        %v674 = vpop.f32.mrf.mxu0
        %v675 = vadd.f32 %v405, %v674
        %v676 = vpop.f32.mrf.mxu0
        %677 = vmatprep.mubr.f32.mxu0 0.0
        %678 = vmatmul.mubr.f32.gmra.mxu0 %v472
        %v679 = vpop.f32.mrf.mxu0
        %v680 = vadd.f32 %v405, %v679
        %v681 = vpop.f32.mrf.mxu0
        %682 = vmatprep.mubr.f32.mxu0 0.0
        %683 = vmatmul.mubr.f32.gmra.mxu0 %v475
        %v684 = vpop.f32.mrf.mxu0
        %v685 = vadd.f32 %v405, %v684
        %v686 = vpop.f32.mrf.mxu0
        %687 = vmatprep.mubr.f32.mxu0 0.0
        %688 = vmatmul.mubr.f32.gmra.mxu0 %v478
        %v689 = vpop.f32.mrf.mxu0
        %v690 = vadd.f32 %v405, %v689
        %v691 = vpop.f32.mrf.mxu0
        %692 = vmatprep.mubr.f32.mxu0 0.0
        %693 = vmatmul.mubr.f32.gmra.mxu0 %v481
        %v694 = vpop.f32.mrf.mxu0
        %v695 = vadd.f32 %v405, %v694
        %v696 = vpop.f32.mrf.mxu0
        %697 = vmatprep.mubr.f32.mxu0 0.0
        %698 = vmatmul.mubr.f32.gmra.mxu0 %v484
        %v699 = vpop.f32.mrf.mxu0
        %v700 = vadd.f32 %v405, %v699
        %v701 = vpop.f32.mrf.mxu0
        %702 = vmatprep.mubr.f32.mxu0 0.0
        %703 = vmatmul.mubr.f32.gmra.mxu0 %v487
        %v704 = vpop.f32.mrf.mxu0
        %v705 = vadd.f32 %v405, %v704
        %v706 = vpop.f32.mrf.mxu0
        %707 = vmatprep.mubr.f32.mxu0 0.0
        %708 = vmatmul.mubr.f32.gmra.mxu0 %v490
        %v709 = vpop.f32.mrf.mxu0
        %v710 = vadd.f32 %v405, %v709
        %v711 = vpop.f32.mrf.mxu0
        %712 = vmatprep.mubr.f32.mxu0 0.0
        %713 = vmatmul.mubr.f32.gmra.mxu0 %v493
        %v714 = vpop.f32.mrf.mxu0
        %v715 = vadd.f32 %v405, %v714
        %v716 = vpop.f32.mrf.mxu0
        %717 = vmatprep.mubr.f32.mxu0 0.0
        %718 = vmatmul.mubr.f32.gmra.mxu0 %v496
        %v719 = vpop.f32.mrf.mxu0
        %v720 = vadd.f32 %v405, %v719
        %v721 = vpop.f32.mrf.mxu0
        %722 = vmatprep.mubr.f32.mxu0 0.0
        %723 = vmatmul.mubr.f32.gmra.mxu0 %v499
        %v724 = vpop.f32.mrf.mxu0
        %v725 = vadd.f32 %v405, %v724
        %v726 = vpop.f32.mrf.mxu0
        %727 = vmatprep.mubr.f32.mxu0 0.0
        %728 = vmatmul.mubr.f32.gmra.mxu0 %v502
        %v729 = vpop.f32.mrf.mxu0
        %v730 = vadd.f32 %v405, %v729
        %v731 = vpop.f32.mrf.mxu0
        %732 = vdwg.mxu0
        %v733 = vmax.f32 %v575, 0.0
        %v734 = vmax.f32 %v580, 0.0
        %v735 = vmax.f32 %v585, 0.0
        %v736 = vmax.f32 %v590, 0.0
        %v737 = vmax.f32 %v595, 0.0
        %v738 = vmax.f32 %v600, 0.0
        %v739 = vmax.f32 %v605, 0.0
        %v740 = vmax.f32 %v610, 0.0
        %v741 = vmax.f32 %v615, 0.0
        %v742 = vmax.f32 %v620, 0.0
        %v743 = vmax.f32 %v625, 0.0
        %v744 = vmax.f32 %v630, 0.0
        %v745 = vmax.f32 %v635, 0.0
        %v746 = vmax.f32 %v640, 0.0
        %v747 = vmax.f32 %v645, 0.0
        %v748 = vmax.f32 %v650, 0.0
        %v749 = vmax.f32 %v655, 0.0
        %v750 = vmax.f32 %v660, 0.0
        %v751 = vmax.f32 %v665, 0.0
        %v752 = vmax.f32 %v670, 0.0
        %v753 = vmax.f32 %v675, 0.0
        %v754 = vmax.f32 %v680, 0.0
        %v755 = vmax.f32 %v685, 0.0
        %v756 = vmax.f32 %v690, 0.0
        %v757 = vmax.f32 %v695, 0.0
        %v758 = vmax.f32 %v700, 0.0
        %v759 = vmax.f32 %v705, 0.0
        %v760 = vmax.f32 %v710, 0.0
        %v761 = vmax.f32 %v715, 0.0
        %v762 = vmax.f32 %v720, 0.0
        %v763 = vmax.f32 %v725, 0.0
        %v764 = vmax.f32 %v730, 0.0
        %765 = vst.msk [vmem:[#allocation2] sm:$0xff] %vm360, %v733
        %766 = vst.msk [vmem:[#allocation2 + $0x8] sm:$0xff] %vm360, %v734
        %767 = vst.msk [vmem:[#allocation2 + $0x10] sm:$0xff] %vm360, %v735
        %768 = vst.msk [vmem:[#allocation2 + $0x18] sm:$0xff] %vm360, %v736
        %769 = vst.msk [vmem:[#allocation2 + $0x20] sm:$0xff] %vm360, %v737
        %770 = vst.msk [vmem:[#allocation2 + $0x28] sm:$0xff] %vm360, %v738
        %771 = vst.msk [vmem:[#allocation2 + $0x30] sm:$0xff] %vm360, %v739
        %772 = vst.msk [vmem:[#allocation2 + $0x38] sm:$0xff] %vm360, %v740
        %773 = vst.msk [vmem:[#allocation2 + $0x40] sm:$0xff] %vm360, %v741
        %774 = vst.msk [vmem:[#allocation2 + $0x48] sm:$0xff] %vm360, %v742
        %775 = vst.msk [vmem:[#allocation2 + $0x50] sm:$0xff] %vm360, %v743
        %776 = vst.msk [vmem:[#allocation2 + $0x58] sm:$0xff] %vm360, %v744
        %777 = vst.msk [vmem:[#allocation2 + $0x60] sm:$0xff] %vm360, %v745
        %778 = vst.msk [vmem:[#allocation2 + $0x68] sm:$0xff] %vm360, %v746
        %779 = vst.msk [vmem:[#allocation2 + $0x70] sm:$0xff] %vm360, %v747
        %780 = vst.msk [vmem:[#allocation2 + $0x78] sm:$0xff] %vm360, %v748
        %781 = vst.msk [vmem:[#allocation2 + $0x80] sm:$0xff] %vm360, %v749
        %782 = vst.msk [vmem:[#allocation2 + $0x88] sm:$0xff] %vm360, %v750
        %783 = vst.msk [vmem:[#allocation2 + $0x90] sm:$0xff] %vm360, %v751
        %784 = vst.msk [vmem:[#allocation2 + $0x98] sm:$0xff] %vm360, %v752
        %785 = vst.msk [vmem:[#allocation2 + $0xa0] sm:$0xff] %vm360, %v753
        %786 = vst.msk [vmem:[#allocation2 + $0xa8] sm:$0xff] %vm360, %v754
        %787 = vst.msk [vmem:[#allocation2 + $0xb0] sm:$0xff] %vm360, %v755
        %788 = vst.msk [vmem:[#allocation2 + $0xb8] sm:$0xff] %vm360, %v756
        %789 = vst.msk [vmem:[#allocation2 + $0xc0] sm:$0xff] %vm360, %v757
        %790 = vst.msk [vmem:[#allocation2 + $0xc8] sm:$0xff] %vm360, %v758
        %791 = vst.msk [vmem:[#allocation2 + $0xd0] sm:$0xff] %vm360, %v759
        %792 = vst.msk [vmem:[#allocation2 + $0xd8] sm:$0xff] %vm360, %v760
        %793 = vst.msk [vmem:[#allocation2 + $0xe0] sm:$0xff] %vm360, %v761
        %794 = vst.msk [vmem:[#allocation2 + $0xe8] sm:$0xff] %vm360, %v762
        %795 = vst.msk [vmem:[#allocation2 + $0xf0] sm:$0xff] %vm360, %v763
        %796 = vst.msk [vmem:[#allocation2 + $0xf8] sm:$0xff] %vm360, %v764
        %v797 = vld [vmem:[#allocation2] sm:$0xff]
        %v798 = vld [vmem:[#allocation2 + $0x8] sm:$0xff]
        %v799 = vld [vmem:[#allocation2 + $0x10] sm:$0xff]
        %v800 = vld [vmem:[#allocation2 + $0x18] sm:$0xff]
        %v801 = vld [vmem:[#allocation2 + $0x20] sm:$0xff]
        %v802 = vld [vmem:[#allocation2 + $0x28] sm:$0xff]
        %v803 = vld [vmem:[#allocation2 + $0x30] sm:$0xff]
        %v804 = vld [vmem:[#allocation2 + $0x38] sm:$0xff]
        %v805 = vld [vmem:[#allocation2 + $0x40] sm:$0xff]
        %v806 = vld [vmem:[#allocation2 + $0x48] sm:$0xff]
        %v807 = vld [vmem:[#allocation2 + $0x50] sm:$0xff]
        %v808 = vld [vmem:[#allocation2 + $0x58] sm:$0xff]
        %v809 = vld [vmem:[#allocation2 + $0x60] sm:$0xff]
        %v810 = vld [vmem:[#allocation2 + $0x68] sm:$0xff]
        %v811 = vld [vmem:[#allocation2 + $0x70] sm:$0xff]
        %v812 = vld [vmem:[#allocation2 + $0x78] sm:$0xff]
        %v813 = vld [vmem:[#allocation2 + $0x80] sm:$0xff]
        %v814 = vld [vmem:[#allocation2 + $0x88] sm:$0xff]
        %v815 = vld [vmem:[#allocation2 + $0x90] sm:$0xff]
        %v816 = vld [vmem:[#allocation2 + $0x98] sm:$0xff]
        %v817 = vld [vmem:[#allocation2 + $0xa0] sm:$0xff]
        %v818 = vld [vmem:[#allocation2 + $0xa8] sm:$0xff]
        %v819 = vld [vmem:[#allocation2 + $0xb0] sm:$0xff]
        %v820 = vld [vmem:[#allocation2 + $0xb8] sm:$0xff]
        %v821 = vld [vmem:[#allocation2 + $0xc0] sm:$0xff]
        %v822 = vld [vmem:[#allocation2 + $0xc8] sm:$0xff]
        %v823 = vld [vmem:[#allocation2 + $0xd0] sm:$0xff]
        %v824 = vld [vmem:[#allocation2 + $0xd8] sm:$0xff]
        %v825 = vld [vmem:[#allocation2 + $0xe0] sm:$0xff]
        %v826 = vld [vmem:[#allocation2 + $0xe8] sm:$0xff]
        %v827 = vld [vmem:[#allocation2 + $0xf0] sm:$0xff]
        %v828 = vld [vmem:[#allocation2 + $0xf8] sm:$0xff]
        %v829 = vpack.c.bf16 %v798, %v797
        %v830 = vpack.c.bf16 %v800, %v799
        %v831 = vpack.c.bf16 %v802, %v801
        %v832 = vpack.c.bf16 %v804, %v803
        %v833 = vpack.c.bf16 %v806, %v805
        %v834 = vpack.c.bf16 %v808, %v807
        %v835 = vpack.c.bf16 %v810, %v809
        %v836 = vpack.c.bf16 %v812, %v811
        %v837 = vpack.c.bf16 %v814, %v813
        %v838 = vpack.c.bf16 %v816, %v815
        %v839 = vpack.c.bf16 %v818, %v817
        %v840 = vpack.c.bf16 %v820, %v819
        %v841 = vpack.c.bf16 %v822, %v821
        %v842 = vpack.c.bf16 %v824, %v823
        %v843 = vpack.c.bf16 %v826, %v825
        %v844 = vpack.c.bf16 %v828, %v827
        %v861 = vunpack.c.l.b16 %v829
        %v862 = vunpack.c.h.b16 %v829
        %v863 = vunpack.c.l.b16 %v830
        %v864 = vunpack.c.h.b16 %v830
        %v865 = vunpack.c.l.b16 %v831
        %v866 = vunpack.c.h.b16 %v831
        %v867 = vunpack.c.l.b16 %v832
        %v868 = vunpack.c.h.b16 %v832
        %v869 = vunpack.c.l.b16 %v833
        %v870 = vunpack.c.h.b16 %v833
        %v871 = vunpack.c.l.b16 %v834
        %v872 = vunpack.c.h.b16 %v834
        %v873 = vunpack.c.l.b16 %v835
        %v874 = vunpack.c.h.b16 %v835
        %v875 = vunpack.c.l.b16 %v836
        %v876 = vunpack.c.h.b16 %v836
        %v877 = vunpack.c.l.b16 %v837
        %v878 = vunpack.c.h.b16 %v837
        %v879 = vunpack.c.l.b16 %v838
        %v880 = vunpack.c.h.b16 %v838
        %v881 = vunpack.c.l.b16 %v839
        %v882 = vunpack.c.h.b16 %v839
        %v883 = vunpack.c.l.b16 %v840
        %v884 = vunpack.c.h.b16 %v840
        %v885 = vunpack.c.l.b16 %v841
        %v886 = vunpack.c.h.b16 %v841
        %v887 = vunpack.c.l.b16 %v842
        %v888 = vunpack.c.h.b16 %v842
        %v889 = vunpack.c.l.b16 %v843
        %v890 = vunpack.c.h.b16 %v843
        %v891 = vunpack.c.l.b16 %v844
        %v892 = vunpack.c.h.b16 %v844
        %v893 = vpack.c.b16 %v861, %v861
        %v894 = vpack.c.b16 %v862, %v862
        %v895 = vpack.c.b16 %v863, %v863
        %v896 = vpack.c.b16 %v864, %v864
        %v897 = vpack.c.b16 %v865, %v865
        %v898 = vpack.c.b16 %v866, %v866
        %v899 = vpack.c.b16 %v867, %v867
        %v900 = vpack.c.b16 %v868, %v868
        %v901 = vpack.c.b16 %v869, %v869
        %v902 = vpack.c.b16 %v870, %v870
        %v903 = vpack.c.b16 %v871, %v871
        %v904 = vpack.c.b16 %v872, %v872
        %v905 = vpack.c.b16 %v873, %v873
        %v906 = vpack.c.b16 %v874, %v874
        %v907 = vpack.c.b16 %v875, %v875
        %v908 = vpack.c.b16 %v876, %v876
        %v909 = vpack.c.b16 %v877, %v877
        %v910 = vpack.c.b16 %v878, %v878
        %v911 = vpack.c.b16 %v879, %v879
        %v912 = vpack.c.b16 %v880, %v880
        %v913 = vpack.c.b16 %v881, %v881
        %v914 = vpack.c.b16 %v882, %v882
        %v915 = vpack.c.b16 %v883, %v883
        %v916 = vpack.c.b16 %v884, %v884
        %v917 = vpack.c.b16 %v885, %v885
        %v918 = vpack.c.b16 %v886, %v886
        %v919 = vpack.c.b16 %v887, %v887
        %v920 = vpack.c.b16 %v888, %v888
        %v921 = vpack.c.b16 %v889, %v889
        %v922 = vpack.c.b16 %v890, %v890
        %v923 = vpack.c.b16 %v891, %v891
        %v924 = vpack.c.b16 %v892, %v892
        %vm957 = vcmask 519168
        %958 = vst.msk [vmem:[#allocation3] sm:$0xf] %vm957, %v893
        %959 = vst.msk [vmem:[#allocation3 + $0x14] sm:$0xf] %vm957, %v894
        %960 = vst.msk [vmem:[#allocation3 + $0x28] sm:$0xf] %vm957, %v895
        %961 = vst.msk [vmem:[#allocation3 + $0x3c] sm:$0xf] %vm957, %v896
        %962 = vst.msk [vmem:[#allocation3 + $0x50] sm:$0xf] %vm957, %v897
        %963 = vst.msk [vmem:[#allocation3 + $0x64] sm:$0xf] %vm957, %v898
        %964 = vst.msk [vmem:[#allocation3 + $0x78] sm:$0xf] %vm957, %v899
        %965 = vst.msk [vmem:[#allocation3 + $0x8c] sm:$0xf] %vm957, %v900
        %966 = vst.msk [vmem:[#allocation3 + $0xa0] sm:$0xf] %vm957, %v901
        %967 = vst.msk [vmem:[#allocation3 + $0xb4] sm:$0xf] %vm957, %v902
        %968 = vst.msk [vmem:[#allocation3 + $0xc8] sm:$0xf] %vm957, %v903
        %969 = vst.msk [vmem:[#allocation3 + $0xdc] sm:$0xf] %vm957, %v904
        %970 = vst.msk [vmem:[#allocation3 + $0xf0] sm:$0xf] %vm957, %v905
        %971 = vst.msk [vmem:[#allocation3 + $0x104] sm:$0xf] %vm957, %v906
        %972 = vst.msk [vmem:[#allocation3 + $0x118] sm:$0xf] %vm957, %v907
        %973 = vst.msk [vmem:[#allocation3 + $0x12c] sm:$0xf] %vm957, %v908
        %974 = vst.msk [vmem:[#allocation3 + $0x140] sm:$0xf] %vm957, %v909
        %975 = vst.msk [vmem:[#allocation3 + $0x154] sm:$0xf] %vm957, %v910
        %976 = vst.msk [vmem:[#allocation3 + $0x168] sm:$0xf] %vm957, %v911
        %977 = vst.msk [vmem:[#allocation3 + $0x17c] sm:$0xf] %vm957, %v912
        %978 = vst.msk [vmem:[#allocation3 + $0x190] sm:$0xf] %vm957, %v913
        %979 = vst.msk [vmem:[#allocation3 + $0x1a4] sm:$0xf] %vm957, %v914
        %980 = vst.msk [vmem:[#allocation3 + $0x1b8] sm:$0xf] %vm957, %v915
        %981 = vst.msk [vmem:[#allocation3 + $0x1cc] sm:$0xf] %vm957, %v916
        %982 = vst.msk [vmem:[#allocation3 + $0x1e0] sm:$0xf] %vm957, %v917
        %983 = vst.msk [vmem:[#allocation3 + $0x1f4] sm:$0xf] %vm957, %v918
        %984 = vst.msk [vmem:[#allocation3 + $0x208] sm:$0xf] %vm957, %v919
        %985 = vst.msk [vmem:[#allocation3 + $0x21c] sm:$0xf] %vm957, %v920
        %986 = vst.msk [vmem:[#allocation3 + $0x230] sm:$0xf] %vm957, %v921
        %987 = vst.msk [vmem:[#allocation3 + $0x244] sm:$0xf] %vm957, %v922
        %988 = vst.msk [vmem:[#allocation3 + $0x258] sm:$0xf] %vm957, %v923
        %989 = vst.msk [vmem:[#allocation3 + $0x26c] sm:$0xf] %vm957, %v924
        %v990 = vld [vmem:[#allocation2 + $0x1] sm:$0xff]
        %v991 = vld [vmem:[#allocation2 + $0x9] sm:$0xff]
        %v992 = vld [vmem:[#allocation2 + $0x11] sm:$0xff]
        %v993 = vld [vmem:[#allocation2 + $0x19] sm:$0xff]
        %v994 = vld [vmem:[#allocation2 + $0x21] sm:$0xff]
        %v995 = vld [vmem:[#allocation2 + $0x29] sm:$0xff]
        %v996 = vld [vmem:[#allocation2 + $0x31] sm:$0xff]
        %v997 = vld [vmem:[#allocation2 + $0x39] sm:$0xff]
        %v998 = vld [vmem:[#allocation2 + $0x41] sm:$0xff]
        %v999 = vld [vmem:[#allocation2 + $0x49] sm:$0xff]
        %v1000 = vld [vmem:[#allocation2 + $0x51] sm:$0xff]
        %v1001 = vld [vmem:[#allocation2 + $0x59] sm:$0xff]
        %v1002 = vld [vmem:[#allocation2 + $0x61] sm:$0xff]
        %v1003 = vld [vmem:[#allocation2 + $0x69] sm:$0xff]
        %v1004 = vld [vmem:[#allocation2 + $0x71] sm:$0xff]
        %v1005 = vld [vmem:[#allocation2 + $0x79] sm:$0xff]
        %v1006 = vld [vmem:[#allocation2 + $0x81] sm:$0xff]
        %v1007 = vld [vmem:[#allocation2 + $0x89] sm:$0xff]
        %v1008 = vld [vmem:[#allocation2 + $0x91] sm:$0xff]
        %v1009 = vld [vmem:[#allocation2 + $0x99] sm:$0xff]
        %v1010 = vld [vmem:[#allocation2 + $0xa1] sm:$0xff]
        %v1011 = vld [vmem:[#allocation2 + $0xa9] sm:$0xff]
        %v1012 = vld [vmem:[#allocation2 + $0xb1] sm:$0xff]
        %v1013 = vld [vmem:[#allocation2 + $0xb9] sm:$0xff]
        %v1014 = vld [vmem:[#allocation2 + $0xc1] sm:$0xff]
        %v1015 = vld [vmem:[#allocation2 + $0xc9] sm:$0xff]
        %v1016 = vld [vmem:[#allocation2 + $0xd1] sm:$0xff]
        %v1017 = vld [vmem:[#allocation2 + $0xd9] sm:$0xff]
        %v1018 = vld [vmem:[#allocation2 + $0xe1] sm:$0xff]
        %v1019 = vld [vmem:[#allocation2 + $0xe9] sm:$0xff]
        %v1020 = vld [vmem:[#allocation2 + $0xf1] sm:$0xff]
        %v1021 = vld [vmem:[#allocation2 + $0xf9] sm:$0xff]
        %v1022 = vpack.c.bf16 %v991, %v990
        %v1023 = vpack.c.bf16 %v993, %v992
        %v1024 = vpack.c.bf16 %v995, %v994
        %v1025 = vpack.c.bf16 %v997, %v996
        %v1026 = vpack.c.bf16 %v999, %v998
        %v1027 = vpack.c.bf16 %v1001, %v1000
        %v1028 = vpack.c.bf16 %v1003, %v1002
        %v1029 = vpack.c.bf16 %v1005, %v1004
        %v1030 = vpack.c.bf16 %v1007, %v1006
        %v1031 = vpack.c.bf16 %v1009, %v1008
        %v1032 = vpack.c.bf16 %v1011, %v1010
        %v1033 = vpack.c.bf16 %v1013, %v1012
        %v1034 = vpack.c.bf16 %v1015, %v1014
        %v1035 = vpack.c.bf16 %v1017, %v1016
        %v1036 = vpack.c.bf16 %v1019, %v1018
        %v1037 = vpack.c.bf16 %v1021, %v1020
        %v1054 = vunpack.c.l.b16 %v1022
        %v1055 = vunpack.c.h.b16 %v1022
        %v1056 = vunpack.c.l.b16 %v1023
        %v1057 = vunpack.c.h.b16 %v1023
        %v1058 = vunpack.c.l.b16 %v1024
        %v1059 = vunpack.c.h.b16 %v1024
        %v1060 = vunpack.c.l.b16 %v1025
        %v1061 = vunpack.c.h.b16 %v1025
        %v1062 = vunpack.c.l.b16 %v1026
        %v1063 = vunpack.c.h.b16 %v1026
        %v1064 = vunpack.c.l.b16 %v1027
        %v1065 = vunpack.c.h.b16 %v1027
        %v1066 = vunpack.c.l.b16 %v1028
        %v1067 = vunpack.c.h.b16 %v1028
        %v1068 = vunpack.c.l.b16 %v1029
        %v1069 = vunpack.c.h.b16 %v1029
        %v1070 = vunpack.c.l.b16 %v1030
        %v1071 = vunpack.c.h.b16 %v1030
        %v1072 = vunpack.c.l.b16 %v1031
        %v1073 = vunpack.c.h.b16 %v1031
        %v1074 = vunpack.c.l.b16 %v1032
        %v1075 = vunpack.c.h.b16 %v1032
        %v1076 = vunpack.c.l.b16 %v1033
        %v1077 = vunpack.c.h.b16 %v1033
        %v1078 = vunpack.c.l.b16 %v1034
        %v1079 = vunpack.c.h.b16 %v1034
        %v1080 = vunpack.c.l.b16 %v1035
        %v1081 = vunpack.c.h.b16 %v1035
        %v1082 = vunpack.c.l.b16 %v1036
        %v1083 = vunpack.c.h.b16 %v1036
        %v1084 = vunpack.c.l.b16 %v1037
        %v1085 = vunpack.c.h.b16 %v1037
        %v1086 = vpack.c.b16 %v1054, %v1054
        %v1087 = vpack.c.b16 %v1055, %v1055
        %v1088 = vpack.c.b16 %v1056, %v1056
        %v1089 = vpack.c.b16 %v1057, %v1057
        %v1090 = vpack.c.b16 %v1058, %v1058
        %v1091 = vpack.c.b16 %v1059, %v1059
        %v1092 = vpack.c.b16 %v1060, %v1060
        %v1093 = vpack.c.b16 %v1061, %v1061
        %v1094 = vpack.c.b16 %v1062, %v1062
        %v1095 = vpack.c.b16 %v1063, %v1063
        %v1096 = vpack.c.b16 %v1064, %v1064
        %v1097 = vpack.c.b16 %v1065, %v1065
        %v1098 = vpack.c.b16 %v1066, %v1066
        %v1099 = vpack.c.b16 %v1067, %v1067
        %v1100 = vpack.c.b16 %v1068, %v1068
        %v1101 = vpack.c.b16 %v1069, %v1069
        %v1102 = vpack.c.b16 %v1070, %v1070
        %v1103 = vpack.c.b16 %v1071, %v1071
        %v1104 = vpack.c.b16 %v1072, %v1072
        %v1105 = vpack.c.b16 %v1073, %v1073
        %v1106 = vpack.c.b16 %v1074, %v1074
        %v1107 = vpack.c.b16 %v1075, %v1075
        %v1108 = vpack.c.b16 %v1076, %v1076
        %v1109 = vpack.c.b16 %v1077, %v1077
        %v1110 = vpack.c.b16 %v1078, %v1078
        %v1111 = vpack.c.b16 %v1079, %v1079
        %v1112 = vpack.c.b16 %v1080, %v1080
        %v1113 = vpack.c.b16 %v1081, %v1081
        %v1114 = vpack.c.b16 %v1082, %v1082
        %v1115 = vpack.c.b16 %v1083, %v1083
        %v1116 = vpack.c.b16 %v1084, %v1084
        %v1117 = vpack.c.b16 %v1085, %v1085
        %1118 = vrot.lane.b32.xlu0 %v1086, 64
        %v1119 = vpop.permute.xlu0 %1118
        %1120 = vrot.lane.b32.xlu0 %v1087, 64
        %v1121 = vpop.permute.xlu0 %1120
        %1122 = vrot.lane.b32.xlu0 %v1088, 64
        %v1123 = vpop.permute.xlu0 %1122
        %1124 = vrot.lane.b32.xlu0 %v1089, 64
        %v1125 = vpop.permute.xlu0 %1124
        %1126 = vrot.lane.b32.xlu0 %v1090, 64
        %v1127 = vpop.permute.xlu0 %1126
        %1128 = vrot.lane.b32.xlu0 %v1091, 64
        %v1129 = vpop.permute.xlu0 %1128
        %1130 = vrot.lane.b32.xlu0 %v1092, 64
        %v1131 = vpop.permute.xlu0 %1130
        %1132 = vrot.lane.b32.xlu0 %v1093, 64
        %v1133 = vpop.permute.xlu0 %1132
        %1134 = vrot.lane.b32.xlu0 %v1094, 64
        %v1135 = vpop.permute.xlu0 %1134
        %1136 = vrot.lane.b32.xlu0 %v1095, 64
        %v1137 = vpop.permute.xlu0 %1136
        %1138 = vrot.lane.b32.xlu0 %v1096, 64
        %v1139 = vpop.permute.xlu0 %1138
        %1140 = vrot.lane.b32.xlu0 %v1097, 64
        %v1141 = vpop.permute.xlu0 %1140
        %1142 = vrot.lane.b32.xlu0 %v1098, 64
        %v1143 = vpop.permute.xlu0 %1142
        %1144 = vrot.lane.b32.xlu0 %v1099, 64
        %v1145 = vpop.permute.xlu0 %1144
        %1146 = vrot.lane.b32.xlu0 %v1100, 64
        %v1147 = vpop.permute.xlu0 %1146
        %1148 = vrot.lane.b32.xlu0 %v1101, 64
        %v1149 = vpop.permute.xlu0 %1148
        %1150 = vrot.lane.b32.xlu0 %v1102, 64
        %v1151 = vpop.permute.xlu0 %1150
        %1152 = vrot.lane.b32.xlu0 %v1103, 64
        %v1153 = vpop.permute.xlu0 %1152
        %1154 = vrot.lane.b32.xlu0 %v1104, 64
        %v1155 = vpop.permute.xlu0 %1154
        %1156 = vrot.lane.b32.xlu0 %v1105, 64
        %v1157 = vpop.permute.xlu0 %1156
        %1158 = vrot.lane.b32.xlu0 %v1106, 64
        %v1159 = vpop.permute.xlu0 %1158
        %1160 = vrot.lane.b32.xlu0 %v1107, 64
        %v1161 = vpop.permute.xlu0 %1160
        %1162 = vrot.lane.b32.xlu0 %v1108, 64
        %v1163 = vpop.permute.xlu0 %1162
        %1164 = vrot.lane.b32.xlu0 %v1109, 64
        %v1165 = vpop.permute.xlu0 %1164
        %1166 = vrot.lane.b32.xlu0 %v1110, 64
        %v1167 = vpop.permute.xlu0 %1166
        %1168 = vrot.lane.b32.xlu0 %v1111, 64
        %v1169 = vpop.permute.xlu0 %1168
        %1170 = vrot.lane.b32.xlu0 %v1112, 64
        %v1171 = vpop.permute.xlu0 %1170
        %1172 = vrot.lane.b32.xlu0 %v1113, 64
        %v1173 = vpop.permute.xlu0 %1172
        %1174 = vrot.lane.b32.xlu0 %v1114, 64
        %v1175 = vpop.permute.xlu0 %1174
        %1176 = vrot.lane.b32.xlu0 %v1115, 64
        %v1177 = vpop.permute.xlu0 %1176
        %1178 = vrot.lane.b32.xlu0 %v1116, 64
        %v1179 = vpop.permute.xlu0 %1178
        %1180 = vrot.lane.b32.xlu0 %v1117, 64
        %v1181 = vpop.permute.xlu0 %1180
        %vm1214 = vcmask 1043968
        %1215 = vst.msk [vmem:[#allocation3] sm:$0xf] %vm1214, %v1119
        %1216 = vst.msk [vmem:[#allocation3 + $0x14] sm:$0xf] %vm1214, %v1121
        %1217 = vst.msk [vmem:[#allocation3 + $0x28] sm:$0xf] %vm1214, %v1123
        %1218 = vst.msk [vmem:[#allocation3 + $0x3c] sm:$0xf] %vm1214, %v1125
        %1219 = vst.msk [vmem:[#allocation3 + $0x50] sm:$0xf] %vm1214, %v1127
        %1220 = vst.msk [vmem:[#allocation3 + $0x64] sm:$0xf] %vm1214, %v1129
        %1221 = vst.msk [vmem:[#allocation3 + $0x78] sm:$0xf] %vm1214, %v1131
        %1222 = vst.msk [vmem:[#allocation3 + $0x8c] sm:$0xf] %vm1214, %v1133
        %1223 = vst.msk [vmem:[#allocation3 + $0xa0] sm:$0xf] %vm1214, %v1135
        %1224 = vst.msk [vmem:[#allocation3 + $0xb4] sm:$0xf] %vm1214, %v1137
        %1225 = vst.msk [vmem:[#allocation3 + $0xc8] sm:$0xf] %vm1214, %v1139
        %1226 = vst.msk [vmem:[#allocation3 + $0xdc] sm:$0xf] %vm1214, %v1141
        %1227 = vst.msk [vmem:[#allocation3 + $0xf0] sm:$0xf] %vm1214, %v1143
        %1228 = vst.msk [vmem:[#allocation3 + $0x104] sm:$0xf] %vm1214, %v1145
        %1229 = vst.msk [vmem:[#allocation3 + $0x118] sm:$0xf] %vm1214, %v1147
        %1230 = vst.msk [vmem:[#allocation3 + $0x12c] sm:$0xf] %vm1214, %v1149
        %1231 = vst.msk [vmem:[#allocation3 + $0x140] sm:$0xf] %vm1214, %v1151
        %1232 = vst.msk [vmem:[#allocation3 + $0x154] sm:$0xf] %vm1214, %v1153
        %1233 = vst.msk [vmem:[#allocation3 + $0x168] sm:$0xf] %vm1214, %v1155
        %1234 = vst.msk [vmem:[#allocation3 + $0x17c] sm:$0xf] %vm1214, %v1157
        %1235 = vst.msk [vmem:[#allocation3 + $0x190] sm:$0xf] %vm1214, %v1159
        %1236 = vst.msk [vmem:[#allocation3 + $0x1a4] sm:$0xf] %vm1214, %v1161
        %1237 = vst.msk [vmem:[#allocation3 + $0x1b8] sm:$0xf] %vm1214, %v1163
        %1238 = vst.msk [vmem:[#allocation3 + $0x1cc] sm:$0xf] %vm1214, %v1165
        %1239 = vst.msk [vmem:[#allocation3 + $0x1e0] sm:$0xf] %vm1214, %v1167
        %1240 = vst.msk [vmem:[#allocation3 + $0x1f4] sm:$0xf] %vm1214, %v1169
        %1241 = vst.msk [vmem:[#allocation3 + $0x208] sm:$0xf] %vm1214, %v1171
        %1242 = vst.msk [vmem:[#allocation3 + $0x21c] sm:$0xf] %vm1214, %v1173
        %1243 = vst.msk [vmem:[#allocation3 + $0x230] sm:$0xf] %vm1214, %v1175
        %1244 = vst.msk [vmem:[#allocation3 + $0x244] sm:$0xf] %vm1214, %v1177
        %1245 = vst.msk [vmem:[#allocation3 + $0x258] sm:$0xf] %vm1214, %v1179
        %1246 = vst.msk [vmem:[#allocation3 + $0x26c] sm:$0xf] %vm1214, %v1181
        %v1247 = vld [vmem:[#allocation2 + $0x2] sm:$0xff]
        %v1248 = vld [vmem:[#allocation2 + $0xa] sm:$0xff]
        %v1249 = vld [vmem:[#allocation2 + $0x12] sm:$0xff]
        %v1250 = vld [vmem:[#allocation2 + $0x1a] sm:$0xff]
        %v1251 = vld [vmem:[#allocation2 + $0x22] sm:$0xff]
        %v1252 = vld [vmem:[#allocation2 + $0x2a] sm:$0xff]
        %v1253 = vld [vmem:[#allocation2 + $0x32] sm:$0xff]
        %v1254 = vld [vmem:[#allocation2 + $0x3a] sm:$0xff]
        %v1255 = vld [vmem:[#allocation2 + $0x42] sm:$0xff]
        %v1256 = vld [vmem:[#allocation2 + $0x4a] sm:$0xff]
        %v1257 = vld [vmem:[#allocation2 + $0x52] sm:$0xff]
        %v1258 = vld [vmem:[#allocation2 + $0x5a] sm:$0xff]
        %v1259 = vld [vmem:[#allocation2 + $0x62] sm:$0xff]
        %v1260 = vld [vmem:[#allocation2 + $0x6a] sm:$0xff]
        %v1261 = vld [vmem:[#allocation2 + $0x72] sm:$0xff]
        %v1262 = vld [vmem:[#allocation2 + $0x7a] sm:$0xff]
        %v1263 = vld [vmem:[#allocation2 + $0x82] sm:$0xff]
        %v1264 = vld [vmem:[#allocation2 + $0x8a] sm:$0xff]
        %v1265 = vld [vmem:[#allocation2 + $0x92] sm:$0xff]
        %v1266 = vld [vmem:[#allocation2 + $0x9a] sm:$0xff]
        %v1267 = vld [vmem:[#allocation2 + $0xa2] sm:$0xff]
        %v1268 = vld [vmem:[#allocation2 + $0xaa] sm:$0xff]
        %v1269 = vld [vmem:[#allocation2 + $0xb2] sm:$0xff]
        %v1270 = vld [vmem:[#allocation2 + $0xba] sm:$0xff]
        %v1271 = vld [vmem:[#allocation2 + $0xc2] sm:$0xff]
        %v1272 = vld [vmem:[#allocation2 + $0xca] sm:$0xff]
        %v1273 = vld [vmem:[#allocation2 + $0xd2] sm:$0xff]
        %v1274 = vld [vmem:[#allocation2 + $0xda] sm:$0xff]
        %v1275 = vld [vmem:[#allocation2 + $0xe2] sm:$0xff]
        %v1276 = vld [vmem:[#allocation2 + $0xea] sm:$0xff]
        %v1277 = vld [vmem:[#allocation2 + $0xf2] sm:$0xff]
        %v1278 = vld [vmem:[#allocation2 + $0xfa] sm:$0xff]
        %v1279 = vpack.c.bf16 %v1248, %v1247
        %v1280 = vpack.c.bf16 %v1250, %v1249
        %v1281 = vpack.c.bf16 %v1252, %v1251
        %v1282 = vpack.c.bf16 %v1254, %v1253
        %v1283 = vpack.c.bf16 %v1256, %v1255
        %v1284 = vpack.c.bf16 %v1258, %v1257
        %v1285 = vpack.c.bf16 %v1260, %v1259
        %v1286 = vpack.c.bf16 %v1262, %v1261
        %v1287 = vpack.c.bf16 %v1264, %v1263
        %v1288 = vpack.c.bf16 %v1266, %v1265
        %v1289 = vpack.c.bf16 %v1268, %v1267
        %v1290 = vpack.c.bf16 %v1270, %v1269
        %v1291 = vpack.c.bf16 %v1272, %v1271
        %v1292 = vpack.c.bf16 %v1274, %v1273
        %v1293 = vpack.c.bf16 %v1276, %v1275
        %v1294 = vpack.c.bf16 %v1278, %v1277
        %v1311 = vunpack.c.l.b16 %v1279
        %v1312 = vunpack.c.h.b16 %v1279
        %v1313 = vunpack.c.l.b16 %v1280
        %v1314 = vunpack.c.h.b16 %v1280
        %v1315 = vunpack.c.l.b16 %v1281
        %v1316 = vunpack.c.h.b16 %v1281
        %v1317 = vunpack.c.l.b16 %v1282
        %v1318 = vunpack.c.h.b16 %v1282
        %v1319 = vunpack.c.l.b16 %v1283
        %v1320 = vunpack.c.h.b16 %v1283
        %v1321 = vunpack.c.l.b16 %v1284
        %v1322 = vunpack.c.h.b16 %v1284
        %v1323 = vunpack.c.l.b16 %v1285
        %v1324 = vunpack.c.h.b16 %v1285
        %v1325 = vunpack.c.l.b16 %v1286
        %v1326 = vunpack.c.h.b16 %v1286
        %v1327 = vunpack.c.l.b16 %v1287
        %v1328 = vunpack.c.h.b16 %v1287
        %v1329 = vunpack.c.l.b16 %v1288
        %v1330 = vunpack.c.h.b16 %v1288
        %v1331 = vunpack.c.l.b16 %v1289
        %v1332 = vunpack.c.h.b16 %v1289
        %v1333 = vunpack.c.l.b16 %v1290
        %v1334 = vunpack.c.h.b16 %v1290
        %v1335 = vunpack.c.l.b16 %v1291
        %v1336 = vunpack.c.h.b16 %v1291
        %v1337 = vunpack.c.l.b16 %v1292
        %v1338 = vunpack.c.h.b16 %v1292
        %v1339 = vunpack.c.l.b16 %v1293
        %v1340 = vunpack.c.h.b16 %v1293
        %v1341 = vunpack.c.l.b16 %v1294
        %v1342 = vunpack.c.h.b16 %v1294
        %v1343 = vpack.c.b16 %v1311, %v1311
        %v1344 = vpack.c.b16 %v1312, %v1312
        %v1345 = vpack.c.b16 %v1313, %v1313
        %v1346 = vpack.c.b16 %v1314, %v1314
        %v1347 = vpack.c.b16 %v1315, %v1315
        %v1348 = vpack.c.b16 %v1316, %v1316
        %v1349 = vpack.c.b16 %v1317, %v1317
        %v1350 = vpack.c.b16 %v1318, %v1318
        %v1351 = vpack.c.b16 %v1319, %v1319
        %v1352 = vpack.c.b16 %v1320, %v1320
        %v1353 = vpack.c.b16 %v1321, %v1321
        %v1354 = vpack.c.b16 %v1322, %v1322
        %v1355 = vpack.c.b16 %v1323, %v1323
        %v1356 = vpack.c.b16 %v1324, %v1324
        %v1357 = vpack.c.b16 %v1325, %v1325
        %v1358 = vpack.c.b16 %v1326, %v1326
        %v1359 = vpack.c.b16 %v1327, %v1327
        %v1360 = vpack.c.b16 %v1328, %v1328
        %v1361 = vpack.c.b16 %v1329, %v1329
        %v1362 = vpack.c.b16 %v1330, %v1330
        %v1363 = vpack.c.b16 %v1331, %v1331
        %v1364 = vpack.c.b16 %v1332, %v1332
        %v1365 = vpack.c.b16 %v1333, %v1333
        %v1366 = vpack.c.b16 %v1334, %v1334
        %v1367 = vpack.c.b16 %v1335, %v1335
        %v1368 = vpack.c.b16 %v1336, %v1336
        %v1369 = vpack.c.b16 %v1337, %v1337
        %v1370 = vpack.c.b16 %v1338, %v1338
        %v1371 = vpack.c.b16 %v1339, %v1339
        %v1372 = vpack.c.b16 %v1340, %v1340
        %v1373 = vpack.c.b16 %v1341, %v1341
        %v1374 = vpack.c.b16 %v1342, %v1342
        %1407 = vst.msk [vmem:[#allocation3 + $0x4] sm:$0xf] %vm957, %v1343
        %1408 = vst.msk [vmem:[#allocation3 + $0x18] sm:$0xf] %vm957, %v1344
        %1409 = vst.msk [vmem:[#allocation3 + $0x2c] sm:$0xf] %vm957, %v1345
        %1410 = vst.msk [vmem:[#allocation3 + $0x40] sm:$0xf] %vm957, %v1346
        %1411 = vst.msk [vmem:[#allocation3 + $0x54] sm:$0xf] %vm957, %v1347
        %1412 = vst.msk [vmem:[#allocation3 + $0x68] sm:$0xf] %vm957, %v1348
        %1413 = vst.msk [vmem:[#allocation3 + $0x7c] sm:$0xf] %vm957, %v1349
        %1414 = vst.msk [vmem:[#allocation3 + $0x90] sm:$0xf] %vm957, %v1350
        %1415 = vst.msk [vmem:[#allocation3 + $0xa4] sm:$0xf] %vm957, %v1351
        %1416 = vst.msk [vmem:[#allocation3 + $0xb8] sm:$0xf] %vm957, %v1352
        %1417 = vst.msk [vmem:[#allocation3 + $0xcc] sm:$0xf] %vm957, %v1353
        %1418 = vst.msk [vmem:[#allocation3 + $0xe0] sm:$0xf] %vm957, %v1354
        %1419 = vst.msk [vmem:[#allocation3 + $0xf4] sm:$0xf] %vm957, %v1355
        %1420 = vst.msk [vmem:[#allocation3 + $0x108] sm:$0xf] %vm957, %v1356
        %1421 = vst.msk [vmem:[#allocation3 + $0x11c] sm:$0xf] %vm957, %v1357
        %1422 = vst.msk [vmem:[#allocation3 + $0x130] sm:$0xf] %vm957, %v1358
        %1423 = vst.msk [vmem:[#allocation3 + $0x144] sm:$0xf] %vm957, %v1359
        %1424 = vst.msk [vmem:[#allocation3 + $0x158] sm:$0xf] %vm957, %v1360
        %1425 = vst.msk [vmem:[#allocation3 + $0x16c] sm:$0xf] %vm957, %v1361
        %1426 = vst.msk [vmem:[#allocation3 + $0x180] sm:$0xf] %vm957, %v1362
        %1427 = vst.msk [vmem:[#allocation3 + $0x194] sm:$0xf] %vm957, %v1363
        %1428 = vst.msk [vmem:[#allocation3 + $0x1a8] sm:$0xf] %vm957, %v1364
        %1429 = vst.msk [vmem:[#allocation3 + $0x1bc] sm:$0xf] %vm957, %v1365
        %1430 = vst.msk [vmem:[#allocation3 + $0x1d0] sm:$0xf] %vm957, %v1366
        %1431 = vst.msk [vmem:[#allocation3 + $0x1e4] sm:$0xf] %vm957, %v1367
        %1432 = vst.msk [vmem:[#allocation3 + $0x1f8] sm:$0xf] %vm957, %v1368
        %1433 = vst.msk [vmem:[#allocation3 + $0x20c] sm:$0xf] %vm957, %v1369
        %1434 = vst.msk [vmem:[#allocation3 + $0x220] sm:$0xf] %vm957, %v1370
        %1435 = vst.msk [vmem:[#allocation3 + $0x234] sm:$0xf] %vm957, %v1371
        %1436 = vst.msk [vmem:[#allocation3 + $0x248] sm:$0xf] %vm957, %v1372
        %1437 = vst.msk [vmem:[#allocation3 + $0x25c] sm:$0xf] %vm957, %v1373
        %1438 = vst.msk [vmem:[#allocation3 + $0x270] sm:$0xf] %vm957, %v1374
        %v1439 = vld [vmem:[#allocation2 + $0x10] sm:$0xff]
        %v1440 = vld [vmem:[#allocation2 + $0x18] sm:$0xff]
        %v1441 = vld [vmem:[#allocation2 + $0x20] sm:$0xff]
        %v1442 = vld [vmem:[#allocation2 + $0x28] sm:$0xff]
        %v1443 = vld [vmem:[#allocation2 + $0x30] sm:$0xff]
        %v1444 = vld [vmem:[#allocation2 + $0x38] sm:$0xff]
        %v1445 = vld [vmem:[#allocation2 + $0x40] sm:$0xff]
        %v1446 = vld [vmem:[#allocation2 + $0x48] sm:$0xff]
        %v1447 = vld [vmem:[#allocation2 + $0x50] sm:$0xff]
        %v1448 = vld [vmem:[#allocation2 + $0x58] sm:$0xff]
        %v1449 = vld [vmem:[#allocation2 + $0x60] sm:$0xff]
        %v1450 = vld [vmem:[#allocation2 + $0x68] sm:$0xff]
        %v1451 = vld [vmem:[#allocation2 + $0x70] sm:$0xff]
        %v1452 = vld [vmem:[#allocation2 + $0x78] sm:$0xff]
        %v1453 = vld [vmem:[#allocation2 + $0x80] sm:$0xff]
        %v1454 = vld [vmem:[#allocation2 + $0x88] sm:$0xff]
        %v1455 = vld [vmem:[#allocation2 + $0x90] sm:$0xff]
        %v1456 = vld [vmem:[#allocation2 + $0x98] sm:$0xff]
        %v1457 = vld [vmem:[#allocation2 + $0xa0] sm:$0xff]
        %v1458 = vld [vmem:[#allocation2 + $0xa8] sm:$0xff]
        %v1459 = vld [vmem:[#allocation2 + $0xb0] sm:$0xff]
        %v1460 = vld [vmem:[#allocation2 + $0xb8] sm:$0xff]
        %v1461 = vld [vmem:[#allocation2 + $0xc0] sm:$0xff]
        %v1462 = vld [vmem:[#allocation2 + $0xc8] sm:$0xff]
        %v1463 = vld [vmem:[#allocation2 + $0xd0] sm:$0xff]
        %v1464 = vld [vmem:[#allocation2 + $0xd8] sm:$0xff]
        %v1465 = vld [vmem:[#allocation2 + $0xe0] sm:$0xff]
        %v1466 = vld [vmem:[#allocation2 + $0xe8] sm:$0xff]
        %v1467 = vld [vmem:[#allocation2 + $0xf0] sm:$0xff]
        %v1468 = vld [vmem:[#allocation2 + $0xf8] sm:$0xff]
        %v1469 = vld [vmem:[#allocation2 + $0x100] sm:$0xff]
        %v1470 = vld [vmem:[#allocation2 + $0x108] sm:$0xff]
        %v1471 = vpack.c.bf16 %v1440, %v1439
        %v1472 = vpack.c.bf16 %v1442, %v1441
        %v1473 = vpack.c.bf16 %v1444, %v1443
        %v1474 = vpack.c.bf16 %v1446, %v1445
        %v1475 = vpack.c.bf16 %v1448, %v1447
        %v1476 = vpack.c.bf16 %v1450, %v1449
        %v1477 = vpack.c.bf16 %v1452, %v1451
        %v1478 = vpack.c.bf16 %v1454, %v1453
        %v1479 = vpack.c.bf16 %v1456, %v1455
        %v1480 = vpack.c.bf16 %v1458, %v1457
        %v1481 = vpack.c.bf16 %v1460, %v1459
        %v1482 = vpack.c.bf16 %v1462, %v1461
        %v1483 = vpack.c.bf16 %v1464, %v1463
        %v1484 = vpack.c.bf16 %v1466, %v1465
        %v1485 = vpack.c.bf16 %v1468, %v1467
        %v1486 = vpack.c.bf16 %v1470, %v1469
        %v1503 = vunpack.c.l.b16 %v1471
        %v1504 = vunpack.c.h.b16 %v1471
        %v1505 = vunpack.c.l.b16 %v1472
        %v1506 = vunpack.c.h.b16 %v1472
        %v1507 = vunpack.c.l.b16 %v1473
        %v1508 = vunpack.c.h.b16 %v1473
        %v1509 = vunpack.c.l.b16 %v1474
        %v1510 = vunpack.c.h.b16 %v1474
        %v1511 = vunpack.c.l.b16 %v1475
        %v1512 = vunpack.c.h.b16 %v1475
        %v1513 = vunpack.c.l.b16 %v1476
        %v1514 = vunpack.c.h.b16 %v1476
        %v1515 = vunpack.c.l.b16 %v1477
        %v1516 = vunpack.c.h.b16 %v1477
        %v1517 = vunpack.c.l.b16 %v1478
        %v1518 = vunpack.c.h.b16 %v1478
        %v1519 = vunpack.c.l.b16 %v1479
        %v1520 = vunpack.c.h.b16 %v1479
        %v1521 = vunpack.c.l.b16 %v1480
        %v1522 = vunpack.c.h.b16 %v1480
        %v1523 = vunpack.c.l.b16 %v1481
        %v1524 = vunpack.c.h.b16 %v1481
        %v1525 = vunpack.c.l.b16 %v1482
        %v1526 = vunpack.c.h.b16 %v1482
        %v1527 = vunpack.c.l.b16 %v1483
        %v1528 = vunpack.c.h.b16 %v1483
        %v1529 = vunpack.c.l.b16 %v1484
        %v1530 = vunpack.c.h.b16 %v1484
        %v1531 = vunpack.c.l.b16 %v1485
        %v1532 = vunpack.c.h.b16 %v1485
        %v1533 = vunpack.c.l.b16 %v1486
        %v1534 = vunpack.c.h.b16 %v1486
        %v1535 = vpack.c.b16 %v1503, %v1503
        %v1536 = vpack.c.b16 %v1504, %v1504
        %v1537 = vpack.c.b16 %v1505, %v1505
        %v1538 = vpack.c.b16 %v1506, %v1506
        %v1539 = vpack.c.b16 %v1507, %v1507
        %v1540 = vpack.c.b16 %v1508, %v1508
        %v1541 = vpack.c.b16 %v1509, %v1509
        %v1542 = vpack.c.b16 %v1510, %v1510
        %v1543 = vpack.c.b16 %v1511, %v1511
        %v1544 = vpack.c.b16 %v1512, %v1512
        %v1545 = vpack.c.b16 %v1513, %v1513
        %v1546 = vpack.c.b16 %v1514, %v1514
        %v1547 = vpack.c.b16 %v1515, %v1515
        %v1548 = vpack.c.b16 %v1516, %v1516
        %v1549 = vpack.c.b16 %v1517, %v1517
        %v1550 = vpack.c.b16 %v1518, %v1518
        %v1551 = vpack.c.b16 %v1519, %v1519
        %v1552 = vpack.c.b16 %v1520, %v1520
        %v1553 = vpack.c.b16 %v1521, %v1521
        %v1554 = vpack.c.b16 %v1522, %v1522
        %v1555 = vpack.c.b16 %v1523, %v1523
        %v1556 = vpack.c.b16 %v1524, %v1524
        %v1557 = vpack.c.b16 %v1525, %v1525
        %v1558 = vpack.c.b16 %v1526, %v1526
        %v1559 = vpack.c.b16 %v1527, %v1527
        %v1560 = vpack.c.b16 %v1528, %v1528
        %v1561 = vpack.c.b16 %v1529, %v1529
        %v1562 = vpack.c.b16 %v1530, %v1530
        %v1563 = vpack.c.b16 %v1531, %v1531
        %v1564 = vpack.c.b16 %v1532, %v1532
        %v1565 = vpack.c.b16 %v1533, %v1533
        %v1566 = vpack.c.b16 %v1534, %v1534
        %1567 = vrot.lane.b32.xlu0 %v1535, 64
        %v1568 = vpop.permute.xlu0 %1567
        %1569 = vrot.lane.b32.xlu0 %v1536, 64
        %v1570 = vpop.permute.xlu0 %1569
        %1571 = vrot.lane.b32.xlu0 %v1537, 64
        %v1572 = vpop.permute.xlu0 %1571
        %1573 = vrot.lane.b32.xlu0 %v1538, 64
        %v1574 = vpop.permute.xlu0 %1573
        %1575 = vrot.lane.b32.xlu0 %v1539, 64
        %v1576 = vpop.permute.xlu0 %1575
        %1577 = vrot.lane.b32.xlu0 %v1540, 64
        %v1578 = vpop.permute.xlu0 %1577
        %1579 = vrot.lane.b32.xlu0 %v1541, 64
        %v1580 = vpop.permute.xlu0 %1579
        %1581 = vrot.lane.b32.xlu0 %v1542, 64
        %v1582 = vpop.permute.xlu0 %1581
        %1583 = vrot.lane.b32.xlu0 %v1543, 64
        %v1584 = vpop.permute.xlu0 %1583
        %1585 = vrot.lane.b32.xlu0 %v1544, 64
        %v1586 = vpop.permute.xlu0 %1585
        %1587 = vrot.lane.b32.xlu0 %v1545, 64
        %v1588 = vpop.permute.xlu0 %1587
        %1589 = vrot.lane.b32.xlu0 %v1546, 64
        %v1590 = vpop.permute.xlu0 %1589
        %1591 = vrot.lane.b32.xlu0 %v1547, 64
        %v1592 = vpop.permute.xlu0 %1591
        %1593 = vrot.lane.b32.xlu0 %v1548, 64
        %v1594 = vpop.permute.xlu0 %1593
        %1595 = vrot.lane.b32.xlu0 %v1549, 64
        %v1596 = vpop.permute.xlu0 %1595
        %1597 = vrot.lane.b32.xlu0 %v1550, 64
        %v1598 = vpop.permute.xlu0 %1597
        %1599 = vrot.lane.b32.xlu0 %v1551, 64
        %v1600 = vpop.permute.xlu0 %1599
        %1601 = vrot.lane.b32.xlu0 %v1552, 64
        %v1602 = vpop.permute.xlu0 %1601
        %1603 = vrot.lane.b32.xlu0 %v1553, 64
        %v1604 = vpop.permute.xlu0 %1603
        %1605 = vrot.lane.b32.xlu0 %v1554, 64
        %v1606 = vpop.permute.xlu0 %1605
        %1607 = vrot.lane.b32.xlu0 %v1555, 64
        %v1608 = vpop.permute.xlu0 %1607
        %1609 = vrot.lane.b32.xlu0 %v1556, 64
        %v1610 = vpop.permute.xlu0 %1609
        %1611 = vrot.lane.b32.xlu0 %v1557, 64
        %v1612 = vpop.permute.xlu0 %1611
        %1613 = vrot.lane.b32.xlu0 %v1558, 64
        %v1614 = vpop.permute.xlu0 %1613
        %1615 = vrot.lane.b32.xlu0 %v1559, 64
        %v1616 = vpop.permute.xlu0 %1615
        %1617 = vrot.lane.b32.xlu0 %v1560, 64
        %v1618 = vpop.permute.xlu0 %1617
        %1619 = vrot.lane.b32.xlu0 %v1561, 64
        %v1620 = vpop.permute.xlu0 %1619
        %1621 = vrot.lane.b32.xlu0 %v1562, 64
        %v1622 = vpop.permute.xlu0 %1621
        %1623 = vrot.lane.b32.xlu0 %v1563, 64
        %v1624 = vpop.permute.xlu0 %1623
        %1625 = vrot.lane.b32.xlu0 %v1564, 64
        %v1626 = vpop.permute.xlu0 %1625
        %1627 = vrot.lane.b32.xlu0 %v1565, 64
        %v1628 = vpop.permute.xlu0 %1627
        %1629 = vrot.lane.b32.xlu0 %v1566, 64
        %v1630 = vpop.permute.xlu0 %1629
        %1663 = vst.msk [vmem:[#allocation3 + $0x4] sm:$0xf] %vm1214, %v1568
        %1664 = vst.msk [vmem:[#allocation3 + $0x18] sm:$0xf] %vm1214, %v1570
        %1665 = vst.msk [vmem:[#allocation3 + $0x2c] sm:$0xf] %vm1214, %v1572
        %1666 = vst.msk [vmem:[#allocation3 + $0x40] sm:$0xf] %vm1214, %v1574
        %1667 = vst.msk [vmem:[#allocation3 + $0x54] sm:$0xf] %vm1214, %v1576
        %1668 = vst.msk [vmem:[#allocation3 + $0x68] sm:$0xf] %vm1214, %v1578
        %1669 = vst.msk [vmem:[#allocation3 + $0x7c] sm:$0xf] %vm1214, %v1580
        %1670 = vst.msk [vmem:[#allocation3 + $0x90] sm:$0xf] %vm1214, %v1582
        %1671 = vst.msk [vmem:[#allocation3 + $0xa4] sm:$0xf] %vm1214, %v1584
        %1672 = vst.msk [vmem:[#allocation3 + $0xb8] sm:$0xf] %vm1214, %v1586
        %1673 = vst.msk [vmem:[#allocation3 + $0xcc] sm:$0xf] %vm1214, %v1588
        %1674 = vst.msk [vmem:[#allocation3 + $0xe0] sm:$0xf] %vm1214, %v1590
        %1675 = vst.msk [vmem:[#allocation3 + $0xf4] sm:$0xf] %vm1214, %v1592
        %1676 = vst.msk [vmem:[#allocation3 + $0x108] sm:$0xf] %vm1214, %v1594
        %1677 = vst.msk [vmem:[#allocation3 + $0x11c] sm:$0xf] %vm1214, %v1596
        %1678 = vst.msk [vmem:[#allocation3 + $0x130] sm:$0xf] %vm1214, %v1598
        %1679 = vst.msk [vmem:[#allocation3 + $0x144] sm:$0xf] %vm1214, %v1600
        %1680 = vst.msk [vmem:[#allocation3 + $0x158] sm:$0xf] %vm1214, %v1602
        %1681 = vst.msk [vmem:[#allocation3 + $0x16c] sm:$0xf] %vm1214, %v1604
        %1682 = vst.msk [vmem:[#allocation3 + $0x180] sm:$0xf] %vm1214, %v1606
        %1683 = vst.msk [vmem:[#allocation3 + $0x194] sm:$0xf] %vm1214, %v1608
        %1684 = vst.msk [vmem:[#allocation3 + $0x1a8] sm:$0xf] %vm1214, %v1610
        %1685 = vst.msk [vmem:[#allocation3 + $0x1bc] sm:$0xf] %vm1214, %v1612
        %1686 = vst.msk [vmem:[#allocation3 + $0x1d0] sm:$0xf] %vm1214, %v1614
        %1687 = vst.msk [vmem:[#allocation3 + $0x1e4] sm:$0xf] %vm1214, %v1616
        %1688 = vst.msk [vmem:[#allocation3 + $0x1f8] sm:$0xf] %vm1214, %v1618
        %1689 = vst.msk [vmem:[#allocation3 + $0x20c] sm:$0xf] %vm1214, %v1620
        %1690 = vst.msk [vmem:[#allocation3 + $0x220] sm:$0xf] %vm1214, %v1622
        %1691 = vst.msk [vmem:[#allocation3 + $0x234] sm:$0xf] %vm1214, %v1624
        %1692 = vst.msk [vmem:[#allocation3 + $0x248] sm:$0xf] %vm1214, %v1626
        %1693 = vst.msk [vmem:[#allocation3 + $0x25c] sm:$0xf] %vm1214, %v1628
        %1694 = vst.msk [vmem:[#allocation3 + $0x270] sm:$0xf] %vm1214, %v1630
        %v1695 = vld [vmem:[#allocation2 + $0x11] sm:$0xff]
        %v1696 = vld [vmem:[#allocation2 + $0x19] sm:$0xff]
        %v1697 = vld [vmem:[#allocation2 + $0x21] sm:$0xff]
        %v1698 = vld [vmem:[#allocation2 + $0x29] sm:$0xff]
        %v1699 = vld [vmem:[#allocation2 + $0x31] sm:$0xff]
        %v1700 = vld [vmem:[#allocation2 + $0x39] sm:$0xff]
        %v1701 = vld [vmem:[#allocation2 + $0x41] sm:$0xff]
        %v1702 = vld [vmem:[#allocation2 + $0x49] sm:$0xff]
        %v1703 = vld [vmem:[#allocation2 + $0x51] sm:$0xff]
        %v1704 = vld [vmem:[#allocation2 + $0x59] sm:$0xff]
        %v1705 = vld [vmem:[#allocation2 + $0x61] sm:$0xff]
        %v1706 = vld [vmem:[#allocation2 + $0x69] sm:$0xff]
        %v1707 = vld [vmem:[#allocation2 + $0x71] sm:$0xff]
        %v1708 = vld [vmem:[#allocation2 + $0x79] sm:$0xff]
        %v1709 = vld [vmem:[#allocation2 + $0x81] sm:$0xff]
        %v1710 = vld [vmem:[#allocation2 + $0x89] sm:$0xff]
        %v1711 = vld [vmem:[#allocation2 + $0x91] sm:$0xff]
        %v1712 = vld [vmem:[#allocation2 + $0x99] sm:$0xff]
        %v1713 = vld [vmem:[#allocation2 + $0xa1] sm:$0xff]
        %v1714 = vld [vmem:[#allocation2 + $0xa9] sm:$0xff]
        %v1715 = vld [vmem:[#allocation2 + $0xb1] sm:$0xff]
        %v1716 = vld [vmem:[#allocation2 + $0xb9] sm:$0xff]
        %v1717 = vld [vmem:[#allocation2 + $0xc1] sm:$0xff]
        %v1718 = vld [vmem:[#allocation2 + $0xc9] sm:$0xff]
        %v1719 = vld [vmem:[#allocation2 + $0xd1] sm:$0xff]
        %v1720 = vld [vmem:[#allocation2 + $0xd9] sm:$0xff]
        %v1721 = vld [vmem:[#allocation2 + $0xe1] sm:$0xff]
        %v1722 = vld [vmem:[#allocation2 + $0xe9] sm:$0xff]
        %v1723 = vld [vmem:[#allocation2 + $0xf1] sm:$0xff]
        %v1724 = vld [vmem:[#allocation2 + $0xf9] sm:$0xff]
        %v1725 = vld [vmem:[#allocation2 + $0x101] sm:$0xff]
        %v1726 = vld [vmem:[#allocation2 + $0x109] sm:$0xff]
        %v1727 = vpack.c.bf16 %v1696, %v1695
        %v1728 = vpack.c.bf16 %v1698, %v1697
        %v1729 = vpack.c.bf16 %v1700, %v1699
        %v1730 = vpack.c.bf16 %v1702, %v1701
        %v1731 = vpack.c.bf16 %v1704, %v1703
        %v1732 = vpack.c.bf16 %v1706, %v1705
        %v1733 = vpack.c.bf16 %v1708, %v1707
        %v1734 = vpack.c.bf16 %v1710, %v1709
        %v1735 = vpack.c.bf16 %v1712, %v1711
        %v1736 = vpack.c.bf16 %v1714, %v1713
        %v1737 = vpack.c.bf16 %v1716, %v1715
        %v1738 = vpack.c.bf16 %v1718, %v1717
        %v1739 = vpack.c.bf16 %v1720, %v1719
        %v1740 = vpack.c.bf16 %v1722, %v1721
        %v1741 = vpack.c.bf16 %v1724, %v1723
        %v1742 = vpack.c.bf16 %v1726, %v1725
        %v1759 = vunpack.c.l.b16 %v1727
        %v1760 = vunpack.c.h.b16 %v1727
        %v1761 = vunpack.c.l.b16 %v1728
        %v1762 = vunpack.c.h.b16 %v1728
        %v1763 = vunpack.c.l.b16 %v1729
        %v1764 = vunpack.c.h.b16 %v1729
        %v1765 = vunpack.c.l.b16 %v1730
        %v1766 = vunpack.c.h.b16 %v1730
        %v1767 = vunpack.c.l.b16 %v1731
        %v1768 = vunpack.c.h.b16 %v1731
        %v1769 = vunpack.c.l.b16 %v1732
        %v1770 = vunpack.c.h.b16 %v1732
        %v1771 = vunpack.c.l.b16 %v1733
        %v1772 = vunpack.c.h.b16 %v1733
        %v1773 = vunpack.c.l.b16 %v1734
        %v1774 = vunpack.c.h.b16 %v1734
        %v1775 = vunpack.c.l.b16 %v1735
        %v1776 = vunpack.c.h.b16 %v1735
        %v1777 = vunpack.c.l.b16 %v1736
        %v1778 = vunpack.c.h.b16 %v1736
        %v1779 = vunpack.c.l.b16 %v1737
        %v1780 = vunpack.c.h.b16 %v1737
        %v1781 = vunpack.c.l.b16 %v1738
        %v1782 = vunpack.c.h.b16 %v1738
        %v1783 = vunpack.c.l.b16 %v1739
        %v1784 = vunpack.c.h.b16 %v1739
        %v1785 = vunpack.c.l.b16 %v1740
        %v1786 = vunpack.c.h.b16 %v1740
        %v1787 = vunpack.c.l.b16 %v1741
        %v1788 = vunpack.c.h.b16 %v1741
        %v1789 = vunpack.c.l.b16 %v1742
        %v1790 = vunpack.c.h.b16 %v1742
        %v1791 = vpack.c.b16 %v1759, %v1759
        %v1792 = vpack.c.b16 %v1760, %v1760
        %v1793 = vpack.c.b16 %v1761, %v1761
        %v1794 = vpack.c.b16 %v1762, %v1762
        %v1795 = vpack.c.b16 %v1763, %v1763
        %v1796 = vpack.c.b16 %v1764, %v1764
        %v1797 = vpack.c.b16 %v1765, %v1765
        %v1798 = vpack.c.b16 %v1766, %v1766
        %v1799 = vpack.c.b16 %v1767, %v1767
        %v1800 = vpack.c.b16 %v1768, %v1768
        %v1801 = vpack.c.b16 %v1769, %v1769
        %v1802 = vpack.c.b16 %v1770, %v1770
        %v1803 = vpack.c.b16 %v1771, %v1771
        %v1804 = vpack.c.b16 %v1772, %v1772
        %v1805 = vpack.c.b16 %v1773, %v1773
        %v1806 = vpack.c.b16 %v1774, %v1774
        %v1807 = vpack.c.b16 %v1775, %v1775
        %v1808 = vpack.c.b16 %v1776, %v1776
        %v1809 = vpack.c.b16 %v1777, %v1777
        %v1810 = vpack.c.b16 %v1778, %v1778
        %v1811 = vpack.c.b16 %v1779, %v1779
        %v1812 = vpack.c.b16 %v1780, %v1780
        %v1813 = vpack.c.b16 %v1781, %v1781
        %v1814 = vpack.c.b16 %v1782, %v1782
        %v1815 = vpack.c.b16 %v1783, %v1783
        %v1816 = vpack.c.b16 %v1784, %v1784
        %v1817 = vpack.c.b16 %v1785, %v1785
        %v1818 = vpack.c.b16 %v1786, %v1786
        %v1819 = vpack.c.b16 %v1787, %v1787
        %v1820 = vpack.c.b16 %v1788, %v1788
        %v1821 = vpack.c.b16 %v1789, %v1789
        %v1822 = vpack.c.b16 %v1790, %v1790
        %1855 = vst.msk [vmem:[#allocation3 + $0x8] sm:$0xf] %vm957, %v1791
        %1856 = vst.msk [vmem:[#allocation3 + $0x1c] sm:$0xf] %vm957, %v1792
        %1857 = vst.msk [vmem:[#allocation3 + $0x30] sm:$0xf] %vm957, %v1793
        %1858 = vst.msk [vmem:[#allocation3 + $0x44] sm:$0xf] %vm957, %v1794
        %1859 = vst.msk [vmem:[#allocation3 + $0x58] sm:$0xf] %vm957, %v1795
        %1860 = vst.msk [vmem:[#allocation3 + $0x6c] sm:$0xf] %vm957, %v1796
        %1861 = vst.msk [vmem:[#allocation3 + $0x80] sm:$0xf] %vm957, %v1797
        %1862 = vst.msk [vmem:[#allocation3 + $0x94] sm:$0xf] %vm957, %v1798
        %1863 = vst.msk [vmem:[#allocation3 + $0xa8] sm:$0xf] %vm957, %v1799
        %1864 = vst.msk [vmem:[#allocation3 + $0xbc] sm:$0xf] %vm957, %v1800
        %1865 = vst.msk [vmem:[#allocation3 + $0xd0] sm:$0xf] %vm957, %v1801
        %1866 = vst.msk [vmem:[#allocation3 + $0xe4] sm:$0xf] %vm957, %v1802
        %1867 = vst.msk [vmem:[#allocation3 + $0xf8] sm:$0xf] %vm957, %v1803
        %1868 = vst.msk [vmem:[#allocation3 + $0x10c] sm:$0xf] %vm957, %v1804
        %1869 = vst.msk [vmem:[#allocation3 + $0x120] sm:$0xf] %vm957, %v1805
        %1870 = vst.msk [vmem:[#allocation3 + $0x134] sm:$0xf] %vm957, %v1806
        %1871 = vst.msk [vmem:[#allocation3 + $0x148] sm:$0xf] %vm957, %v1807
        %1872 = vst.msk [vmem:[#allocation3 + $0x15c] sm:$0xf] %vm957, %v1808
        %1873 = vst.msk [vmem:[#allocation3 + $0x170] sm:$0xf] %vm957, %v1809
        %1874 = vst.msk [vmem:[#allocation3 + $0x184] sm:$0xf] %vm957, %v1810
        %1875 = vst.msk [vmem:[#allocation3 + $0x198] sm:$0xf] %vm957, %v1811
        %1876 = vst.msk [vmem:[#allocation3 + $0x1ac] sm:$0xf] %vm957, %v1812
        %1877 = vst.msk [vmem:[#allocation3 + $0x1c0] sm:$0xf] %vm957, %v1813
        %1878 = vst.msk [vmem:[#allocation3 + $0x1d4] sm:$0xf] %vm957, %v1814
        %1879 = vst.msk [vmem:[#allocation3 + $0x1e8] sm:$0xf] %vm957, %v1815
        %1880 = vst.msk [vmem:[#allocation3 + $0x1fc] sm:$0xf] %vm957, %v1816
        %1881 = vst.msk [vmem:[#allocation3 + $0x210] sm:$0xf] %vm957, %v1817
        %1882 = vst.msk [vmem:[#allocation3 + $0x224] sm:$0xf] %vm957, %v1818
        %1883 = vst.msk [vmem:[#allocation3 + $0x238] sm:$0xf] %vm957, %v1819
        %1884 = vst.msk [vmem:[#allocation3 + $0x24c] sm:$0xf] %vm957, %v1820
        %1885 = vst.msk [vmem:[#allocation3 + $0x260] sm:$0xf] %vm957, %v1821
        %1886 = vst.msk [vmem:[#allocation3 + $0x274] sm:$0xf] %vm957, %v1822
        %v1887 = vld [vmem:[#allocation2 + $0x12] sm:$0xff]
        %v1888 = vld [vmem:[#allocation2 + $0x1a] sm:$0xff]
        %v1889 = vld [vmem:[#allocation2 + $0x22] sm:$0xff]
        %v1890 = vld [vmem:[#allocation2 + $0x2a] sm:$0xff]
        %v1891 = vld [vmem:[#allocation2 + $0x32] sm:$0xff]
        %v1892 = vld [vmem:[#allocation2 + $0x3a] sm:$0xff]
        %v1893 = vld [vmem:[#allocation2 + $0x42] sm:$0xff]
        %v1894 = vld [vmem:[#allocation2 + $0x4a] sm:$0xff]
        %v1895 = vld [vmem:[#allocation2 + $0x52] sm:$0xff]
        %v1896 = vld [vmem:[#allocation2 + $0x5a] sm:$0xff]
        %v1897 = vld [vmem:[#allocation2 + $0x62] sm:$0xff]
        %v1898 = vld [vmem:[#allocation2 + $0x6a] sm:$0xff]
        %v1899 = vld [vmem:[#allocation2 + $0x72] sm:$0xff]
        %v1900 = vld [vmem:[#allocation2 + $0x7a] sm:$0xff]
        %v1901 = vld [vmem:[#allocation2 + $0x82] sm:$0xff]
        %v1902 = vld [vmem:[#allocation2 + $0x8a] sm:$0xff]
        %v1903 = vld [vmem:[#allocation2 + $0x92] sm:$0xff]
        %v1904 = vld [vmem:[#allocation2 + $0x9a] sm:$0xff]
        %v1905 = vld [vmem:[#allocation2 + $0xa2] sm:$0xff]
        %v1906 = vld [vmem:[#allocation2 + $0xaa] sm:$0xff]
        %v1907 = vld [vmem:[#allocation2 + $0xb2] sm:$0xff]
        %v1908 = vld [vmem:[#allocation2 + $0xba] sm:$0xff]
        %v1909 = vld [vmem:[#allocation2 + $0xc2] sm:$0xff]
        %v1910 = vld [vmem:[#allocation2 + $0xca] sm:$0xff]
        %v1911 = vld [vmem:[#allocation2 + $0xd2] sm:$0xff]
        %v1912 = vld [vmem:[#allocation2 + $0xda] sm:$0xff]
        %v1913 = vld [vmem:[#allocation2 + $0xe2] sm:$0xff]
        %v1914 = vld [vmem:[#allocation2 + $0xea] sm:$0xff]
        %v1915 = vld [vmem:[#allocation2 + $0xf2] sm:$0xff]
        %v1916 = vld [vmem:[#allocation2 + $0xfa] sm:$0xff]
        %v1917 = vld [vmem:[#allocation2 + $0x102] sm:$0xff]
        %v1918 = vld [vmem:[#allocation2 + $0x10a] sm:$0xff]
        %v1919 = vpack.c.bf16 %v1888, %v1887
        %v1920 = vpack.c.bf16 %v1890, %v1889
        %v1921 = vpack.c.bf16 %v1892, %v1891
        %v1922 = vpack.c.bf16 %v1894, %v1893
        %v1923 = vpack.c.bf16 %v1896, %v1895
        %v1924 = vpack.c.bf16 %v1898, %v1897
        %v1925 = vpack.c.bf16 %v1900, %v1899
        %v1926 = vpack.c.bf16 %v1902, %v1901
        %v1927 = vpack.c.bf16 %v1904, %v1903
        %v1928 = vpack.c.bf16 %v1906, %v1905
        %v1929 = vpack.c.bf16 %v1908, %v1907
        %v1930 = vpack.c.bf16 %v1910, %v1909
        %v1931 = vpack.c.bf16 %v1912, %v1911
        %v1932 = vpack.c.bf16 %v1914, %v1913
        %v1933 = vpack.c.bf16 %v1916, %v1915
        %v1934 = vpack.c.bf16 %v1918, %v1917
        %v1951 = vunpack.c.l.b16 %v1919
        %v1952 = vunpack.c.h.b16 %v1919
        %v1953 = vunpack.c.l.b16 %v1920
        %v1954 = vunpack.c.h.b16 %v1920
        %v1955 = vunpack.c.l.b16 %v1921
        %v1956 = vunpack.c.h.b16 %v1921
        %v1957 = vunpack.c.l.b16 %v1922
        %v1958 = vunpack.c.h.b16 %v1922
        %v1959 = vunpack.c.l.b16 %v1923
        %v1960 = vunpack.c.h.b16 %v1923
        %v1961 = vunpack.c.l.b16 %v1924
        %v1962 = vunpack.c.h.b16 %v1924
        %v1963 = vunpack.c.l.b16 %v1925
        %v1964 = vunpack.c.h.b16 %v1925
        %v1965 = vunpack.c.l.b16 %v1926
        %v1966 = vunpack.c.h.b16 %v1926
        %v1967 = vunpack.c.l.b16 %v1927
        %v1968 = vunpack.c.h.b16 %v1927
        %v1969 = vunpack.c.l.b16 %v1928
        %v1970 = vunpack.c.h.b16 %v1928
        %v1971 = vunpack.c.l.b16 %v1929
        %v1972 = vunpack.c.h.b16 %v1929
        %v1973 = vunpack.c.l.b16 %v1930
        %v1974 = vunpack.c.h.b16 %v1930
        %v1975 = vunpack.c.l.b16 %v1931
        %v1976 = vunpack.c.h.b16 %v1931
        %v1977 = vunpack.c.l.b16 %v1932
        %v1978 = vunpack.c.h.b16 %v1932
        %v1979 = vunpack.c.l.b16 %v1933
        %v1980 = vunpack.c.h.b16 %v1933
        %v1981 = vunpack.c.l.b16 %v1934
        %v1982 = vunpack.c.h.b16 %v1934
        %v1983 = vpack.c.b16 %v1951, %v1951
        %v1984 = vpack.c.b16 %v1952, %v1952
        %v1985 = vpack.c.b16 %v1953, %v1953
        %v1986 = vpack.c.b16 %v1954, %v1954
        %v1987 = vpack.c.b16 %v1955, %v1955
        %v1988 = vpack.c.b16 %v1956, %v1956
        %v1989 = vpack.c.b16 %v1957, %v1957
        %v1990 = vpack.c.b16 %v1958, %v1958
        %v1991 = vpack.c.b16 %v1959, %v1959
        %v1992 = vpack.c.b16 %v1960, %v1960
        %v1993 = vpack.c.b16 %v1961, %v1961
        %v1994 = vpack.c.b16 %v1962, %v1962
        %v1995 = vpack.c.b16 %v1963, %v1963
        %v1996 = vpack.c.b16 %v1964, %v1964
        %v1997 = vpack.c.b16 %v1965, %v1965
        %v1998 = vpack.c.b16 %v1966, %v1966
        %v1999 = vpack.c.b16 %v1967, %v1967
        %v2000 = vpack.c.b16 %v1968, %v1968
        %v2001 = vpack.c.b16 %v1969, %v1969
        %v2002 = vpack.c.b16 %v1970, %v1970
        %v2003 = vpack.c.b16 %v1971, %v1971
        %v2004 = vpack.c.b16 %v1972, %v1972
        %v2005 = vpack.c.b16 %v1973, %v1973
        %v2006 = vpack.c.b16 %v1974, %v1974
        %v2007 = vpack.c.b16 %v1975, %v1975
        %v2008 = vpack.c.b16 %v1976, %v1976
        %v2009 = vpack.c.b16 %v1977, %v1977
        %v2010 = vpack.c.b16 %v1978, %v1978
        %v2011 = vpack.c.b16 %v1979, %v1979
        %v2012 = vpack.c.b16 %v1980, %v1980
        %v2013 = vpack.c.b16 %v1981, %v1981
        %v2014 = vpack.c.b16 %v1982, %v1982
        %2015 = vrot.lane.b32.xlu0 %v1983, 64
        %v2016 = vpop.permute.xlu0 %2015
        %2017 = vrot.lane.b32.xlu0 %v1984, 64
        %v2018 = vpop.permute.xlu0 %2017
        %2019 = vrot.lane.b32.xlu0 %v1985, 64
        %v2020 = vpop.permute.xlu0 %2019
        %2021 = vrot.lane.b32.xlu0 %v1986, 64
        %v2022 = vpop.permute.xlu0 %2021
        %2023 = vrot.lane.b32.xlu0 %v1987, 64
        %v2024 = vpop.permute.xlu0 %2023
        %2025 = vrot.lane.b32.xlu0 %v1988, 64
        %v2026 = vpop.permute.xlu0 %2025
        %2027 = vrot.lane.b32.xlu0 %v1989, 64
        %v2028 = vpop.permute.xlu0 %2027
        %2029 = vrot.lane.b32.xlu0 %v1990, 64
        %v2030 = vpop.permute.xlu0 %2029
        %2031 = vrot.lane.b32.xlu0 %v1991, 64
        %v2032 = vpop.permute.xlu0 %2031
        %2033 = vrot.lane.b32.xlu0 %v1992, 64
        %v2034 = vpop.permute.xlu0 %2033
        %2035 = vrot.lane.b32.xlu0 %v1993, 64
        %v2036 = vpop.permute.xlu0 %2035
        %2037 = vrot.lane.b32.xlu0 %v1994, 64
        %v2038 = vpop.permute.xlu0 %2037
        %2039 = vrot.lane.b32.xlu0 %v1995, 64
        %v2040 = vpop.permute.xlu0 %2039
        %2041 = vrot.lane.b32.xlu0 %v1996, 64
        %v2042 = vpop.permute.xlu0 %2041
        %2043 = vrot.lane.b32.xlu0 %v1997, 64
        %v2044 = vpop.permute.xlu0 %2043
        %2045 = vrot.lane.b32.xlu0 %v1998, 64
        %v2046 = vpop.permute.xlu0 %2045
        %2047 = vrot.lane.b32.xlu0 %v1999, 64
        %v2048 = vpop.permute.xlu0 %2047
        %2049 = vrot.lane.b32.xlu0 %v2000, 64
        %v2050 = vpop.permute.xlu0 %2049
        %2051 = vrot.lane.b32.xlu0 %v2001, 64
        %v2052 = vpop.permute.xlu0 %2051
        %2053 = vrot.lane.b32.xlu0 %v2002, 64
        %v2054 = vpop.permute.xlu0 %2053
        %2055 = vrot.lane.b32.xlu0 %v2003, 64
        %v2056 = vpop.permute.xlu0 %2055
        %2057 = vrot.lane.b32.xlu0 %v2004, 64
        %v2058 = vpop.permute.xlu0 %2057
        %2059 = vrot.lane.b32.xlu0 %v2005, 64
        %v2060 = vpop.permute.xlu0 %2059
        %2061 = vrot.lane.b32.xlu0 %v2006, 64
        %v2062 = vpop.permute.xlu0 %2061
        %2063 = vrot.lane.b32.xlu0 %v2007, 64
        %v2064 = vpop.permute.xlu0 %2063
        %2065 = vrot.lane.b32.xlu0 %v2008, 64
        %v2066 = vpop.permute.xlu0 %2065
        %2067 = vrot.lane.b32.xlu0 %v2009, 64
        %v2068 = vpop.permute.xlu0 %2067
        %2069 = vrot.lane.b32.xlu0 %v2010, 64
        %v2070 = vpop.permute.xlu0 %2069
        %2071 = vrot.lane.b32.xlu0 %v2011, 64
        %v2072 = vpop.permute.xlu0 %2071
        %2073 = vrot.lane.b32.xlu0 %v2012, 64
        %v2074 = vpop.permute.xlu0 %2073
        %2075 = vrot.lane.b32.xlu0 %v2013, 64
        %v2076 = vpop.permute.xlu0 %2075
        %2077 = vrot.lane.b32.xlu0 %v2014, 64
        %v2078 = vpop.permute.xlu0 %2077
        %2111 = vst.msk [vmem:[#allocation3 + $0x8] sm:$0xf] %vm1214, %v2016
        %2112 = vst.msk [vmem:[#allocation3 + $0x1c] sm:$0xf] %vm1214, %v2018
        %2113 = vst.msk [vmem:[#allocation3 + $0x30] sm:$0xf] %vm1214, %v2020
        %2114 = vst.msk [vmem:[#allocation3 + $0x44] sm:$0xf] %vm1214, %v2022
        %2115 = vst.msk [vmem:[#allocation3 + $0x58] sm:$0xf] %vm1214, %v2024
        %2116 = vst.msk [vmem:[#allocation3 + $0x6c] sm:$0xf] %vm1214, %v2026
        %2117 = vst.msk [vmem:[#allocation3 + $0x80] sm:$0xf] %vm1214, %v2028
        %2118 = vst.msk [vmem:[#allocation3 + $0x94] sm:$0xf] %vm1214, %v2030
        %2119 = vst.msk [vmem:[#allocation3 + $0xa8] sm:$0xf] %vm1214, %v2032
        %2120 = vst.msk [vmem:[#allocation3 + $0xbc] sm:$0xf] %vm1214, %v2034
        %2121 = vst.msk [vmem:[#allocation3 + $0xd0] sm:$0xf] %vm1214, %v2036
        %2122 = vst.msk [vmem:[#allocation3 + $0xe4] sm:$0xf] %vm1214, %v2038
        %2123 = vst.msk [vmem:[#allocation3 + $0xf8] sm:$0xf] %vm1214, %v2040
        %2124 = vst.msk [vmem:[#allocation3 + $0x10c] sm:$0xf] %vm1214, %v2042
        %2125 = vst.msk [vmem:[#allocation3 + $0x120] sm:$0xf] %vm1214, %v2044
        %2126 = vst.msk [vmem:[#allocation3 + $0x134] sm:$0xf] %vm1214, %v2046
        %2127 = vst.msk [vmem:[#allocation3 + $0x148] sm:$0xf] %vm1214, %v2048
        %2128 = vst.msk [vmem:[#allocation3 + $0x15c] sm:$0xf] %vm1214, %v2050
        %2129 = vst.msk [vmem:[#allocation3 + $0x170] sm:$0xf] %vm1214, %v2052
        %2130 = vst.msk [vmem:[#allocation3 + $0x184] sm:$0xf] %vm1214, %v2054
        %2131 = vst.msk [vmem:[#allocation3 + $0x198] sm:$0xf] %vm1214, %v2056
        %2132 = vst.msk [vmem:[#allocation3 + $0x1ac] sm:$0xf] %vm1214, %v2058
        %2133 = vst.msk [vmem:[#allocation3 + $0x1c0] sm:$0xf] %vm1214, %v2060
        %2134 = vst.msk [vmem:[#allocation3 + $0x1d4] sm:$0xf] %vm1214, %v2062
        %2135 = vst.msk [vmem:[#allocation3 + $0x1e8] sm:$0xf] %vm1214, %v2064
        %2136 = vst.msk [vmem:[#allocation3 + $0x1fc] sm:$0xf] %vm1214, %v2066
        %2137 = vst.msk [vmem:[#allocation3 + $0x210] sm:$0xf] %vm1214, %v2068
        %2138 = vst.msk [vmem:[#allocation3 + $0x224] sm:$0xf] %vm1214, %v2070
        %2139 = vst.msk [vmem:[#allocation3 + $0x238] sm:$0xf] %vm1214, %v2072
        %2140 = vst.msk [vmem:[#allocation3 + $0x24c] sm:$0xf] %vm1214, %v2074
        %2141 = vst.msk [vmem:[#allocation3 + $0x260] sm:$0xf] %vm1214, %v2076
        %2142 = vst.msk [vmem:[#allocation3 + $0x274] sm:$0xf] %vm1214, %v2078
        %v2143 = vld [vmem:[#allocation2 + $0x20] sm:$0xff]
        %v2144 = vld [vmem:[#allocation2 + $0x28] sm:$0xff]
        %v2145 = vld [vmem:[#allocation2 + $0x30] sm:$0xff]
        %v2146 = vld [vmem:[#allocation2 + $0x38] sm:$0xff]
        %v2147 = vld [vmem:[#allocation2 + $0x40] sm:$0xff]
        %v2148 = vld [vmem:[#allocation2 + $0x48] sm:$0xff]
        %v2149 = vld [vmem:[#allocation2 + $0x50] sm:$0xff]
        %v2150 = vld [vmem:[#allocation2 + $0x58] sm:$0xff]
        %v2151 = vld [vmem:[#allocation2 + $0x60] sm:$0xff]
        %v2152 = vld [vmem:[#allocation2 + $0x68] sm:$0xff]
        %v2153 = vld [vmem:[#allocation2 + $0x70] sm:$0xff]
        %v2154 = vld [vmem:[#allocation2 + $0x78] sm:$0xff]
        %v2155 = vld [vmem:[#allocation2 + $0x80] sm:$0xff]
        %v2156 = vld [vmem:[#allocation2 + $0x88] sm:$0xff]
        %v2157 = vld [vmem:[#allocation2 + $0x90] sm:$0xff]
        %v2158 = vld [vmem:[#allocation2 + $0x98] sm:$0xff]
        %v2159 = vld [vmem:[#allocation2 + $0xa0] sm:$0xff]
        %v2160 = vld [vmem:[#allocation2 + $0xa8] sm:$0xff]
        %v2161 = vld [vmem:[#allocation2 + $0xb0] sm:$0xff]
        %v2162 = vld [vmem:[#allocation2 + $0xb8] sm:$0xff]
        %v2163 = vld [vmem:[#allocation2 + $0xc0] sm:$0xff]
        %v2164 = vld [vmem:[#allocation2 + $0xc8] sm:$0xff]
        %v2165 = vld [vmem:[#allocation2 + $0xd0] sm:$0xff]
        %v2166 = vld [vmem:[#allocation2 + $0xd8] sm:$0xff]
        %v2167 = vld [vmem:[#allocation2 + $0xe0] sm:$0xff]
        %v2168 = vld [vmem:[#allocation2 + $0xe8] sm:$0xff]
        %v2169 = vld [vmem:[#allocation2 + $0xf0] sm:$0xff]
        %v2170 = vld [vmem:[#allocation2 + $0xf8] sm:$0xff]
        %v2171 = vld [vmem:[#allocation2 + $0x100] sm:$0xff]
        %v2172 = vld [vmem:[#allocation2 + $0x108] sm:$0xff]
        %v2173 = vld [vmem:[#allocation2 + $0x110] sm:$0xff]
        %v2174 = vld [vmem:[#allocation2 + $0x118] sm:$0xff]
        %v2175 = vpack.c.bf16 %v2144, %v2143
        %v2176 = vpack.c.bf16 %v2146, %v2145
        %v2177 = vpack.c.bf16 %v2148, %v2147
        %v2178 = vpack.c.bf16 %v2150, %v2149
        %v2179 = vpack.c.bf16 %v2152, %v2151
        %v2180 = vpack.c.bf16 %v2154, %v2153
        %v2181 = vpack.c.bf16 %v2156, %v2155
        %v2182 = vpack.c.bf16 %v2158, %v2157
        %v2183 = vpack.c.bf16 %v2160, %v2159
        %v2184 = vpack.c.bf16 %v2162, %v2161
        %v2185 = vpack.c.bf16 %v2164, %v2163
        %v2186 = vpack.c.bf16 %v2166, %v2165
        %v2187 = vpack.c.bf16 %v2168, %v2167
        %v2188 = vpack.c.bf16 %v2170, %v2169
        %v2189 = vpack.c.bf16 %v2172, %v2171
        %v2190 = vpack.c.bf16 %v2174, %v2173
        %v2207 = vunpack.c.l.b16 %v2175
        %v2208 = vunpack.c.h.b16 %v2175
        %v2209 = vunpack.c.l.b16 %v2176
        %v2210 = vunpack.c.h.b16 %v2176
        %v2211 = vunpack.c.l.b16 %v2177
        %v2212 = vunpack.c.h.b16 %v2177
        %v2213 = vunpack.c.l.b16 %v2178
        %v2214 = vunpack.c.h.b16 %v2178
        %v2215 = vunpack.c.l.b16 %v2179
        %v2216 = vunpack.c.h.b16 %v2179
        %v2217 = vunpack.c.l.b16 %v2180
        %v2218 = vunpack.c.h.b16 %v2180
        %v2219 = vunpack.c.l.b16 %v2181
        %v2220 = vunpack.c.h.b16 %v2181
        %v2221 = vunpack.c.l.b16 %v2182
        %v2222 = vunpack.c.h.b16 %v2182
        %v2223 = vunpack.c.l.b16 %v2183
        %v2224 = vunpack.c.h.b16 %v2183
        %v2225 = vunpack.c.l.b16 %v2184
        %v2226 = vunpack.c.h.b16 %v2184
        %v2227 = vunpack.c.l.b16 %v2185
        %v2228 = vunpack.c.h.b16 %v2185
        %v2229 = vunpack.c.l.b16 %v2186
        %v2230 = vunpack.c.h.b16 %v2186
        %v2231 = vunpack.c.l.b16 %v2187
        %v2232 = vunpack.c.h.b16 %v2187
        %v2233 = vunpack.c.l.b16 %v2188
        %v2234 = vunpack.c.h.b16 %v2188
        %v2235 = vunpack.c.l.b16 %v2189
        %v2236 = vunpack.c.h.b16 %v2189
        %v2237 = vunpack.c.l.b16 %v2190
        %v2238 = vunpack.c.h.b16 %v2190
        %v2239 = vpack.c.b16 %v2207, %v2207
        %v2240 = vpack.c.b16 %v2208, %v2208
        %v2241 = vpack.c.b16 %v2209, %v2209
        %v2242 = vpack.c.b16 %v2210, %v2210
        %v2243 = vpack.c.b16 %v2211, %v2211
        %v2244 = vpack.c.b16 %v2212, %v2212
        %v2245 = vpack.c.b16 %v2213, %v2213
        %v2246 = vpack.c.b16 %v2214, %v2214
        %v2247 = vpack.c.b16 %v2215, %v2215
        %v2248 = vpack.c.b16 %v2216, %v2216
        %v2249 = vpack.c.b16 %v2217, %v2217
        %v2250 = vpack.c.b16 %v2218, %v2218
        %v2251 = vpack.c.b16 %v2219, %v2219
        %v2252 = vpack.c.b16 %v2220, %v2220
        %v2253 = vpack.c.b16 %v2221, %v2221
        %v2254 = vpack.c.b16 %v2222, %v2222
        %v2255 = vpack.c.b16 %v2223, %v2223
        %v2256 = vpack.c.b16 %v2224, %v2224
        %v2257 = vpack.c.b16 %v2225, %v2225
        %v2258 = vpack.c.b16 %v2226, %v2226
        %v2259 = vpack.c.b16 %v2227, %v2227
        %v2260 = vpack.c.b16 %v2228, %v2228
        %v2261 = vpack.c.b16 %v2229, %v2229
        %v2262 = vpack.c.b16 %v2230, %v2230
        %v2263 = vpack.c.b16 %v2231, %v2231
        %v2264 = vpack.c.b16 %v2232, %v2232
        %v2265 = vpack.c.b16 %v2233, %v2233
        %v2266 = vpack.c.b16 %v2234, %v2234
        %v2267 = vpack.c.b16 %v2235, %v2235
        %v2268 = vpack.c.b16 %v2236, %v2236
        %v2269 = vpack.c.b16 %v2237, %v2237
        %v2270 = vpack.c.b16 %v2238, %v2238
        %2303 = vst.msk [vmem:[#allocation3 + $0xc] sm:$0xf] %vm957, %v2239
        %2304 = vst.msk [vmem:[#allocation3 + $0x20] sm:$0xf] %vm957, %v2240
        %2305 = vst.msk [vmem:[#allocation3 + $0x34] sm:$0xf] %vm957, %v2241
        %2306 = vst.msk [vmem:[#allocation3 + $0x48] sm:$0xf] %vm957, %v2242
        %2307 = vst.msk [vmem:[#allocation3 + $0x5c] sm:$0xf] %vm957, %v2243
        %2308 = vst.msk [vmem:[#allocation3 + $0x70] sm:$0xf] %vm957, %v2244
        %2309 = vst.msk [vmem:[#allocation3 + $0x84] sm:$0xf] %vm957, %v2245
        %2310 = vst.msk [vmem:[#allocation3 + $0x98] sm:$0xf] %vm957, %v2246
        %2311 = vst.msk [vmem:[#allocation3 + $0xac] sm:$0xf] %vm957, %v2247
        %2312 = vst.msk [vmem:[#allocation3 + $0xc0] sm:$0xf] %vm957, %v2248
        %2313 = vst.msk [vmem:[#allocation3 + $0xd4] sm:$0xf] %vm957, %v2249
        %2314 = vst.msk [vmem:[#allocation3 + $0xe8] sm:$0xf] %vm957, %v2250
        %2315 = vst.msk [vmem:[#allocation3 + $0xfc] sm:$0xf] %vm957, %v2251
        %2316 = vst.msk [vmem:[#allocation3 + $0x110] sm:$0xf] %vm957, %v2252
        %2317 = vst.msk [vmem:[#allocation3 + $0x124] sm:$0xf] %vm957, %v2253
        %2318 = vst.msk [vmem:[#allocation3 + $0x138] sm:$0xf] %vm957, %v2254
        %2319 = vst.msk [vmem:[#allocation3 + $0x14c] sm:$0xf] %vm957, %v2255
        %2320 = vst.msk [vmem:[#allocation3 + $0x160] sm:$0xf] %vm957, %v2256
        %2321 = vst.msk [vmem:[#allocation3 + $0x174] sm:$0xf] %vm957, %v2257
        %2322 = vst.msk [vmem:[#allocation3 + $0x188] sm:$0xf] %vm957, %v2258
        %2323 = vst.msk [vmem:[#allocation3 + $0x19c] sm:$0xf] %vm957, %v2259
        %2324 = vst.msk [vmem:[#allocation3 + $0x1b0] sm:$0xf] %vm957, %v2260
        %2325 = vst.msk [vmem:[#allocation3 + $0x1c4] sm:$0xf] %vm957, %v2261
        %2326 = vst.msk [vmem:[#allocation3 + $0x1d8] sm:$0xf] %vm957, %v2262
        %2327 = vst.msk [vmem:[#allocation3 + $0x1ec] sm:$0xf] %vm957, %v2263
        %2328 = vst.msk [vmem:[#allocation3 + $0x200] sm:$0xf] %vm957, %v2264
        %2329 = vst.msk [vmem:[#allocation3 + $0x214] sm:$0xf] %vm957, %v2265
        %2330 = vst.msk [vmem:[#allocation3 + $0x228] sm:$0xf] %vm957, %v2266
        %2331 = vst.msk [vmem:[#allocation3 + $0x23c] sm:$0xf] %vm957, %v2267
        %2332 = vst.msk [vmem:[#allocation3 + $0x250] sm:$0xf] %vm957, %v2268
        %2333 = vst.msk [vmem:[#allocation3 + $0x264] sm:$0xf] %vm957, %v2269
        %2334 = vst.msk [vmem:[#allocation3 + $0x278] sm:$0xf] %vm957, %v2270
        %v2335 = vld [vmem:[#allocation2 + $0x21] sm:$0xff]
        %v2336 = vld [vmem:[#allocation2 + $0x29] sm:$0xff]
        %v2337 = vld [vmem:[#allocation2 + $0x31] sm:$0xff]
        %v2338 = vld [vmem:[#allocation2 + $0x39] sm:$0xff]
        %v2339 = vld [vmem:[#allocation2 + $0x41] sm:$0xff]
        %v2340 = vld [vmem:[#allocation2 + $0x49] sm:$0xff]
        %v2341 = vld [vmem:[#allocation2 + $0x51] sm:$0xff]
        %v2342 = vld [vmem:[#allocation2 + $0x59] sm:$0xff]
        %v2343 = vld [vmem:[#allocation2 + $0x61] sm:$0xff]
        %v2344 = vld [vmem:[#allocation2 + $0x69] sm:$0xff]
        %v2345 = vld [vmem:[#allocation2 + $0x71] sm:$0xff]
        %v2346 = vld [vmem:[#allocation2 + $0x79] sm:$0xff]
        %v2347 = vld [vmem:[#allocation2 + $0x81] sm:$0xff]
        %v2348 = vld [vmem:[#allocation2 + $0x89] sm:$0xff]
        %v2349 = vld [vmem:[#allocation2 + $0x91] sm:$0xff]
        %v2350 = vld [vmem:[#allocation2 + $0x99] sm:$0xff]
        %v2351 = vld [vmem:[#allocation2 + $0xa1] sm:$0xff]
        %v2352 = vld [vmem:[#allocation2 + $0xa9] sm:$0xff]
        %v2353 = vld [vmem:[#allocation2 + $0xb1] sm:$0xff]
        %v2354 = vld [vmem:[#allocation2 + $0xb9] sm:$0xff]
        %v2355 = vld [vmem:[#allocation2 + $0xc1] sm:$0xff]
        %v2356 = vld [vmem:[#allocation2 + $0xc9] sm:$0xff]
        %v2357 = vld [vmem:[#allocation2 + $0xd1] sm:$0xff]
        %v2358 = vld [vmem:[#allocation2 + $0xd9] sm:$0xff]
        %v2359 = vld [vmem:[#allocation2 + $0xe1] sm:$0xff]
        %v2360 = vld [vmem:[#allocation2 + $0xe9] sm:$0xff]
        %v2361 = vld [vmem:[#allocation2 + $0xf1] sm:$0xff]
        %v2362 = vld [vmem:[#allocation2 + $0xf9] sm:$0xff]
        %v2363 = vld [vmem:[#allocation2 + $0x101] sm:$0xff]
        %v2364 = vld [vmem:[#allocation2 + $0x109] sm:$0xff]
        %v2365 = vld [vmem:[#allocation2 + $0x111] sm:$0xff]
        %v2366 = vld [vmem:[#allocation2 + $0x119] sm:$0xff]
        %v2367 = vpack.c.bf16 %v2336, %v2335
        %v2368 = vpack.c.bf16 %v2338, %v2337
        %v2369 = vpack.c.bf16 %v2340, %v2339
        %v2370 = vpack.c.bf16 %v2342, %v2341
        %v2371 = vpack.c.bf16 %v2344, %v2343
        %v2372 = vpack.c.bf16 %v2346, %v2345
        %v2373 = vpack.c.bf16 %v2348, %v2347
        %v2374 = vpack.c.bf16 %v2350, %v2349
        %v2375 = vpack.c.bf16 %v2352, %v2351
        %v2376 = vpack.c.bf16 %v2354, %v2353
        %v2377 = vpack.c.bf16 %v2356, %v2355
        %v2378 = vpack.c.bf16 %v2358, %v2357
        %v2379 = vpack.c.bf16 %v2360, %v2359
        %v2380 = vpack.c.bf16 %v2362, %v2361
        %v2381 = vpack.c.bf16 %v2364, %v2363
        %v2382 = vpack.c.bf16 %v2366, %v2365
        %v2399 = vunpack.c.l.b16 %v2367
        %v2400 = vunpack.c.h.b16 %v2367
        %v2401 = vunpack.c.l.b16 %v2368
        %v2402 = vunpack.c.h.b16 %v2368
        %v2403 = vunpack.c.l.b16 %v2369
        %v2404 = vunpack.c.h.b16 %v2369
        %v2405 = vunpack.c.l.b16 %v2370
        %v2406 = vunpack.c.h.b16 %v2370
        %v2407 = vunpack.c.l.b16 %v2371
        %v2408 = vunpack.c.h.b16 %v2371
        %v2409 = vunpack.c.l.b16 %v2372
        %v2410 = vunpack.c.h.b16 %v2372
        %v2411 = vunpack.c.l.b16 %v2373
        %v2412 = vunpack.c.h.b16 %v2373
        %v2413 = vunpack.c.l.b16 %v2374
        %v2414 = vunpack.c.h.b16 %v2374
        %v2415 = vunpack.c.l.b16 %v2375
        %v2416 = vunpack.c.h.b16 %v2375
        %v2417 = vunpack.c.l.b16 %v2376
        %v2418 = vunpack.c.h.b16 %v2376
        %v2419 = vunpack.c.l.b16 %v2377
        %v2420 = vunpack.c.h.b16 %v2377
        %v2421 = vunpack.c.l.b16 %v2378
        %v2422 = vunpack.c.h.b16 %v2378
        %v2423 = vunpack.c.l.b16 %v2379
        %v2424 = vunpack.c.h.b16 %v2379
        %v2425 = vunpack.c.l.b16 %v2380
        %v2426 = vunpack.c.h.b16 %v2380
        %v2427 = vunpack.c.l.b16 %v2381
        %v2428 = vunpack.c.h.b16 %v2381
        %v2429 = vunpack.c.l.b16 %v2382
        %v2430 = vunpack.c.h.b16 %v2382
        %v2431 = vpack.c.b16 %v2399, %v2399
        %v2432 = vpack.c.b16 %v2400, %v2400
        %v2433 = vpack.c.b16 %v2401, %v2401
        %v2434 = vpack.c.b16 %v2402, %v2402
        %v2435 = vpack.c.b16 %v2403, %v2403
        %v2436 = vpack.c.b16 %v2404, %v2404
        %v2437 = vpack.c.b16 %v2405, %v2405
        %v2438 = vpack.c.b16 %v2406, %v2406
        %v2439 = vpack.c.b16 %v2407, %v2407
        %v2440 = vpack.c.b16 %v2408, %v2408
        %v2441 = vpack.c.b16 %v2409, %v2409
        %v2442 = vpack.c.b16 %v2410, %v2410
        %v2443 = vpack.c.b16 %v2411, %v2411
        %v2444 = vpack.c.b16 %v2412, %v2412
        %v2445 = vpack.c.b16 %v2413, %v2413
        %v2446 = vpack.c.b16 %v2414, %v2414
        %v2447 = vpack.c.b16 %v2415, %v2415
        %v2448 = vpack.c.b16 %v2416, %v2416
        %v2449 = vpack.c.b16 %v2417, %v2417
        %v2450 = vpack.c.b16 %v2418, %v2418
        %v2451 = vpack.c.b16 %v2419, %v2419
        %v2452 = vpack.c.b16 %v2420, %v2420
        %v2453 = vpack.c.b16 %v2421, %v2421
        %v2454 = vpack.c.b16 %v2422, %v2422
        %v2455 = vpack.c.b16 %v2423, %v2423
        %v2456 = vpack.c.b16 %v2424, %v2424
        %v2457 = vpack.c.b16 %v2425, %v2425
        %v2458 = vpack.c.b16 %v2426, %v2426
        %v2459 = vpack.c.b16 %v2427, %v2427
        %v2460 = vpack.c.b16 %v2428, %v2428
        %v2461 = vpack.c.b16 %v2429, %v2429
        %v2462 = vpack.c.b16 %v2430, %v2430
        %2463 = vrot.lane.b32.xlu0 %v2431, 64
        %v2464 = vpop.permute.xlu0 %2463
        %2465 = vrot.lane.b32.xlu0 %v2432, 64
        %v2466 = vpop.permute.xlu0 %2465
        %2467 = vrot.lane.b32.xlu0 %v2433, 64
        %v2468 = vpop.permute.xlu0 %2467
        %2469 = vrot.lane.b32.xlu0 %v2434, 64
        %v2470 = vpop.permute.xlu0 %2469
        %2471 = vrot.lane.b32.xlu0 %v2435, 64
        %v2472 = vpop.permute.xlu0 %2471
        %2473 = vrot.lane.b32.xlu0 %v2436, 64
        %v2474 = vpop.permute.xlu0 %2473
        %2475 = vrot.lane.b32.xlu0 %v2437, 64
        %v2476 = vpop.permute.xlu0 %2475
        %2477 = vrot.lane.b32.xlu0 %v2438, 64
        %v2478 = vpop.permute.xlu0 %2477
        %2479 = vrot.lane.b32.xlu0 %v2439, 64
        %v2480 = vpop.permute.xlu0 %2479
        %2481 = vrot.lane.b32.xlu0 %v2440, 64
        %v2482 = vpop.permute.xlu0 %2481
        %2483 = vrot.lane.b32.xlu0 %v2441, 64
        %v2484 = vpop.permute.xlu0 %2483
        %2485 = vrot.lane.b32.xlu0 %v2442, 64
        %v2486 = vpop.permute.xlu0 %2485
        %2487 = vrot.lane.b32.xlu0 %v2443, 64
        %v2488 = vpop.permute.xlu0 %2487
        %2489 = vrot.lane.b32.xlu0 %v2444, 64
        %v2490 = vpop.permute.xlu0 %2489
        %2491 = vrot.lane.b32.xlu0 %v2445, 64
        %v2492 = vpop.permute.xlu0 %2491
        %2493 = vrot.lane.b32.xlu0 %v2446, 64
        %v2494 = vpop.permute.xlu0 %2493
        %2495 = vrot.lane.b32.xlu0 %v2447, 64
        %v2496 = vpop.permute.xlu0 %2495
        %2497 = vrot.lane.b32.xlu0 %v2448, 64
        %v2498 = vpop.permute.xlu0 %2497
        %2499 = vrot.lane.b32.xlu0 %v2449, 64
        %v2500 = vpop.permute.xlu0 %2499
        %2501 = vrot.lane.b32.xlu0 %v2450, 64
        %v2502 = vpop.permute.xlu0 %2501
        %2503 = vrot.lane.b32.xlu0 %v2451, 64
        %v2504 = vpop.permute.xlu0 %2503
        %2505 = vrot.lane.b32.xlu0 %v2452, 64
        %v2506 = vpop.permute.xlu0 %2505
        %2507 = vrot.lane.b32.xlu0 %v2453, 64
        %v2508 = vpop.permute.xlu0 %2507
        %2509 = vrot.lane.b32.xlu0 %v2454, 64
        %v2510 = vpop.permute.xlu0 %2509
        %2511 = vrot.lane.b32.xlu0 %v2455, 64
        %v2512 = vpop.permute.xlu0 %2511
        %2513 = vrot.lane.b32.xlu0 %v2456, 64
        %v2514 = vpop.permute.xlu0 %2513
        %2515 = vrot.lane.b32.xlu0 %v2457, 64
        %v2516 = vpop.permute.xlu0 %2515
        %2517 = vrot.lane.b32.xlu0 %v2458, 64
        %v2518 = vpop.permute.xlu0 %2517
        %2519 = vrot.lane.b32.xlu0 %v2459, 64
        %v2520 = vpop.permute.xlu0 %2519
        %2521 = vrot.lane.b32.xlu0 %v2460, 64
        %v2522 = vpop.permute.xlu0 %2521
        %2523 = vrot.lane.b32.xlu0 %v2461, 64
        %v2524 = vpop.permute.xlu0 %2523
        %2525 = vrot.lane.b32.xlu0 %v2462, 64
        %v2526 = vpop.permute.xlu0 %2525
        %2559 = vst.msk [vmem:[#allocation3 + $0xc] sm:$0xf] %vm1214, %v2464
        %2560 = vst.msk [vmem:[#allocation3 + $0x20] sm:$0xf] %vm1214, %v2466
        %2561 = vst.msk [vmem:[#allocation3 + $0x34] sm:$0xf] %vm1214, %v2468
        %2562 = vst.msk [vmem:[#allocation3 + $0x48] sm:$0xf] %vm1214, %v2470
        %2563 = vst.msk [vmem:[#allocation3 + $0x5c] sm:$0xf] %vm1214, %v2472
        %2564 = vst.msk [vmem:[#allocation3 + $0x70] sm:$0xf] %vm1214, %v2474
        %2565 = vst.msk [vmem:[#allocation3 + $0x84] sm:$0xf] %vm1214, %v2476
        %2566 = vst.msk [vmem:[#allocation3 + $0x98] sm:$0xf] %vm1214, %v2478
        %2567 = vst.msk [vmem:[#allocation3 + $0xac] sm:$0xf] %vm1214, %v2480
        %2568 = vst.msk [vmem:[#allocation3 + $0xc0] sm:$0xf] %vm1214, %v2482
        %2569 = vst.msk [vmem:[#allocation3 + $0xd4] sm:$0xf] %vm1214, %v2484
        %2570 = vst.msk [vmem:[#allocation3 + $0xe8] sm:$0xf] %vm1214, %v2486
        %2571 = vst.msk [vmem:[#allocation3 + $0xfc] sm:$0xf] %vm1214, %v2488
        %2572 = vst.msk [vmem:[#allocation3 + $0x110] sm:$0xf] %vm1214, %v2490
        %2573 = vst.msk [vmem:[#allocation3 + $0x124] sm:$0xf] %vm1214, %v2492
        %2574 = vst.msk [vmem:[#allocation3 + $0x138] sm:$0xf] %vm1214, %v2494
        %2575 = vst.msk [vmem:[#allocation3 + $0x14c] sm:$0xf] %vm1214, %v2496
        %2576 = vst.msk [vmem:[#allocation3 + $0x160] sm:$0xf] %vm1214, %v2498
        %2577 = vst.msk [vmem:[#allocation3 + $0x174] sm:$0xf] %vm1214, %v2500
        %2578 = vst.msk [vmem:[#allocation3 + $0x188] sm:$0xf] %vm1214, %v2502
        %2579 = vst.msk [vmem:[#allocation3 + $0x19c] sm:$0xf] %vm1214, %v2504
        %2580 = vst.msk [vmem:[#allocation3 + $0x1b0] sm:$0xf] %vm1214, %v2506
        %2581 = vst.msk [vmem:[#allocation3 + $0x1c4] sm:$0xf] %vm1214, %v2508
        %2582 = vst.msk [vmem:[#allocation3 + $0x1d8] sm:$0xf] %vm1214, %v2510
        %2583 = vst.msk [vmem:[#allocation3 + $0x1ec] sm:$0xf] %vm1214, %v2512
        %2584 = vst.msk [vmem:[#allocation3 + $0x200] sm:$0xf] %vm1214, %v2514
        %2585 = vst.msk [vmem:[#allocation3 + $0x214] sm:$0xf] %vm1214, %v2516
        %2586 = vst.msk [vmem:[#allocation3 + $0x228] sm:$0xf] %vm1214, %v2518
        %2587 = vst.msk [vmem:[#allocation3 + $0x23c] sm:$0xf] %vm1214, %v2520
        %2588 = vst.msk [vmem:[#allocation3 + $0x250] sm:$0xf] %vm1214, %v2522
        %2589 = vst.msk [vmem:[#allocation3 + $0x264] sm:$0xf] %vm1214, %v2524
        %2590 = vst.msk [vmem:[#allocation3 + $0x278] sm:$0xf] %vm1214, %v2526
        %v2591 = vld [vmem:[#allocation2 + $0x22] sm:$0xff]
        %v2592 = vld [vmem:[#allocation2 + $0x2a] sm:$0xff]
        %v2593 = vld [vmem:[#allocation2 + $0x32] sm:$0xff]
        %v2594 = vld [vmem:[#allocation2 + $0x3a] sm:$0xff]
        %v2595 = vld [vmem:[#allocation2 + $0x42] sm:$0xff]
        %v2596 = vld [vmem:[#allocation2 + $0x4a] sm:$0xff]
        %v2597 = vld [vmem:[#allocation2 + $0x52] sm:$0xff]
        %v2598 = vld [vmem:[#allocation2 + $0x5a] sm:$0xff]
        %v2599 = vld [vmem:[#allocation2 + $0x62] sm:$0xff]
        %v2600 = vld [vmem:[#allocation2 + $0x6a] sm:$0xff]
        %v2601 = vld [vmem:[#allocation2 + $0x72] sm:$0xff]
        %v2602 = vld [vmem:[#allocation2 + $0x7a] sm:$0xff]
        %v2603 = vld [vmem:[#allocation2 + $0x82] sm:$0xff]
        %v2604 = vld [vmem:[#allocation2 + $0x8a] sm:$0xff]
        %v2605 = vld [vmem:[#allocation2 + $0x92] sm:$0xff]
        %v2606 = vld [vmem:[#allocation2 + $0x9a] sm:$0xff]
        %v2607 = vld [vmem:[#allocation2 + $0xa2] sm:$0xff]
        %v2608 = vld [vmem:[#allocation2 + $0xaa] sm:$0xff]
        %v2609 = vld [vmem:[#allocation2 + $0xb2] sm:$0xff]
        %v2610 = vld [vmem:[#allocation2 + $0xba] sm:$0xff]
        %v2611 = vld [vmem:[#allocation2 + $0xc2] sm:$0xff]
        %v2612 = vld [vmem:[#allocation2 + $0xca] sm:$0xff]
        %v2613 = vld [vmem:[#allocation2 + $0xd2] sm:$0xff]
        %v2614 = vld [vmem:[#allocation2 + $0xda] sm:$0xff]
        %v2615 = vld [vmem:[#allocation2 + $0xe2] sm:$0xff]
        %v2616 = vld [vmem:[#allocation2 + $0xea] sm:$0xff]
        %v2617 = vld [vmem:[#allocation2 + $0xf2] sm:$0xff]
        %v2618 = vld [vmem:[#allocation2 + $0xfa] sm:$0xff]
        %v2619 = vld [vmem:[#allocation2 + $0x102] sm:$0xff]
        %v2620 = vld [vmem:[#allocation2 + $0x10a] sm:$0xff]
        %v2621 = vld [vmem:[#allocation2 + $0x112] sm:$0xff]
        %v2622 = vld [vmem:[#allocation2 + $0x11a] sm:$0xff]
        %v2623 = vpack.c.bf16 %v2592, %v2591
        %v2624 = vpack.c.bf16 %v2594, %v2593
        %v2625 = vpack.c.bf16 %v2596, %v2595
        %v2626 = vpack.c.bf16 %v2598, %v2597
        %v2627 = vpack.c.bf16 %v2600, %v2599
        %v2628 = vpack.c.bf16 %v2602, %v2601
        %v2629 = vpack.c.bf16 %v2604, %v2603
        %v2630 = vpack.c.bf16 %v2606, %v2605
        %v2631 = vpack.c.bf16 %v2608, %v2607
        %v2632 = vpack.c.bf16 %v2610, %v2609
        %v2633 = vpack.c.bf16 %v2612, %v2611
        %v2634 = vpack.c.bf16 %v2614, %v2613
        %v2635 = vpack.c.bf16 %v2616, %v2615
        %v2636 = vpack.c.bf16 %v2618, %v2617
        %v2637 = vpack.c.bf16 %v2620, %v2619
        %v2638 = vpack.c.bf16 %v2622, %v2621
        %v2655 = vunpack.c.l.b16 %v2623
        %v2656 = vunpack.c.h.b16 %v2623
        %v2657 = vunpack.c.l.b16 %v2624
        %v2658 = vunpack.c.h.b16 %v2624
        %v2659 = vunpack.c.l.b16 %v2625
        %v2660 = vunpack.c.h.b16 %v2625
        %v2661 = vunpack.c.l.b16 %v2626
        %v2662 = vunpack.c.h.b16 %v2626
        %v2663 = vunpack.c.l.b16 %v2627
        %v2664 = vunpack.c.h.b16 %v2627
        %v2665 = vunpack.c.l.b16 %v2628
        %v2666 = vunpack.c.h.b16 %v2628
        %v2667 = vunpack.c.l.b16 %v2629
        %v2668 = vunpack.c.h.b16 %v2629
        %v2669 = vunpack.c.l.b16 %v2630
        %v2670 = vunpack.c.h.b16 %v2630
        %v2671 = vunpack.c.l.b16 %v2631
        %v2672 = vunpack.c.h.b16 %v2631
        %v2673 = vunpack.c.l.b16 %v2632
        %v2674 = vunpack.c.h.b16 %v2632
        %v2675 = vunpack.c.l.b16 %v2633
        %v2676 = vunpack.c.h.b16 %v2633
        %v2677 = vunpack.c.l.b16 %v2634
        %v2678 = vunpack.c.h.b16 %v2634
        %v2679 = vunpack.c.l.b16 %v2635
        %v2680 = vunpack.c.h.b16 %v2635
        %v2681 = vunpack.c.l.b16 %v2636
        %v2682 = vunpack.c.h.b16 %v2636
        %v2683 = vunpack.c.l.b16 %v2637
        %v2684 = vunpack.c.h.b16 %v2637
        %v2685 = vunpack.c.l.b16 %v2638
        %v2686 = vunpack.c.h.b16 %v2638
        %v2687 = vpack.c.b16 %v2655, %v2655
        %v2688 = vpack.c.b16 %v2656, %v2656
        %v2689 = vpack.c.b16 %v2657, %v2657
        %v2690 = vpack.c.b16 %v2658, %v2658
        %v2691 = vpack.c.b16 %v2659, %v2659
        %v2692 = vpack.c.b16 %v2660, %v2660
        %v2693 = vpack.c.b16 %v2661, %v2661
        %v2694 = vpack.c.b16 %v2662, %v2662
        %v2695 = vpack.c.b16 %v2663, %v2663
        %v2696 = vpack.c.b16 %v2664, %v2664
        %v2697 = vpack.c.b16 %v2665, %v2665
        %v2698 = vpack.c.b16 %v2666, %v2666
        %v2699 = vpack.c.b16 %v2667, %v2667
        %v2700 = vpack.c.b16 %v2668, %v2668
        %v2701 = vpack.c.b16 %v2669, %v2669
        %v2702 = vpack.c.b16 %v2670, %v2670
        %v2703 = vpack.c.b16 %v2671, %v2671
        %v2704 = vpack.c.b16 %v2672, %v2672
        %v2705 = vpack.c.b16 %v2673, %v2673
        %v2706 = vpack.c.b16 %v2674, %v2674
        %v2707 = vpack.c.b16 %v2675, %v2675
        %v2708 = vpack.c.b16 %v2676, %v2676
        %v2709 = vpack.c.b16 %v2677, %v2677
        %v2710 = vpack.c.b16 %v2678, %v2678
        %v2711 = vpack.c.b16 %v2679, %v2679
        %v2712 = vpack.c.b16 %v2680, %v2680
        %v2713 = vpack.c.b16 %v2681, %v2681
        %v2714 = vpack.c.b16 %v2682, %v2682
        %v2715 = vpack.c.b16 %v2683, %v2683
        %v2716 = vpack.c.b16 %v2684, %v2684
        %v2717 = vpack.c.b16 %v2685, %v2685
        %v2718 = vpack.c.b16 %v2686, %v2686
        %2751 = vst.msk [vmem:[#allocation3 + $0x10] sm:$0xf] %vm957, %v2687
        %2752 = vst.msk [vmem:[#allocation3 + $0x24] sm:$0xf] %vm957, %v2688
        %2753 = vst.msk [vmem:[#allocation3 + $0x38] sm:$0xf] %vm957, %v2689
        %2754 = vst.msk [vmem:[#allocation3 + $0x4c] sm:$0xf] %vm957, %v2690
        %2755 = vst.msk [vmem:[#allocation3 + $0x60] sm:$0xf] %vm957, %v2691
        %2756 = vst.msk [vmem:[#allocation3 + $0x74] sm:$0xf] %vm957, %v2692
        %2757 = vst.msk [vmem:[#allocation3 + $0x88] sm:$0xf] %vm957, %v2693
        %2758 = vst.msk [vmem:[#allocation3 + $0x9c] sm:$0xf] %vm957, %v2694
        %2759 = vst.msk [vmem:[#allocation3 + $0xb0] sm:$0xf] %vm957, %v2695
        %2760 = vst.msk [vmem:[#allocation3 + $0xc4] sm:$0xf] %vm957, %v2696
        %2761 = vst.msk [vmem:[#allocation3 + $0xd8] sm:$0xf] %vm957, %v2697
        %2762 = vst.msk [vmem:[#allocation3 + $0xec] sm:$0xf] %vm957, %v2698
        %2763 = vst.msk [vmem:[#allocation3 + $0x100] sm:$0xf] %vm957, %v2699
        %2764 = vst.msk [vmem:[#allocation3 + $0x114] sm:$0xf] %vm957, %v2700
        %2765 = vst.msk [vmem:[#allocation3 + $0x128] sm:$0xf] %vm957, %v2701
        %2766 = vst.msk [vmem:[#allocation3 + $0x13c] sm:$0xf] %vm957, %v2702
        %2767 = vst.msk [vmem:[#allocation3 + $0x150] sm:$0xf] %vm957, %v2703
        %2768 = vst.msk [vmem:[#allocation3 + $0x164] sm:$0xf] %vm957, %v2704
        %2769 = vst.msk [vmem:[#allocation3 + $0x178] sm:$0xf] %vm957, %v2705
        %2770 = vst.msk [vmem:[#allocation3 + $0x18c] sm:$0xf] %vm957, %v2706
        %2771 = vst.msk [vmem:[#allocation3 + $0x1a0] sm:$0xf] %vm957, %v2707
        %2772 = vst.msk [vmem:[#allocation3 + $0x1b4] sm:$0xf] %vm957, %v2708
        %2773 = vst.msk [vmem:[#allocation3 + $0x1c8] sm:$0xf] %vm957, %v2709
        %2774 = vst.msk [vmem:[#allocation3 + $0x1dc] sm:$0xf] %vm957, %v2710
        %2775 = vst.msk [vmem:[#allocation3 + $0x1f0] sm:$0xf] %vm957, %v2711
        %2776 = vst.msk [vmem:[#allocation3 + $0x204] sm:$0xf] %vm957, %v2712
        %2777 = vst.msk [vmem:[#allocation3 + $0x218] sm:$0xf] %vm957, %v2713
        %2778 = vst.msk [vmem:[#allocation3 + $0x22c] sm:$0xf] %vm957, %v2714
        %2779 = vst.msk [vmem:[#allocation3 + $0x240] sm:$0xf] %vm957, %v2715
        %2780 = vst.msk [vmem:[#allocation3 + $0x254] sm:$0xf] %vm957, %v2716
        %2781 = vst.msk [vmem:[#allocation3 + $0x268] sm:$0xf] %vm957, %v2717
        %2782 = vst.msk [vmem:[#allocation3 + $0x27c] sm:$0xf] %vm957, %v2718
        %v2783 = vld [vmem:[#allocation3] sm:$0xff]
        %v2784 = vld [vmem:[#allocation3 + $0x8] sm:$0xff]
        %v2785 = vld [vmem:[#allocation3 + $0x10] sm:$0xf]
        %v2786 = vld [vmem:[#allocation3 + $0x14] sm:$0xff]
        %v2787 = vld [vmem:[#allocation3 + $0x1c] sm:$0xff]
        %v2788 = vld [vmem:[#allocation3 + $0x24] sm:$0xf]
        %v2789 = vld [vmem:[#allocation3 + $0x28] sm:$0xff]
        %v2790 = vld [vmem:[#allocation3 + $0x30] sm:$0xff]
        %v2791 = vld [vmem:[#allocation3 + $0x38] sm:$0xf]
        %v2792 = vld [vmem:[#allocation3 + $0x3c] sm:$0xff]
        %v2793 = vld [vmem:[#allocation3 + $0x44] sm:$0xff]
        %v2794 = vld [vmem:[#allocation3 + $0x4c] sm:$0xf]
        %v2795 = vld [vmem:[#allocation3 + $0x50] sm:$0xff]
        %v2796 = vld [vmem:[#allocation3 + $0x58] sm:$0xff]
        %v2797 = vld [vmem:[#allocation3 + $0x60] sm:$0xf]
        %v2798 = vld [vmem:[#allocation3 + $0x64] sm:$0xff]
        %v2799 = vld [vmem:[#allocation3 + $0x6c] sm:$0xff]
        %v2800 = vld [vmem:[#allocation3 + $0x74] sm:$0xf]
        %v2801 = vld [vmem:[#allocation3 + $0x78] sm:$0xff]
        %v2802 = vld [vmem:[#allocation3 + $0x80] sm:$0xff]
        %v2803 = vld [vmem:[#allocation3 + $0x88] sm:$0xf]
        %v2804 = vld [vmem:[#allocation3 + $0x8c] sm:$0xff]
        %v2805 = vld [vmem:[#allocation3 + $0x94] sm:$0xff]
        %v2806 = vld [vmem:[#allocation3 + $0x9c] sm:$0xf]
        %v2807 = vld [vmem:[#allocation3 + $0xa0] sm:$0xff]
        %v2808 = vld [vmem:[#allocation3 + $0xa8] sm:$0xff]
        %v2809 = vld [vmem:[#allocation3 + $0xb0] sm:$0xf]
        %v2810 = vld [vmem:[#allocation3 + $0xb4] sm:$0xff]
        %v2811 = vld [vmem:[#allocation3 + $0xbc] sm:$0xff]
        %v2812 = vld [vmem:[#allocation3 + $0xc4] sm:$0xf]
        %v2813 = vld [vmem:[#allocation3 + $0xc8] sm:$0xff]
        %v2814 = vld [vmem:[#allocation3 + $0xd0] sm:$0xff]
        %v2815 = vld [vmem:[#allocation3 + $0xd8] sm:$0xf]
        %v2816 = vld [vmem:[#allocation3 + $0xdc] sm:$0xff]
        %v2817 = vld [vmem:[#allocation3 + $0xe4] sm:$0xff]
        %v2818 = vld [vmem:[#allocation3 + $0xec] sm:$0xf]
        %v2819 = vld [vmem:[#allocation3 + $0xf0] sm:$0xff]
        %v2820 = vld [vmem:[#allocation3 + $0xf8] sm:$0xff]
        %v2821 = vld [vmem:[#allocation3 + $0x100] sm:$0xf]
        %v2822 = vld [vmem:[#allocation3 + $0x104] sm:$0xff]
        %v2823 = vld [vmem:[#allocation3 + $0x10c] sm:$0xff]
        %v2824 = vld [vmem:[#allocation3 + $0x114] sm:$0xf]
        %v2825 = vld [vmem:[#allocation3 + $0x118] sm:$0xff]
        %v2826 = vld [vmem:[#allocation3 + $0x120] sm:$0xff]
        %v2827 = vld [vmem:[#allocation3 + $0x128] sm:$0xf]
        %v2828 = vld [vmem:[#allocation3 + $0x12c] sm:$0xff]
        %v2829 = vld [vmem:[#allocation3 + $0x134] sm:$0xff]
        %v2830 = vld [vmem:[#allocation3 + $0x13c] sm:$0xf]
        %v2831 = vld [vmem:[#allocation3 + $0x140] sm:$0xff]
        %v2832 = vld [vmem:[#allocation3 + $0x148] sm:$0xff]
        %v2833 = vld [vmem:[#allocation3 + $0x150] sm:$0xf]
        %v2834 = vld [vmem:[#allocation3 + $0x154] sm:$0xff]
        %v2835 = vld [vmem:[#allocation3 + $0x15c] sm:$0xff]
        %v2836 = vld [vmem:[#allocation3 + $0x164] sm:$0xf]
        %v2837 = vld [vmem:[#allocation3 + $0x168] sm:$0xff]
        %v2838 = vld [vmem:[#allocation3 + $0x170] sm:$0xff]
        %v2839 = vld [vmem:[#allocation3 + $0x178] sm:$0xf]
        %v2840 = vld [vmem:[#allocation3 + $0x17c] sm:$0xff]
        %v2841 = vld [vmem:[#allocation3 + $0x184] sm:$0xff]
        %v2842 = vld [vmem:[#allocation3 + $0x18c] sm:$0xf]
        %v2843 = vld [vmem:[#allocation3 + $0x190] sm:$0xff]
        %v2844 = vld [vmem:[#allocation3 + $0x198] sm:$0xff]
        %v2845 = vld [vmem:[#allocation3 + $0x1a0] sm:$0xf]
        %v2846 = vld [vmem:[#allocation3 + $0x1a4] sm:$0xff]
        %v2847 = vld [vmem:[#allocation3 + $0x1ac] sm:$0xff]
        %v2848 = vld [vmem:[#allocation3 + $0x1b4] sm:$0xf]
        %v2849 = vld [vmem:[#allocation3 + $0x1b8] sm:$0xff]
        %v2850 = vld [vmem:[#allocation3 + $0x1c0] sm:$0xff]
        %v2851 = vld [vmem:[#allocation3 + $0x1c8] sm:$0xf]
        %v2852 = vld [vmem:[#allocation3 + $0x1cc] sm:$0xff]
        %v2853 = vld [vmem:[#allocation3 + $0x1d4] sm:$0xff]
        %v2854 = vld [vmem:[#allocation3 + $0x1dc] sm:$0xf]
        %v2855 = vld [vmem:[#allocation3 + $0x1e0] sm:$0xff]
        %v2856 = vld [vmem:[#allocation3 + $0x1e8] sm:$0xff]
        %v2857 = vld [vmem:[#allocation3 + $0x1f0] sm:$0xf]
        %v2858 = vld [vmem:[#allocation3 + $0x1f4] sm:$0xff]
        %v2859 = vld [vmem:[#allocation3 + $0x1fc] sm:$0xff]
        %v2860 = vld [vmem:[#allocation3 + $0x204] sm:$0xf]
        %v2861 = vld [vmem:[#allocation3 + $0x208] sm:$0xff]
        %v2862 = vld [vmem:[#allocation3 + $0x210] sm:$0xff]
        %v2863 = vld [vmem:[#allocation3 + $0x218] sm:$0xf]
        %v2864 = vld [vmem:[#allocation3 + $0x21c] sm:$0xff]
        %v2865 = vld [vmem:[#allocation3 + $0x224] sm:$0xff]
        %v2866 = vld [vmem:[#allocation3 + $0x22c] sm:$0xf]
        %v2867 = vld [vmem:[#allocation3 + $0x230] sm:$0xff]
        %v2868 = vld [vmem:[#allocation3 + $0x238] sm:$0xff]
        %v2869 = vld [vmem:[#allocation3 + $0x240] sm:$0xf]
        %v2870 = vld [vmem:[#allocation3 + $0x244] sm:$0xff]
        %v2871 = vld [vmem:[#allocation3 + $0x24c] sm:$0xff]
        %v2872 = vld [vmem:[#allocation3 + $0x254] sm:$0xf]
        %v2873 = vld [vmem:[#allocation3 + $0x258] sm:$0xff]
        %v2874 = vld [vmem:[#allocation3 + $0x260] sm:$0xff]
        %v2875 = vld [vmem:[#allocation3 + $0x268] sm:$0xf]
        %v2876 = vld [vmem:[#allocation3 + $0x26c] sm:$0xff]
        %v2877 = vld [vmem:[#allocation3 + $0x274] sm:$0xff]
        %v2878 = vld [vmem:[#allocation3 + $0x27c] sm:$0xf]
        %v2879 = vld [vmem:[%s3] sm:$0xf]
        %v2880 = vld [vmem:[%s3 + $0x4] sm:$0xf]
        %v2881 = vld [vmem:[%s3 + $0x8] sm:$0xf]
        %v2882 = vld [vmem:[%s3 + $0xc] sm:$0xf]
        %v2883 = vld [vmem:[%s3 + $0x10] sm:$0xf]
        %v2884 = vld [vmem:[%s3 + $0x14] sm:$0xf]
        %v2885 = vld [vmem:[%s3 + $0x18] sm:$0xf]
        %v2886 = vld [vmem:[%s3 + $0x1c] sm:$0xf]
        %v2887 = vld [vmem:[%s3 + $0x20] sm:$0xf]
        %v2888 = vld [vmem:[%s3 + $0x24] sm:$0xf]
        %v2889 = vld [vmem:[%s3 + $0x28] sm:$0xf]
        %v2890 = vld [vmem:[%s3 + $0x2c] sm:$0xf]
        %v2891 = vld [vmem:[%s3 + $0x30] sm:$0xf]
        %v2892 = vld [vmem:[%s3 + $0x34] sm:$0xf]
        %v2893 = vld [vmem:[%s3 + $0x38] sm:$0xf]
        %v2894 = vld [vmem:[%s3 + $0x3c] sm:$0xf]
        %v2895 = vld [vmem:[%s3 + $0x40] sm:$0xf]
        %v2896 = vld [vmem:[%s3 + $0x44] sm:$0xf]
        %v2897 = vld [vmem:[%s3 + $0x48] sm:$0xf]
        %v2898 = vld [vmem:[%s3 + $0x4c] sm:$0xf]
        %v2899 = vld [vmem:[%s3 + $0x50] sm:$0xf]
        %v2900 = vld [vmem:[%s3 + $0x54] sm:$0xf]
        %v2901 = vld [vmem:[%s3 + $0x58] sm:$0xf]
        %v2902 = vld [vmem:[%s3 + $0x5c] sm:$0xf]
        %v2903 = vld [vmem:[%s3 + $0x60] sm:$0xf]
        %v2904 = vld [vmem:[%s3 + $0x64] sm:$0xf]
        %v2905 = vld [vmem:[%s3 + $0x68] sm:$0xf]
        %v2906 = vld [vmem:[%s3 + $0x6c] sm:$0xf]
        %v2907 = vld [vmem:[%s3 + $0x70] sm:$0xf]
        %v2908 = vld [vmem:[%s3 + $0x74] sm:$0xf]
        %v2909 = vld [vmem:[%s3 + $0x78] sm:$0xf]
        %v2910 = vld [vmem:[%s3 + $0x7c] sm:$0xf]
        %v2911 = vld [vmem:[%s3 + $0x80] sm:$0xf]
        %v2912 = vld [vmem:[%s3 + $0x84] sm:$0xf]
        %v2913 = vld [vmem:[%s3 + $0x88] sm:$0xf]
        %v2914 = vld [vmem:[%s3 + $0x8c] sm:$0xf]
        %v2915 = vld [vmem:[%s3 + $0x90] sm:$0xf]
        %v2916 = vld [vmem:[%s3 + $0x94] sm:$0xf]
        %v2917 = vld [vmem:[%s3 + $0x98] sm:$0xf]
        %v2918 = vld [vmem:[%s3 + $0x9c] sm:$0xf]
        %v2919 = vld [vmem:[%s3 + $0xa0] sm:$0xf]
        %v2920 = vld [vmem:[%s3 + $0xa4] sm:$0xf]
        %v2921 = vld [vmem:[%s3 + $0xa8] sm:$0xf]
        %v2922 = vld [vmem:[%s3 + $0xac] sm:$0xf]
        %v2923 = vld [vmem:[%s3 + $0xb0] sm:$0xf]
        %v2924 = vld [vmem:[%s3 + $0xb4] sm:$0xf]
        %v2925 = vld [vmem:[%s3 + $0xb8] sm:$0xf]
        %v2926 = vld [vmem:[%s3 + $0xbc] sm:$0xf]
        %v2927 = vld [vmem:[%s3 + $0xc0] sm:$0xf]
        %v2928 = vld [vmem:[%s3 + $0xc4] sm:$0xf]
        %v2929 = vld [vmem:[%s3 + $0xc8] sm:$0xf]
        %v2930 = vld [vmem:[%s3 + $0xcc] sm:$0xf]
        %v2931 = vld [vmem:[%s3 + $0xd0] sm:$0xf]
        %v2932 = vld [vmem:[%s3 + $0xd4] sm:$0xf]
        %v2933 = vld [vmem:[%s3 + $0xd8] sm:$0xf]
        %v2934 = vld [vmem:[%s3 + $0xdc] sm:$0xf]
        %v2935 = vld [vmem:[%s3 + $0xe0] sm:$0xf]
        %v2936 = vld [vmem:[%s3 + $0xe4] sm:$0xf]
        %v2937 = vld [vmem:[%s3 + $0xe8] sm:$0xf]
        %v2938 = vld [vmem:[%s3 + $0xec] sm:$0xf]
        %v2939 = vld [vmem:[%s3 + $0xf0] sm:$0xf]
        %v2940 = vld [vmem:[%s3 + $0xf4] sm:$0xf]
        %v2941 = vld [vmem:[%s3 + $0xf8] sm:$0xf]
        %v2942 = vld [vmem:[%s3 + $0xfc] sm:$0xf]
        %v2943 = vld [vmem:[%s3 + $0x100] sm:$0xf]
        %v2944 = vld [vmem:[%s3 + $0x104] sm:$0xf]
        %v2945 = vld [vmem:[%s3 + $0x108] sm:$0xf]
        %v2946 = vld [vmem:[%s3 + $0x10c] sm:$0xf]
        %v2947 = vld [vmem:[%s3 + $0x110] sm:$0xf]
        %v2948 = vld [vmem:[%s3 + $0x114] sm:$0xf]
        %v2949 = vld [vmem:[%s3 + $0x118] sm:$0xf]
        %v2950 = vld [vmem:[%s3 + $0x11c] sm:$0xf]
        %v2951 = vld [vmem:[%s4] sm:$0x1]
        %v2953 = vlaneseq
        %v2954 = vshrl.u32 %v2953, 7
        %v2955 = vsub.s32 0, %v2954
        %v2956 = vrot.slane %v2951, %v2955
        %v3054 = vunpack.c.l.b16 %v2783
        %v3055 = vunpack.c.h.b16 %v2783
        %v3056 = vunpack.c.l.b16 %v2784
        %v3057 = vunpack.c.h.b16 %v2784
        %v3058 = vunpack.c.l.b16 %v2785
        %v3059 = vunpack.c.l.b16 %v2786
        %v3060 = vunpack.c.h.b16 %v2786
        %v3061 = vunpack.c.l.b16 %v2787
        %v3062 = vunpack.c.h.b16 %v2787
        %v3063 = vunpack.c.l.b16 %v2788
        %v3064 = vunpack.c.l.b16 %v2789
        %v3065 = vunpack.c.h.b16 %v2789
        %v3066 = vunpack.c.l.b16 %v2790
        %v3067 = vunpack.c.h.b16 %v2790
        %v3068 = vunpack.c.l.b16 %v2791
        %v3069 = vunpack.c.l.b16 %v2792
        %v3070 = vunpack.c.h.b16 %v2792
        %v3071 = vunpack.c.l.b16 %v2793
        %v3072 = vunpack.c.h.b16 %v2793
        %v3073 = vunpack.c.l.b16 %v2794
        %v3074 = vunpack.c.l.b16 %v2795
        %v3075 = vunpack.c.h.b16 %v2795
        %v3076 = vunpack.c.l.b16 %v2796
        %v3077 = vunpack.c.h.b16 %v2796
        %v3078 = vunpack.c.l.b16 %v2797
        %v3079 = vunpack.c.l.b16 %v2798
        %v3080 = vunpack.c.h.b16 %v2798
        %v3081 = vunpack.c.l.b16 %v2799
        %v3082 = vunpack.c.h.b16 %v2799
        %v3083 = vunpack.c.l.b16 %v2800
        %v3084 = vunpack.c.l.b16 %v2801
        %v3085 = vunpack.c.h.b16 %v2801
        %v3086 = vunpack.c.l.b16 %v2802
        %v3087 = vunpack.c.h.b16 %v2802
        %v3088 = vunpack.c.l.b16 %v2803
        %v3089 = vunpack.c.l.b16 %v2804
        %v3090 = vunpack.c.h.b16 %v2804
        %v3091 = vunpack.c.l.b16 %v2805
        %v3092 = vunpack.c.h.b16 %v2805
        %v3093 = vunpack.c.l.b16 %v2806
        %v3094 = vunpack.c.l.b16 %v2807
        %v3095 = vunpack.c.h.b16 %v2807
        %v3096 = vunpack.c.l.b16 %v2808
        %v3097 = vunpack.c.h.b16 %v2808
        %v3098 = vunpack.c.l.b16 %v2809
        %v3099 = vunpack.c.l.b16 %v2810
        %v3100 = vunpack.c.h.b16 %v2810
        %v3101 = vunpack.c.l.b16 %v2811
        %v3102 = vunpack.c.h.b16 %v2811
        %v3103 = vunpack.c.l.b16 %v2812
        %v3104 = vunpack.c.l.b16 %v2813
        %v3105 = vunpack.c.h.b16 %v2813
        %v3106 = vunpack.c.l.b16 %v2814
        %v3107 = vunpack.c.h.b16 %v2814
        %v3108 = vunpack.c.l.b16 %v2815
        %v3109 = vunpack.c.l.b16 %v2816
        %v3110 = vunpack.c.h.b16 %v2816
        %v3111 = vunpack.c.l.b16 %v2817
        %v3112 = vunpack.c.h.b16 %v2817
        %v3113 = vunpack.c.l.b16 %v2818
        %v3114 = vunpack.c.l.b16 %v2819
        %v3115 = vunpack.c.h.b16 %v2819
        %v3116 = vunpack.c.l.b16 %v2820
        %v3117 = vunpack.c.h.b16 %v2820
        %v3118 = vunpack.c.l.b16 %v2821
        %v3119 = vunpack.c.l.b16 %v2822
        %v3120 = vunpack.c.h.b16 %v2822
        %v3121 = vunpack.c.l.b16 %v2823
        %v3122 = vunpack.c.h.b16 %v2823
        %v3123 = vunpack.c.l.b16 %v2824
        %v3124 = vunpack.c.l.b16 %v2825
        %v3125 = vunpack.c.h.b16 %v2825
        %v3126 = vunpack.c.l.b16 %v2826
        %v3127 = vunpack.c.h.b16 %v2826
        %v3128 = vunpack.c.l.b16 %v2827
        %v3129 = vunpack.c.l.b16 %v2828
        %v3130 = vunpack.c.h.b16 %v2828
        %v3131 = vunpack.c.l.b16 %v2829
        %v3132 = vunpack.c.h.b16 %v2829
        %v3133 = vunpack.c.l.b16 %v2830
        %v3134 = vunpack.c.l.b16 %v2831
        %v3135 = vunpack.c.h.b16 %v2831
        %v3136 = vunpack.c.l.b16 %v2832
        %v3137 = vunpack.c.h.b16 %v2832
        %v3138 = vunpack.c.l.b16 %v2833
        %v3139 = vunpack.c.l.b16 %v2834
        %v3140 = vunpack.c.h.b16 %v2834
        %v3141 = vunpack.c.l.b16 %v2835
        %v3142 = vunpack.c.h.b16 %v2835
        %v3143 = vunpack.c.l.b16 %v2836
        %v3144 = vunpack.c.l.b16 %v2837
        %v3145 = vunpack.c.h.b16 %v2837
        %v3146 = vunpack.c.l.b16 %v2838
        %v3147 = vunpack.c.h.b16 %v2838
        %v3148 = vunpack.c.l.b16 %v2839
        %v3149 = vunpack.c.l.b16 %v2840
        %v3150 = vunpack.c.h.b16 %v2840
        %v3151 = vunpack.c.l.b16 %v2841
        %v3152 = vunpack.c.h.b16 %v2841
        %v3153 = vunpack.c.l.b16 %v2842
        %v3154 = vunpack.c.l.b16 %v2843
        %v3155 = vunpack.c.h.b16 %v2843
        %v3156 = vunpack.c.l.b16 %v2844
        %v3157 = vunpack.c.h.b16 %v2844
        %v3158 = vunpack.c.l.b16 %v2845
        %v3159 = vunpack.c.l.b16 %v2846
        %v3160 = vunpack.c.h.b16 %v2846
        %v3161 = vunpack.c.l.b16 %v2847
        %v3162 = vunpack.c.h.b16 %v2847
        %v3163 = vunpack.c.l.b16 %v2848
        %v3164 = vunpack.c.l.b16 %v2849
        %v3165 = vunpack.c.h.b16 %v2849
        %v3166 = vunpack.c.l.b16 %v2850
        %v3167 = vunpack.c.h.b16 %v2850
        %v3168 = vunpack.c.l.b16 %v2851
        %v3169 = vunpack.c.l.b16 %v2852
        %v3170 = vunpack.c.h.b16 %v2852
        %v3171 = vunpack.c.l.b16 %v2853
        %v3172 = vunpack.c.h.b16 %v2853
        %v3173 = vunpack.c.l.b16 %v2854
        %v3174 = vunpack.c.l.b16 %v2855
        %v3175 = vunpack.c.h.b16 %v2855
        %v3176 = vunpack.c.l.b16 %v2856
        %v3177 = vunpack.c.h.b16 %v2856
        %v3178 = vunpack.c.l.b16 %v2857
        %v3179 = vunpack.c.l.b16 %v2858
        %v3180 = vunpack.c.h.b16 %v2858
        %v3181 = vunpack.c.l.b16 %v2859
        %v3182 = vunpack.c.h.b16 %v2859
        %v3183 = vunpack.c.l.b16 %v2860
        %v3184 = vunpack.c.l.b16 %v2861
        %v3185 = vunpack.c.h.b16 %v2861
        %v3186 = vunpack.c.l.b16 %v2862
        %v3187 = vunpack.c.h.b16 %v2862
        %v3188 = vunpack.c.l.b16 %v2863
        %v3189 = vunpack.c.l.b16 %v2864
        %v3190 = vunpack.c.h.b16 %v2864
        %v3191 = vunpack.c.l.b16 %v2865
        %v3192 = vunpack.c.h.b16 %v2865
        %v3193 = vunpack.c.l.b16 %v2866
        %v3194 = vunpack.c.l.b16 %v2867
        %v3195 = vunpack.c.h.b16 %v2867
        %v3196 = vunpack.c.l.b16 %v2868
        %v3197 = vunpack.c.h.b16 %v2868
        %v3198 = vunpack.c.l.b16 %v2869
        %v3199 = vunpack.c.l.b16 %v2870
        %v3200 = vunpack.c.h.b16 %v2870
        %v3201 = vunpack.c.l.b16 %v2871
        %v3202 = vunpack.c.h.b16 %v2871
        %v3203 = vunpack.c.l.b16 %v2872
        %v3204 = vunpack.c.l.b16 %v2873
        %v3205 = vunpack.c.h.b16 %v2873
        %v3206 = vunpack.c.l.b16 %v2874
        %v3207 = vunpack.c.h.b16 %v2874
        %v3208 = vunpack.c.l.b16 %v2875
        %v3209 = vunpack.c.l.b16 %v2876
        %v3210 = vunpack.c.h.b16 %v2876
        %v3211 = vunpack.c.l.b16 %v2877
        %v3212 = vunpack.c.h.b16 %v2877
        %v3213 = vunpack.c.l.b16 %v2878
        %v3214 = vpack.c.b16 %v3059, %v3054
        %v3215 = vpack.c.b16 %v3060, %v3055
        %v3216 = vpack.c.b16 %v3061, %v3056
        %v3217 = vpack.c.b16 %v3062, %v3057
        %v3218 = vpack.c.b16 %v3063, %v3058
        %v3219 = vpack.c.b16 %v3069, %v3064
        %v3220 = vpack.c.b16 %v3070, %v3065
        %v3221 = vpack.c.b16 %v3071, %v3066
        %v3222 = vpack.c.b16 %v3072, %v3067
        %v3223 = vpack.c.b16 %v3073, %v3068
        %v3224 = vpack.c.b16 %v3079, %v3074
        %v3225 = vpack.c.b16 %v3080, %v3075
        %v3226 = vpack.c.b16 %v3081, %v3076
        %v3227 = vpack.c.b16 %v3082, %v3077
        %v3228 = vpack.c.b16 %v3083, %v3078
        %v3229 = vpack.c.b16 %v3089, %v3084
        %v3230 = vpack.c.b16 %v3090, %v3085
        %v3231 = vpack.c.b16 %v3091, %v3086
        %v3232 = vpack.c.b16 %v3092, %v3087
        %v3233 = vpack.c.b16 %v3093, %v3088
        %v3234 = vpack.c.b16 %v3099, %v3094
        %v3235 = vpack.c.b16 %v3100, %v3095
        %v3236 = vpack.c.b16 %v3101, %v3096
        %v3237 = vpack.c.b16 %v3102, %v3097
        %v3238 = vpack.c.b16 %v3103, %v3098
        %v3239 = vpack.c.b16 %v3109, %v3104
        %v3240 = vpack.c.b16 %v3110, %v3105
        %v3241 = vpack.c.b16 %v3111, %v3106
        %v3242 = vpack.c.b16 %v3112, %v3107
        %v3243 = vpack.c.b16 %v3113, %v3108
        %v3244 = vpack.c.b16 %v3119, %v3114
        %v3245 = vpack.c.b16 %v3120, %v3115
        %v3246 = vpack.c.b16 %v3121, %v3116
        %v3247 = vpack.c.b16 %v3122, %v3117
        %v3248 = vpack.c.b16 %v3123, %v3118
        %v3249 = vpack.c.b16 %v3129, %v3124
        %v3250 = vpack.c.b16 %v3130, %v3125
        %v3251 = vpack.c.b16 %v3131, %v3126
        %v3252 = vpack.c.b16 %v3132, %v3127
        %v3253 = vpack.c.b16 %v3133, %v3128
        %v3254 = vpack.c.b16 %v3139, %v3134
        %v3255 = vpack.c.b16 %v3140, %v3135
        %v3256 = vpack.c.b16 %v3141, %v3136
        %v3257 = vpack.c.b16 %v3142, %v3137
        %v3258 = vpack.c.b16 %v3143, %v3138
        %v3259 = vpack.c.b16 %v3149, %v3144
        %v3260 = vpack.c.b16 %v3150, %v3145
        %v3261 = vpack.c.b16 %v3151, %v3146
        %v3262 = vpack.c.b16 %v3152, %v3147
        %v3263 = vpack.c.b16 %v3153, %v3148
        %v3264 = vpack.c.b16 %v3159, %v3154
        %v3265 = vpack.c.b16 %v3160, %v3155
        %v3266 = vpack.c.b16 %v3161, %v3156
        %v3267 = vpack.c.b16 %v3162, %v3157
        %v3268 = vpack.c.b16 %v3163, %v3158
        %v3269 = vpack.c.b16 %v3169, %v3164
        %v3270 = vpack.c.b16 %v3170, %v3165
        %v3271 = vpack.c.b16 %v3171, %v3166
        %v3272 = vpack.c.b16 %v3172, %v3167
        %v3273 = vpack.c.b16 %v3173, %v3168
        %v3274 = vpack.c.b16 %v3179, %v3174
        %v3275 = vpack.c.b16 %v3180, %v3175
        %v3276 = vpack.c.b16 %v3181, %v3176
        %v3277 = vpack.c.b16 %v3182, %v3177
        %v3278 = vpack.c.b16 %v3183, %v3178
        %v3279 = vpack.c.b16 %v3189, %v3184
        %v3280 = vpack.c.b16 %v3190, %v3185
        %v3281 = vpack.c.b16 %v3191, %v3186
        %v3282 = vpack.c.b16 %v3192, %v3187
        %v3283 = vpack.c.b16 %v3193, %v3188
        %v3284 = vpack.c.b16 %v3199, %v3194
        %v3285 = vpack.c.b16 %v3200, %v3195
        %v3286 = vpack.c.b16 %v3201, %v3196
        %v3287 = vpack.c.b16 %v3202, %v3197
        %v3288 = vpack.c.b16 %v3203, %v3198
        %v3289 = vpack.c.b16 %v3209, %v3204
        %v3290 = vpack.c.b16 %v3210, %v3205
        %v3291 = vpack.c.b16 %v3211, %v3206
        %v3292 = vpack.c.b16 %v3212, %v3207
        %v3293 = vpack.c.b16 %v3213, %v3208
        %v3430 = vunpack.c.l.b16 %v2879
        %v3431 = vunpack.c.l.b16 %v2880
        %v3432 = vunpack.c.l.b16 %v2881
        %v3433 = vunpack.c.l.b16 %v2882
        %v3434 = vunpack.c.l.b16 %v2883
        %v3435 = vunpack.c.l.b16 %v2884
        %v3436 = vunpack.c.l.b16 %v2885
        %v3437 = vunpack.c.l.b16 %v2886
        %v3438 = vunpack.c.l.b16 %v2887
        %v3439 = vunpack.c.l.b16 %v2888
        %v3440 = vunpack.c.l.b16 %v2889
        %v3441 = vunpack.c.l.b16 %v2890
        %v3442 = vunpack.c.l.b16 %v2891
        %v3443 = vunpack.c.l.b16 %v2892
        %v3444 = vunpack.c.l.b16 %v2893
        %v3445 = vunpack.c.l.b16 %v2894
        %v3446 = vunpack.c.l.b16 %v2895
        %v3447 = vunpack.c.l.b16 %v2896
        %v3448 = vunpack.c.l.b16 %v2897
        %v3449 = vunpack.c.l.b16 %v2898
        %v3450 = vunpack.c.l.b16 %v2899
        %v3451 = vunpack.c.l.b16 %v2900
        %v3452 = vunpack.c.l.b16 %v2901
        %v3453 = vunpack.c.l.b16 %v2902
        %v3454 = vunpack.c.l.b16 %v2903
        %v3455 = vunpack.c.l.b16 %v2904
        %v3456 = vunpack.c.l.b16 %v2905
        %v3457 = vunpack.c.l.b16 %v2906
        %v3458 = vunpack.c.l.b16 %v2907
        %v3459 = vunpack.c.l.b16 %v2908
        %v3460 = vunpack.c.l.b16 %v2909
        %v3461 = vunpack.c.l.b16 %v2910
        %v3462 = vunpack.c.l.b16 %v2911
        %v3463 = vunpack.c.l.b16 %v2912
        %v3464 = vunpack.c.l.b16 %v2913
        %v3465 = vunpack.c.l.b16 %v2914
        %v3466 = vunpack.c.l.b16 %v2915
        %v3467 = vunpack.c.l.b16 %v2916
        %v3468 = vunpack.c.l.b16 %v2917
        %v3469 = vunpack.c.l.b16 %v2918
        %v3470 = vunpack.c.l.b16 %v2919
        %v3471 = vunpack.c.l.b16 %v2920
        %v3472 = vunpack.c.l.b16 %v2921
        %v3473 = vunpack.c.l.b16 %v2922
        %v3474 = vunpack.c.l.b16 %v2923
        %v3475 = vunpack.c.l.b16 %v2924
        %v3476 = vunpack.c.l.b16 %v2925
        %v3477 = vunpack.c.l.b16 %v2926
        %v3478 = vunpack.c.l.b16 %v2927
        %v3479 = vunpack.c.l.b16 %v2928
        %v3480 = vunpack.c.l.b16 %v2929
        %v3481 = vunpack.c.l.b16 %v2930
        %v3482 = vunpack.c.l.b16 %v2931
        %v3483 = vunpack.c.l.b16 %v2932
        %v3484 = vunpack.c.l.b16 %v2933
        %v3485 = vunpack.c.l.b16 %v2934
        %v3486 = vunpack.c.l.b16 %v2935
        %v3487 = vunpack.c.l.b16 %v2936
        %v3488 = vunpack.c.l.b16 %v2937
        %v3489 = vunpack.c.l.b16 %v2938
        %v3490 = vunpack.c.l.b16 %v2939
        %v3491 = vunpack.c.l.b16 %v2940
        %v3492 = vunpack.c.l.b16 %v2941
        %v3493 = vunpack.c.l.b16 %v2942
        %v3494 = vunpack.c.l.b16 %v2943
        %v3495 = vunpack.c.l.b16 %v2944
        %v3496 = vunpack.c.l.b16 %v2945
        %v3497 = vunpack.c.l.b16 %v2946
        %v3498 = vunpack.c.l.b16 %v2947
        %v3499 = vunpack.c.l.b16 %v2948
        %v3500 = vunpack.c.l.b16 %v2949
        %v3501 = vunpack.c.l.b16 %v2950
        %v3502 = vpack.c.b16 %v3431, %v3430
        %v3503 = vpack.c.b16 %v3433, %v3432
        %v3504 = vpack.c.b16 %v3435, %v3434
        %v3505 = vpack.c.b16 %v3437, %v3436
        %v3506 = vpack.c.b16 %v3439, %v3438
        %v3507 = vpack.c.b16 %v3441, %v3440
        %v3508 = vpack.c.b16 %v3443, %v3442
        %v3509 = vpack.c.b16 %v3445, %v3444
        %v3510 = vpack.c.b16 %v3447, %v3446
        %v3511 = vpack.c.b16 %v3449, %v3448
        %v3512 = vpack.c.b16 %v3451, %v3450
        %v3513 = vpack.c.b16 %v3453, %v3452
        %v3514 = vpack.c.b16 %v3455, %v3454
        %v3515 = vpack.c.b16 %v3457, %v3456
        %v3516 = vpack.c.b16 %v3459, %v3458
        %v3517 = vpack.c.b16 %v3461, %v3460
        %v3518 = vpack.c.b16 %v3463, %v3462
        %v3519 = vpack.c.b16 %v3465, %v3464
        %v3520 = vpack.c.b16 %v3467, %v3466
        %v3521 = vpack.c.b16 %v3469, %v3468
        %v3522 = vpack.c.b16 %v3471, %v3470
        %v3523 = vpack.c.b16 %v3473, %v3472
        %v3524 = vpack.c.b16 %v3475, %v3474
        %v3525 = vpack.c.b16 %v3477, %v3476
        %v3526 = vpack.c.b16 %v3479, %v3478
        %v3527 = vpack.c.b16 %v3481, %v3480
        %v3528 = vpack.c.b16 %v3483, %v3482
        %v3529 = vpack.c.b16 %v3485, %v3484
        %v3530 = vpack.c.b16 %v3487, %v3486
        %v3531 = vpack.c.b16 %v3489, %v3488
        %v3532 = vpack.c.b16 %v3491, %v3490
        %v3533 = vpack.c.b16 %v3493, %v3492
        %v3534 = vpack.c.b16 %v3495, %v3494
        %v3535 = vpack.c.b16 %v3497, %v3496
        %v3536 = vpack.c.b16 %v3499, %v3498
        %v3537 = vpack.c.b16 %v3501, %v3500
        %v3575 = vsel %vm360, %v3218, 0
        %v3578 = vsel %vm360, %v3223, 0
        %v3581 = vsel %vm360, %v3228, 0
        %v3584 = vsel %vm360, %v3233, 0
        %v3587 = vsel %vm360, %v3238, 0
        %v3590 = vsel %vm360, %v3243, 0
        %v3593 = vsel %vm360, %v3248, 0
        %v3596 = vsel %vm360, %v3253, 0
        %v3599 = vsel %vm360, %v3258, 0
        %v3602 = vsel %vm360, %v3263, 0
        %v3605 = vsel %vm360, %v3268, 0
        %v3608 = vsel %vm360, %v3273, 0
        %v3611 = vsel %vm360, %v3278, 0
        %v3614 = vsel %vm360, %v3283, 0
        %v3617 = vsel %vm360, %v3288, 0
        %v3620 = vsel %vm360, %v3293, 0
        %3622 = vmatprep.subr.bf16.mxu0 0
        %3623 = vmatpush1.bf16.msra.mxu0 %v3509
        %3624 = vmatprep.subr.bf16.mxu0 0
        %3625 = vmatpush1.bf16.msra.mxu0 %v3508
        %3626 = vmatprep.subr.bf16.mxu0 0
        %3627 = vmatpush1.bf16.msra.mxu0 %v3507
        %3628 = vmatprep.subr.bf16.mxu0 0
        %3629 = vmatpush1.bf16.msra.mxu0 %v3506
        %3630 = vmatprep.subr.bf16.mxu0 0
        %3631 = vmatpush1.bf16.msra.mxu0 %v3505
        %3632 = vmatprep.subr.bf16.mxu0 0
        %3633 = vmatpush1.bf16.msra.mxu0 %v3504
        %3634 = vmatprep.subr.bf16.mxu0 0
        %3635 = vmatpush1.bf16.msra.mxu0 %v3503
        %3636 = vmatprep.subr.bf16.mxu0 0
        %3637 = vmatpush1.bf16.msra.mxu0 %v3502
        %3638 = vmatprep.subr.bf16.mxu0 0
        %3639 = vmatpush2.bf16.msra.mxu0 %v3517
        %3640 = vmatprep.subr.bf16.mxu0 0
        %3641 = vmatpush2.bf16.msra.mxu0 %v3516
        %3642 = vmatprep.subr.bf16.mxu0 0
        %3643 = vmatpush2.bf16.msra.mxu0 %v3515
        %3644 = vmatprep.subr.bf16.mxu0 0
        %3645 = vmatpush2.bf16.msra.mxu0 %v3514
        %3646 = vmatprep.subr.bf16.mxu0 0
        %3647 = vmatpush2.bf16.msra.mxu0 %v3513
        %3648 = vmatprep.subr.bf16.mxu0 0
        %3649 = vmatpush2.bf16.msra.mxu0 %v3512
        %3650 = vmatprep.subr.bf16.mxu0 0
        %3651 = vmatpush2.bf16.msra.mxu0 %v3511
        %3652 = vmatprep.subr.bf16.mxu0 0
        %3653 = vmatpush2.bf16.msra.mxu0 %v3510
        %3654 = vmatprep.mubr.bf16.mxu0 %v3215
        %3655 = vmatmul.mubr.bf16.gmra.mxu0 %v3214
        %v3656 = vpop.f32.mrf.mxu0
        %v3657 = vadd.f32 %v2956, %v3656
        %v3658 = vpop.f32.mrf.mxu0
        %v3659 = vpop.f32.mrf.mxu0
        %v3660 = vadd.f32 %v2956, %v3659
        %v3661 = vpop.f32.mrf.mxu0
        %3662 = vmatprep.mubr.bf16.mxu0 %v3220
        %3663 = vmatmul.mubr.bf16.gmra.mxu0 %v3219
        %v3664 = vpop.f32.mrf.mxu0
        %v3665 = vadd.f32 %v2956, %v3664
        %v3666 = vpop.f32.mrf.mxu0
        %v3667 = vpop.f32.mrf.mxu0
        %v3668 = vadd.f32 %v2956, %v3667
        %v3669 = vpop.f32.mrf.mxu0
        %3670 = vmatprep.mubr.bf16.mxu0 %v3225
        %3671 = vmatmul.mubr.bf16.gmra.mxu0 %v3224
        %v3672 = vpop.f32.mrf.mxu0
        %v3673 = vadd.f32 %v2956, %v3672
        %v3674 = vpop.f32.mrf.mxu0
        %v3675 = vpop.f32.mrf.mxu0
        %v3676 = vadd.f32 %v2956, %v3675
        %v3677 = vpop.f32.mrf.mxu0
        %3678 = vmatprep.mubr.bf16.mxu0 %v3230
        %3679 = vmatmul.mubr.bf16.gmra.mxu0 %v3229
        %v3680 = vpop.f32.mrf.mxu0
        %v3681 = vadd.f32 %v2956, %v3680
        %v3682 = vpop.f32.mrf.mxu0
        %v3683 = vpop.f32.mrf.mxu0
        %v3684 = vadd.f32 %v2956, %v3683
        %v3685 = vpop.f32.mrf.mxu0
        %3686 = vmatprep.mubr.bf16.mxu0 %v3235
        %3687 = vmatmul.mubr.bf16.gmra.mxu0 %v3234
        %v3688 = vpop.f32.mrf.mxu0
        %v3689 = vadd.f32 %v2956, %v3688
        %v3690 = vpop.f32.mrf.mxu0
        %v3691 = vpop.f32.mrf.mxu0
        %v3692 = vadd.f32 %v2956, %v3691
        %v3693 = vpop.f32.mrf.mxu0
        %3694 = vmatprep.mubr.bf16.mxu0 %v3240
        %3695 = vmatmul.mubr.bf16.gmra.mxu0 %v3239
        %v3696 = vpop.f32.mrf.mxu0
        %v3697 = vadd.f32 %v2956, %v3696
        %v3698 = vpop.f32.mrf.mxu0
        %v3699 = vpop.f32.mrf.mxu0
        %v3700 = vadd.f32 %v2956, %v3699
        %v3701 = vpop.f32.mrf.mxu0
        %3702 = vmatprep.mubr.bf16.mxu0 %v3245
        %3703 = vmatmul.mubr.bf16.gmra.mxu0 %v3244
        %v3704 = vpop.f32.mrf.mxu0
        %v3705 = vadd.f32 %v2956, %v3704
        %v3706 = vpop.f32.mrf.mxu0
        %v3707 = vpop.f32.mrf.mxu0
        %v3708 = vadd.f32 %v2956, %v3707
        %v3709 = vpop.f32.mrf.mxu0
        %3710 = vmatprep.mubr.bf16.mxu0 %v3250
        %3711 = vmatmul.mubr.bf16.gmra.mxu0 %v3249
        %v3712 = vpop.f32.mrf.mxu0
        %v3713 = vadd.f32 %v2956, %v3712
        %v3714 = vpop.f32.mrf.mxu0
        %v3715 = vpop.f32.mrf.mxu0
        %v3716 = vadd.f32 %v2956, %v3715
        %v3717 = vpop.f32.mrf.mxu0
        %3718 = vmatprep.mubr.bf16.mxu0 %v3255
        %3719 = vmatmul.mubr.bf16.gmra.mxu0 %v3254
        %v3720 = vpop.f32.mrf.mxu0
        %v3721 = vadd.f32 %v2956, %v3720
        %v3722 = vpop.f32.mrf.mxu0
        %v3723 = vpop.f32.mrf.mxu0
        %v3724 = vadd.f32 %v2956, %v3723
        %v3725 = vpop.f32.mrf.mxu0
        %3726 = vmatprep.mubr.bf16.mxu0 %v3260
        %3727 = vmatmul.mubr.bf16.gmra.mxu0 %v3259
        %v3728 = vpop.f32.mrf.mxu0
        %v3729 = vadd.f32 %v2956, %v3728
        %v3730 = vpop.f32.mrf.mxu0
        %v3731 = vpop.f32.mrf.mxu0
        %v3732 = vadd.f32 %v2956, %v3731
        %v3733 = vpop.f32.mrf.mxu0
        %3734 = vmatprep.mubr.bf16.mxu0 %v3265
        %3735 = vmatmul.mubr.bf16.gmra.mxu0 %v3264
        %v3736 = vpop.f32.mrf.mxu0
        %v3737 = vadd.f32 %v2956, %v3736
        %v3738 = vpop.f32.mrf.mxu0
        %v3739 = vpop.f32.mrf.mxu0
        %v3740 = vadd.f32 %v2956, %v3739
        %v3741 = vpop.f32.mrf.mxu0
        %3742 = vmatprep.mubr.bf16.mxu0 %v3270
        %3743 = vmatmul.mubr.bf16.gmra.mxu0 %v3269
        %v3744 = vpop.f32.mrf.mxu0
        %v3745 = vadd.f32 %v2956, %v3744
        %v3746 = vpop.f32.mrf.mxu0
        %v3747 = vpop.f32.mrf.mxu0
        %v3748 = vadd.f32 %v2956, %v3747
        %v3749 = vpop.f32.mrf.mxu0
        %3750 = vmatprep.mubr.bf16.mxu0 %v3275
        %3751 = vmatmul.mubr.bf16.gmra.mxu0 %v3274
        %v3752 = vpop.f32.mrf.mxu0
        %v3753 = vadd.f32 %v2956, %v3752
        %v3754 = vpop.f32.mrf.mxu0
        %v3755 = vpop.f32.mrf.mxu0
        %v3756 = vadd.f32 %v2956, %v3755
        %v3757 = vpop.f32.mrf.mxu0
        %3758 = vmatprep.mubr.bf16.mxu0 %v3280
        %3759 = vmatmul.mubr.bf16.gmra.mxu0 %v3279
        %v3760 = vpop.f32.mrf.mxu0
        %v3761 = vadd.f32 %v2956, %v3760
        %v3762 = vpop.f32.mrf.mxu0
        %v3763 = vpop.f32.mrf.mxu0
        %v3764 = vadd.f32 %v2956, %v3763
        %v3765 = vpop.f32.mrf.mxu0
        %3766 = vmatprep.mubr.bf16.mxu0 %v3285
        %3767 = vmatmul.mubr.bf16.gmra.mxu0 %v3284
        %v3768 = vpop.f32.mrf.mxu0
        %v3769 = vadd.f32 %v2956, %v3768
        %v3770 = vpop.f32.mrf.mxu0
        %v3771 = vpop.f32.mrf.mxu0
        %v3772 = vadd.f32 %v2956, %v3771
        %v3773 = vpop.f32.mrf.mxu0
        %3774 = vmatprep.mubr.bf16.mxu0 %v3290
        %3775 = vmatmul.mubr.bf16.gmra.mxu0 %v3289
        %v3776 = vpop.f32.mrf.mxu0
        %v3777 = vadd.f32 %v2956, %v3776
        %v3778 = vpop.f32.mrf.mxu0
        %v3779 = vpop.f32.mrf.mxu0
        %v3780 = vadd.f32 %v2956, %v3779
        %v3781 = vpop.f32.mrf.mxu0
        %3782 = vdwg.mxu0
        %3783 = vmatprep.subr.bf16.mxu0 0
        %3784 = vmatpush1.bf16.msra.mxu0 %v3525
        %3785 = vmatprep.subr.bf16.mxu0 0
        %3786 = vmatpush1.bf16.msra.mxu0 %v3524
        %3787 = vmatprep.subr.bf16.mxu0 0
        %3788 = vmatpush1.bf16.msra.mxu0 %v3523
        %3789 = vmatprep.subr.bf16.mxu0 0
        %3790 = vmatpush1.bf16.msra.mxu0 %v3522
        %3791 = vmatprep.subr.bf16.mxu0 0
        %3792 = vmatpush1.bf16.msra.mxu0 %v3521
        %3793 = vmatprep.subr.bf16.mxu0 0
        %3794 = vmatpush1.bf16.msra.mxu0 %v3520
        %3795 = vmatprep.subr.bf16.mxu0 0
        %3796 = vmatpush1.bf16.msra.mxu0 %v3519
        %3797 = vmatprep.subr.bf16.mxu0 0
        %3798 = vmatpush1.bf16.msra.mxu0 %v3518
        %3799 = vmatprep.subr.bf16.mxu0 0
        %3800 = vmatpush2.bf16.msra.mxu0 %v3533
        %3801 = vmatprep.subr.bf16.mxu0 0
        %3802 = vmatpush2.bf16.msra.mxu0 %v3532
        %3803 = vmatprep.subr.bf16.mxu0 0
        %3804 = vmatpush2.bf16.msra.mxu0 %v3531
        %3805 = vmatprep.subr.bf16.mxu0 0
        %3806 = vmatpush2.bf16.msra.mxu0 %v3530
        %3807 = vmatprep.subr.bf16.mxu0 0
        %3808 = vmatpush2.bf16.msra.mxu0 %v3529
        %3809 = vmatprep.subr.bf16.mxu0 0
        %3810 = vmatpush2.bf16.msra.mxu0 %v3528
        %3811 = vmatprep.subr.bf16.mxu0 0
        %3812 = vmatpush2.bf16.msra.mxu0 %v3527
        %3813 = vmatprep.subr.bf16.mxu0 0
        %3814 = vmatpush2.bf16.msra.mxu0 %v3526
        %3815 = vmatprep.mubr.bf16.mxu0 %v3217
        %3816 = vmatmul.mubr.bf16.gmra.mxu0 %v3216
        %v3817 = vpop.f32.mrf.mxu0
        %v3818 = vadd.f32 %v3657, %v3817
        %v3819 = vpop.f32.mrf.mxu0
        %v3820 = vpop.f32.mrf.mxu0
        %v3821 = vadd.f32 %v3660, %v3820
        %v3822 = vpop.f32.mrf.mxu0
        %3823 = vmatprep.mubr.bf16.mxu0 %v3222
        %3824 = vmatmul.mubr.bf16.gmra.mxu0 %v3221
        %v3825 = vpop.f32.mrf.mxu0
        %v3826 = vadd.f32 %v3665, %v3825
        %v3827 = vpop.f32.mrf.mxu0
        %v3828 = vpop.f32.mrf.mxu0
        %v3829 = vadd.f32 %v3668, %v3828
        %v3830 = vpop.f32.mrf.mxu0
        %3831 = vmatprep.mubr.bf16.mxu0 %v3227
        %3832 = vmatmul.mubr.bf16.gmra.mxu0 %v3226
        %v3833 = vpop.f32.mrf.mxu0
        %v3834 = vadd.f32 %v3673, %v3833
        %v3835 = vpop.f32.mrf.mxu0
        %v3836 = vpop.f32.mrf.mxu0
        %v3837 = vadd.f32 %v3676, %v3836
        %v3838 = vpop.f32.mrf.mxu0
        %3839 = vmatprep.mubr.bf16.mxu0 %v3232
        %3840 = vmatmul.mubr.bf16.gmra.mxu0 %v3231
        %v3841 = vpop.f32.mrf.mxu0
        %v3842 = vadd.f32 %v3681, %v3841
        %v3843 = vpop.f32.mrf.mxu0
        %v3844 = vpop.f32.mrf.mxu0
        %v3845 = vadd.f32 %v3684, %v3844
        %v3846 = vpop.f32.mrf.mxu0
        %3847 = vmatprep.mubr.bf16.mxu0 %v3237
        %3848 = vmatmul.mubr.bf16.gmra.mxu0 %v3236
        %v3849 = vpop.f32.mrf.mxu0
        %v3850 = vadd.f32 %v3689, %v3849
        %v3851 = vpop.f32.mrf.mxu0
        %v3852 = vpop.f32.mrf.mxu0
        %v3853 = vadd.f32 %v3692, %v3852
        %v3854 = vpop.f32.mrf.mxu0
        %3855 = vmatprep.mubr.bf16.mxu0 %v3242
        %3856 = vmatmul.mubr.bf16.gmra.mxu0 %v3241
        %v3857 = vpop.f32.mrf.mxu0
        %v3858 = vadd.f32 %v3697, %v3857
        %v3859 = vpop.f32.mrf.mxu0
        %v3860 = vpop.f32.mrf.mxu0
        %v3861 = vadd.f32 %v3700, %v3860
        %v3862 = vpop.f32.mrf.mxu0
        %3863 = vmatprep.mubr.bf16.mxu0 %v3247
        %3864 = vmatmul.mubr.bf16.gmra.mxu0 %v3246
        %v3865 = vpop.f32.mrf.mxu0
        %v3866 = vadd.f32 %v3705, %v3865
        %v3867 = vpop.f32.mrf.mxu0
        %v3868 = vpop.f32.mrf.mxu0
        %v3869 = vadd.f32 %v3708, %v3868
        %v3870 = vpop.f32.mrf.mxu0
        %3871 = vmatprep.mubr.bf16.mxu0 %v3252
        %3872 = vmatmul.mubr.bf16.gmra.mxu0 %v3251
        %v3873 = vpop.f32.mrf.mxu0
        %v3874 = vadd.f32 %v3713, %v3873
        %v3875 = vpop.f32.mrf.mxu0
        %v3876 = vpop.f32.mrf.mxu0
        %v3877 = vadd.f32 %v3716, %v3876
        %v3878 = vpop.f32.mrf.mxu0
        %3879 = vmatprep.mubr.bf16.mxu0 %v3257
        %3880 = vmatmul.mubr.bf16.gmra.mxu0 %v3256
        %v3881 = vpop.f32.mrf.mxu0
        %v3882 = vadd.f32 %v3721, %v3881
        %v3883 = vpop.f32.mrf.mxu0
        %v3884 = vpop.f32.mrf.mxu0
        %v3885 = vadd.f32 %v3724, %v3884
        %v3886 = vpop.f32.mrf.mxu0
        %3887 = vmatprep.mubr.bf16.mxu0 %v3262
        %3888 = vmatmul.mubr.bf16.gmra.mxu0 %v3261
        %v3889 = vpop.f32.mrf.mxu0
        %v3890 = vadd.f32 %v3729, %v3889
        %v3891 = vpop.f32.mrf.mxu0
        %v3892 = vpop.f32.mrf.mxu0
        %v3893 = vadd.f32 %v3732, %v3892
        %v3894 = vpop.f32.mrf.mxu0
        %3895 = vmatprep.mubr.bf16.mxu0 %v3267
        %3896 = vmatmul.mubr.bf16.gmra.mxu0 %v3266
        %v3897 = vpop.f32.mrf.mxu0
        %v3898 = vadd.f32 %v3737, %v3897
        %v3899 = vpop.f32.mrf.mxu0
        %v3900 = vpop.f32.mrf.mxu0
        %v3901 = vadd.f32 %v3740, %v3900
        %v3902 = vpop.f32.mrf.mxu0
        %3903 = vmatprep.mubr.bf16.mxu0 %v3272
        %3904 = vmatmul.mubr.bf16.gmra.mxu0 %v3271
        %v3905 = vpop.f32.mrf.mxu0
        %v3906 = vadd.f32 %v3745, %v3905
        %v3907 = vpop.f32.mrf.mxu0
        %v3908 = vpop.f32.mrf.mxu0
        %v3909 = vadd.f32 %v3748, %v3908
        %v3910 = vpop.f32.mrf.mxu0
        %3911 = vmatprep.mubr.bf16.mxu0 %v3277
        %3912 = vmatmul.mubr.bf16.gmra.mxu0 %v3276
        %v3913 = vpop.f32.mrf.mxu0
        %v3914 = vadd.f32 %v3753, %v3913
        %v3915 = vpop.f32.mrf.mxu0
        %v3916 = vpop.f32.mrf.mxu0
        %v3917 = vadd.f32 %v3756, %v3916
        %v3918 = vpop.f32.mrf.mxu0
        %3919 = vmatprep.mubr.bf16.mxu0 %v3282
        %3920 = vmatmul.mubr.bf16.gmra.mxu0 %v3281
        %v3921 = vpop.f32.mrf.mxu0
        %v3922 = vadd.f32 %v3761, %v3921
        %v3923 = vpop.f32.mrf.mxu0
        %v3924 = vpop.f32.mrf.mxu0
        %v3925 = vadd.f32 %v3764, %v3924
        %v3926 = vpop.f32.mrf.mxu0
        %3927 = vmatprep.mubr.bf16.mxu0 %v3287
        %3928 = vmatmul.mubr.bf16.gmra.mxu0 %v3286
        %v3929 = vpop.f32.mrf.mxu0
        %v3930 = vadd.f32 %v3769, %v3929
        %v3931 = vpop.f32.mrf.mxu0
        %v3932 = vpop.f32.mrf.mxu0
        %v3933 = vadd.f32 %v3772, %v3932
        %v3934 = vpop.f32.mrf.mxu0
        %3935 = vmatprep.mubr.bf16.mxu0 %v3292
        %3936 = vmatmul.mubr.bf16.gmra.mxu0 %v3291
        %v3937 = vpop.f32.mrf.mxu0
        %v3938 = vadd.f32 %v3777, %v3937
        %v3939 = vpop.f32.mrf.mxu0
        %v3940 = vpop.f32.mrf.mxu0
        %v3941 = vadd.f32 %v3780, %v3940
        %v3942 = vpop.f32.mrf.mxu0
        %3943 = vdwg.mxu0
        %3944 = vmatprep.subr.bf16.mxu0 0
        %3945 = vmatpush1.bf16.msra.mxu0 0
        %3946 = vmatprep.subr.bf16.mxu0 0
        %3947 = vmatpush1.bf16.msra.mxu0 0
        %3948 = vmatprep.subr.bf16.mxu0 0
        %3949 = vmatpush1.bf16.msra.mxu0 0
        %3950 = vmatprep.subr.bf16.mxu0 0
        %3951 = vmatpush1.bf16.msra.mxu0 0
        %3952 = vmatprep.subr.bf16.mxu0 0
        %3953 = vmatpush1.bf16.msra.mxu0 %v3537
        %3954 = vmatprep.subr.bf16.mxu0 0
        %3955 = vmatpush1.bf16.msra.mxu0 %v3536
        %3956 = vmatprep.subr.bf16.mxu0 0
        %3957 = vmatpush1.bf16.msra.mxu0 %v3535
        %3958 = vmatprep.subr.bf16.mxu0 0
        %3959 = vmatpush1.bf16.msra.mxu0 %v3534
        %3960 = vmatprep.subr.bf16.mxu0 0
        %3961 = vmatpush2.bf16.msra.mxu0 0
        %3962 = vmatprep.subr.bf16.mxu0 0
        %3963 = vmatpush2.bf16.msra.mxu0 0
        %3964 = vmatprep.subr.bf16.mxu0 0
        %3965 = vmatpush2.bf16.msra.mxu0 0
        %3966 = vmatprep.subr.bf16.mxu0 0
        %3967 = vmatpush2.bf16.msra.mxu0 0
        %3968 = vmatprep.subr.bf16.mxu0 0
        %3969 = vmatpush2.bf16.msra.mxu0 0
        %3970 = vmatprep.subr.bf16.mxu0 0
        %3971 = vmatpush2.bf16.msra.mxu0 0
        %3972 = vmatprep.subr.bf16.mxu0 0
        %3973 = vmatpush2.bf16.msra.mxu0 0
        %3974 = vmatprep.subr.bf16.mxu0 0
        %3975 = vmatpush2.bf16.msra.mxu0 0
        %3976 = vmatprep.mubr.bf16.mxu0 0
        %3977 = vmatmul.mubr.bf16.gmra.mxu0 %v3575
        %v3978 = vpop.f32.mrf.mxu0
        %v3979 = vadd.f32 %v3818, %v3978
        %v3980 = vpop.f32.mrf.mxu0
        %v3981 = vpop.f32.mrf.mxu0
        %v3982 = vadd.f32 %v3821, %v3981
        %v3983 = vpop.f32.mrf.mxu0
        %3984 = vmatprep.mubr.bf16.mxu0 0
        %3985 = vmatmul.mubr.bf16.gmra.mxu0 %v3578
        %v3986 = vpop.f32.mrf.mxu0
        %v3987 = vadd.f32 %v3826, %v3986
        %v3988 = vpop.f32.mrf.mxu0
        %v3989 = vpop.f32.mrf.mxu0
        %v3990 = vadd.f32 %v3829, %v3989
        %v3991 = vpop.f32.mrf.mxu0
        %3992 = vmatprep.mubr.bf16.mxu0 0
        %3993 = vmatmul.mubr.bf16.gmra.mxu0 %v3581
        %v3994 = vpop.f32.mrf.mxu0
        %v3995 = vadd.f32 %v3834, %v3994
        %v3996 = vpop.f32.mrf.mxu0
        %v3997 = vpop.f32.mrf.mxu0
        %v3998 = vadd.f32 %v3837, %v3997
        %v3999 = vpop.f32.mrf.mxu0
        %4000 = vmatprep.mubr.bf16.mxu0 0
        %4001 = vmatmul.mubr.bf16.gmra.mxu0 %v3584
        %v4002 = vpop.f32.mrf.mxu0
        %v4003 = vadd.f32 %v3842, %v4002
        %v4004 = vpop.f32.mrf.mxu0
        %v4005 = vpop.f32.mrf.mxu0
        %v4006 = vadd.f32 %v3845, %v4005
        %v4007 = vpop.f32.mrf.mxu0
        %4008 = vmatprep.mubr.bf16.mxu0 0
        %4009 = vmatmul.mubr.bf16.gmra.mxu0 %v3587
        %v4010 = vpop.f32.mrf.mxu0
        %v4011 = vadd.f32 %v3850, %v4010
        %v4012 = vpop.f32.mrf.mxu0
        %v4013 = vpop.f32.mrf.mxu0
        %v4014 = vadd.f32 %v3853, %v4013
        %v4015 = vpop.f32.mrf.mxu0
        %4016 = vmatprep.mubr.bf16.mxu0 0
        %4017 = vmatmul.mubr.bf16.gmra.mxu0 %v3590
        %v4018 = vpop.f32.mrf.mxu0
        %v4019 = vadd.f32 %v3858, %v4018
        %v4020 = vpop.f32.mrf.mxu0
        %v4021 = vpop.f32.mrf.mxu0
        %v4022 = vadd.f32 %v3861, %v4021
        %v4023 = vpop.f32.mrf.mxu0
        %4024 = vmatprep.mubr.bf16.mxu0 0
        %4025 = vmatmul.mubr.bf16.gmra.mxu0 %v3593
        %v4026 = vpop.f32.mrf.mxu0
        %v4027 = vadd.f32 %v3866, %v4026
        %v4028 = vpop.f32.mrf.mxu0
        %v4029 = vpop.f32.mrf.mxu0
        %v4030 = vadd.f32 %v3869, %v4029
        %v4031 = vpop.f32.mrf.mxu0
        %4032 = vmatprep.mubr.bf16.mxu0 0
        %4033 = vmatmul.mubr.bf16.gmra.mxu0 %v3596
        %v4034 = vpop.f32.mrf.mxu0
        %v4035 = vadd.f32 %v3874, %v4034
        %v4036 = vpop.f32.mrf.mxu0
        %v4037 = vpop.f32.mrf.mxu0
        %v4038 = vadd.f32 %v3877, %v4037
        %v4039 = vpop.f32.mrf.mxu0
        %4040 = vmatprep.mubr.bf16.mxu0 0
        %4041 = vmatmul.mubr.bf16.gmra.mxu0 %v3599
        %v4042 = vpop.f32.mrf.mxu0
        %v4043 = vadd.f32 %v3882, %v4042
        %v4044 = vpop.f32.mrf.mxu0
        %v4045 = vpop.f32.mrf.mxu0
        %v4046 = vadd.f32 %v3885, %v4045
        %v4047 = vpop.f32.mrf.mxu0
        %4048 = vmatprep.mubr.bf16.mxu0 0
        %4049 = vmatmul.mubr.bf16.gmra.mxu0 %v3602
        %v4050 = vpop.f32.mrf.mxu0
        %v4051 = vadd.f32 %v3890, %v4050
        %v4052 = vpop.f32.mrf.mxu0
        %v4053 = vpop.f32.mrf.mxu0
        %v4054 = vadd.f32 %v3893, %v4053
        %v4055 = vpop.f32.mrf.mxu0
        %4056 = vmatprep.mubr.bf16.mxu0 0
        %4057 = vmatmul.mubr.bf16.gmra.mxu0 %v3605
        %v4058 = vpop.f32.mrf.mxu0
        %v4059 = vadd.f32 %v3898, %v4058
        %v4060 = vpop.f32.mrf.mxu0
        %v4061 = vpop.f32.mrf.mxu0
        %v4062 = vadd.f32 %v3901, %v4061
        %v4063 = vpop.f32.mrf.mxu0
        %4064 = vmatprep.mubr.bf16.mxu0 0
        %4065 = vmatmul.mubr.bf16.gmra.mxu0 %v3608
        %v4066 = vpop.f32.mrf.mxu0
        %v4067 = vadd.f32 %v3906, %v4066
        %v4068 = vpop.f32.mrf.mxu0
        %v4069 = vpop.f32.mrf.mxu0
        %v4070 = vadd.f32 %v3909, %v4069
        %v4071 = vpop.f32.mrf.mxu0
        %4072 = vmatprep.mubr.bf16.mxu0 0
        %4073 = vmatmul.mubr.bf16.gmra.mxu0 %v3611
        %v4074 = vpop.f32.mrf.mxu0
        %v4075 = vadd.f32 %v3914, %v4074
        %v4076 = vpop.f32.mrf.mxu0
        %v4077 = vpop.f32.mrf.mxu0
        %v4078 = vadd.f32 %v3917, %v4077
        %v4079 = vpop.f32.mrf.mxu0
        %4080 = vmatprep.mubr.bf16.mxu0 0
        %4081 = vmatmul.mubr.bf16.gmra.mxu0 %v3614
        %v4082 = vpop.f32.mrf.mxu0
        %v4083 = vadd.f32 %v3922, %v4082
        %v4084 = vpop.f32.mrf.mxu0
        %v4085 = vpop.f32.mrf.mxu0
        %v4086 = vadd.f32 %v3925, %v4085
        %v4087 = vpop.f32.mrf.mxu0
        %4088 = vmatprep.mubr.bf16.mxu0 0
        %4089 = vmatmul.mubr.bf16.gmra.mxu0 %v3617
        %v4090 = vpop.f32.mrf.mxu0
        %v4091 = vadd.f32 %v3930, %v4090
        %v4092 = vpop.f32.mrf.mxu0
        %v4093 = vpop.f32.mrf.mxu0
        %v4094 = vadd.f32 %v3933, %v4093
        %v4095 = vpop.f32.mrf.mxu0
        %4096 = vmatprep.mubr.bf16.mxu0 0
        %4097 = vmatmul.mubr.bf16.gmra.mxu0 %v3620
        %v4098 = vpop.f32.mrf.mxu0
        %v4099 = vadd.f32 %v3938, %v4098
        %v4100 = vpop.f32.mrf.mxu0
        %v4101 = vpop.f32.mrf.mxu0
        %v4102 = vadd.f32 %v3941, %v4101
        %v4103 = vpop.f32.mrf.mxu0
        %4104 = vdwg.mxu0
        %v4105 = vmax.f32 %v3979, 0.0
        %v4106 = vmax.f32 %v3982, 0.0
        %v4107 = vmax.f32 %v3987, 0.0
        %v4108 = vmax.f32 %v3990, 0.0
        %v4109 = vmax.f32 %v3995, 0.0
        %v4110 = vmax.f32 %v3998, 0.0
        %v4111 = vmax.f32 %v4003, 0.0
        %v4112 = vmax.f32 %v4006, 0.0
        %v4113 = vmax.f32 %v4011, 0.0
        %v4114 = vmax.f32 %v4014, 0.0
        %v4115 = vmax.f32 %v4019, 0.0
        %v4116 = vmax.f32 %v4022, 0.0
        %v4117 = vmax.f32 %v4027, 0.0
        %v4118 = vmax.f32 %v4030, 0.0
        %v4119 = vmax.f32 %v4035, 0.0
        %v4120 = vmax.f32 %v4038, 0.0
        %v4121 = vmax.f32 %v4043, 0.0
        %v4122 = vmax.f32 %v4046, 0.0
        %v4123 = vmax.f32 %v4051, 0.0
        %v4124 = vmax.f32 %v4054, 0.0
        %v4125 = vmax.f32 %v4059, 0.0
        %v4126 = vmax.f32 %v4062, 0.0
        %v4127 = vmax.f32 %v4067, 0.0
        %v4128 = vmax.f32 %v4070, 0.0
        %v4129 = vmax.f32 %v4075, 0.0
        %v4130 = vmax.f32 %v4078, 0.0
        %v4131 = vmax.f32 %v4083, 0.0
        %v4132 = vmax.f32 %v4086, 0.0
        %v4133 = vmax.f32 %v4091, 0.0
        %v4134 = vmax.f32 %v4094, 0.0
        %v4135 = vmax.f32 %v4099, 0.0
        %v4136 = vmax.f32 %v4102, 0.0
        %4137 = vst.msk [vmem:[#allocation2] sm:$0xff] %vm360, %v4105
        %4138 = vst.msk [vmem:[#allocation2 + $0x8] sm:$0xff] %vm360, %v4106
        %4139 = vst.msk [vmem:[#allocation2 + $0x10] sm:$0xff] %vm360, %v4107
        %4140 = vst.msk [vmem:[#allocation2 + $0x18] sm:$0xff] %vm360, %v4108
        %4141 = vst.msk [vmem:[#allocation2 + $0x20] sm:$0xff] %vm360, %v4109
        %4142 = vst.msk [vmem:[#allocation2 + $0x28] sm:$0xff] %vm360, %v4110
        %4143 = vst.msk [vmem:[#allocation2 + $0x30] sm:$0xff] %vm360, %v4111
        %4144 = vst.msk [vmem:[#allocation2 + $0x38] sm:$0xff] %vm360, %v4112
        %4145 = vst.msk [vmem:[#allocation2 + $0x40] sm:$0xff] %vm360, %v4113
        %4146 = vst.msk [vmem:[#allocation2 + $0x48] sm:$0xff] %vm360, %v4114
        %4147 = vst.msk [vmem:[#allocation2 + $0x50] sm:$0xff] %vm360, %v4115
        %4148 = vst.msk [vmem:[#allocation2 + $0x58] sm:$0xff] %vm360, %v4116
        %4149 = vst.msk [vmem:[#allocation2 + $0x60] sm:$0xff] %vm360, %v4117
        %4150 = vst.msk [vmem:[#allocation2 + $0x68] sm:$0xff] %vm360, %v4118
        %4151 = vst.msk [vmem:[#allocation2 + $0x70] sm:$0xff] %vm360, %v4119
        %4152 = vst.msk [vmem:[#allocation2 + $0x78] sm:$0xff] %vm360, %v4120
        %4153 = vst.msk [vmem:[#allocation2 + $0x80] sm:$0xff] %vm360, %v4121
        %4154 = vst.msk [vmem:[#allocation2 + $0x88] sm:$0xff] %vm360, %v4122
        %4155 = vst.msk [vmem:[#allocation2 + $0x90] sm:$0xff] %vm360, %v4123
        %4156 = vst.msk [vmem:[#allocation2 + $0x98] sm:$0xff] %vm360, %v4124
        %4157 = vst.msk [vmem:[#allocation2 + $0xa0] sm:$0xff] %vm360, %v4125
        %4158 = vst.msk [vmem:[#allocation2 + $0xa8] sm:$0xff] %vm360, %v4126
        %4159 = vst.msk [vmem:[#allocation2 + $0xb0] sm:$0xff] %vm360, %v4127
        %4160 = vst.msk [vmem:[#allocation2 + $0xb8] sm:$0xff] %vm360, %v4128
        %4161 = vst.msk [vmem:[#allocation2 + $0xc0] sm:$0xff] %vm360, %v4129
        %4162 = vst.msk [vmem:[#allocation2 + $0xc8] sm:$0xff] %vm360, %v4130
        %4163 = vst.msk [vmem:[#allocation2 + $0xd0] sm:$0xff] %vm360, %v4131
        %4164 = vst.msk [vmem:[#allocation2 + $0xd8] sm:$0xff] %vm360, %v4132
        %4165 = vst.msk [vmem:[#allocation2 + $0xe0] sm:$0xff] %vm360, %v4133
        %4166 = vst.msk [vmem:[#allocation2 + $0xe8] sm:$0xff] %vm360, %v4134
        %4167 = vst.msk [vmem:[#allocation2 + $0xf0] sm:$0xff] %vm360, %v4135
        %4168 = vst.msk [vmem:[#allocation2 + $0xf8] sm:$0xff] %vm360, %v4136
        %v4169 = vld [vmem:[#allocation2] sm:$0xff]
        %v4170 = vld [vmem:[#allocation2 + $0x8] sm:$0xff]
        %v4171 = vld [vmem:[#allocation2 + $0x10] sm:$0xff]
        %v4172 = vld [vmem:[#allocation2 + $0x18] sm:$0xff]
        %v4173 = vld [vmem:[#allocation2 + $0x20] sm:$0xff]
        %v4174 = vld [vmem:[#allocation2 + $0x28] sm:$0xff]
        %v4175 = vld [vmem:[#allocation2 + $0x30] sm:$0xff]
        %v4176 = vld [vmem:[#allocation2 + $0x38] sm:$0xff]
        %v4177 = vld [vmem:[#allocation2 + $0x40] sm:$0xff]
        %v4178 = vld [vmem:[#allocation2 + $0x48] sm:$0xff]
        %v4179 = vld [vmem:[#allocation2 + $0x50] sm:$0xff]
        %v4180 = vld [vmem:[#allocation2 + $0x58] sm:$0xff]
        %v4181 = vld [vmem:[#allocation2 + $0x60] sm:$0xff]
        %v4182 = vld [vmem:[#allocation2 + $0x68] sm:$0xff]
        %v4183 = vld [vmem:[#allocation2 + $0x70] sm:$0xff]
        %v4184 = vld [vmem:[#allocation2 + $0x78] sm:$0xff]
        %v4185 = vld [vmem:[#allocation2 + $0x80] sm:$0xff]
        %v4186 = vld [vmem:[#allocation2 + $0x88] sm:$0xff]
        %v4187 = vld [vmem:[#allocation2 + $0x90] sm:$0xff]
        %v4188 = vld [vmem:[#allocation2 + $0x98] sm:$0xff]
        %v4189 = vld [vmem:[#allocation2 + $0xa0] sm:$0xff]
        %v4190 = vld [vmem:[#allocation2 + $0xa8] sm:$0xff]
        %v4191 = vld [vmem:[#allocation2 + $0xb0] sm:$0xff]
        %v4192 = vld [vmem:[#allocation2 + $0xb8] sm:$0xff]
        %v4193 = vld [vmem:[#allocation2 + $0xc0] sm:$0xff]
        %v4194 = vld [vmem:[#allocation2 + $0xc8] sm:$0xff]
        %v4195 = vld [vmem:[#allocation2 + $0xd0] sm:$0xff]
        %v4196 = vld [vmem:[#allocation2 + $0xd8] sm:$0xff]
        %v4197 = vld [vmem:[#allocation2 + $0xe0] sm:$0xff]
        %v4198 = vld [vmem:[#allocation2 + $0xe8] sm:$0xff]
        %v4199 = vld [vmem:[#allocation2 + $0xf0] sm:$0xff]
        %v4200 = vld [vmem:[#allocation2 + $0xf8] sm:$0xff]
        %v4201 = vpack.c.bf16 %v4170, %v4169
        %v4202 = vpack.c.bf16 %v4172, %v4171
        %v4203 = vpack.c.bf16 %v4174, %v4173
        %v4204 = vpack.c.bf16 %v4176, %v4175
        %v4205 = vpack.c.bf16 %v4178, %v4177
        %v4206 = vpack.c.bf16 %v4180, %v4179
        %v4207 = vpack.c.bf16 %v4182, %v4181
        %v4208 = vpack.c.bf16 %v4184, %v4183
        %v4209 = vpack.c.bf16 %v4186, %v4185
        %v4210 = vpack.c.bf16 %v4188, %v4187
        %v4211 = vpack.c.bf16 %v4190, %v4189
        %v4212 = vpack.c.bf16 %v4192, %v4191
        %v4213 = vpack.c.bf16 %v4194, %v4193
        %v4214 = vpack.c.bf16 %v4196, %v4195
        %v4215 = vpack.c.bf16 %v4198, %v4197
        %v4216 = vpack.c.bf16 %v4200, %v4199
        %v4233 = vunpack.c.l.b16 %v4201
        %v4234 = vunpack.c.h.b16 %v4201
        %v4235 = vunpack.c.l.b16 %v4202
        %v4236 = vunpack.c.h.b16 %v4202
        %v4237 = vunpack.c.l.b16 %v4203
        %v4238 = vunpack.c.h.b16 %v4203
        %v4239 = vunpack.c.l.b16 %v4204
        %v4240 = vunpack.c.h.b16 %v4204
        %v4241 = vunpack.c.l.b16 %v4205
        %v4242 = vunpack.c.h.b16 %v4205
        %v4243 = vunpack.c.l.b16 %v4206
        %v4244 = vunpack.c.h.b16 %v4206
        %v4245 = vunpack.c.l.b16 %v4207
        %v4246 = vunpack.c.h.b16 %v4207
        %v4247 = vunpack.c.l.b16 %v4208
        %v4248 = vunpack.c.h.b16 %v4208
        %v4249 = vunpack.c.l.b16 %v4209
        %v4250 = vunpack.c.h.b16 %v4209
        %v4251 = vunpack.c.l.b16 %v4210
        %v4252 = vunpack.c.h.b16 %v4210
        %v4253 = vunpack.c.l.b16 %v4211
        %v4254 = vunpack.c.h.b16 %v4211
        %v4255 = vunpack.c.l.b16 %v4212
        %v4256 = vunpack.c.h.b16 %v4212
        %v4257 = vunpack.c.l.b16 %v4213
        %v4258 = vunpack.c.h.b16 %v4213
        %v4259 = vunpack.c.l.b16 %v4214
        %v4260 = vunpack.c.h.b16 %v4214
        %v4261 = vunpack.c.l.b16 %v4215
        %v4262 = vunpack.c.h.b16 %v4215
        %v4263 = vunpack.c.l.b16 %v4216
        %v4264 = vunpack.c.h.b16 %v4216
        %v4265 = vpack.c.b16 %v4233, %v4233
        %v4266 = vpack.c.b16 %v4234, %v4234
        %v4267 = vpack.c.b16 %v4235, %v4235
        %v4268 = vpack.c.b16 %v4236, %v4236
        %v4269 = vpack.c.b16 %v4237, %v4237
        %v4270 = vpack.c.b16 %v4238, %v4238
        %v4271 = vpack.c.b16 %v4239, %v4239
        %v4272 = vpack.c.b16 %v4240, %v4240
        %v4273 = vpack.c.b16 %v4241, %v4241
        %v4274 = vpack.c.b16 %v4242, %v4242
        %v4275 = vpack.c.b16 %v4243, %v4243
        %v4276 = vpack.c.b16 %v4244, %v4244
        %v4277 = vpack.c.b16 %v4245, %v4245
        %v4278 = vpack.c.b16 %v4246, %v4246
        %v4279 = vpack.c.b16 %v4247, %v4247
        %v4280 = vpack.c.b16 %v4248, %v4248
        %v4281 = vpack.c.b16 %v4249, %v4249
        %v4282 = vpack.c.b16 %v4250, %v4250
        %v4283 = vpack.c.b16 %v4251, %v4251
        %v4284 = vpack.c.b16 %v4252, %v4252
        %v4285 = vpack.c.b16 %v4253, %v4253
        %v4286 = vpack.c.b16 %v4254, %v4254
        %v4287 = vpack.c.b16 %v4255, %v4255
        %v4288 = vpack.c.b16 %v4256, %v4256
        %v4289 = vpack.c.b16 %v4257, %v4257
        %v4290 = vpack.c.b16 %v4258, %v4258
        %v4291 = vpack.c.b16 %v4259, %v4259
        %v4292 = vpack.c.b16 %v4260, %v4260
        %v4293 = vpack.c.b16 %v4261, %v4261
        %v4294 = vpack.c.b16 %v4262, %v4262
        %v4295 = vpack.c.b16 %v4263, %v4263
        %v4296 = vpack.c.b16 %v4264, %v4264
        %4329 = vst.msk [vmem:[#allocation3] sm:$0xf] %vm957, %v4265
        %4330 = vst.msk [vmem:[#allocation3 + $0x14] sm:$0xf] %vm957, %v4266
        %4331 = vst.msk [vmem:[#allocation3 + $0x28] sm:$0xf] %vm957, %v4267
        %4332 = vst.msk [vmem:[#allocation3 + $0x3c] sm:$0xf] %vm957, %v4268
        %4333 = vst.msk [vmem:[#allocation3 + $0x50] sm:$0xf] %vm957, %v4269
        %4334 = vst.msk [vmem:[#allocation3 + $0x64] sm:$0xf] %vm957, %v4270
        %4335 = vst.msk [vmem:[#allocation3 + $0x78] sm:$0xf] %vm957, %v4271
        %4336 = vst.msk [vmem:[#allocation3 + $0x8c] sm:$0xf] %vm957, %v4272
        %4337 = vst.msk [vmem:[#allocation3 + $0xa0] sm:$0xf] %vm957, %v4273
        %4338 = vst.msk [vmem:[#allocation3 + $0xb4] sm:$0xf] %vm957, %v4274
        %4339 = vst.msk [vmem:[#allocation3 + $0xc8] sm:$0xf] %vm957, %v4275
        %4340 = vst.msk [vmem:[#allocation3 + $0xdc] sm:$0xf] %vm957, %v4276
        %4341 = vst.msk [vmem:[#allocation3 + $0xf0] sm:$0xf] %vm957, %v4277
        %4342 = vst.msk [vmem:[#allocation3 + $0x104] sm:$0xf] %vm957, %v4278
        %4343 = vst.msk [vmem:[#allocation3 + $0x118] sm:$0xf] %vm957, %v4279
        %4344 = vst.msk [vmem:[#allocation3 + $0x12c] sm:$0xf] %vm957, %v4280
        %4345 = vst.msk [vmem:[#allocation3 + $0x140] sm:$0xf] %vm957, %v4281
        %4346 = vst.msk [vmem:[#allocation3 + $0x154] sm:$0xf] %vm957, %v4282
        %4347 = vst.msk [vmem:[#allocation3 + $0x168] sm:$0xf] %vm957, %v4283
        %4348 = vst.msk [vmem:[#allocation3 + $0x17c] sm:$0xf] %vm957, %v4284
        %4349 = vst.msk [vmem:[#allocation3 + $0x190] sm:$0xf] %vm957, %v4285
        %4350 = vst.msk [vmem:[#allocation3 + $0x1a4] sm:$0xf] %vm957, %v4286
        %4351 = vst.msk [vmem:[#allocation3 + $0x1b8] sm:$0xf] %vm957, %v4287
        %4352 = vst.msk [vmem:[#allocation3 + $0x1cc] sm:$0xf] %vm957, %v4288
        %4353 = vst.msk [vmem:[#allocation3 + $0x1e0] sm:$0xf] %vm957, %v4289
        %4354 = vst.msk [vmem:[#allocation3 + $0x1f4] sm:$0xf] %vm957, %v4290
        %4355 = vst.msk [vmem:[#allocation3 + $0x208] sm:$0xf] %vm957, %v4291
        %4356 = vst.msk [vmem:[#allocation3 + $0x21c] sm:$0xf] %vm957, %v4292
        %4357 = vst.msk [vmem:[#allocation3 + $0x230] sm:$0xf] %vm957, %v4293
        %4358 = vst.msk [vmem:[#allocation3 + $0x244] sm:$0xf] %vm957, %v4294
        %4359 = vst.msk [vmem:[#allocation3 + $0x258] sm:$0xf] %vm957, %v4295
        %4360 = vst.msk [vmem:[#allocation3 + $0x26c] sm:$0xf] %vm957, %v4296
        %v4361 = vld [vmem:[#allocation2 + $0x1] sm:$0xff]
        %v4362 = vld [vmem:[#allocation2 + $0x9] sm:$0xff]
        %v4363 = vld [vmem:[#allocation2 + $0x11] sm:$0xff]
        %v4364 = vld [vmem:[#allocation2 + $0x19] sm:$0xff]
        %v4365 = vld [vmem:[#allocation2 + $0x21] sm:$0xff]
        %v4366 = vld [vmem:[#allocation2 + $0x29] sm:$0xff]
        %v4367 = vld [vmem:[#allocation2 + $0x31] sm:$0xff]
        %v4368 = vld [vmem:[#allocation2 + $0x39] sm:$0xff]
        %v4369 = vld [vmem:[#allocation2 + $0x41] sm:$0xff]
        %v4370 = vld [vmem:[#allocation2 + $0x49] sm:$0xff]
        %v4371 = vld [vmem:[#allocation2 + $0x51] sm:$0xff]
        %v4372 = vld [vmem:[#allocation2 + $0x59] sm:$0xff]
        %v4373 = vld [vmem:[#allocation2 + $0x61] sm:$0xff]
        %v4374 = vld [vmem:[#allocation2 + $0x69] sm:$0xff]
        %v4375 = vld [vmem:[#allocation2 + $0x71] sm:$0xff]
        %v4376 = vld [vmem:[#allocation2 + $0x79] sm:$0xff]
        %v4377 = vld [vmem:[#allocation2 + $0x81] sm:$0xff]
        %v4378 = vld [vmem:[#allocation2 + $0x89] sm:$0xff]
        %v4379 = vld [vmem:[#allocation2 + $0x91] sm:$0xff]
        %v4380 = vld [vmem:[#allocation2 + $0x99] sm:$0xff]
        %v4381 = vld [vmem:[#allocation2 + $0xa1] sm:$0xff]
        %v4382 = vld [vmem:[#allocation2 + $0xa9] sm:$0xff]
        %v4383 = vld [vmem:[#allocation2 + $0xb1] sm:$0xff]
        %v4384 = vld [vmem:[#allocation2 + $0xb9] sm:$0xff]
        %v4385 = vld [vmem:[#allocation2 + $0xc1] sm:$0xff]
        %v4386 = vld [vmem:[#allocation2 + $0xc9] sm:$0xff]
        %v4387 = vld [vmem:[#allocation2 + $0xd1] sm:$0xff]
        %v4388 = vld [vmem:[#allocation2 + $0xd9] sm:$0xff]
        %v4389 = vld [vmem:[#allocation2 + $0xe1] sm:$0xff]
        %v4390 = vld [vmem:[#allocation2 + $0xe9] sm:$0xff]
        %v4391 = vld [vmem:[#allocation2 + $0xf1] sm:$0xff]
        %v4392 = vld [vmem:[#allocation2 + $0xf9] sm:$0xff]
        %v4393 = vpack.c.bf16 %v4362, %v4361
        %v4394 = vpack.c.bf16 %v4364, %v4363
        %v4395 = vpack.c.bf16 %v4366, %v4365
        %v4396 = vpack.c.bf16 %v4368, %v4367
        %v4397 = vpack.c.bf16 %v4370, %v4369
        %v4398 = vpack.c.bf16 %v4372, %v4371
        %v4399 = vpack.c.bf16 %v4374, %v4373
        %v4400 = vpack.c.bf16 %v4376, %v4375
        %v4401 = vpack.c.bf16 %v4378, %v4377
        %v4402 = vpack.c.bf16 %v4380, %v4379
        %v4403 = vpack.c.bf16 %v4382, %v4381
        %v4404 = vpack.c.bf16 %v4384, %v4383
        %v4405 = vpack.c.bf16 %v4386, %v4385
        %v4406 = vpack.c.bf16 %v4388, %v4387
        %v4407 = vpack.c.bf16 %v4390, %v4389
        %v4408 = vpack.c.bf16 %v4392, %v4391
        %v4425 = vunpack.c.l.b16 %v4393
        %v4426 = vunpack.c.h.b16 %v4393
        %v4427 = vunpack.c.l.b16 %v4394
        %v4428 = vunpack.c.h.b16 %v4394
        %v4429 = vunpack.c.l.b16 %v4395
        %v4430 = vunpack.c.h.b16 %v4395
        %v4431 = vunpack.c.l.b16 %v4396
        %v4432 = vunpack.c.h.b16 %v4396
        %v4433 = vunpack.c.l.b16 %v4397
        %v4434 = vunpack.c.h.b16 %v4397
        %v4435 = vunpack.c.l.b16 %v4398
        %v4436 = vunpack.c.h.b16 %v4398
        %v4437 = vunpack.c.l.b16 %v4399
        %v4438 = vunpack.c.h.b16 %v4399
        %v4439 = vunpack.c.l.b16 %v4400
        %v4440 = vunpack.c.h.b16 %v4400
        %v4441 = vunpack.c.l.b16 %v4401
        %v4442 = vunpack.c.h.b16 %v4401
        %v4443 = vunpack.c.l.b16 %v4402
        %v4444 = vunpack.c.h.b16 %v4402
        %v4445 = vunpack.c.l.b16 %v4403
        %v4446 = vunpack.c.h.b16 %v4403
        %v4447 = vunpack.c.l.b16 %v4404
        %v4448 = vunpack.c.h.b16 %v4404
        %v4449 = vunpack.c.l.b16 %v4405
        %v4450 = vunpack.c.h.b16 %v4405
        %v4451 = vunpack.c.l.b16 %v4406
        %v4452 = vunpack.c.h.b16 %v4406
        %v4453 = vunpack.c.l.b16 %v4407
        %v4454 = vunpack.c.h.b16 %v4407
        %v4455 = vunpack.c.l.b16 %v4408
        %v4456 = vunpack.c.h.b16 %v4408
        %v4457 = vpack.c.b16 %v4425, %v4425
        %v4458 = vpack.c.b16 %v4426, %v4426
        %v4459 = vpack.c.b16 %v4427, %v4427
        %v4460 = vpack.c.b16 %v4428, %v4428
        %v4461 = vpack.c.b16 %v4429, %v4429
        %v4462 = vpack.c.b16 %v4430, %v4430
        %v4463 = vpack.c.b16 %v4431, %v4431
        %v4464 = vpack.c.b16 %v4432, %v4432
        %v4465 = vpack.c.b16 %v4433, %v4433
        %v4466 = vpack.c.b16 %v4434, %v4434
        %v4467 = vpack.c.b16 %v4435, %v4435
        %v4468 = vpack.c.b16 %v4436, %v4436
        %v4469 = vpack.c.b16 %v4437, %v4437
        %v4470 = vpack.c.b16 %v4438, %v4438
        %v4471 = vpack.c.b16 %v4439, %v4439
        %v4472 = vpack.c.b16 %v4440, %v4440
        %v4473 = vpack.c.b16 %v4441, %v4441
        %v4474 = vpack.c.b16 %v4442, %v4442
        %v4475 = vpack.c.b16 %v4443, %v4443
        %v4476 = vpack.c.b16 %v4444, %v4444
        %v4477 = vpack.c.b16 %v4445, %v4445
        %v4478 = vpack.c.b16 %v4446, %v4446
        %v4479 = vpack.c.b16 %v4447, %v4447
        %v4480 = vpack.c.b16 %v4448, %v4448
        %v4481 = vpack.c.b16 %v4449, %v4449
        %v4482 = vpack.c.b16 %v4450, %v4450
        %v4483 = vpack.c.b16 %v4451, %v4451
        %v4484 = vpack.c.b16 %v4452, %v4452
        %v4485 = vpack.c.b16 %v4453, %v4453
        %v4486 = vpack.c.b16 %v4454, %v4454
        %v4487 = vpack.c.b16 %v4455, %v4455
        %v4488 = vpack.c.b16 %v4456, %v4456
        %4489 = vrot.lane.b32.xlu0 %v4457, 64
        %v4490 = vpop.permute.xlu0 %4489
        %4491 = vrot.lane.b32.xlu0 %v4458, 64
        %v4492 = vpop.permute.xlu0 %4491
        %4493 = vrot.lane.b32.xlu0 %v4459, 64
        %v4494 = vpop.permute.xlu0 %4493
        %4495 = vrot.lane.b32.xlu0 %v4460, 64
        %v4496 = vpop.permute.xlu0 %4495
        %4497 = vrot.lane.b32.xlu0 %v4461, 64
        %v4498 = vpop.permute.xlu0 %4497
        %4499 = vrot.lane.b32.xlu0 %v4462, 64
        %v4500 = vpop.permute.xlu0 %4499
        %4501 = vrot.lane.b32.xlu0 %v4463, 64
        %v4502 = vpop.permute.xlu0 %4501
        %4503 = vrot.lane.b32.xlu0 %v4464, 64
        %v4504 = vpop.permute.xlu0 %4503
        %4505 = vrot.lane.b32.xlu0 %v4465, 64
        %v4506 = vpop.permute.xlu0 %4505
        %4507 = vrot.lane.b32.xlu0 %v4466, 64
        %v4508 = vpop.permute.xlu0 %4507
        %4509 = vrot.lane.b32.xlu0 %v4467, 64
        %v4510 = vpop.permute.xlu0 %4509
        %4511 = vrot.lane.b32.xlu0 %v4468, 64
        %v4512 = vpop.permute.xlu0 %4511
        %4513 = vrot.lane.b32.xlu0 %v4469, 64
        %v4514 = vpop.permute.xlu0 %4513
        %4515 = vrot.lane.b32.xlu0 %v4470, 64
        %v4516 = vpop.permute.xlu0 %4515
        %4517 = vrot.lane.b32.xlu0 %v4471, 64
        %v4518 = vpop.permute.xlu0 %4517
        %4519 = vrot.lane.b32.xlu0 %v4472, 64
        %v4520 = vpop.permute.xlu0 %4519
        %4521 = vrot.lane.b32.xlu0 %v4473, 64
        %v4522 = vpop.permute.xlu0 %4521
        %4523 = vrot.lane.b32.xlu0 %v4474, 64
        %v4524 = vpop.permute.xlu0 %4523
        %4525 = vrot.lane.b32.xlu0 %v4475, 64
        %v4526 = vpop.permute.xlu0 %4525
        %4527 = vrot.lane.b32.xlu0 %v4476, 64
        %v4528 = vpop.permute.xlu0 %4527
        %4529 = vrot.lane.b32.xlu0 %v4477, 64
        %v4530 = vpop.permute.xlu0 %4529
        %4531 = vrot.lane.b32.xlu0 %v4478, 64
        %v4532 = vpop.permute.xlu0 %4531
        %4533 = vrot.lane.b32.xlu0 %v4479, 64
        %v4534 = vpop.permute.xlu0 %4533
        %4535 = vrot.lane.b32.xlu0 %v4480, 64
        %v4536 = vpop.permute.xlu0 %4535
        %4537 = vrot.lane.b32.xlu0 %v4481, 64
        %v4538 = vpop.permute.xlu0 %4537
        %4539 = vrot.lane.b32.xlu0 %v4482, 64
        %v4540 = vpop.permute.xlu0 %4539
        %4541 = vrot.lane.b32.xlu0 %v4483, 64
        %v4542 = vpop.permute.xlu0 %4541
        %4543 = vrot.lane.b32.xlu0 %v4484, 64
        %v4544 = vpop.permute.xlu0 %4543
        %4545 = vrot.lane.b32.xlu0 %v4485, 64
        %v4546 = vpop.permute.xlu0 %4545
        %4547 = vrot.lane.b32.xlu0 %v4486, 64
        %v4548 = vpop.permute.xlu0 %4547
        %4549 = vrot.lane.b32.xlu0 %v4487, 64
        %v4550 = vpop.permute.xlu0 %4549
        %4551 = vrot.lane.b32.xlu0 %v4488, 64
        %v4552 = vpop.permute.xlu0 %4551
        %4585 = vst.msk [vmem:[#allocation3] sm:$0xf] %vm1214, %v4490
        %4586 = vst.msk [vmem:[#allocation3 + $0x14] sm:$0xf] %vm1214, %v4492
        %4587 = vst.msk [vmem:[#allocation3 + $0x28] sm:$0xf] %vm1214, %v4494
        %4588 = vst.msk [vmem:[#allocation3 + $0x3c] sm:$0xf] %vm1214, %v4496
        %4589 = vst.msk [vmem:[#allocation3 + $0x50] sm:$0xf] %vm1214, %v4498
        %4590 = vst.msk [vmem:[#allocation3 + $0x64] sm:$0xf] %vm1214, %v4500
        %4591 = vst.msk [vmem:[#allocation3 + $0x78] sm:$0xf] %vm1214, %v4502
        %4592 = vst.msk [vmem:[#allocation3 + $0x8c] sm:$0xf] %vm1214, %v4504
        %4593 = vst.msk [vmem:[#allocation3 + $0xa0] sm:$0xf] %vm1214, %v4506
        %4594 = vst.msk [vmem:[#allocation3 + $0xb4] sm:$0xf] %vm1214, %v4508
        %4595 = vst.msk [vmem:[#allocation3 + $0xc8] sm:$0xf] %vm1214, %v4510
        %4596 = vst.msk [vmem:[#allocation3 + $0xdc] sm:$0xf] %vm1214, %v4512
        %4597 = vst.msk [vmem:[#allocation3 + $0xf0] sm:$0xf] %vm1214, %v4514
        %4598 = vst.msk [vmem:[#allocation3 + $0x104] sm:$0xf] %vm1214, %v4516
        %4599 = vst.msk [vmem:[#allocation3 + $0x118] sm:$0xf] %vm1214, %v4518
        %4600 = vst.msk [vmem:[#allocation3 + $0x12c] sm:$0xf] %vm1214, %v4520
        %4601 = vst.msk [vmem:[#allocation3 + $0x140] sm:$0xf] %vm1214, %v4522
        %4602 = vst.msk [vmem:[#allocation3 + $0x154] sm:$0xf] %vm1214, %v4524
        %4603 = vst.msk [vmem:[#allocation3 + $0x168] sm:$0xf] %vm1214, %v4526
        %4604 = vst.msk [vmem:[#allocation3 + $0x17c] sm:$0xf] %vm1214, %v4528
        %4605 = vst.msk [vmem:[#allocation3 + $0x190] sm:$0xf] %vm1214, %v4530
        %4606 = vst.msk [vmem:[#allocation3 + $0x1a4] sm:$0xf] %vm1214, %v4532
        %4607 = vst.msk [vmem:[#allocation3 + $0x1b8] sm:$0xf] %vm1214, %v4534
        %4608 = vst.msk [vmem:[#allocation3 + $0x1cc] sm:$0xf] %vm1214, %v4536
        %4609 = vst.msk [vmem:[#allocation3 + $0x1e0] sm:$0xf] %vm1214, %v4538
        %4610 = vst.msk [vmem:[#allocation3 + $0x1f4] sm:$0xf] %vm1214, %v4540
        %4611 = vst.msk [vmem:[#allocation3 + $0x208] sm:$0xf] %vm1214, %v4542
        %4612 = vst.msk [vmem:[#allocation3 + $0x21c] sm:$0xf] %vm1214, %v4544
        %4613 = vst.msk [vmem:[#allocation3 + $0x230] sm:$0xf] %vm1214, %v4546
        %4614 = vst.msk [vmem:[#allocation3 + $0x244] sm:$0xf] %vm1214, %v4548
        %4615 = vst.msk [vmem:[#allocation3 + $0x258] sm:$0xf] %vm1214, %v4550
        %4616 = vst.msk [vmem:[#allocation3 + $0x26c] sm:$0xf] %vm1214, %v4552
        %v4617 = vld [vmem:[#allocation2 + $0x2] sm:$0xff]
        %v4618 = vld [vmem:[#allocation2 + $0xa] sm:$0xff]
        %v4619 = vld [vmem:[#allocation2 + $0x12] sm:$0xff]
        %v4620 = vld [vmem:[#allocation2 + $0x1a] sm:$0xff]
        %v4621 = vld [vmem:[#allocation2 + $0x22] sm:$0xff]
        %v4622 = vld [vmem:[#allocation2 + $0x2a] sm:$0xff]
        %v4623 = vld [vmem:[#allocation2 + $0x32] sm:$0xff]
        %v4624 = vld [vmem:[#allocation2 + $0x3a] sm:$0xff]
        %v4625 = vld [vmem:[#allocation2 + $0x42] sm:$0xff]
        %v4626 = vld [vmem:[#allocation2 + $0x4a] sm:$0xff]
        %v4627 = vld [vmem:[#allocation2 + $0x52] sm:$0xff]
        %v4628 = vld [vmem:[#allocation2 + $0x5a] sm:$0xff]
        %v4629 = vld [vmem:[#allocation2 + $0x62] sm:$0xff]
        %v4630 = vld [vmem:[#allocation2 + $0x6a] sm:$0xff]
        %v4631 = vld [vmem:[#allocation2 + $0x72] sm:$0xff]
        %v4632 = vld [vmem:[#allocation2 + $0x7a] sm:$0xff]
        %v4633 = vld [vmem:[#allocation2 + $0x82] sm:$0xff]
        %v4634 = vld [vmem:[#allocation2 + $0x8a] sm:$0xff]
        %v4635 = vld [vmem:[#allocation2 + $0x92] sm:$0xff]
        %v4636 = vld [vmem:[#allocation2 + $0x9a] sm:$0xff]
        %v4637 = vld [vmem:[#allocation2 + $0xa2] sm:$0xff]
        %v4638 = vld [vmem:[#allocation2 + $0xaa] sm:$0xff]
        %v4639 = vld [vmem:[#allocation2 + $0xb2] sm:$0xff]
        %v4640 = vld [vmem:[#allocation2 + $0xba] sm:$0xff]
        %v4641 = vld [vmem:[#allocation2 + $0xc2] sm:$0xff]
        %v4642 = vld [vmem:[#allocation2 + $0xca] sm:$0xff]
        %v4643 = vld [vmem:[#allocation2 + $0xd2] sm:$0xff]
        %v4644 = vld [vmem:[#allocation2 + $0xda] sm:$0xff]
        %v4645 = vld [vmem:[#allocation2 + $0xe2] sm:$0xff]
        %v4646 = vld [vmem:[#allocation2 + $0xea] sm:$0xff]
        %v4647 = vld [vmem:[#allocation2 + $0xf2] sm:$0xff]
        %v4648 = vld [vmem:[#allocation2 + $0xfa] sm:$0xff]
        %v4649 = vpack.c.bf16 %v4618, %v4617
        %v4650 = vpack.c.bf16 %v4620, %v4619
        %v4651 = vpack.c.bf16 %v4622, %v4621
        %v4652 = vpack.c.bf16 %v4624, %v4623
        %v4653 = vpack.c.bf16 %v4626, %v4625
        %v4654 = vpack.c.bf16 %v4628, %v4627
        %v4655 = vpack.c.bf16 %v4630, %v4629
        %v4656 = vpack.c.bf16 %v4632, %v4631
        %v4657 = vpack.c.bf16 %v4634, %v4633
        %v4658 = vpack.c.bf16 %v4636, %v4635
        %v4659 = vpack.c.bf16 %v4638, %v4637
        %v4660 = vpack.c.bf16 %v4640, %v4639
        %v4661 = vpack.c.bf16 %v4642, %v4641
        %v4662 = vpack.c.bf16 %v4644, %v4643
        %v4663 = vpack.c.bf16 %v4646, %v4645
        %v4664 = vpack.c.bf16 %v4648, %v4647
        %v4681 = vunpack.c.l.b16 %v4649
        %v4682 = vunpack.c.h.b16 %v4649
        %v4683 = vunpack.c.l.b16 %v4650
        %v4684 = vunpack.c.h.b16 %v4650
        %v4685 = vunpack.c.l.b16 %v4651
        %v4686 = vunpack.c.h.b16 %v4651
        %v4687 = vunpack.c.l.b16 %v4652
        %v4688 = vunpack.c.h.b16 %v4652
        %v4689 = vunpack.c.l.b16 %v4653
        %v4690 = vunpack.c.h.b16 %v4653
        %v4691 = vunpack.c.l.b16 %v4654
        %v4692 = vunpack.c.h.b16 %v4654
        %v4693 = vunpack.c.l.b16 %v4655
        %v4694 = vunpack.c.h.b16 %v4655
        %v4695 = vunpack.c.l.b16 %v4656
        %v4696 = vunpack.c.h.b16 %v4656
        %v4697 = vunpack.c.l.b16 %v4657
        %v4698 = vunpack.c.h.b16 %v4657
        %v4699 = vunpack.c.l.b16 %v4658
        %v4700 = vunpack.c.h.b16 %v4658
        %v4701 = vunpack.c.l.b16 %v4659
        %v4702 = vunpack.c.h.b16 %v4659
        %v4703 = vunpack.c.l.b16 %v4660
        %v4704 = vunpack.c.h.b16 %v4660
        %v4705 = vunpack.c.l.b16 %v4661
        %v4706 = vunpack.c.h.b16 %v4661
        %v4707 = vunpack.c.l.b16 %v4662
        %v4708 = vunpack.c.h.b16 %v4662
        %v4709 = vunpack.c.l.b16 %v4663
        %v4710 = vunpack.c.h.b16 %v4663
        %v4711 = vunpack.c.l.b16 %v4664
        %v4712 = vunpack.c.h.b16 %v4664
        %v4713 = vpack.c.b16 %v4681, %v4681
        %v4714 = vpack.c.b16 %v4682, %v4682
        %v4715 = vpack.c.b16 %v4683, %v4683
        %v4716 = vpack.c.b16 %v4684, %v4684
        %v4717 = vpack.c.b16 %v4685, %v4685
        %v4718 = vpack.c.b16 %v4686, %v4686
        %v4719 = vpack.c.b16 %v4687, %v4687
        %v4720 = vpack.c.b16 %v4688, %v4688
        %v4721 = vpack.c.b16 %v4689, %v4689
        %v4722 = vpack.c.b16 %v4690, %v4690
        %v4723 = vpack.c.b16 %v4691, %v4691
        %v4724 = vpack.c.b16 %v4692, %v4692
        %v4725 = vpack.c.b16 %v4693, %v4693
        %v4726 = vpack.c.b16 %v4694, %v4694
        %v4727 = vpack.c.b16 %v4695, %v4695
        %v4728 = vpack.c.b16 %v4696, %v4696
        %v4729 = vpack.c.b16 %v4697, %v4697
        %v4730 = vpack.c.b16 %v4698, %v4698
        %v4731 = vpack.c.b16 %v4699, %v4699
        %v4732 = vpack.c.b16 %v4700, %v4700
        %v4733 = vpack.c.b16 %v4701, %v4701
        %v4734 = vpack.c.b16 %v4702, %v4702
        %v4735 = vpack.c.b16 %v4703, %v4703
        %v4736 = vpack.c.b16 %v4704, %v4704
        %v4737 = vpack.c.b16 %v4705, %v4705
        %v4738 = vpack.c.b16 %v4706, %v4706
        %v4739 = vpack.c.b16 %v4707, %v4707
        %v4740 = vpack.c.b16 %v4708, %v4708
        %v4741 = vpack.c.b16 %v4709, %v4709
        %v4742 = vpack.c.b16 %v4710, %v4710
        %v4743 = vpack.c.b16 %v4711, %v4711
        %v4744 = vpack.c.b16 %v4712, %v4712
        %4777 = vst.msk [vmem:[#allocation3 + $0x4] sm:$0xf] %vm957, %v4713
        %4778 = vst.msk [vmem:[#allocation3 + $0x18] sm:$0xf] %vm957, %v4714
        %4779 = vst.msk [vmem:[#allocation3 + $0x2c] sm:$0xf] %vm957, %v4715
        %4780 = vst.msk [vmem:[#allocation3 + $0x40] sm:$0xf] %vm957, %v4716
        %4781 = vst.msk [vmem:[#allocation3 + $0x54] sm:$0xf] %vm957, %v4717
        %4782 = vst.msk [vmem:[#allocation3 + $0x68] sm:$0xf] %vm957, %v4718
        %4783 = vst.msk [vmem:[#allocation3 + $0x7c] sm:$0xf] %vm957, %v4719
        %4784 = vst.msk [vmem:[#allocation3 + $0x90] sm:$0xf] %vm957, %v4720
        %4785 = vst.msk [vmem:[#allocation3 + $0xa4] sm:$0xf] %vm957, %v4721
        %4786 = vst.msk [vmem:[#allocation3 + $0xb8] sm:$0xf] %vm957, %v4722
        %4787 = vst.msk [vmem:[#allocation3 + $0xcc] sm:$0xf] %vm957, %v4723
        %4788 = vst.msk [vmem:[#allocation3 + $0xe0] sm:$0xf] %vm957, %v4724
        %4789 = vst.msk [vmem:[#allocation3 + $0xf4] sm:$0xf] %vm957, %v4725
        %4790 = vst.msk [vmem:[#allocation3 + $0x108] sm:$0xf] %vm957, %v4726
        %4791 = vst.msk [vmem:[#allocation3 + $0x11c] sm:$0xf] %vm957, %v4727
        %4792 = vst.msk [vmem:[#allocation3 + $0x130] sm:$0xf] %vm957, %v4728
        %4793 = vst.msk [vmem:[#allocation3 + $0x144] sm:$0xf] %vm957, %v4729
        %4794 = vst.msk [vmem:[#allocation3 + $0x158] sm:$0xf] %vm957, %v4730
        %4795 = vst.msk [vmem:[#allocation3 + $0x16c] sm:$0xf] %vm957, %v4731
        %4796 = vst.msk [vmem:[#allocation3 + $0x180] sm:$0xf] %vm957, %v4732
        %4797 = vst.msk [vmem:[#allocation3 + $0x194] sm:$0xf] %vm957, %v4733
        %4798 = vst.msk [vmem:[#allocation3 + $0x1a8] sm:$0xf] %vm957, %v4734
        %4799 = vst.msk [vmem:[#allocation3 + $0x1bc] sm:$0xf] %vm957, %v4735
        %4800 = vst.msk [vmem:[#allocation3 + $0x1d0] sm:$0xf] %vm957, %v4736
        %4801 = vst.msk [vmem:[#allocation3 + $0x1e4] sm:$0xf] %vm957, %v4737
        %4802 = vst.msk [vmem:[#allocation3 + $0x1f8] sm:$0xf] %vm957, %v4738
        %4803 = vst.msk [vmem:[#allocation3 + $0x20c] sm:$0xf] %vm957, %v4739
        %4804 = vst.msk [vmem:[#allocation3 + $0x220] sm:$0xf] %vm957, %v4740
        %4805 = vst.msk [vmem:[#allocation3 + $0x234] sm:$0xf] %vm957, %v4741
        %4806 = vst.msk [vmem:[#allocation3 + $0x248] sm:$0xf] %vm957, %v4742
        %4807 = vst.msk [vmem:[#allocation3 + $0x25c] sm:$0xf] %vm957, %v4743
        %4808 = vst.msk [vmem:[#allocation3 + $0x270] sm:$0xf] %vm957, %v4744
        %v4809 = vld [vmem:[#allocation2 + $0x10] sm:$0xff]
        %v4810 = vld [vmem:[#allocation2 + $0x18] sm:$0xff]
        %v4811 = vld [vmem:[#allocation2 + $0x20] sm:$0xff]
        %v4812 = vld [vmem:[#allocation2 + $0x28] sm:$0xff]
        %v4813 = vld [vmem:[#allocation2 + $0x30] sm:$0xff]
        %v4814 = vld [vmem:[#allocation2 + $0x38] sm:$0xff]
        %v4815 = vld [vmem:[#allocation2 + $0x40] sm:$0xff]
        %v4816 = vld [vmem:[#allocation2 + $0x48] sm:$0xff]
        %v4817 = vld [vmem:[#allocation2 + $0x50] sm:$0xff]
        %v4818 = vld [vmem:[#allocation2 + $0x58] sm:$0xff]
        %v4819 = vld [vmem:[#allocation2 + $0x60] sm:$0xff]
        %v4820 = vld [vmem:[#allocation2 + $0x68] sm:$0xff]
        %v4821 = vld [vmem:[#allocation2 + $0x70] sm:$0xff]
        %v4822 = vld [vmem:[#allocation2 + $0x78] sm:$0xff]
        %v4823 = vld [vmem:[#allocation2 + $0x80] sm:$0xff]
        %v4824 = vld [vmem:[#allocation2 + $0x88] sm:$0xff]
        %v4825 = vld [vmem:[#allocation2 + $0x90] sm:$0xff]
        %v4826 = vld [vmem:[#allocation2 + $0x98] sm:$0xff]
        %v4827 = vld [vmem:[#allocation2 + $0xa0] sm:$0xff]
        %v4828 = vld [vmem:[#allocation2 + $0xa8] sm:$0xff]
        %v4829 = vld [vmem:[#allocation2 + $0xb0] sm:$0xff]
        %v4830 = vld [vmem:[#allocation2 + $0xb8] sm:$0xff]
        %v4831 = vld [vmem:[#allocation2 + $0xc0] sm:$0xff]
        %v4832 = vld [vmem:[#allocation2 + $0xc8] sm:$0xff]
        %v4833 = vld [vmem:[#allocation2 + $0xd0] sm:$0xff]
        %v4834 = vld [vmem:[#allocation2 + $0xd8] sm:$0xff]
        %v4835 = vld [vmem:[#allocation2 + $0xe0] sm:$0xff]
        %v4836 = vld [vmem:[#allocation2 + $0xe8] sm:$0xff]
        %v4837 = vld [vmem:[#allocation2 + $0xf0] sm:$0xff]
        %v4838 = vld [vmem:[#allocation2 + $0xf8] sm:$0xff]
        %v4839 = vld [vmem:[#allocation2 + $0x100] sm:$0xff]
        %v4840 = vld [vmem:[#allocation2 + $0x108] sm:$0xff]
        %v4841 = vpack.c.bf16 %v4810, %v4809
        %v4842 = vpack.c.bf16 %v4812, %v4811
        %v4843 = vpack.c.bf16 %v4814, %v4813
        %v4844 = vpack.c.bf16 %v4816, %v4815
        %v4845 = vpack.c.bf16 %v4818, %v4817
        %v4846 = vpack.c.bf16 %v4820, %v4819
        %v4847 = vpack.c.bf16 %v4822, %v4821
        %v4848 = vpack.c.bf16 %v4824, %v4823
        %v4849 = vpack.c.bf16 %v4826, %v4825
        %v4850 = vpack.c.bf16 %v4828, %v4827
        %v4851 = vpack.c.bf16 %v4830, %v4829
        %v4852 = vpack.c.bf16 %v4832, %v4831
        %v4853 = vpack.c.bf16 %v4834, %v4833
        %v4854 = vpack.c.bf16 %v4836, %v4835
        %v4855 = vpack.c.bf16 %v4838, %v4837
        %v4856 = vpack.c.bf16 %v4840, %v4839
        %v4873 = vunpack.c.l.b16 %v4841
        %v4874 = vunpack.c.h.b16 %v4841
        %v4875 = vunpack.c.l.b16 %v4842
        %v4876 = vunpack.c.h.b16 %v4842
        %v4877 = vunpack.c.l.b16 %v4843
        %v4878 = vunpack.c.h.b16 %v4843
        %v4879 = vunpack.c.l.b16 %v4844
        %v4880 = vunpack.c.h.b16 %v4844
        %v4881 = vunpack.c.l.b16 %v4845
        %v4882 = vunpack.c.h.b16 %v4845
        %v4883 = vunpack.c.l.b16 %v4846
        %v4884 = vunpack.c.h.b16 %v4846
        %v4885 = vunpack.c.l.b16 %v4847
        %v4886 = vunpack.c.h.b16 %v4847
        %v4887 = vunpack.c.l.b16 %v4848
        %v4888 = vunpack.c.h.b16 %v4848
        %v4889 = vunpack.c.l.b16 %v4849
        %v4890 = vunpack.c.h.b16 %v4849
        %v4891 = vunpack.c.l.b16 %v4850
        %v4892 = vunpack.c.h.b16 %v4850
        %v4893 = vunpack.c.l.b16 %v4851
        %v4894 = vunpack.c.h.b16 %v4851
        %v4895 = vunpack.c.l.b16 %v4852
        %v4896 = vunpack.c.h.b16 %v4852
        %v4897 = vunpack.c.l.b16 %v4853
        %v4898 = vunpack.c.h.b16 %v4853
        %v4899 = vunpack.c.l.b16 %v4854
        %v4900 = vunpack.c.h.b16 %v4854
        %v4901 = vunpack.c.l.b16 %v4855
        %v4902 = vunpack.c.h.b16 %v4855
        %v4903 = vunpack.c.l.b16 %v4856
        %v4904 = vunpack.c.h.b16 %v4856
        %v4905 = vpack.c.b16 %v4873, %v4873
        %v4906 = vpack.c.b16 %v4874, %v4874
        %v4907 = vpack.c.b16 %v4875, %v4875
        %v4908 = vpack.c.b16 %v4876, %v4876
        %v4909 = vpack.c.b16 %v4877, %v4877
        %v4910 = vpack.c.b16 %v4878, %v4878
        %v4911 = vpack.c.b16 %v4879, %v4879
        %v4912 = vpack.c.b16 %v4880, %v4880
        %v4913 = vpack.c.b16 %v4881, %v4881
        %v4914 = vpack.c.b16 %v4882, %v4882
        %v4915 = vpack.c.b16 %v4883, %v4883
        %v4916 = vpack.c.b16 %v4884, %v4884
        %v4917 = vpack.c.b16 %v4885, %v4885
        %v4918 = vpack.c.b16 %v4886, %v4886
        %v4919 = vpack.c.b16 %v4887, %v4887
        %v4920 = vpack.c.b16 %v4888, %v4888
        %v4921 = vpack.c.b16 %v4889, %v4889
        %v4922 = vpack.c.b16 %v4890, %v4890
        %v4923 = vpack.c.b16 %v4891, %v4891
        %v4924 = vpack.c.b16 %v4892, %v4892
        %v4925 = vpack.c.b16 %v4893, %v4893
        %v4926 = vpack.c.b16 %v4894, %v4894
        %v4927 = vpack.c.b16 %v4895, %v4895
        %v4928 = vpack.c.b16 %v4896, %v4896
        %v4929 = vpack.c.b16 %v4897, %v4897
        %v4930 = vpack.c.b16 %v4898, %v4898
        %v4931 = vpack.c.b16 %v4899, %v4899
        %v4932 = vpack.c.b16 %v4900, %v4900
        %v4933 = vpack.c.b16 %v4901, %v4901
        %v4934 = vpack.c.b16 %v4902, %v4902
        %v4935 = vpack.c.b16 %v4903, %v4903
        %v4936 = vpack.c.b16 %v4904, %v4904
        %4937 = vrot.lane.b32.xlu0 %v4905, 64
        %v4938 = vpop.permute.xlu0 %4937
        %4939 = vrot.lane.b32.xlu0 %v4906, 64
        %v4940 = vpop.permute.xlu0 %4939
        %4941 = vrot.lane.b32.xlu0 %v4907, 64
        %v4942 = vpop.permute.xlu0 %4941
        %4943 = vrot.lane.b32.xlu0 %v4908, 64
        %v4944 = vpop.permute.xlu0 %4943
        %4945 = vrot.lane.b32.xlu0 %v4909, 64
        %v4946 = vpop.permute.xlu0 %4945
        %4947 = vrot.lane.b32.xlu0 %v4910, 64
        %v4948 = vpop.permute.xlu0 %4947
        %4949 = vrot.lane.b32.xlu0 %v4911, 64
        %v4950 = vpop.permute.xlu0 %4949
        %4951 = vrot.lane.b32.xlu0 %v4912, 64
        %v4952 = vpop.permute.xlu0 %4951
        %4953 = vrot.lane.b32.xlu0 %v4913, 64
        %v4954 = vpop.permute.xlu0 %4953
        %4955 = vrot.lane.b32.xlu0 %v4914, 64
        %v4956 = vpop.permute.xlu0 %4955
        %4957 = vrot.lane.b32.xlu0 %v4915, 64
        %v4958 = vpop.permute.xlu0 %4957
        %4959 = vrot.lane.b32.xlu0 %v4916, 64
        %v4960 = vpop.permute.xlu0 %4959
        %4961 = vrot.lane.b32.xlu0 %v4917, 64
        %v4962 = vpop.permute.xlu0 %4961
        %4963 = vrot.lane.b32.xlu0 %v4918, 64
        %v4964 = vpop.permute.xlu0 %4963
        %4965 = vrot.lane.b32.xlu0 %v4919, 64
        %v4966 = vpop.permute.xlu0 %4965
        %4967 = vrot.lane.b32.xlu0 %v4920, 64
        %v4968 = vpop.permute.xlu0 %4967
        %4969 = vrot.lane.b32.xlu0 %v4921, 64
        %v4970 = vpop.permute.xlu0 %4969
        %4971 = vrot.lane.b32.xlu0 %v4922, 64
        %v4972 = vpop.permute.xlu0 %4971
        %4973 = vrot.lane.b32.xlu0 %v4923, 64
        %v4974 = vpop.permute.xlu0 %4973
        %4975 = vrot.lane.b32.xlu0 %v4924, 64
        %v4976 = vpop.permute.xlu0 %4975
        %4977 = vrot.lane.b32.xlu0 %v4925, 64
        %v4978 = vpop.permute.xlu0 %4977
        %4979 = vrot.lane.b32.xlu0 %v4926, 64
        %v4980 = vpop.permute.xlu0 %4979
        %4981 = vrot.lane.b32.xlu0 %v4927, 64
        %v4982 = vpop.permute.xlu0 %4981
        %4983 = vrot.lane.b32.xlu0 %v4928, 64
        %v4984 = vpop.permute.xlu0 %4983
        %4985 = vrot.lane.b32.xlu0 %v4929, 64
        %v4986 = vpop.permute.xlu0 %4985
        %4987 = vrot.lane.b32.xlu0 %v4930, 64
        %v4988 = vpop.permute.xlu0 %4987
        %4989 = vrot.lane.b32.xlu0 %v4931, 64
        %v4990 = vpop.permute.xlu0 %4989
        %4991 = vrot.lane.b32.xlu0 %v4932, 64
        %v4992 = vpop.permute.xlu0 %4991
        %4993 = vrot.lane.b32.xlu0 %v4933, 64
        %v4994 = vpop.permute.xlu0 %4993
        %4995 = vrot.lane.b32.xlu0 %v4934, 64
        %v4996 = vpop.permute.xlu0 %4995
        %4997 = vrot.lane.b32.xlu0 %v4935, 64
        %v4998 = vpop.permute.xlu0 %4997
        %4999 = vrot.lane.b32.xlu0 %v4936, 64
        %v5000 = vpop.permute.xlu0 %4999
        %5033 = vst.msk [vmem:[#allocation3 + $0x4] sm:$0xf] %vm1214, %v4938
        %5034 = vst.msk [vmem:[#allocation3 + $0x18] sm:$0xf] %vm1214, %v4940
        %5035 = vst.msk [vmem:[#allocation3 + $0x2c] sm:$0xf] %vm1214, %v4942
        %5036 = vst.msk [vmem:[#allocation3 + $0x40] sm:$0xf] %vm1214, %v4944
        %5037 = vst.msk [vmem:[#allocation3 + $0x54] sm:$0xf] %vm1214, %v4946
        %5038 = vst.msk [vmem:[#allocation3 + $0x68] sm:$0xf] %vm1214, %v4948
        %5039 = vst.msk [vmem:[#allocation3 + $0x7c] sm:$0xf] %vm1214, %v4950
        %5040 = vst.msk [vmem:[#allocation3 + $0x90] sm:$0xf] %vm1214, %v4952
        %5041 = vst.msk [vmem:[#allocation3 + $0xa4] sm:$0xf] %vm1214, %v4954
        %5042 = vst.msk [vmem:[#allocation3 + $0xb8] sm:$0xf] %vm1214, %v4956
        %5043 = vst.msk [vmem:[#allocation3 + $0xcc] sm:$0xf] %vm1214, %v4958
        %5044 = vst.msk [vmem:[#allocation3 + $0xe0] sm:$0xf] %vm1214, %v4960
        %5045 = vst.msk [vmem:[#allocation3 + $0xf4] sm:$0xf] %vm1214, %v4962
        %5046 = vst.msk [vmem:[#allocation3 + $0x108] sm:$0xf] %vm1214, %v4964
        %5047 = vst.msk [vmem:[#allocation3 + $0x11c] sm:$0xf] %vm1214, %v4966
        %5048 = vst.msk [vmem:[#allocation3 + $0x130] sm:$0xf] %vm1214, %v4968
        %5049 = vst.msk [vmem:[#allocation3 + $0x144] sm:$0xf] %vm1214, %v4970
        %5050 = vst.msk [vmem:[#allocation3 + $0x158] sm:$0xf] %vm1214, %v4972
        %5051 = vst.msk [vmem:[#allocation3 + $0x16c] sm:$0xf] %vm1214, %v4974
        %5052 = vst.msk [vmem:[#allocation3 + $0x180] sm:$0xf] %vm1214, %v4976
        %5053 = vst.msk [vmem:[#allocation3 + $0x194] sm:$0xf] %vm1214, %v4978
        %5054 = vst.msk [vmem:[#allocation3 + $0x1a8] sm:$0xf] %vm1214, %v4980
        %5055 = vst.msk [vmem:[#allocation3 + $0x1bc] sm:$0xf] %vm1214, %v4982
        %5056 = vst.msk [vmem:[#allocation3 + $0x1d0] sm:$0xf] %vm1214, %v4984
        %5057 = vst.msk [vmem:[#allocation3 + $0x1e4] sm:$0xf] %vm1214, %v4986
        %5058 = vst.msk [vmem:[#allocation3 + $0x1f8] sm:$0xf] %vm1214, %v4988
        %5059 = vst.msk [vmem:[#allocation3 + $0x20c] sm:$0xf] %vm1214, %v4990
        %5060 = vst.msk [vmem:[#allocation3 + $0x220] sm:$0xf] %vm1214, %v4992
        %5061 = vst.msk [vmem:[#allocation3 + $0x234] sm:$0xf] %vm1214, %v4994
        %5062 = vst.msk [vmem:[#allocation3 + $0x248] sm:$0xf] %vm1214, %v4996
        %5063 = vst.msk [vmem:[#allocation3 + $0x25c] sm:$0xf] %vm1214, %v4998
        %5064 = vst.msk [vmem:[#allocation3 + $0x270] sm:$0xf] %vm1214, %v5000
        %v5065 = vld [vmem:[#allocation2 + $0x11] sm:$0xff]
        %v5066 = vld [vmem:[#allocation2 + $0x19] sm:$0xff]
        %v5067 = vld [vmem:[#allocation2 + $0x21] sm:$0xff]
        %v5068 = vld [vmem:[#allocation2 + $0x29] sm:$0xff]
        %v5069 = vld [vmem:[#allocation2 + $0x31] sm:$0xff]
        %v5070 = vld [vmem:[#allocation2 + $0x39] sm:$0xff]
        %v5071 = vld [vmem:[#allocation2 + $0x41] sm:$0xff]
        %v5072 = vld [vmem:[#allocation2 + $0x49] sm:$0xff]
        %v5073 = vld [vmem:[#allocation2 + $0x51] sm:$0xff]
        %v5074 = vld [vmem:[#allocation2 + $0x59] sm:$0xff]
        %v5075 = vld [vmem:[#allocation2 + $0x61] sm:$0xff]
        %v5076 = vld [vmem:[#allocation2 + $0x69] sm:$0xff]
        %v5077 = vld [vmem:[#allocation2 + $0x71] sm:$0xff]
        %v5078 = vld [vmem:[#allocation2 + $0x79] sm:$0xff]
        %v5079 = vld [vmem:[#allocation2 + $0x81] sm:$0xff]
        %v5080 = vld [vmem:[#allocation2 + $0x89] sm:$0xff]
        %v5081 = vld [vmem:[#allocation2 + $0x91] sm:$0xff]
        %v5082 = vld [vmem:[#allocation2 + $0x99] sm:$0xff]
        %v5083 = vld [vmem:[#allocation2 + $0xa1] sm:$0xff]
        %v5084 = vld [vmem:[#allocation2 + $0xa9] sm:$0xff]
        %v5085 = vld [vmem:[#allocation2 + $0xb1] sm:$0xff]
        %v5086 = vld [vmem:[#allocation2 + $0xb9] sm:$0xff]
        %v5087 = vld [vmem:[#allocation2 + $0xc1] sm:$0xff]
        %v5088 = vld [vmem:[#allocation2 + $0xc9] sm:$0xff]
        %v5089 = vld [vmem:[#allocation2 + $0xd1] sm:$0xff]
        %v5090 = vld [vmem:[#allocation2 + $0xd9] sm:$0xff]
        %v5091 = vld [vmem:[#allocation2 + $0xe1] sm:$0xff]
        %v5092 = vld [vmem:[#allocation2 + $0xe9] sm:$0xff]
        %v5093 = vld [vmem:[#allocation2 + $0xf1] sm:$0xff]
        %v5094 = vld [vmem:[#allocation2 + $0xf9] sm:$0xff]
        %v5095 = vld [vmem:[#allocation2 + $0x101] sm:$0xff]
        %v5096 = vld [vmem:[#allocation2 + $0x109] sm:$0xff]
        %v5097 = vpack.c.bf16 %v5066, %v5065
        %v5098 = vpack.c.bf16 %v5068, %v5067
        %v5099 = vpack.c.bf16 %v5070, %v5069
        %v5100 = vpack.c.bf16 %v5072, %v5071
        %v5101 = vpack.c.bf16 %v5074, %v5073
        %v5102 = vpack.c.bf16 %v5076, %v5075
        %v5103 = vpack.c.bf16 %v5078, %v5077
        %v5104 = vpack.c.bf16 %v5080, %v5079
        %v5105 = vpack.c.bf16 %v5082, %v5081
        %v5106 = vpack.c.bf16 %v5084, %v5083
        %v5107 = vpack.c.bf16 %v5086, %v5085
        %v5108 = vpack.c.bf16 %v5088, %v5087
        %v5109 = vpack.c.bf16 %v5090, %v5089
        %v5110 = vpack.c.bf16 %v5092, %v5091
        %v5111 = vpack.c.bf16 %v5094, %v5093
        %v5112 = vpack.c.bf16 %v5096, %v5095
        %v5129 = vunpack.c.l.b16 %v5097
        %v5130 = vunpack.c.h.b16 %v5097
        %v5131 = vunpack.c.l.b16 %v5098
        %v5132 = vunpack.c.h.b16 %v5098
        %v5133 = vunpack.c.l.b16 %v5099
        %v5134 = vunpack.c.h.b16 %v5099
        %v5135 = vunpack.c.l.b16 %v5100
        %v5136 = vunpack.c.h.b16 %v5100
        %v5137 = vunpack.c.l.b16 %v5101
        %v5138 = vunpack.c.h.b16 %v5101
        %v5139 = vunpack.c.l.b16 %v5102
        %v5140 = vunpack.c.h.b16 %v5102
        %v5141 = vunpack.c.l.b16 %v5103
        %v5142 = vunpack.c.h.b16 %v5103
        %v5143 = vunpack.c.l.b16 %v5104
        %v5144 = vunpack.c.h.b16 %v5104
        %v5145 = vunpack.c.l.b16 %v5105
        %v5146 = vunpack.c.h.b16 %v5105
        %v5147 = vunpack.c.l.b16 %v5106
        %v5148 = vunpack.c.h.b16 %v5106
        %v5149 = vunpack.c.l.b16 %v5107
        %v5150 = vunpack.c.h.b16 %v5107
        %v5151 = vunpack.c.l.b16 %v5108
        %v5152 = vunpack.c.h.b16 %v5108
        %v5153 = vunpack.c.l.b16 %v5109
        %v5154 = vunpack.c.h.b16 %v5109
        %v5155 = vunpack.c.l.b16 %v5110
        %v5156 = vunpack.c.h.b16 %v5110
        %v5157 = vunpack.c.l.b16 %v5111
        %v5158 = vunpack.c.h.b16 %v5111
        %v5159 = vunpack.c.l.b16 %v5112
        %v5160 = vunpack.c.h.b16 %v5112
        %v5161 = vpack.c.b16 %v5129, %v5129
        %v5162 = vpack.c.b16 %v5130, %v5130
        %v5163 = vpack.c.b16 %v5131, %v5131
        %v5164 = vpack.c.b16 %v5132, %v5132
        %v5165 = vpack.c.b16 %v5133, %v5133
        %v5166 = vpack.c.b16 %v5134, %v5134
        %v5167 = vpack.c.b16 %v5135, %v5135
        %v5168 = vpack.c.b16 %v5136, %v5136
        %v5169 = vpack.c.b16 %v5137, %v5137
        %v5170 = vpack.c.b16 %v5138, %v5138
        %v5171 = vpack.c.b16 %v5139, %v5139
        %v5172 = vpack.c.b16 %v5140, %v5140
        %v5173 = vpack.c.b16 %v5141, %v5141
        %v5174 = vpack.c.b16 %v5142, %v5142
        %v5175 = vpack.c.b16 %v5143, %v5143
        %v5176 = vpack.c.b16 %v5144, %v5144
        %v5177 = vpack.c.b16 %v5145, %v5145
        %v5178 = vpack.c.b16 %v5146, %v5146
        %v5179 = vpack.c.b16 %v5147, %v5147
        %v5180 = vpack.c.b16 %v5148, %v5148
        %v5181 = vpack.c.b16 %v5149, %v5149
        %v5182 = vpack.c.b16 %v5150, %v5150
        %v5183 = vpack.c.b16 %v5151, %v5151
        %v5184 = vpack.c.b16 %v5152, %v5152
        %v5185 = vpack.c.b16 %v5153, %v5153
        %v5186 = vpack.c.b16 %v5154, %v5154
        %v5187 = vpack.c.b16 %v5155, %v5155
        %v5188 = vpack.c.b16 %v5156, %v5156
        %v5189 = vpack.c.b16 %v5157, %v5157
        %v5190 = vpack.c.b16 %v5158, %v5158
        %v5191 = vpack.c.b16 %v5159, %v5159
        %v5192 = vpack.c.b16 %v5160, %v5160
        %5225 = vst.msk [vmem:[#allocation3 + $0x8] sm:$0xf] %vm957, %v5161
        %5226 = vst.msk [vmem:[#allocation3 + $0x1c] sm:$0xf] %vm957, %v5162
        %5227 = vst.msk [vmem:[#allocation3 + $0x30] sm:$0xf] %vm957, %v5163
        %5228 = vst.msk [vmem:[#allocation3 + $0x44] sm:$0xf] %vm957, %v5164
        %5229 = vst.msk [vmem:[#allocation3 + $0x58] sm:$0xf] %vm957, %v5165
        %5230 = vst.msk [vmem:[#allocation3 + $0x6c] sm:$0xf] %vm957, %v5166
        %5231 = vst.msk [vmem:[#allocation3 + $0x80] sm:$0xf] %vm957, %v5167
        %5232 = vst.msk [vmem:[#allocation3 + $0x94] sm:$0xf] %vm957, %v5168
        %5233 = vst.msk [vmem:[#allocation3 + $0xa8] sm:$0xf] %vm957, %v5169
        %5234 = vst.msk [vmem:[#allocation3 + $0xbc] sm:$0xf] %vm957, %v5170
        %5235 = vst.msk [vmem:[#allocation3 + $0xd0] sm:$0xf] %vm957, %v5171
        %5236 = vst.msk [vmem:[#allocation3 + $0xe4] sm:$0xf] %vm957, %v5172
        %5237 = vst.msk [vmem:[#allocation3 + $0xf8] sm:$0xf] %vm957, %v5173
        %5238 = vst.msk [vmem:[#allocation3 + $0x10c] sm:$0xf] %vm957, %v5174
        %5239 = vst.msk [vmem:[#allocation3 + $0x120] sm:$0xf] %vm957, %v5175
        %5240 = vst.msk [vmem:[#allocation3 + $0x134] sm:$0xf] %vm957, %v5176
        %5241 = vst.msk [vmem:[#allocation3 + $0x148] sm:$0xf] %vm957, %v5177
        %5242 = vst.msk [vmem:[#allocation3 + $0x15c] sm:$0xf] %vm957, %v5178
        %5243 = vst.msk [vmem:[#allocation3 + $0x170] sm:$0xf] %vm957, %v5179
        %5244 = vst.msk [vmem:[#allocation3 + $0x184] sm:$0xf] %vm957, %v5180
        %5245 = vst.msk [vmem:[#allocation3 + $0x198] sm:$0xf] %vm957, %v5181
        %5246 = vst.msk [vmem:[#allocation3 + $0x1ac] sm:$0xf] %vm957, %v5182
        %5247 = vst.msk [vmem:[#allocation3 + $0x1c0] sm:$0xf] %vm957, %v5183
        %5248 = vst.msk [vmem:[#allocation3 + $0x1d4] sm:$0xf] %vm957, %v5184
        %5249 = vst.msk [vmem:[#allocation3 + $0x1e8] sm:$0xf] %vm957, %v5185
        %5250 = vst.msk [vmem:[#allocation3 + $0x1fc] sm:$0xf] %vm957, %v5186
        %5251 = vst.msk [vmem:[#allocation3 + $0x210] sm:$0xf] %vm957, %v5187
        %5252 = vst.msk [vmem:[#allocation3 + $0x224] sm:$0xf] %vm957, %v5188
        %5253 = vst.msk [vmem:[#allocation3 + $0x238] sm:$0xf] %vm957, %v5189
        %5254 = vst.msk [vmem:[#allocation3 + $0x24c] sm:$0xf] %vm957, %v5190
        %5255 = vst.msk [vmem:[#allocation3 + $0x260] sm:$0xf] %vm957, %v5191
        %5256 = vst.msk [vmem:[#allocation3 + $0x274] sm:$0xf] %vm957, %v5192
        %v5257 = vld [vmem:[#allocation2 + $0x12] sm:$0xff]
        %v5258 = vld [vmem:[#allocation2 + $0x1a] sm:$0xff]
        %v5259 = vld [vmem:[#allocation2 + $0x22] sm:$0xff]
        %v5260 = vld [vmem:[#allocation2 + $0x2a] sm:$0xff]
        %v5261 = vld [vmem:[#allocation2 + $0x32] sm:$0xff]
        %v5262 = vld [vmem:[#allocation2 + $0x3a] sm:$0xff]
        %v5263 = vld [vmem:[#allocation2 + $0x42] sm:$0xff]
        %v5264 = vld [vmem:[#allocation2 + $0x4a] sm:$0xff]
        %v5265 = vld [vmem:[#allocation2 + $0x52] sm:$0xff]
        %v5266 = vld [vmem:[#allocation2 + $0x5a] sm:$0xff]
        %v5267 = vld [vmem:[#allocation2 + $0x62] sm:$0xff]
        %v5268 = vld [vmem:[#allocation2 + $0x6a] sm:$0xff]
        %v5269 = vld [vmem:[#allocation2 + $0x72] sm:$0xff]
        %v5270 = vld [vmem:[#allocation2 + $0x7a] sm:$0xff]
        %v5271 = vld [vmem:[#allocation2 + $0x82] sm:$0xff]
        %v5272 = vld [vmem:[#allocation2 + $0x8a] sm:$0xff]
        %v5273 = vld [vmem:[#allocation2 + $0x92] sm:$0xff]
        %v5274 = vld [vmem:[#allocation2 + $0x9a] sm:$0xff]
        %v5275 = vld [vmem:[#allocation2 + $0xa2] sm:$0xff]
        %v5276 = vld [vmem:[#allocation2 + $0xaa] sm:$0xff]
        %v5277 = vld [vmem:[#allocation2 + $0xb2] sm:$0xff]
        %v5278 = vld [vmem:[#allocation2 + $0xba] sm:$0xff]
        %v5279 = vld [vmem:[#allocation2 + $0xc2] sm:$0xff]
        %v5280 = vld [vmem:[#allocation2 + $0xca] sm:$0xff]
        %v5281 = vld [vmem:[#allocation2 + $0xd2] sm:$0xff]
        %v5282 = vld [vmem:[#allocation2 + $0xda] sm:$0xff]
        %v5283 = vld [vmem:[#allocation2 + $0xe2] sm:$0xff]
        %v5284 = vld [vmem:[#allocation2 + $0xea] sm:$0xff]
        %v5285 = vld [vmem:[#allocation2 + $0xf2] sm:$0xff]
        %v5286 = vld [vmem:[#allocation2 + $0xfa] sm:$0xff]
        %v5287 = vld [vmem:[#allocation2 + $0x102] sm:$0xff]
        %v5288 = vld [vmem:[#allocation2 + $0x10a] sm:$0xff]
        %v5289 = vpack.c.bf16 %v5258, %v5257
        %v5290 = vpack.c.bf16 %v5260, %v5259
        %v5291 = vpack.c.bf16 %v5262, %v5261
        %v5292 = vpack.c.bf16 %v5264, %v5263
        %v5293 = vpack.c.bf16 %v5266, %v5265
        %v5294 = vpack.c.bf16 %v5268, %v5267
        %v5295 = vpack.c.bf16 %v5270, %v5269
        %v5296 = vpack.c.bf16 %v5272, %v5271
        %v5297 = vpack.c.bf16 %v5274, %v5273
        %v5298 = vpack.c.bf16 %v5276, %v5275
        %v5299 = vpack.c.bf16 %v5278, %v5277
        %v5300 = vpack.c.bf16 %v5280, %v5279
        %v5301 = vpack.c.bf16 %v5282, %v5281
        %v5302 = vpack.c.bf16 %v5284, %v5283
        %v5303 = vpack.c.bf16 %v5286, %v5285
        %v5304 = vpack.c.bf16 %v5288, %v5287
        %v5321 = vunpack.c.l.b16 %v5289
        %v5322 = vunpack.c.h.b16 %v5289
        %v5323 = vunpack.c.l.b16 %v5290
        %v5324 = vunpack.c.h.b16 %v5290
        %v5325 = vunpack.c.l.b16 %v5291
        %v5326 = vunpack.c.h.b16 %v5291
        %v5327 = vunpack.c.l.b16 %v5292
        %v5328 = vunpack.c.h.b16 %v5292
        %v5329 = vunpack.c.l.b16 %v5293
        %v5330 = vunpack.c.h.b16 %v5293
        %v5331 = vunpack.c.l.b16 %v5294
        %v5332 = vunpack.c.h.b16 %v5294
        %v5333 = vunpack.c.l.b16 %v5295
        %v5334 = vunpack.c.h.b16 %v5295
        %v5335 = vunpack.c.l.b16 %v5296
        %v5336 = vunpack.c.h.b16 %v5296
        %v5337 = vunpack.c.l.b16 %v5297
        %v5338 = vunpack.c.h.b16 %v5297
        %v5339 = vunpack.c.l.b16 %v5298
        %v5340 = vunpack.c.h.b16 %v5298
        %v5341 = vunpack.c.l.b16 %v5299
        %v5342 = vunpack.c.h.b16 %v5299
        %v5343 = vunpack.c.l.b16 %v5300
        %v5344 = vunpack.c.h.b16 %v5300
        %v5345 = vunpack.c.l.b16 %v5301
        %v5346 = vunpack.c.h.b16 %v5301
        %v5347 = vunpack.c.l.b16 %v5302
        %v5348 = vunpack.c.h.b16 %v5302
        %v5349 = vunpack.c.l.b16 %v5303
        %v5350 = vunpack.c.h.b16 %v5303
        %v5351 = vunpack.c.l.b16 %v5304
        %v5352 = vunpack.c.h.b16 %v5304
        %v5353 = vpack.c.b16 %v5321, %v5321
        %v5354 = vpack.c.b16 %v5322, %v5322
        %v5355 = vpack.c.b16 %v5323, %v5323
        %v5356 = vpack.c.b16 %v5324, %v5324
        %v5357 = vpack.c.b16 %v5325, %v5325
        %v5358 = vpack.c.b16 %v5326, %v5326
        %v5359 = vpack.c.b16 %v5327, %v5327
        %v5360 = vpack.c.b16 %v5328, %v5328
        %v5361 = vpack.c.b16 %v5329, %v5329
        %v5362 = vpack.c.b16 %v5330, %v5330
        %v5363 = vpack.c.b16 %v5331, %v5331
        %v5364 = vpack.c.b16 %v5332, %v5332
        %v5365 = vpack.c.b16 %v5333, %v5333
        %v5366 = vpack.c.b16 %v5334, %v5334
        %v5367 = vpack.c.b16 %v5335, %v5335
        %v5368 = vpack.c.b16 %v5336, %v5336
        %v5369 = vpack.c.b16 %v5337, %v5337
        %v5370 = vpack.c.b16 %v5338, %v5338
        %v5371 = vpack.c.b16 %v5339, %v5339
        %v5372 = vpack.c.b16 %v5340, %v5340
        %v5373 = vpack.c.b16 %v5341, %v5341
        %v5374 = vpack.c.b16 %v5342, %v5342
        %v5375 = vpack.c.b16 %v5343, %v5343
        %v5376 = vpack.c.b16 %v5344, %v5344
        %v5377 = vpack.c.b16 %v5345, %v5345
        %v5378 = vpack.c.b16 %v5346, %v5346
        %v5379 = vpack.c.b16 %v5347, %v5347
        %v5380 = vpack.c.b16 %v5348, %v5348
        %v5381 = vpack.c.b16 %v5349, %v5349
        %v5382 = vpack.c.b16 %v5350, %v5350
        %v5383 = vpack.c.b16 %v5351, %v5351
        %v5384 = vpack.c.b16 %v5352, %v5352
        %5385 = vrot.lane.b32.xlu0 %v5353, 64
        %v5386 = vpop.permute.xlu0 %5385
        %5387 = vrot.lane.b32.xlu0 %v5354, 64
        %v5388 = vpop.permute.xlu0 %5387
        %5389 = vrot.lane.b32.xlu0 %v5355, 64
        %v5390 = vpop.permute.xlu0 %5389
        %5391 = vrot.lane.b32.xlu0 %v5356, 64
        %v5392 = vpop.permute.xlu0 %5391
        %5393 = vrot.lane.b32.xlu0 %v5357, 64
        %v5394 = vpop.permute.xlu0 %5393
        %5395 = vrot.lane.b32.xlu0 %v5358, 64
        %v5396 = vpop.permute.xlu0 %5395
        %5397 = vrot.lane.b32.xlu0 %v5359, 64
        %v5398 = vpop.permute.xlu0 %5397
        %5399 = vrot.lane.b32.xlu0 %v5360, 64
        %v5400 = vpop.permute.xlu0 %5399
        %5401 = vrot.lane.b32.xlu0 %v5361, 64
        %v5402 = vpop.permute.xlu0 %5401
        %5403 = vrot.lane.b32.xlu0 %v5362, 64
        %v5404 = vpop.permute.xlu0 %5403
        %5405 = vrot.lane.b32.xlu0 %v5363, 64
        %v5406 = vpop.permute.xlu0 %5405
        %5407 = vrot.lane.b32.xlu0 %v5364, 64
        %v5408 = vpop.permute.xlu0 %5407
        %5409 = vrot.lane.b32.xlu0 %v5365, 64
        %v5410 = vpop.permute.xlu0 %5409
        %5411 = vrot.lane.b32.xlu0 %v5366, 64
        %v5412 = vpop.permute.xlu0 %5411
        %5413 = vrot.lane.b32.xlu0 %v5367, 64
        %v5414 = vpop.permute.xlu0 %5413
        %5415 = vrot.lane.b32.xlu0 %v5368, 64
        %v5416 = vpop.permute.xlu0 %5415
        %5417 = vrot.lane.b32.xlu0 %v5369, 64
        %v5418 = vpop.permute.xlu0 %5417
        %5419 = vrot.lane.b32.xlu0 %v5370, 64
        %v5420 = vpop.permute.xlu0 %5419
        %5421 = vrot.lane.b32.xlu0 %v5371, 64
        %v5422 = vpop.permute.xlu0 %5421
        %5423 = vrot.lane.b32.xlu0 %v5372, 64
        %v5424 = vpop.permute.xlu0 %5423
        %5425 = vrot.lane.b32.xlu0 %v5373, 64
        %v5426 = vpop.permute.xlu0 %5425
        %5427 = vrot.lane.b32.xlu0 %v5374, 64
        %v5428 = vpop.permute.xlu0 %5427
        %5429 = vrot.lane.b32.xlu0 %v5375, 64
        %v5430 = vpop.permute.xlu0 %5429
        %5431 = vrot.lane.b32.xlu0 %v5376, 64
        %v5432 = vpop.permute.xlu0 %5431
        %5433 = vrot.lane.b32.xlu0 %v5377, 64
        %v5434 = vpop.permute.xlu0 %5433
        %5435 = vrot.lane.b32.xlu0 %v5378, 64
        %v5436 = vpop.permute.xlu0 %5435
        %5437 = vrot.lane.b32.xlu0 %v5379, 64
        %v5438 = vpop.permute.xlu0 %5437
        %5439 = vrot.lane.b32.xlu0 %v5380, 64
        %v5440 = vpop.permute.xlu0 %5439
        %5441 = vrot.lane.b32.xlu0 %v5381, 64
        %v5442 = vpop.permute.xlu0 %5441
        %5443 = vrot.lane.b32.xlu0 %v5382, 64
        %v5444 = vpop.permute.xlu0 %5443
        %5445 = vrot.lane.b32.xlu0 %v5383, 64
        %v5446 = vpop.permute.xlu0 %5445
        %5447 = vrot.lane.b32.xlu0 %v5384, 64
        %v5448 = vpop.permute.xlu0 %5447
        %5481 = vst.msk [vmem:[#allocation3 + $0x8] sm:$0xf] %vm1214, %v5386
        %5482 = vst.msk [vmem:[#allocation3 + $0x1c] sm:$0xf] %vm1214, %v5388
        %5483 = vst.msk [vmem:[#allocation3 + $0x30] sm:$0xf] %vm1214, %v5390
        %5484 = vst.msk [vmem:[#allocation3 + $0x44] sm:$0xf] %vm1214, %v5392
        %5485 = vst.msk [vmem:[#allocation3 + $0x58] sm:$0xf] %vm1214, %v5394
        %5486 = vst.msk [vmem:[#allocation3 + $0x6c] sm:$0xf] %vm1214, %v5396
        %5487 = vst.msk [vmem:[#allocation3 + $0x80] sm:$0xf] %vm1214, %v5398
        %5488 = vst.msk [vmem:[#allocation3 + $0x94] sm:$0xf] %vm1214, %v5400
        %5489 = vst.msk [vmem:[#allocation3 + $0xa8] sm:$0xf] %vm1214, %v5402
        %5490 = vst.msk [vmem:[#allocation3 + $0xbc] sm:$0xf] %vm1214, %v5404
        %5491 = vst.msk [vmem:[#allocation3 + $0xd0] sm:$0xf] %vm1214, %v5406
        %5492 = vst.msk [vmem:[#allocation3 + $0xe4] sm:$0xf] %vm1214, %v5408
        %5493 = vst.msk [vmem:[#allocation3 + $0xf8] sm:$0xf] %vm1214, %v5410
        %5494 = vst.msk [vmem:[#allocation3 + $0x10c] sm:$0xf] %vm1214, %v5412
        %5495 = vst.msk [vmem:[#allocation3 + $0x120] sm:$0xf] %vm1214, %v5414
        %5496 = vst.msk [vmem:[#allocation3 + $0x134] sm:$0xf] %vm1214, %v5416
        %5497 = vst.msk [vmem:[#allocation3 + $0x148] sm:$0xf] %vm1214, %v5418
        %5498 = vst.msk [vmem:[#allocation3 + $0x15c] sm:$0xf] %vm1214, %v5420
        %5499 = vst.msk [vmem:[#allocation3 + $0x170] sm:$0xf] %vm1214, %v5422
        %5500 = vst.msk [vmem:[#allocation3 + $0x184] sm:$0xf] %vm1214, %v5424
        %5501 = vst.msk [vmem:[#allocation3 + $0x198] sm:$0xf] %vm1214, %v5426
        %5502 = vst.msk [vmem:[#allocation3 + $0x1ac] sm:$0xf] %vm1214, %v5428
        %5503 = vst.msk [vmem:[#allocation3 + $0x1c0] sm:$0xf] %vm1214, %v5430
        %5504 = vst.msk [vmem:[#allocation3 + $0x1d4] sm:$0xf] %vm1214, %v5432
        %5505 = vst.msk [vmem:[#allocation3 + $0x1e8] sm:$0xf] %vm1214, %v5434
        %5506 = vst.msk [vmem:[#allocation3 + $0x1fc] sm:$0xf] %vm1214, %v5436
        %5507 = vst.msk [vmem:[#allocation3 + $0x210] sm:$0xf] %vm1214, %v5438
        %5508 = vst.msk [vmem:[#allocation3 + $0x224] sm:$0xf] %vm1214, %v5440
        %5509 = vst.msk [vmem:[#allocation3 + $0x238] sm:$0xf] %vm1214, %v5442
        %5510 = vst.msk [vmem:[#allocation3 + $0x24c] sm:$0xf] %vm1214, %v5444
        %5511 = vst.msk [vmem:[#allocation3 + $0x260] sm:$0xf] %vm1214, %v5446
        %5512 = vst.msk [vmem:[#allocation3 + $0x274] sm:$0xf] %vm1214, %v5448
        %v5513 = vld [vmem:[#allocation2 + $0x20] sm:$0xff]
        %v5514 = vld [vmem:[#allocation2 + $0x28] sm:$0xff]
        %v5515 = vld [vmem:[#allocation2 + $0x30] sm:$0xff]
        %v5516 = vld [vmem:[#allocation2 + $0x38] sm:$0xff]
        %v5517 = vld [vmem:[#allocation2 + $0x40] sm:$0xff]
        %v5518 = vld [vmem:[#allocation2 + $0x48] sm:$0xff]
        %v5519 = vld [vmem:[#allocation2 + $0x50] sm:$0xff]
        %v5520 = vld [vmem:[#allocation2 + $0x58] sm:$0xff]
        %v5521 = vld [vmem:[#allocation2 + $0x60] sm:$0xff]
        %v5522 = vld [vmem:[#allocation2 + $0x68] sm:$0xff]
        %v5523 = vld [vmem:[#allocation2 + $0x70] sm:$0xff]
        %v5524 = vld [vmem:[#allocation2 + $0x78] sm:$0xff]
        %v5525 = vld [vmem:[#allocation2 + $0x80] sm:$0xff]
        %v5526 = vld [vmem:[#allocation2 + $0x88] sm:$0xff]
        %v5527 = vld [vmem:[#allocation2 + $0x90] sm:$0xff]
        %v5528 = vld [vmem:[#allocation2 + $0x98] sm:$0xff]
        %v5529 = vld [vmem:[#allocation2 + $0xa0] sm:$0xff]
        %v5530 = vld [vmem:[#allocation2 + $0xa8] sm:$0xff]
        %v5531 = vld [vmem:[#allocation2 + $0xb0] sm:$0xff]
        %v5532 = vld [vmem:[#allocation2 + $0xb8] sm:$0xff]
        %v5533 = vld [vmem:[#allocation2 + $0xc0] sm:$0xff]
        %v5534 = vld [vmem:[#allocation2 + $0xc8] sm:$0xff]
        %v5535 = vld [vmem:[#allocation2 + $0xd0] sm:$0xff]
        %v5536 = vld [vmem:[#allocation2 + $0xd8] sm:$0xff]
        %v5537 = vld [vmem:[#allocation2 + $0xe0] sm:$0xff]
        %v5538 = vld [vmem:[#allocation2 + $0xe8] sm:$0xff]
        %v5539 = vld [vmem:[#allocation2 + $0xf0] sm:$0xff]
        %v5540 = vld [vmem:[#allocation2 + $0xf8] sm:$0xff]
        %v5541 = vld [vmem:[#allocation2 + $0x100] sm:$0xff]
        %v5542 = vld [vmem:[#allocation2 + $0x108] sm:$0xff]
        %v5543 = vld [vmem:[#allocation2 + $0x110] sm:$0xff]
        %v5544 = vld [vmem:[#allocation2 + $0x118] sm:$0xff]
        %v5545 = vpack.c.bf16 %v5514, %v5513
        %v5546 = vpack.c.bf16 %v5516, %v5515
        %v5547 = vpack.c.bf16 %v5518, %v5517
        %v5548 = vpack.c.bf16 %v5520, %v5519
        %v5549 = vpack.c.bf16 %v5522, %v5521
        %v5550 = vpack.c.bf16 %v5524, %v5523
        %v5551 = vpack.c.bf16 %v5526, %v5525
        %v5552 = vpack.c.bf16 %v5528, %v5527
        %v5553 = vpack.c.bf16 %v5530, %v5529
        %v5554 = vpack.c.bf16 %v5532, %v5531
        %v5555 = vpack.c.bf16 %v5534, %v5533
        %v5556 = vpack.c.bf16 %v5536, %v5535
        %v5557 = vpack.c.bf16 %v5538, %v5537
        %v5558 = vpack.c.bf16 %v5540, %v5539
        %v5559 = vpack.c.bf16 %v5542, %v5541
        %v5560 = vpack.c.bf16 %v5544, %v5543
        %v5577 = vunpack.c.l.b16 %v5545
        %v5578 = vunpack.c.h.b16 %v5545
        %v5579 = vunpack.c.l.b16 %v5546
        %v5580 = vunpack.c.h.b16 %v5546
        %v5581 = vunpack.c.l.b16 %v5547
        %v5582 = vunpack.c.h.b16 %v5547
        %v5583 = vunpack.c.l.b16 %v5548
        %v5584 = vunpack.c.h.b16 %v5548
        %v5585 = vunpack.c.l.b16 %v5549
        %v5586 = vunpack.c.h.b16 %v5549
        %v5587 = vunpack.c.l.b16 %v5550
        %v5588 = vunpack.c.h.b16 %v5550
        %v5589 = vunpack.c.l.b16 %v5551
        %v5590 = vunpack.c.h.b16 %v5551
        %v5591 = vunpack.c.l.b16 %v5552
        %v5592 = vunpack.c.h.b16 %v5552
        %v5593 = vunpack.c.l.b16 %v5553
        %v5594 = vunpack.c.h.b16 %v5553
        %v5595 = vunpack.c.l.b16 %v5554
        %v5596 = vunpack.c.h.b16 %v5554
        %v5597 = vunpack.c.l.b16 %v5555
        %v5598 = vunpack.c.h.b16 %v5555
        %v5599 = vunpack.c.l.b16 %v5556
        %v5600 = vunpack.c.h.b16 %v5556
        %v5601 = vunpack.c.l.b16 %v5557
        %v5602 = vunpack.c.h.b16 %v5557
        %v5603 = vunpack.c.l.b16 %v5558
        %v5604 = vunpack.c.h.b16 %v5558
        %v5605 = vunpack.c.l.b16 %v5559
        %v5606 = vunpack.c.h.b16 %v5559
        %v5607 = vunpack.c.l.b16 %v5560
        %v5608 = vunpack.c.h.b16 %v5560
        %v5609 = vpack.c.b16 %v5577, %v5577
        %v5610 = vpack.c.b16 %v5578, %v5578
        %v5611 = vpack.c.b16 %v5579, %v5579
        %v5612 = vpack.c.b16 %v5580, %v5580
        %v5613 = vpack.c.b16 %v5581, %v5581
        %v5614 = vpack.c.b16 %v5582, %v5582
        %v5615 = vpack.c.b16 %v5583, %v5583
        %v5616 = vpack.c.b16 %v5584, %v5584
        %v5617 = vpack.c.b16 %v5585, %v5585
        %v5618 = vpack.c.b16 %v5586, %v5586
        %v5619 = vpack.c.b16 %v5587, %v5587
        %v5620 = vpack.c.b16 %v5588, %v5588
        %v5621 = vpack.c.b16 %v5589, %v5589
        %v5622 = vpack.c.b16 %v5590, %v5590
        %v5623 = vpack.c.b16 %v5591, %v5591
        %v5624 = vpack.c.b16 %v5592, %v5592
        %v5625 = vpack.c.b16 %v5593, %v5593
        %v5626 = vpack.c.b16 %v5594, %v5594
        %v5627 = vpack.c.b16 %v5595, %v5595
        %v5628 = vpack.c.b16 %v5596, %v5596
        %v5629 = vpack.c.b16 %v5597, %v5597
        %v5630 = vpack.c.b16 %v5598, %v5598
        %v5631 = vpack.c.b16 %v5599, %v5599
        %v5632 = vpack.c.b16 %v5600, %v5600
        %v5633 = vpack.c.b16 %v5601, %v5601
        %v5634 = vpack.c.b16 %v5602, %v5602
        %v5635 = vpack.c.b16 %v5603, %v5603
        %v5636 = vpack.c.b16 %v5604, %v5604
        %v5637 = vpack.c.b16 %v5605, %v5605
        %v5638 = vpack.c.b16 %v5606, %v5606
        %v5639 = vpack.c.b16 %v5607, %v5607
        %v5640 = vpack.c.b16 %v5608, %v5608
        %5673 = vst.msk [vmem:[#allocation3 + $0xc] sm:$0xf] %vm957, %v5609
        %5674 = vst.msk [vmem:[#allocation3 + $0x20] sm:$0xf] %vm957, %v5610
        %5675 = vst.msk [vmem:[#allocation3 + $0x34] sm:$0xf] %vm957, %v5611
        %5676 = vst.msk [vmem:[#allocation3 + $0x48] sm:$0xf] %vm957, %v5612
        %5677 = vst.msk [vmem:[#allocation3 + $0x5c] sm:$0xf] %vm957, %v5613
        %5678 = vst.msk [vmem:[#allocation3 + $0x70] sm:$0xf] %vm957, %v5614
        %5679 = vst.msk [vmem:[#allocation3 + $0x84] sm:$0xf] %vm957, %v5615
        %5680 = vst.msk [vmem:[#allocation3 + $0x98] sm:$0xf] %vm957, %v5616
        %5681 = vst.msk [vmem:[#allocation3 + $0xac] sm:$0xf] %vm957, %v5617
        %5682 = vst.msk [vmem:[#allocation3 + $0xc0] sm:$0xf] %vm957, %v5618
        %5683 = vst.msk [vmem:[#allocation3 + $0xd4] sm:$0xf] %vm957, %v5619
        %5684 = vst.msk [vmem:[#allocation3 + $0xe8] sm:$0xf] %vm957, %v5620
        %5685 = vst.msk [vmem:[#allocation3 + $0xfc] sm:$0xf] %vm957, %v5621
        %5686 = vst.msk [vmem:[#allocation3 + $0x110] sm:$0xf] %vm957, %v5622
        %5687 = vst.msk [vmem:[#allocation3 + $0x124] sm:$0xf] %vm957, %v5623
        %5688 = vst.msk [vmem:[#allocation3 + $0x138] sm:$0xf] %vm957, %v5624
        %5689 = vst.msk [vmem:[#allocation3 + $0x14c] sm:$0xf] %vm957, %v5625
        %5690 = vst.msk [vmem:[#allocation3 + $0x160] sm:$0xf] %vm957, %v5626
        %5691 = vst.msk [vmem:[#allocation3 + $0x174] sm:$0xf] %vm957, %v5627
        %5692 = vst.msk [vmem:[#allocation3 + $0x188] sm:$0xf] %vm957, %v5628
        %5693 = vst.msk [vmem:[#allocation3 + $0x19c] sm:$0xf] %vm957, %v5629
        %5694 = vst.msk [vmem:[#allocation3 + $0x1b0] sm:$0xf] %vm957, %v5630
        %5695 = vst.msk [vmem:[#allocation3 + $0x1c4] sm:$0xf] %vm957, %v5631
        %5696 = vst.msk [vmem:[#allocation3 + $0x1d8] sm:$0xf] %vm957, %v5632
        %5697 = vst.msk [vmem:[#allocation3 + $0x1ec] sm:$0xf] %vm957, %v5633
        %5698 = vst.msk [vmem:[#allocation3 + $0x200] sm:$0xf] %vm957, %v5634
        %5699 = vst.msk [vmem:[#allocation3 + $0x214] sm:$0xf] %vm957, %v5635
        %5700 = vst.msk [vmem:[#allocation3 + $0x228] sm:$0xf] %vm957, %v5636
        %5701 = vst.msk [vmem:[#allocation3 + $0x23c] sm:$0xf] %vm957, %v5637
        %5702 = vst.msk [vmem:[#allocation3 + $0x250] sm:$0xf] %vm957, %v5638
        %5703 = vst.msk [vmem:[#allocation3 + $0x264] sm:$0xf] %vm957, %v5639
        %5704 = vst.msk [vmem:[#allocation3 + $0x278] sm:$0xf] %vm957, %v5640
        %v5705 = vld [vmem:[#allocation2 + $0x21] sm:$0xff]
        %v5706 = vld [vmem:[#allocation2 + $0x29] sm:$0xff]
        %v5707 = vld [vmem:[#allocation2 + $0x31] sm:$0xff]
        %v5708 = vld [vmem:[#allocation2 + $0x39] sm:$0xff]
        %v5709 = vld [vmem:[#allocation2 + $0x41] sm:$0xff]
        %v5710 = vld [vmem:[#allocation2 + $0x49] sm:$0xff]
        %v5711 = vld [vmem:[#allocation2 + $0x51] sm:$0xff]
        %v5712 = vld [vmem:[#allocation2 + $0x59] sm:$0xff]
        %v5713 = vld [vmem:[#allocation2 + $0x61] sm:$0xff]
        %v5714 = vld [vmem:[#allocation2 + $0x69] sm:$0xff]
        %v5715 = vld [vmem:[#allocation2 + $0x71] sm:$0xff]
        %v5716 = vld [vmem:[#allocation2 + $0x79] sm:$0xff]
        %v5717 = vld [vmem:[#allocation2 + $0x81] sm:$0xff]
        %v5718 = vld [vmem:[#allocation2 + $0x89] sm:$0xff]
        %v5719 = vld [vmem:[#allocation2 + $0x91] sm:$0xff]
        %v5720 = vld [vmem:[#allocation2 + $0x99] sm:$0xff]
        %v5721 = vld [vmem:[#allocation2 + $0xa1] sm:$0xff]
        %v5722 = vld [vmem:[#allocation2 + $0xa9] sm:$0xff]
        %v5723 = vld [vmem:[#allocation2 + $0xb1] sm:$0xff]
        %v5724 = vld [vmem:[#allocation2 + $0xb9] sm:$0xff]
        %v5725 = vld [vmem:[#allocation2 + $0xc1] sm:$0xff]
        %v5726 = vld [vmem:[#allocation2 + $0xc9] sm:$0xff]
        %v5727 = vld [vmem:[#allocation2 + $0xd1] sm:$0xff]
        %v5728 = vld [vmem:[#allocation2 + $0xd9] sm:$0xff]
        %v5729 = vld [vmem:[#allocation2 + $0xe1] sm:$0xff]
        %v5730 = vld [vmem:[#allocation2 + $0xe9] sm:$0xff]
        %v5731 = vld [vmem:[#allocation2 + $0xf1] sm:$0xff]
        %v5732 = vld [vmem:[#allocation2 + $0xf9] sm:$0xff]
        %v5733 = vld [vmem:[#allocation2 + $0x101] sm:$0xff]
        %v5734 = vld [vmem:[#allocation2 + $0x109] sm:$0xff]
        %v5735 = vld [vmem:[#allocation2 + $0x111] sm:$0xff]
        %v5736 = vld [vmem:[#allocation2 + $0x119] sm:$0xff]
        %v5737 = vpack.c.bf16 %v5706, %v5705
        %v5738 = vpack.c.bf16 %v5708, %v5707
        %v5739 = vpack.c.bf16 %v5710, %v5709
        %v5740 = vpack.c.bf16 %v5712, %v5711
        %v5741 = vpack.c.bf16 %v5714, %v5713
        %v5742 = vpack.c.bf16 %v5716, %v5715
        %v5743 = vpack.c.bf16 %v5718, %v5717
        %v5744 = vpack.c.bf16 %v5720, %v5719
        %v5745 = vpack.c.bf16 %v5722, %v5721
        %v5746 = vpack.c.bf16 %v5724, %v5723
        %v5747 = vpack.c.bf16 %v5726, %v5725
        %v5748 = vpack.c.bf16 %v5728, %v5727
        %v5749 = vpack.c.bf16 %v5730, %v5729
        %v5750 = vpack.c.bf16 %v5732, %v5731
        %v5751 = vpack.c.bf16 %v5734, %v5733
        %v5752 = vpack.c.bf16 %v5736, %v5735
        %v5769 = vunpack.c.l.b16 %v5737
        %v5770 = vunpack.c.h.b16 %v5737
        %v5771 = vunpack.c.l.b16 %v5738
        %v5772 = vunpack.c.h.b16 %v5738
        %v5773 = vunpack.c.l.b16 %v5739
        %v5774 = vunpack.c.h.b16 %v5739
        %v5775 = vunpack.c.l.b16 %v5740
        %v5776 = vunpack.c.h.b16 %v5740
        %v5777 = vunpack.c.l.b16 %v5741
        %v5778 = vunpack.c.h.b16 %v5741
        %v5779 = vunpack.c.l.b16 %v5742
        %v5780 = vunpack.c.h.b16 %v5742
        %v5781 = vunpack.c.l.b16 %v5743
        %v5782 = vunpack.c.h.b16 %v5743
        %v5783 = vunpack.c.l.b16 %v5744
        %v5784 = vunpack.c.h.b16 %v5744
        %v5785 = vunpack.c.l.b16 %v5745
        %v5786 = vunpack.c.h.b16 %v5745
        %v5787 = vunpack.c.l.b16 %v5746
        %v5788 = vunpack.c.h.b16 %v5746
        %v5789 = vunpack.c.l.b16 %v5747
        %v5790 = vunpack.c.h.b16 %v5747
        %v5791 = vunpack.c.l.b16 %v5748
        %v5792 = vunpack.c.h.b16 %v5748
        %v5793 = vunpack.c.l.b16 %v5749
        %v5794 = vunpack.c.h.b16 %v5749
        %v5795 = vunpack.c.l.b16 %v5750
        %v5796 = vunpack.c.h.b16 %v5750
        %v5797 = vunpack.c.l.b16 %v5751
        %v5798 = vunpack.c.h.b16 %v5751
        %v5799 = vunpack.c.l.b16 %v5752
        %v5800 = vunpack.c.h.b16 %v5752
        %v5801 = vpack.c.b16 %v5769, %v5769
        %v5802 = vpack.c.b16 %v5770, %v5770
        %v5803 = vpack.c.b16 %v5771, %v5771
        %v5804 = vpack.c.b16 %v5772, %v5772
        %v5805 = vpack.c.b16 %v5773, %v5773
        %v5806 = vpack.c.b16 %v5774, %v5774
        %v5807 = vpack.c.b16 %v5775, %v5775
        %v5808 = vpack.c.b16 %v5776, %v5776
        %v5809 = vpack.c.b16 %v5777, %v5777
        %v5810 = vpack.c.b16 %v5778, %v5778
        %v5811 = vpack.c.b16 %v5779, %v5779
        %v5812 = vpack.c.b16 %v5780, %v5780
        %v5813 = vpack.c.b16 %v5781, %v5781
        %v5814 = vpack.c.b16 %v5782, %v5782
        %v5815 = vpack.c.b16 %v5783, %v5783
        %v5816 = vpack.c.b16 %v5784, %v5784
        %v5817 = vpack.c.b16 %v5785, %v5785
        %v5818 = vpack.c.b16 %v5786, %v5786
        %v5819 = vpack.c.b16 %v5787, %v5787
        %v5820 = vpack.c.b16 %v5788, %v5788
        %v5821 = vpack.c.b16 %v5789, %v5789
        %v5822 = vpack.c.b16 %v5790, %v5790
        %v5823 = vpack.c.b16 %v5791, %v5791
        %v5824 = vpack.c.b16 %v5792, %v5792
        %v5825 = vpack.c.b16 %v5793, %v5793
        %v5826 = vpack.c.b16 %v5794, %v5794
        %v5827 = vpack.c.b16 %v5795, %v5795
        %v5828 = vpack.c.b16 %v5796, %v5796
        %v5829 = vpack.c.b16 %v5797, %v5797
        %v5830 = vpack.c.b16 %v5798, %v5798
        %v5831 = vpack.c.b16 %v5799, %v5799
        %v5832 = vpack.c.b16 %v5800, %v5800
        %5833 = vrot.lane.b32.xlu0 %v5801, 64
        %v5834 = vpop.permute.xlu0 %5833
        %5835 = vrot.lane.b32.xlu0 %v5802, 64
        %v5836 = vpop.permute.xlu0 %5835
        %5837 = vrot.lane.b32.xlu0 %v5803, 64
        %v5838 = vpop.permute.xlu0 %5837
        %5839 = vrot.lane.b32.xlu0 %v5804, 64
        %v5840 = vpop.permute.xlu0 %5839
        %5841 = vrot.lane.b32.xlu0 %v5805, 64
        %v5842 = vpop.permute.xlu0 %5841
        %5843 = vrot.lane.b32.xlu0 %v5806, 64
        %v5844 = vpop.permute.xlu0 %5843
        %5845 = vrot.lane.b32.xlu0 %v5807, 64
        %v5846 = vpop.permute.xlu0 %5845
        %5847 = vrot.lane.b32.xlu0 %v5808, 64
        %v5848 = vpop.permute.xlu0 %5847
        %5849 = vrot.lane.b32.xlu0 %v5809, 64
        %v5850 = vpop.permute.xlu0 %5849
        %5851 = vrot.lane.b32.xlu0 %v5810, 64
        %v5852 = vpop.permute.xlu0 %5851
        %5853 = vrot.lane.b32.xlu0 %v5811, 64
        %v5854 = vpop.permute.xlu0 %5853
        %5855 = vrot.lane.b32.xlu0 %v5812, 64
        %v5856 = vpop.permute.xlu0 %5855
        %5857 = vrot.lane.b32.xlu0 %v5813, 64
        %v5858 = vpop.permute.xlu0 %5857
        %5859 = vrot.lane.b32.xlu0 %v5814, 64
        %v5860 = vpop.permute.xlu0 %5859
        %5861 = vrot.lane.b32.xlu0 %v5815, 64
        %v5862 = vpop.permute.xlu0 %5861
        %5863 = vrot.lane.b32.xlu0 %v5816, 64
        %v5864 = vpop.permute.xlu0 %5863
        %5865 = vrot.lane.b32.xlu0 %v5817, 64
        %v5866 = vpop.permute.xlu0 %5865
        %5867 = vrot.lane.b32.xlu0 %v5818, 64
        %v5868 = vpop.permute.xlu0 %5867
        %5869 = vrot.lane.b32.xlu0 %v5819, 64
        %v5870 = vpop.permute.xlu0 %5869
        %5871 = vrot.lane.b32.xlu0 %v5820, 64
        %v5872 = vpop.permute.xlu0 %5871
        %5873 = vrot.lane.b32.xlu0 %v5821, 64
        %v5874 = vpop.permute.xlu0 %5873
        %5875 = vrot.lane.b32.xlu0 %v5822, 64
        %v5876 = vpop.permute.xlu0 %5875
        %5877 = vrot.lane.b32.xlu0 %v5823, 64
        %v5878 = vpop.permute.xlu0 %5877
        %5879 = vrot.lane.b32.xlu0 %v5824, 64
        %v5880 = vpop.permute.xlu0 %5879
        %5881 = vrot.lane.b32.xlu0 %v5825, 64
        %v5882 = vpop.permute.xlu0 %5881
        %5883 = vrot.lane.b32.xlu0 %v5826, 64
        %v5884 = vpop.permute.xlu0 %5883
        %5885 = vrot.lane.b32.xlu0 %v5827, 64
        %v5886 = vpop.permute.xlu0 %5885
        %5887 = vrot.lane.b32.xlu0 %v5828, 64
        %v5888 = vpop.permute.xlu0 %5887
        %5889 = vrot.lane.b32.xlu0 %v5829, 64
        %v5890 = vpop.permute.xlu0 %5889
        %5891 = vrot.lane.b32.xlu0 %v5830, 64
        %v5892 = vpop.permute.xlu0 %5891
        %5893 = vrot.lane.b32.xlu0 %v5831, 64
        %v5894 = vpop.permute.xlu0 %5893
        %5895 = vrot.lane.b32.xlu0 %v5832, 64
        %v5896 = vpop.permute.xlu0 %5895
        %5929 = vst.msk [vmem:[#allocation3 + $0xc] sm:$0xf] %vm1214, %v5834
        %5930 = vst.msk [vmem:[#allocation3 + $0x20] sm:$0xf] %vm1214, %v5836
        %5931 = vst.msk [vmem:[#allocation3 + $0x34] sm:$0xf] %vm1214, %v5838
        %5932 = vst.msk [vmem:[#allocation3 + $0x48] sm:$0xf] %vm1214, %v5840
        %5933 = vst.msk [vmem:[#allocation3 + $0x5c] sm:$0xf] %vm1214, %v5842
        %5934 = vst.msk [vmem:[#allocation3 + $0x70] sm:$0xf] %vm1214, %v5844
        %5935 = vst.msk [vmem:[#allocation3 + $0x84] sm:$0xf] %vm1214, %v5846
        %5936 = vst.msk [vmem:[#allocation3 + $0x98] sm:$0xf] %vm1214, %v5848
        %5937 = vst.msk [vmem:[#allocation3 + $0xac] sm:$0xf] %vm1214, %v5850
        %5938 = vst.msk [vmem:[#allocation3 + $0xc0] sm:$0xf] %vm1214, %v5852
        %5939 = vst.msk [vmem:[#allocation3 + $0xd4] sm:$0xf] %vm1214, %v5854
        %5940 = vst.msk [vmem:[#allocation3 + $0xe8] sm:$0xf] %vm1214, %v5856
        %5941 = vst.msk [vmem:[#allocation3 + $0xfc] sm:$0xf] %vm1214, %v5858
        %5942 = vst.msk [vmem:[#allocation3 + $0x110] sm:$0xf] %vm1214, %v5860
        %5943 = vst.msk [vmem:[#allocation3 + $0x124] sm:$0xf] %vm1214, %v5862
        %5944 = vst.msk [vmem:[#allocation3 + $0x138] sm:$0xf] %vm1214, %v5864
        %5945 = vst.msk [vmem:[#allocation3 + $0x14c] sm:$0xf] %vm1214, %v5866
        %5946 = vst.msk [vmem:[#allocation3 + $0x160] sm:$0xf] %vm1214, %v5868
        %5947 = vst.msk [vmem:[#allocation3 + $0x174] sm:$0xf] %vm1214, %v5870
        %5948 = vst.msk [vmem:[#allocation3 + $0x188] sm:$0xf] %vm1214, %v5872
        %5949 = vst.msk [vmem:[#allocation3 + $0x19c] sm:$0xf] %vm1214, %v5874
        %5950 = vst.msk [vmem:[#allocation3 + $0x1b0] sm:$0xf] %vm1214, %v5876
        %5951 = vst.msk [vmem:[#allocation3 + $0x1c4] sm:$0xf] %vm1214, %v5878
        %5952 = vst.msk [vmem:[#allocation3 + $0x1d8] sm:$0xf] %vm1214, %v5880
        %5953 = vst.msk [vmem:[#allocation3 + $0x1ec] sm:$0xf] %vm1214, %v5882
        %5954 = vst.msk [vmem:[#allocation3 + $0x200] sm:$0xf] %vm1214, %v5884
        %5955 = vst.msk [vmem:[#allocation3 + $0x214] sm:$0xf] %vm1214, %v5886
        %5956 = vst.msk [vmem:[#allocation3 + $0x228] sm:$0xf] %vm1214, %v5888
        %5957 = vst.msk [vmem:[#allocation3 + $0x23c] sm:$0xf] %vm1214, %v5890
        %5958 = vst.msk [vmem:[#allocation3 + $0x250] sm:$0xf] %vm1214, %v5892
        %5959 = vst.msk [vmem:[#allocation3 + $0x264] sm:$0xf] %vm1214, %v5894
        %5960 = vst.msk [vmem:[#allocation3 + $0x278] sm:$0xf] %vm1214, %v5896
        %v5961 = vld [vmem:[#allocation2 + $0x22] sm:$0xff]
        %v5962 = vld [vmem:[#allocation2 + $0x2a] sm:$0xff]
        %v5963 = vld [vmem:[#allocation2 + $0x32] sm:$0xff]
        %v5964 = vld [vmem:[#allocation2 + $0x3a] sm:$0xff]
        %v5965 = vld [vmem:[#allocation2 + $0x42] sm:$0xff]
        %v5966 = vld [vmem:[#allocation2 + $0x4a] sm:$0xff]
        %v5967 = vld [vmem:[#allocation2 + $0x52] sm:$0xff]
        %v5968 = vld [vmem:[#allocation2 + $0x5a] sm:$0xff]
        %v5969 = vld [vmem:[#allocation2 + $0x62] sm:$0xff]
        %v5970 = vld [vmem:[#allocation2 + $0x6a] sm:$0xff]
        %v5971 = vld [vmem:[#allocation2 + $0x72] sm:$0xff]
        %v5972 = vld [vmem:[#allocation2 + $0x7a] sm:$0xff]
        %v5973 = vld [vmem:[#allocation2 + $0x82] sm:$0xff]
        %v5974 = vld [vmem:[#allocation2 + $0x8a] sm:$0xff]
        %v5975 = vld [vmem:[#allocation2 + $0x92] sm:$0xff]
        %v5976 = vld [vmem:[#allocation2 + $0x9a] sm:$0xff]
        %v5977 = vld [vmem:[#allocation2 + $0xa2] sm:$0xff]
        %v5978 = vld [vmem:[#allocation2 + $0xaa] sm:$0xff]
        %v5979 = vld [vmem:[#allocation2 + $0xb2] sm:$0xff]
        %v5980 = vld [vmem:[#allocation2 + $0xba] sm:$0xff]
        %v5981 = vld [vmem:[#allocation2 + $0xc2] sm:$0xff]
        %v5982 = vld [vmem:[#allocation2 + $0xca] sm:$0xff]
        %v5983 = vld [vmem:[#allocation2 + $0xd2] sm:$0xff]
        %v5984 = vld [vmem:[#allocation2 + $0xda] sm:$0xff]
        %v5985 = vld [vmem:[#allocation2 + $0xe2] sm:$0xff]
        %v5986 = vld [vmem:[#allocation2 + $0xea] sm:$0xff]
        %v5987 = vld [vmem:[#allocation2 + $0xf2] sm:$0xff]
        %v5988 = vld [vmem:[#allocation2 + $0xfa] sm:$0xff]
        %v5989 = vld [vmem:[#allocation2 + $0x102] sm:$0xff]
        %v5990 = vld [vmem:[#allocation2 + $0x10a] sm:$0xff]
        %v5991 = vld [vmem:[#allocation2 + $0x112] sm:$0xff]
        %v5992 = vld [vmem:[#allocation2 + $0x11a] sm:$0xff]
        %v5993 = vpack.c.bf16 %v5962, %v5961
        %v5994 = vpack.c.bf16 %v5964, %v5963
        %v5995 = vpack.c.bf16 %v5966, %v5965
        %v5996 = vpack.c.bf16 %v5968, %v5967
        %v5997 = vpack.c.bf16 %v5970, %v5969
        %v5998 = vpack.c.bf16 %v5972, %v5971
        %v5999 = vpack.c.bf16 %v5974, %v5973
        %v6000 = vpack.c.bf16 %v5976, %v5975
        %v6001 = vpack.c.bf16 %v5978, %v5977
        %v6002 = vpack.c.bf16 %v5980, %v5979
        %v6003 = vpack.c.bf16 %v5982, %v5981
        %v6004 = vpack.c.bf16 %v5984, %v5983
        %v6005 = vpack.c.bf16 %v5986, %v5985
        %v6006 = vpack.c.bf16 %v5988, %v5987
        %v6007 = vpack.c.bf16 %v5990, %v5989
        %v6008 = vpack.c.bf16 %v5992, %v5991
        %v6025 = vunpack.c.l.b16 %v5993
        %v6026 = vunpack.c.h.b16 %v5993
        %v6027 = vunpack.c.l.b16 %v5994
        %v6028 = vunpack.c.h.b16 %v5994
        %v6029 = vunpack.c.l.b16 %v5995
        %v6030 = vunpack.c.h.b16 %v5995
        %v6031 = vunpack.c.l.b16 %v5996
        %v6032 = vunpack.c.h.b16 %v5996
        %v6033 = vunpack.c.l.b16 %v5997
        %v6034 = vunpack.c.h.b16 %v5997
        %v6035 = vunpack.c.l.b16 %v5998
        %v6036 = vunpack.c.h.b16 %v5998
        %v6037 = vunpack.c.l.b16 %v5999
        %v6038 = vunpack.c.h.b16 %v5999
        %v6039 = vunpack.c.l.b16 %v6000
        %v6040 = vunpack.c.h.b16 %v6000
        %v6041 = vunpack.c.l.b16 %v6001
        %v6042 = vunpack.c.h.b16 %v6001
        %v6043 = vunpack.c.l.b16 %v6002
        %v6044 = vunpack.c.h.b16 %v6002
        %v6045 = vunpack.c.l.b16 %v6003
        %v6046 = vunpack.c.h.b16 %v6003
        %v6047 = vunpack.c.l.b16 %v6004
        %v6048 = vunpack.c.h.b16 %v6004
        %v6049 = vunpack.c.l.b16 %v6005
        %v6050 = vunpack.c.h.b16 %v6005
        %v6051 = vunpack.c.l.b16 %v6006
        %v6052 = vunpack.c.h.b16 %v6006
        %v6053 = vunpack.c.l.b16 %v6007
        %v6054 = vunpack.c.h.b16 %v6007
        %v6055 = vunpack.c.l.b16 %v6008
        %v6056 = vunpack.c.h.b16 %v6008
        %v6057 = vpack.c.b16 %v6025, %v6025
        %v6058 = vpack.c.b16 %v6026, %v6026
        %v6059 = vpack.c.b16 %v6027, %v6027
        %v6060 = vpack.c.b16 %v6028, %v6028
        %v6061 = vpack.c.b16 %v6029, %v6029
        %v6062 = vpack.c.b16 %v6030, %v6030
        %v6063 = vpack.c.b16 %v6031, %v6031
        %v6064 = vpack.c.b16 %v6032, %v6032
        %v6065 = vpack.c.b16 %v6033, %v6033
        %v6066 = vpack.c.b16 %v6034, %v6034
        %v6067 = vpack.c.b16 %v6035, %v6035
        %v6068 = vpack.c.b16 %v6036, %v6036
        %v6069 = vpack.c.b16 %v6037, %v6037
        %v6070 = vpack.c.b16 %v6038, %v6038
        %v6071 = vpack.c.b16 %v6039, %v6039
        %v6072 = vpack.c.b16 %v6040, %v6040
        %v6073 = vpack.c.b16 %v6041, %v6041
        %v6074 = vpack.c.b16 %v6042, %v6042
        %v6075 = vpack.c.b16 %v6043, %v6043
        %v6076 = vpack.c.b16 %v6044, %v6044
        %v6077 = vpack.c.b16 %v6045, %v6045
        %v6078 = vpack.c.b16 %v6046, %v6046
        %v6079 = vpack.c.b16 %v6047, %v6047
        %v6080 = vpack.c.b16 %v6048, %v6048
        %v6081 = vpack.c.b16 %v6049, %v6049
        %v6082 = vpack.c.b16 %v6050, %v6050
        %v6083 = vpack.c.b16 %v6051, %v6051
        %v6084 = vpack.c.b16 %v6052, %v6052
        %v6085 = vpack.c.b16 %v6053, %v6053
        %v6086 = vpack.c.b16 %v6054, %v6054
        %v6087 = vpack.c.b16 %v6055, %v6055
        %v6088 = vpack.c.b16 %v6056, %v6056
        %6121 = vst.msk [vmem:[#allocation3 + $0x10] sm:$0xf] %vm957, %v6057
        %6122 = vst.msk [vmem:[#allocation3 + $0x24] sm:$0xf] %vm957, %v6058
        %6123 = vst.msk [vmem:[#allocation3 + $0x38] sm:$0xf] %vm957, %v6059
        %6124 = vst.msk [vmem:[#allocation3 + $0x4c] sm:$0xf] %vm957, %v6060
        %6125 = vst.msk [vmem:[#allocation3 + $0x60] sm:$0xf] %vm957, %v6061
        %6126 = vst.msk [vmem:[#allocation3 + $0x74] sm:$0xf] %vm957, %v6062
        %6127 = vst.msk [vmem:[#allocation3 + $0x88] sm:$0xf] %vm957, %v6063
        %6128 = vst.msk [vmem:[#allocation3 + $0x9c] sm:$0xf] %vm957, %v6064
        %6129 = vst.msk [vmem:[#allocation3 + $0xb0] sm:$0xf] %vm957, %v6065
        %6130 = vst.msk [vmem:[#allocation3 + $0xc4] sm:$0xf] %vm957, %v6066
        %6131 = vst.msk [vmem:[#allocation3 + $0xd8] sm:$0xf] %vm957, %v6067
        %6132 = vst.msk [vmem:[#allocation3 + $0xec] sm:$0xf] %vm957, %v6068
        %6133 = vst.msk [vmem:[#allocation3 + $0x100] sm:$0xf] %vm957, %v6069
        %6134 = vst.msk [vmem:[#allocation3 + $0x114] sm:$0xf] %vm957, %v6070
        %6135 = vst.msk [vmem:[#allocation3 + $0x128] sm:$0xf] %vm957, %v6071
        %6136 = vst.msk [vmem:[#allocation3 + $0x13c] sm:$0xf] %vm957, %v6072
        %6137 = vst.msk [vmem:[#allocation3 + $0x150] sm:$0xf] %vm957, %v6073
        %6138 = vst.msk [vmem:[#allocation3 + $0x164] sm:$0xf] %vm957, %v6074
        %6139 = vst.msk [vmem:[#allocation3 + $0x178] sm:$0xf] %vm957, %v6075
        %6140 = vst.msk [vmem:[#allocation3 + $0x18c] sm:$0xf] %vm957, %v6076
        %6141 = vst.msk [vmem:[#allocation3 + $0x1a0] sm:$0xf] %vm957, %v6077
        %6142 = vst.msk [vmem:[#allocation3 + $0x1b4] sm:$0xf] %vm957, %v6078
        %6143 = vst.msk [vmem:[#allocation3 + $0x1c8] sm:$0xf] %vm957, %v6079
        %6144 = vst.msk [vmem:[#allocation3 + $0x1dc] sm:$0xf] %vm957, %v6080
        %6145 = vst.msk [vmem:[#allocation3 + $0x1f0] sm:$0xf] %vm957, %v6081
        %6146 = vst.msk [vmem:[#allocation3 + $0x204] sm:$0xf] %vm957, %v6082
        %6147 = vst.msk [vmem:[#allocation3 + $0x218] sm:$0xf] %vm957, %v6083
        %6148 = vst.msk [vmem:[#allocation3 + $0x22c] sm:$0xf] %vm957, %v6084
        %6149 = vst.msk [vmem:[#allocation3 + $0x240] sm:$0xf] %vm957, %v6085
        %6150 = vst.msk [vmem:[#allocation3 + $0x254] sm:$0xf] %vm957, %v6086
        %6151 = vst.msk [vmem:[#allocation3 + $0x268] sm:$0xf] %vm957, %v6087
        %6152 = vst.msk [vmem:[#allocation3 + $0x27c] sm:$0xf] %vm957, %v6088
        %v6153 = vld [vmem:[#allocation3] sm:$0xff]
        %v6154 = vld [vmem:[#allocation3 + $0x8] sm:$0xff]
        %v6155 = vld [vmem:[#allocation3 + $0x10] sm:$0xf]
        %v6156 = vld [vmem:[#allocation3 + $0x14] sm:$0xff]
        %v6157 = vld [vmem:[#allocation3 + $0x1c] sm:$0xff]
        %v6158 = vld [vmem:[#allocation3 + $0x24] sm:$0xf]
        %v6159 = vld [vmem:[#allocation3 + $0x28] sm:$0xff]
        %v6160 = vld [vmem:[#allocation3 + $0x30] sm:$0xff]
        %v6161 = vld [vmem:[#allocation3 + $0x38] sm:$0xf]
        %v6162 = vld [vmem:[#allocation3 + $0x3c] sm:$0xff]
        %v6163 = vld [vmem:[#allocation3 + $0x44] sm:$0xff]
        %v6164 = vld [vmem:[#allocation3 + $0x4c] sm:$0xf]
        %v6165 = vld [vmem:[#allocation3 + $0x50] sm:$0xff]
        %v6166 = vld [vmem:[#allocation3 + $0x58] sm:$0xff]
        %v6167 = vld [vmem:[#allocation3 + $0x60] sm:$0xf]
        %v6168 = vld [vmem:[#allocation3 + $0x64] sm:$0xff]
        %v6169 = vld [vmem:[#allocation3 + $0x6c] sm:$0xff]
        %v6170 = vld [vmem:[#allocation3 + $0x74] sm:$0xf]
        %v6171 = vld [vmem:[#allocation3 + $0x78] sm:$0xff]
        %v6172 = vld [vmem:[#allocation3 + $0x80] sm:$0xff]
        %v6173 = vld [vmem:[#allocation3 + $0x88] sm:$0xf]
        %v6174 = vld [vmem:[#allocation3 + $0x8c] sm:$0xff]
        %v6175 = vld [vmem:[#allocation3 + $0x94] sm:$0xff]
        %v6176 = vld [vmem:[#allocation3 + $0x9c] sm:$0xf]
        %v6177 = vld [vmem:[#allocation3 + $0xa0] sm:$0xff]
        %v6178 = vld [vmem:[#allocation3 + $0xa8] sm:$0xff]
        %v6179 = vld [vmem:[#allocation3 + $0xb0] sm:$0xf]
        %v6180 = vld [vmem:[#allocation3 + $0xb4] sm:$0xff]
        %v6181 = vld [vmem:[#allocation3 + $0xbc] sm:$0xff]
        %v6182 = vld [vmem:[#allocation3 + $0xc4] sm:$0xf]
        %v6183 = vld [vmem:[#allocation3 + $0xc8] sm:$0xff]
        %v6184 = vld [vmem:[#allocation3 + $0xd0] sm:$0xff]
        %v6185 = vld [vmem:[#allocation3 + $0xd8] sm:$0xf]
        %v6186 = vld [vmem:[#allocation3 + $0xdc] sm:$0xff]
        %v6187 = vld [vmem:[#allocation3 + $0xe4] sm:$0xff]
        %v6188 = vld [vmem:[#allocation3 + $0xec] sm:$0xf]
        %v6189 = vld [vmem:[#allocation3 + $0xf0] sm:$0xff]
        %v6190 = vld [vmem:[#allocation3 + $0xf8] sm:$0xff]
        %v6191 = vld [vmem:[#allocation3 + $0x100] sm:$0xf]
        %v6192 = vld [vmem:[#allocation3 + $0x104] sm:$0xff]
        %v6193 = vld [vmem:[#allocation3 + $0x10c] sm:$0xff]
        %v6194 = vld [vmem:[#allocation3 + $0x114] sm:$0xf]
        %v6195 = vld [vmem:[#allocation3 + $0x118] sm:$0xff]
        %v6196 = vld [vmem:[#allocation3 + $0x120] sm:$0xff]
        %v6197 = vld [vmem:[#allocation3 + $0x128] sm:$0xf]
        %v6198 = vld [vmem:[#allocation3 + $0x12c] sm:$0xff]
        %v6199 = vld [vmem:[#allocation3 + $0x134] sm:$0xff]
        %v6200 = vld [vmem:[#allocation3 + $0x13c] sm:$0xf]
        %v6201 = vld [vmem:[#allocation3 + $0x140] sm:$0xff]
        %v6202 = vld [vmem:[#allocation3 + $0x148] sm:$0xff]
        %v6203 = vld [vmem:[#allocation3 + $0x150] sm:$0xf]
        %v6204 = vld [vmem:[#allocation3 + $0x154] sm:$0xff]
        %v6205 = vld [vmem:[#allocation3 + $0x15c] sm:$0xff]
        %v6206 = vld [vmem:[#allocation3 + $0x164] sm:$0xf]
        %v6207 = vld [vmem:[#allocation3 + $0x168] sm:$0xff]
        %v6208 = vld [vmem:[#allocation3 + $0x170] sm:$0xff]
        %v6209 = vld [vmem:[#allocation3 + $0x178] sm:$0xf]
        %v6210 = vld [vmem:[#allocation3 + $0x17c] sm:$0xff]
        %v6211 = vld [vmem:[#allocation3 + $0x184] sm:$0xff]
        %v6212 = vld [vmem:[#allocation3 + $0x18c] sm:$0xf]
        %v6213 = vld [vmem:[#allocation3 + $0x190] sm:$0xff]
        %v6214 = vld [vmem:[#allocation3 + $0x198] sm:$0xff]
        %v6215 = vld [vmem:[#allocation3 + $0x1a0] sm:$0xf]
        %v6216 = vld [vmem:[#allocation3 + $0x1a4] sm:$0xff]
        %v6217 = vld [vmem:[#allocation3 + $0x1ac] sm:$0xff]
        %v6218 = vld [vmem:[#allocation3 + $0x1b4] sm:$0xf]
        %v6219 = vld [vmem:[#allocation3 + $0x1b8] sm:$0xff]
        %v6220 = vld [vmem:[#allocation3 + $0x1c0] sm:$0xff]
        %v6221 = vld [vmem:[#allocation3 + $0x1c8] sm:$0xf]
        %v6222 = vld [vmem:[#allocation3 + $0x1cc] sm:$0xff]
        %v6223 = vld [vmem:[#allocation3 + $0x1d4] sm:$0xff]
        %v6224 = vld [vmem:[#allocation3 + $0x1dc] sm:$0xf]
        %v6225 = vld [vmem:[#allocation3 + $0x1e0] sm:$0xff]
        %v6226 = vld [vmem:[#allocation3 + $0x1e8] sm:$0xff]
        %v6227 = vld [vmem:[#allocation3 + $0x1f0] sm:$0xf]
        %v6228 = vld [vmem:[#allocation3 + $0x1f4] sm:$0xff]
        %v6229 = vld [vmem:[#allocation3 + $0x1fc] sm:$0xff]
        %v6230 = vld [vmem:[#allocation3 + $0x204] sm:$0xf]
        %v6231 = vld [vmem:[#allocation3 + $0x208] sm:$0xff]
        %v6232 = vld [vmem:[#allocation3 + $0x210] sm:$0xff]
        %v6233 = vld [vmem:[#allocation3 + $0x218] sm:$0xf]
        %v6234 = vld [vmem:[#allocation3 + $0x21c] sm:$0xff]
        %v6235 = vld [vmem:[#allocation3 + $0x224] sm:$0xff]
        %v6236 = vld [vmem:[#allocation3 + $0x22c] sm:$0xf]
        %v6237 = vld [vmem:[#allocation3 + $0x230] sm:$0xff]
        %v6238 = vld [vmem:[#allocation3 + $0x238] sm:$0xff]
        %v6239 = vld [vmem:[#allocation3 + $0x240] sm:$0xf]
        %v6240 = vld [vmem:[#allocation3 + $0x244] sm:$0xff]
        %v6241 = vld [vmem:[#allocation3 + $0x24c] sm:$0xff]
        %v6242 = vld [vmem:[#allocation3 + $0x254] sm:$0xf]
        %v6243 = vld [vmem:[#allocation3 + $0x258] sm:$0xff]
        %v6244 = vld [vmem:[#allocation3 + $0x260] sm:$0xff]
        %v6245 = vld [vmem:[#allocation3 + $0x268] sm:$0xf]
        %v6246 = vld [vmem:[#allocation3 + $0x26c] sm:$0xff]
        %v6247 = vld [vmem:[#allocation3 + $0x274] sm:$0xff]
        %v6248 = vld [vmem:[#allocation3 + $0x27c] sm:$0xf]
        %v6249 = vld [vmem:[%s5] sm:$0xf]
        %v6250 = vld [vmem:[%s5 + $0x4] sm:$0xf]
        %v6251 = vld [vmem:[%s5 + $0x8] sm:$0xf]
        %v6252 = vld [vmem:[%s5 + $0xc] sm:$0xf]
        %v6253 = vld [vmem:[%s5 + $0x10] sm:$0xf]
        %v6254 = vld [vmem:[%s5 + $0x14] sm:$0xf]
        %v6255 = vld [vmem:[%s5 + $0x18] sm:$0xf]
        %v6256 = vld [vmem:[%s5 + $0x1c] sm:$0xf]
        %v6257 = vld [vmem:[%s5 + $0x20] sm:$0xf]
        %v6258 = vld [vmem:[%s5 + $0x24] sm:$0xf]
        %v6259 = vld [vmem:[%s5 + $0x28] sm:$0xf]
        %v6260 = vld [vmem:[%s5 + $0x2c] sm:$0xf]
        %v6261 = vld [vmem:[%s5 + $0x30] sm:$0xf]
        %v6262 = vld [vmem:[%s5 + $0x34] sm:$0xf]
        %v6263 = vld [vmem:[%s5 + $0x38] sm:$0xf]
        %v6264 = vld [vmem:[%s5 + $0x3c] sm:$0xf]
        %v6265 = vld [vmem:[%s5 + $0x40] sm:$0xf]
        %v6266 = vld [vmem:[%s5 + $0x44] sm:$0xf]
        %v6267 = vld [vmem:[%s5 + $0x48] sm:$0xf]
        %v6268 = vld [vmem:[%s5 + $0x4c] sm:$0xf]
        %v6269 = vld [vmem:[%s5 + $0x50] sm:$0xf]
        %v6270 = vld [vmem:[%s5 + $0x54] sm:$0xf]
        %v6271 = vld [vmem:[%s5 + $0x58] sm:$0xf]
        %v6272 = vld [vmem:[%s5 + $0x5c] sm:$0xf]
        %v6273 = vld [vmem:[%s5 + $0x60] sm:$0xf]
        %v6274 = vld [vmem:[%s5 + $0x64] sm:$0xf]
        %v6275 = vld [vmem:[%s5 + $0x68] sm:$0xf]
        %v6276 = vld [vmem:[%s5 + $0x6c] sm:$0xf]
        %v6277 = vld [vmem:[%s5 + $0x70] sm:$0xf]
        %v6278 = vld [vmem:[%s5 + $0x74] sm:$0xf]
        %v6279 = vld [vmem:[%s5 + $0x78] sm:$0xf]
        %v6280 = vld [vmem:[%s5 + $0x7c] sm:$0xf]
        %v6281 = vld [vmem:[%s5 + $0x80] sm:$0xf]
        %v6282 = vld [vmem:[%s5 + $0x84] sm:$0xf]
        %v6283 = vld [vmem:[%s5 + $0x88] sm:$0xf]
        %v6284 = vld [vmem:[%s5 + $0x8c] sm:$0xf]
        %v6285 = vld [vmem:[%s5 + $0x90] sm:$0xf]
        %v6286 = vld [vmem:[%s5 + $0x94] sm:$0xf]
        %v6287 = vld [vmem:[%s5 + $0x98] sm:$0xf]
        %v6288 = vld [vmem:[%s5 + $0x9c] sm:$0xf]
        %v6289 = vld [vmem:[%s5 + $0xa0] sm:$0xf]
        %v6290 = vld [vmem:[%s5 + $0xa4] sm:$0xf]
        %v6291 = vld [vmem:[%s5 + $0xa8] sm:$0xf]
        %v6292 = vld [vmem:[%s5 + $0xac] sm:$0xf]
        %v6293 = vld [vmem:[%s5 + $0xb0] sm:$0xf]
        %v6294 = vld [vmem:[%s5 + $0xb4] sm:$0xf]
        %v6295 = vld [vmem:[%s5 + $0xb8] sm:$0xf]
        %v6296 = vld [vmem:[%s5 + $0xbc] sm:$0xf]
        %v6297 = vld [vmem:[%s5 + $0xc0] sm:$0xf]
        %v6298 = vld [vmem:[%s5 + $0xc4] sm:$0xf]
        %v6299 = vld [vmem:[%s5 + $0xc8] sm:$0xf]
        %v6300 = vld [vmem:[%s5 + $0xcc] sm:$0xf]
        %v6301 = vld [vmem:[%s5 + $0xd0] sm:$0xf]
        %v6302 = vld [vmem:[%s5 + $0xd4] sm:$0xf]
        %v6303 = vld [vmem:[%s5 + $0xd8] sm:$0xf]
        %v6304 = vld [vmem:[%s5 + $0xdc] sm:$0xf]
        %v6305 = vld [vmem:[%s5 + $0xe0] sm:$0xf]
        %v6306 = vld [vmem:[%s5 + $0xe4] sm:$0xf]
        %v6307 = vld [vmem:[%s5 + $0xe8] sm:$0xf]
        %v6308 = vld [vmem:[%s5 + $0xec] sm:$0xf]
        %v6309 = vld [vmem:[%s5 + $0xf0] sm:$0xf]
        %v6310 = vld [vmem:[%s5 + $0xf4] sm:$0xf]
        %v6311 = vld [vmem:[%s5 + $0xf8] sm:$0xf]
        %v6312 = vld [vmem:[%s5 + $0xfc] sm:$0xf]
        %v6313 = vld [vmem:[%s5 + $0x100] sm:$0xf]
        %v6314 = vld [vmem:[%s5 + $0x104] sm:$0xf]
        %v6315 = vld [vmem:[%s5 + $0x108] sm:$0xf]
        %v6316 = vld [vmem:[%s5 + $0x10c] sm:$0xf]
        %v6317 = vld [vmem:[%s5 + $0x110] sm:$0xf]
        %v6318 = vld [vmem:[%s5 + $0x114] sm:$0xf]
        %v6319 = vld [vmem:[%s5 + $0x118] sm:$0xf]
        %v6320 = vld [vmem:[%s5 + $0x11c] sm:$0xf]
        %v6321 = vld [vmem:[%s6] sm:$0x1]
        %v6323 = vlaneseq
        %v6324 = vshrl.u32 %v6323, 7
        %v6325 = vsub.s32 0, %v6324
        %v6326 = vrot.slane %v6321, %v6325
        %v6424 = vunpack.c.l.b16 %v6153
        %v6425 = vunpack.c.h.b16 %v6153
        %v6426 = vunpack.c.l.b16 %v6154
        %v6427 = vunpack.c.h.b16 %v6154
        %v6428 = vunpack.c.l.b16 %v6155
        %v6429 = vunpack.c.l.b16 %v6156
        %v6430 = vunpack.c.h.b16 %v6156
        %v6431 = vunpack.c.l.b16 %v6157
        %v6432 = vunpack.c.h.b16 %v6157
        %v6433 = vunpack.c.l.b16 %v6158
        %v6434 = vunpack.c.l.b16 %v6159
        %v6435 = vunpack.c.h.b16 %v6159
        %v6436 = vunpack.c.l.b16 %v6160
        %v6437 = vunpack.c.h.b16 %v6160
        %v6438 = vunpack.c.l.b16 %v6161
        %v6439 = vunpack.c.l.b16 %v6162
        %v6440 = vunpack.c.h.b16 %v6162
        %v6441 = vunpack.c.l.b16 %v6163
        %v6442 = vunpack.c.h.b16 %v6163
        %v6443 = vunpack.c.l.b16 %v6164
        %v6444 = vunpack.c.l.b16 %v6165
        %v6445 = vunpack.c.h.b16 %v6165
        %v6446 = vunpack.c.l.b16 %v6166
        %v6447 = vunpack.c.h.b16 %v6166
        %v6448 = vunpack.c.l.b16 %v6167
        %v6449 = vunpack.c.l.b16 %v6168
        %v6450 = vunpack.c.h.b16 %v6168
        %v6451 = vunpack.c.l.b16 %v6169
        %v6452 = vunpack.c.h.b16 %v6169
        %v6453 = vunpack.c.l.b16 %v6170
        %v6454 = vunpack.c.l.b16 %v6171
        %v6455 = vunpack.c.h.b16 %v6171
        %v6456 = vunpack.c.l.b16 %v6172
        %v6457 = vunpack.c.h.b16 %v6172
        %v6458 = vunpack.c.l.b16 %v6173
        %v6459 = vunpack.c.l.b16 %v6174
        %v6460 = vunpack.c.h.b16 %v6174
        %v6461 = vunpack.c.l.b16 %v6175
        %v6462 = vunpack.c.h.b16 %v6175
        %v6463 = vunpack.c.l.b16 %v6176
        %v6464 = vunpack.c.l.b16 %v6177
        %v6465 = vunpack.c.h.b16 %v6177
        %v6466 = vunpack.c.l.b16 %v6178
        %v6467 = vunpack.c.h.b16 %v6178
        %v6468 = vunpack.c.l.b16 %v6179
        %v6469 = vunpack.c.l.b16 %v6180
        %v6470 = vunpack.c.h.b16 %v6180
        %v6471 = vunpack.c.l.b16 %v6181
        %v6472 = vunpack.c.h.b16 %v6181
        %v6473 = vunpack.c.l.b16 %v6182
        %v6474 = vunpack.c.l.b16 %v6183
        %v6475 = vunpack.c.h.b16 %v6183
        %v6476 = vunpack.c.l.b16 %v6184
        %v6477 = vunpack.c.h.b16 %v6184
        %v6478 = vunpack.c.l.b16 %v6185
        %v6479 = vunpack.c.l.b16 %v6186
        %v6480 = vunpack.c.h.b16 %v6186
        %v6481 = vunpack.c.l.b16 %v6187
        %v6482 = vunpack.c.h.b16 %v6187
        %v6483 = vunpack.c.l.b16 %v6188
        %v6484 = vunpack.c.l.b16 %v6189
        %v6485 = vunpack.c.h.b16 %v6189
        %v6486 = vunpack.c.l.b16 %v6190
        %v6487 = vunpack.c.h.b16 %v6190
        %v6488 = vunpack.c.l.b16 %v6191
        %v6489 = vunpack.c.l.b16 %v6192
        %v6490 = vunpack.c.h.b16 %v6192
        %v6491 = vunpack.c.l.b16 %v6193
        %v6492 = vunpack.c.h.b16 %v6193
        %v6493 = vunpack.c.l.b16 %v6194
        %v6494 = vunpack.c.l.b16 %v6195
        %v6495 = vunpack.c.h.b16 %v6195
        %v6496 = vunpack.c.l.b16 %v6196
        %v6497 = vunpack.c.h.b16 %v6196
        %v6498 = vunpack.c.l.b16 %v6197
        %v6499 = vunpack.c.l.b16 %v6198
        %v6500 = vunpack.c.h.b16 %v6198
        %v6501 = vunpack.c.l.b16 %v6199
        %v6502 = vunpack.c.h.b16 %v6199
        %v6503 = vunpack.c.l.b16 %v6200
        %v6504 = vunpack.c.l.b16 %v6201
        %v6505 = vunpack.c.h.b16 %v6201
        %v6506 = vunpack.c.l.b16 %v6202
        %v6507 = vunpack.c.h.b16 %v6202
        %v6508 = vunpack.c.l.b16 %v6203
        %v6509 = vunpack.c.l.b16 %v6204
        %v6510 = vunpack.c.h.b16 %v6204
        %v6511 = vunpack.c.l.b16 %v6205
        %v6512 = vunpack.c.h.b16 %v6205
        %v6513 = vunpack.c.l.b16 %v6206
        %v6514 = vunpack.c.l.b16 %v6207
        %v6515 = vunpack.c.h.b16 %v6207
        %v6516 = vunpack.c.l.b16 %v6208
        %v6517 = vunpack.c.h.b16 %v6208
        %v6518 = vunpack.c.l.b16 %v6209
        %v6519 = vunpack.c.l.b16 %v6210
        %v6520 = vunpack.c.h.b16 %v6210
        %v6521 = vunpack.c.l.b16 %v6211
        %v6522 = vunpack.c.h.b16 %v6211
        %v6523 = vunpack.c.l.b16 %v6212
        %v6524 = vunpack.c.l.b16 %v6213
        %v6525 = vunpack.c.h.b16 %v6213
        %v6526 = vunpack.c.l.b16 %v6214
        %v6527 = vunpack.c.h.b16 %v6214
        %v6528 = vunpack.c.l.b16 %v6215
        %v6529 = vunpack.c.l.b16 %v6216
        %v6530 = vunpack.c.h.b16 %v6216
        %v6531 = vunpack.c.l.b16 %v6217
        %v6532 = vunpack.c.h.b16 %v6217
        %v6533 = vunpack.c.l.b16 %v6218
        %v6534 = vunpack.c.l.b16 %v6219
        %v6535 = vunpack.c.h.b16 %v6219
        %v6536 = vunpack.c.l.b16 %v6220
        %v6537 = vunpack.c.h.b16 %v6220
        %v6538 = vunpack.c.l.b16 %v6221
        %v6539 = vunpack.c.l.b16 %v6222
        %v6540 = vunpack.c.h.b16 %v6222
        %v6541 = vunpack.c.l.b16 %v6223
        %v6542 = vunpack.c.h.b16 %v6223
        %v6543 = vunpack.c.l.b16 %v6224
        %v6544 = vunpack.c.l.b16 %v6225
        %v6545 = vunpack.c.h.b16 %v6225
        %v6546 = vunpack.c.l.b16 %v6226
        %v6547 = vunpack.c.h.b16 %v6226
        %v6548 = vunpack.c.l.b16 %v6227
        %v6549 = vunpack.c.l.b16 %v6228
        %v6550 = vunpack.c.h.b16 %v6228
        %v6551 = vunpack.c.l.b16 %v6229
        %v6552 = vunpack.c.h.b16 %v6229
        %v6553 = vunpack.c.l.b16 %v6230
        %v6554 = vunpack.c.l.b16 %v6231
        %v6555 = vunpack.c.h.b16 %v6231
        %v6556 = vunpack.c.l.b16 %v6232
        %v6557 = vunpack.c.h.b16 %v6232
        %v6558 = vunpack.c.l.b16 %v6233
        %v6559 = vunpack.c.l.b16 %v6234
        %v6560 = vunpack.c.h.b16 %v6234
        %v6561 = vunpack.c.l.b16 %v6235
        %v6562 = vunpack.c.h.b16 %v6235
        %v6563 = vunpack.c.l.b16 %v6236
        %v6564 = vunpack.c.l.b16 %v6237
        %v6565 = vunpack.c.h.b16 %v6237
        %v6566 = vunpack.c.l.b16 %v6238
        %v6567 = vunpack.c.h.b16 %v6238
        %v6568 = vunpack.c.l.b16 %v6239
        %v6569 = vunpack.c.l.b16 %v6240
        %v6570 = vunpack.c.h.b16 %v6240
        %v6571 = vunpack.c.l.b16 %v6241
        %v6572 = vunpack.c.h.b16 %v6241
        %v6573 = vunpack.c.l.b16 %v6242
        %v6574 = vunpack.c.l.b16 %v6243
        %v6575 = vunpack.c.h.b16 %v6243
        %v6576 = vunpack.c.l.b16 %v6244
        %v6577 = vunpack.c.h.b16 %v6244
        %v6578 = vunpack.c.l.b16 %v6245
        %v6579 = vunpack.c.l.b16 %v6246
        %v6580 = vunpack.c.h.b16 %v6246
        %v6581 = vunpack.c.l.b16 %v6247
        %v6582 = vunpack.c.h.b16 %v6247
        %v6583 = vunpack.c.l.b16 %v6248
        %v6584 = vpack.c.b16 %v6429, %v6424
        %v6585 = vpack.c.b16 %v6430, %v6425
        %v6586 = vpack.c.b16 %v6431, %v6426
        %v6587 = vpack.c.b16 %v6432, %v6427
        %v6588 = vpack.c.b16 %v6433, %v6428
        %v6589 = vpack.c.b16 %v6439, %v6434
        %v6590 = vpack.c.b16 %v6440, %v6435
        %v6591 = vpack.c.b16 %v6441, %v6436
        %v6592 = vpack.c.b16 %v6442, %v6437
        %v6593 = vpack.c.b16 %v6443, %v6438
        %v6594 = vpack.c.b16 %v6449, %v6444
        %v6595 = vpack.c.b16 %v6450, %v6445
        %v6596 = vpack.c.b16 %v6451, %v6446
        %v6597 = vpack.c.b16 %v6452, %v6447
        %v6598 = vpack.c.b16 %v6453, %v6448
        %v6599 = vpack.c.b16 %v6459, %v6454
        %v6600 = vpack.c.b16 %v6460, %v6455
        %v6601 = vpack.c.b16 %v6461, %v6456
        %v6602 = vpack.c.b16 %v6462, %v6457
        %v6603 = vpack.c.b16 %v6463, %v6458
        %v6604 = vpack.c.b16 %v6469, %v6464
        %v6605 = vpack.c.b16 %v6470, %v6465
        %v6606 = vpack.c.b16 %v6471, %v6466
        %v6607 = vpack.c.b16 %v6472, %v6467
        %v6608 = vpack.c.b16 %v6473, %v6468
        %v6609 = vpack.c.b16 %v6479, %v6474
        %v6610 = vpack.c.b16 %v6480, %v6475
        %v6611 = vpack.c.b16 %v6481, %v6476
        %v6612 = vpack.c.b16 %v6482, %v6477
        %v6613 = vpack.c.b16 %v6483, %v6478
        %v6614 = vpack.c.b16 %v6489, %v6484
        %v6615 = vpack.c.b16 %v6490, %v6485
        %v6616 = vpack.c.b16 %v6491, %v6486
        %v6617 = vpack.c.b16 %v6492, %v6487
        %v6618 = vpack.c.b16 %v6493, %v6488
        %v6619 = vpack.c.b16 %v6499, %v6494
        %v6620 = vpack.c.b16 %v6500, %v6495
        %v6621 = vpack.c.b16 %v6501, %v6496
        %v6622 = vpack.c.b16 %v6502, %v6497
        %v6623 = vpack.c.b16 %v6503, %v6498
        %v6624 = vpack.c.b16 %v6509, %v6504
        %v6625 = vpack.c.b16 %v6510, %v6505
        %v6626 = vpack.c.b16 %v6511, %v6506
        %v6627 = vpack.c.b16 %v6512, %v6507
        %v6628 = vpack.c.b16 %v6513, %v6508
        %v6629 = vpack.c.b16 %v6519, %v6514
        %v6630 = vpack.c.b16 %v6520, %v6515
        %v6631 = vpack.c.b16 %v6521, %v6516
        %v6632 = vpack.c.b16 %v6522, %v6517
        %v6633 = vpack.c.b16 %v6523, %v6518
        %v6634 = vpack.c.b16 %v6529, %v6524
        %v6635 = vpack.c.b16 %v6530, %v6525
        %v6636 = vpack.c.b16 %v6531, %v6526
        %v6637 = vpack.c.b16 %v6532, %v6527
        %v6638 = vpack.c.b16 %v6533, %v6528
        %v6639 = vpack.c.b16 %v6539, %v6534
        %v6640 = vpack.c.b16 %v6540, %v6535
        %v6641 = vpack.c.b16 %v6541, %v6536
        %v6642 = vpack.c.b16 %v6542, %v6537
        %v6643 = vpack.c.b16 %v6543, %v6538
        %v6644 = vpack.c.b16 %v6549, %v6544
        %v6645 = vpack.c.b16 %v6550, %v6545
        %v6646 = vpack.c.b16 %v6551, %v6546
        %v6647 = vpack.c.b16 %v6552, %v6547
        %v6648 = vpack.c.b16 %v6553, %v6548
        %v6649 = vpack.c.b16 %v6559, %v6554
        %v6650 = vpack.c.b16 %v6560, %v6555
        %v6651 = vpack.c.b16 %v6561, %v6556
        %v6652 = vpack.c.b16 %v6562, %v6557
        %v6653 = vpack.c.b16 %v6563, %v6558
        %v6654 = vpack.c.b16 %v6569, %v6564
        %v6655 = vpack.c.b16 %v6570, %v6565
        %v6656 = vpack.c.b16 %v6571, %v6566
        %v6657 = vpack.c.b16 %v6572, %v6567
        %v6658 = vpack.c.b16 %v6573, %v6568
        %v6659 = vpack.c.b16 %v6579, %v6574
        %v6660 = vpack.c.b16 %v6580, %v6575
        %v6661 = vpack.c.b16 %v6581, %v6576
        %v6662 = vpack.c.b16 %v6582, %v6577
        %v6663 = vpack.c.b16 %v6583, %v6578
        %v6800 = vunpack.c.l.b16 %v6249
        %v6801 = vunpack.c.l.b16 %v6250
        %v6802 = vunpack.c.l.b16 %v6251
        %v6803 = vunpack.c.l.b16 %v6252
        %v6804 = vunpack.c.l.b16 %v6253
        %v6805 = vunpack.c.l.b16 %v6254
        %v6806 = vunpack.c.l.b16 %v6255
        %v6807 = vunpack.c.l.b16 %v6256
        %v6808 = vunpack.c.l.b16 %v6257
        %v6809 = vunpack.c.l.b16 %v6258
        %v6810 = vunpack.c.l.b16 %v6259
        %v6811 = vunpack.c.l.b16 %v6260
        %v6812 = vunpack.c.l.b16 %v6261
        %v6813 = vunpack.c.l.b16 %v6262
        %v6814 = vunpack.c.l.b16 %v6263
        %v6815 = vunpack.c.l.b16 %v6264
        %v6816 = vunpack.c.l.b16 %v6265
        %v6817 = vunpack.c.l.b16 %v6266
        %v6818 = vunpack.c.l.b16 %v6267
        %v6819 = vunpack.c.l.b16 %v6268
        %v6820 = vunpack.c.l.b16 %v6269
        %v6821 = vunpack.c.l.b16 %v6270
        %v6822 = vunpack.c.l.b16 %v6271
        %v6823 = vunpack.c.l.b16 %v6272
        %v6824 = vunpack.c.l.b16 %v6273
        %v6825 = vunpack.c.l.b16 %v6274
        %v6826 = vunpack.c.l.b16 %v6275
        %v6827 = vunpack.c.l.b16 %v6276
        %v6828 = vunpack.c.l.b16 %v6277
        %v6829 = vunpack.c.l.b16 %v6278
        %v6830 = vunpack.c.l.b16 %v6279
        %v6831 = vunpack.c.l.b16 %v6280
        %v6832 = vunpack.c.l.b16 %v6281
        %v6833 = vunpack.c.l.b16 %v6282
        %v6834 = vunpack.c.l.b16 %v6283
        %v6835 = vunpack.c.l.b16 %v6284
        %v6836 = vunpack.c.l.b16 %v6285
        %v6837 = vunpack.c.l.b16 %v6286
        %v6838 = vunpack.c.l.b16 %v6287
        %v6839 = vunpack.c.l.b16 %v6288
        %v6840 = vunpack.c.l.b16 %v6289
        %v6841 = vunpack.c.l.b16 %v6290
        %v6842 = vunpack.c.l.b16 %v6291
        %v6843 = vunpack.c.l.b16 %v6292
        %v6844 = vunpack.c.l.b16 %v6293
        %v6845 = vunpack.c.l.b16 %v6294
        %v6846 = vunpack.c.l.b16 %v6295
        %v6847 = vunpack.c.l.b16 %v6296
        %v6848 = vunpack.c.l.b16 %v6297
        %v6849 = vunpack.c.l.b16 %v6298
        %v6850 = vunpack.c.l.b16 %v6299
        %v6851 = vunpack.c.l.b16 %v6300
        %v6852 = vunpack.c.l.b16 %v6301
        %v6853 = vunpack.c.l.b16 %v6302
        %v6854 = vunpack.c.l.b16 %v6303
        %v6855 = vunpack.c.l.b16 %v6304
        %v6856 = vunpack.c.l.b16 %v6305
        %v6857 = vunpack.c.l.b16 %v6306
        %v6858 = vunpack.c.l.b16 %v6307
        %v6859 = vunpack.c.l.b16 %v6308
        %v6860 = vunpack.c.l.b16 %v6309
        %v6861 = vunpack.c.l.b16 %v6310
        %v6862 = vunpack.c.l.b16 %v6311
        %v6863 = vunpack.c.l.b16 %v6312
        %v6864 = vunpack.c.l.b16 %v6313
        %v6865 = vunpack.c.l.b16 %v6314
        %v6866 = vunpack.c.l.b16 %v6315
        %v6867 = vunpack.c.l.b16 %v6316
        %v6868 = vunpack.c.l.b16 %v6317
        %v6869 = vunpack.c.l.b16 %v6318
        %v6870 = vunpack.c.l.b16 %v6319
        %v6871 = vunpack.c.l.b16 %v6320
        %v6872 = vpack.c.b16 %v6801, %v6800
        %v6873 = vpack.c.b16 %v6803, %v6802
        %v6874 = vpack.c.b16 %v6805, %v6804
        %v6875 = vpack.c.b16 %v6807, %v6806
        %v6876 = vpack.c.b16 %v6809, %v6808
        %v6877 = vpack.c.b16 %v6811, %v6810
        %v6878 = vpack.c.b16 %v6813, %v6812
        %v6879 = vpack.c.b16 %v6815, %v6814
        %v6880 = vpack.c.b16 %v6817, %v6816
        %v6881 = vpack.c.b16 %v6819, %v6818
        %v6882 = vpack.c.b16 %v6821, %v6820
        %v6883 = vpack.c.b16 %v6823, %v6822
        %v6884 = vpack.c.b16 %v6825, %v6824
        %v6885 = vpack.c.b16 %v6827, %v6826
        %v6886 = vpack.c.b16 %v6829, %v6828
        %v6887 = vpack.c.b16 %v6831, %v6830
        %v6888 = vpack.c.b16 %v6833, %v6832
        %v6889 = vpack.c.b16 %v6835, %v6834
        %v6890 = vpack.c.b16 %v6837, %v6836
        %v6891 = vpack.c.b16 %v6839, %v6838
        %v6892 = vpack.c.b16 %v6841, %v6840
        %v6893 = vpack.c.b16 %v6843, %v6842
        %v6894 = vpack.c.b16 %v6845, %v6844
        %v6895 = vpack.c.b16 %v6847, %v6846
        %v6896 = vpack.c.b16 %v6849, %v6848
        %v6897 = vpack.c.b16 %v6851, %v6850
        %v6898 = vpack.c.b16 %v6853, %v6852
        %v6899 = vpack.c.b16 %v6855, %v6854
        %v6900 = vpack.c.b16 %v6857, %v6856
        %v6901 = vpack.c.b16 %v6859, %v6858
        %v6902 = vpack.c.b16 %v6861, %v6860
        %v6903 = vpack.c.b16 %v6863, %v6862
        %v6904 = vpack.c.b16 %v6865, %v6864
        %v6905 = vpack.c.b16 %v6867, %v6866
        %v6906 = vpack.c.b16 %v6869, %v6868
        %v6907 = vpack.c.b16 %v6871, %v6870
        %v6945 = vsel %vm360, %v6588, 0
        %v6948 = vsel %vm360, %v6593, 0
        %v6951 = vsel %vm360, %v6598, 0
        %v6954 = vsel %vm360, %v6603, 0
        %v6957 = vsel %vm360, %v6608, 0
        %v6960 = vsel %vm360, %v6613, 0
        %v6963 = vsel %vm360, %v6618, 0
        %v6966 = vsel %vm360, %v6623, 0
        %v6969 = vsel %vm360, %v6628, 0
        %v6972 = vsel %vm360, %v6633, 0
        %v6975 = vsel %vm360, %v6638, 0
        %v6978 = vsel %vm360, %v6643, 0
        %v6981 = vsel %vm360, %v6648, 0
        %v6984 = vsel %vm360, %v6653, 0
        %v6987 = vsel %vm360, %v6658, 0
        %v6990 = vsel %vm360, %v6663, 0
        %6992 = vmatprep.subr.bf16.mxu0 0
        %6993 = vmatpush1.bf16.msra.mxu0 %v6879
        %6994 = vmatprep.subr.bf16.mxu0 0
        %6995 = vmatpush1.bf16.msra.mxu0 %v6878
        %6996 = vmatprep.subr.bf16.mxu0 0
        %6997 = vmatpush1.bf16.msra.mxu0 %v6877
        %6998 = vmatprep.subr.bf16.mxu0 0
        %6999 = vmatpush1.bf16.msra.mxu0 %v6876
        %7000 = vmatprep.subr.bf16.mxu0 0
        %7001 = vmatpush1.bf16.msra.mxu0 %v6875
        %7002 = vmatprep.subr.bf16.mxu0 0
        %7003 = vmatpush1.bf16.msra.mxu0 %v6874
        %7004 = vmatprep.subr.bf16.mxu0 0
        %7005 = vmatpush1.bf16.msra.mxu0 %v6873
        %7006 = vmatprep.subr.bf16.mxu0 0
        %7007 = vmatpush1.bf16.msra.mxu0 %v6872
        %7008 = vmatprep.subr.bf16.mxu0 0
        %7009 = vmatpush2.bf16.msra.mxu0 %v6887
        %7010 = vmatprep.subr.bf16.mxu0 0
        %7011 = vmatpush2.bf16.msra.mxu0 %v6886
        %7012 = vmatprep.subr.bf16.mxu0 0
        %7013 = vmatpush2.bf16.msra.mxu0 %v6885
        %7014 = vmatprep.subr.bf16.mxu0 0
        %7015 = vmatpush2.bf16.msra.mxu0 %v6884
        %7016 = vmatprep.subr.bf16.mxu0 0
        %7017 = vmatpush2.bf16.msra.mxu0 %v6883
        %7018 = vmatprep.subr.bf16.mxu0 0
        %7019 = vmatpush2.bf16.msra.mxu0 %v6882
        %7020 = vmatprep.subr.bf16.mxu0 0
        %7021 = vmatpush2.bf16.msra.mxu0 %v6881
        %7022 = vmatprep.subr.bf16.mxu0 0
        %7023 = vmatpush2.bf16.msra.mxu0 %v6880
        %7024 = vmatprep.mubr.bf16.mxu0 %v6585
        %7025 = vmatmul.mubr.bf16.gmra.mxu0 %v6584
        %v7026 = vpop.f32.mrf.mxu0
        %v7027 = vadd.f32 %v6326, %v7026
        %v7028 = vpop.f32.mrf.mxu0
        %v7029 = vpop.f32.mrf.mxu0
        %v7030 = vadd.f32 %v6326, %v7029
        %v7031 = vpop.f32.mrf.mxu0
        %7032 = vmatprep.mubr.bf16.mxu0 %v6590
        %7033 = vmatmul.mubr.bf16.gmra.mxu0 %v6589
        %v7034 = vpop.f32.mrf.mxu0
        %v7035 = vadd.f32 %v6326, %v7034
        %v7036 = vpop.f32.mrf.mxu0
        %v7037 = vpop.f32.mrf.mxu0
        %v7038 = vadd.f32 %v6326, %v7037
        %v7039 = vpop.f32.mrf.mxu0
        %7040 = vmatprep.mubr.bf16.mxu0 %v6595
        %7041 = vmatmul.mubr.bf16.gmra.mxu0 %v6594
        %v7042 = vpop.f32.mrf.mxu0
        %v7043 = vadd.f32 %v6326, %v7042
        %v7044 = vpop.f32.mrf.mxu0
        %v7045 = vpop.f32.mrf.mxu0
        %v7046 = vadd.f32 %v6326, %v7045
        %v7047 = vpop.f32.mrf.mxu0
        %7048 = vmatprep.mubr.bf16.mxu0 %v6600
        %7049 = vmatmul.mubr.bf16.gmra.mxu0 %v6599
        %v7050 = vpop.f32.mrf.mxu0
        %v7051 = vadd.f32 %v6326, %v7050
        %v7052 = vpop.f32.mrf.mxu0
        %v7053 = vpop.f32.mrf.mxu0
        %v7054 = vadd.f32 %v6326, %v7053
        %v7055 = vpop.f32.mrf.mxu0
        %7056 = vmatprep.mubr.bf16.mxu0 %v6605
        %7057 = vmatmul.mubr.bf16.gmra.mxu0 %v6604
        %v7058 = vpop.f32.mrf.mxu0
        %v7059 = vadd.f32 %v6326, %v7058
        %v7060 = vpop.f32.mrf.mxu0
        %v7061 = vpop.f32.mrf.mxu0
        %v7062 = vadd.f32 %v6326, %v7061
        %v7063 = vpop.f32.mrf.mxu0
        %7064 = vmatprep.mubr.bf16.mxu0 %v6610
        %7065 = vmatmul.mubr.bf16.gmra.mxu0 %v6609
        %v7066 = vpop.f32.mrf.mxu0
        %v7067 = vadd.f32 %v6326, %v7066
        %v7068 = vpop.f32.mrf.mxu0
        %v7069 = vpop.f32.mrf.mxu0
        %v7070 = vadd.f32 %v6326, %v7069
        %v7071 = vpop.f32.mrf.mxu0
        %7072 = vmatprep.mubr.bf16.mxu0 %v6615
        %7073 = vmatmul.mubr.bf16.gmra.mxu0 %v6614
        %v7074 = vpop.f32.mrf.mxu0
        %v7075 = vadd.f32 %v6326, %v7074
        %v7076 = vpop.f32.mrf.mxu0
        %v7077 = vpop.f32.mrf.mxu0
        %v7078 = vadd.f32 %v6326, %v7077
        %v7079 = vpop.f32.mrf.mxu0
        %7080 = vmatprep.mubr.bf16.mxu0 %v6620
        %7081 = vmatmul.mubr.bf16.gmra.mxu0 %v6619
        %v7082 = vpop.f32.mrf.mxu0
        %v7083 = vadd.f32 %v6326, %v7082
        %v7084 = vpop.f32.mrf.mxu0
        %v7085 = vpop.f32.mrf.mxu0
        %v7086 = vadd.f32 %v6326, %v7085
        %v7087 = vpop.f32.mrf.mxu0
        %7088 = vmatprep.mubr.bf16.mxu0 %v6625
        %7089 = vmatmul.mubr.bf16.gmra.mxu0 %v6624
        %v7090 = vpop.f32.mrf.mxu0
        %v7091 = vadd.f32 %v6326, %v7090
        %v7092 = vpop.f32.mrf.mxu0
        %v7093 = vpop.f32.mrf.mxu0
        %v7094 = vadd.f32 %v6326, %v7093
        %v7095 = vpop.f32.mrf.mxu0
        %7096 = vmatprep.mubr.bf16.mxu0 %v6630
        %7097 = vmatmul.mubr.bf16.gmra.mxu0 %v6629
        %v7098 = vpop.f32.mrf.mxu0
        %v7099 = vadd.f32 %v6326, %v7098
        %v7100 = vpop.f32.mrf.mxu0
        %v7101 = vpop.f32.mrf.mxu0
        %v7102 = vadd.f32 %v6326, %v7101
        %v7103 = vpop.f32.mrf.mxu0
        %7104 = vmatprep.mubr.bf16.mxu0 %v6635
        %7105 = vmatmul.mubr.bf16.gmra.mxu0 %v6634
        %v7106 = vpop.f32.mrf.mxu0
        %v7107 = vadd.f32 %v6326, %v7106
        %v7108 = vpop.f32.mrf.mxu0
        %v7109 = vpop.f32.mrf.mxu0
        %v7110 = vadd.f32 %v6326, %v7109
        %v7111 = vpop.f32.mrf.mxu0
        %7112 = vmatprep.mubr.bf16.mxu0 %v6640
        %7113 = vmatmul.mubr.bf16.gmra.mxu0 %v6639
        %v7114 = vpop.f32.mrf.mxu0
        %v7115 = vadd.f32 %v6326, %v7114
        %v7116 = vpop.f32.mrf.mxu0
        %v7117 = vpop.f32.mrf.mxu0
        %v7118 = vadd.f32 %v6326, %v7117
        %v7119 = vpop.f32.mrf.mxu0
        %7120 = vmatprep.mubr.bf16.mxu0 %v6645
        %7121 = vmatmul.mubr.bf16.gmra.mxu0 %v6644
        %v7122 = vpop.f32.mrf.mxu0
        %v7123 = vadd.f32 %v6326, %v7122
        %v7124 = vpop.f32.mrf.mxu0
        %v7125 = vpop.f32.mrf.mxu0
        %v7126 = vadd.f32 %v6326, %v7125
        %v7127 = vpop.f32.mrf.mxu0
        %7128 = vmatprep.mubr.bf16.mxu0 %v6650
        %7129 = vmatmul.mubr.bf16.gmra.mxu0 %v6649
        %v7130 = vpop.f32.mrf.mxu0
        %v7131 = vadd.f32 %v6326, %v7130
        %v7132 = vpop.f32.mrf.mxu0
        %v7133 = vpop.f32.mrf.mxu0
        %v7134 = vadd.f32 %v6326, %v7133
        %v7135 = vpop.f32.mrf.mxu0
        %7136 = vmatprep.mubr.bf16.mxu0 %v6655
        %7137 = vmatmul.mubr.bf16.gmra.mxu0 %v6654
        %v7138 = vpop.f32.mrf.mxu0
        %v7139 = vadd.f32 %v6326, %v7138
        %v7140 = vpop.f32.mrf.mxu0
        %v7141 = vpop.f32.mrf.mxu0
        %v7142 = vadd.f32 %v6326, %v7141
        %v7143 = vpop.f32.mrf.mxu0
        %7144 = vmatprep.mubr.bf16.mxu0 %v6660
        %7145 = vmatmul.mubr.bf16.gmra.mxu0 %v6659
        %v7146 = vpop.f32.mrf.mxu0
        %v7147 = vadd.f32 %v6326, %v7146
        %v7148 = vpop.f32.mrf.mxu0
        %v7149 = vpop.f32.mrf.mxu0
        %v7150 = vadd.f32 %v6326, %v7149
        %v7151 = vpop.f32.mrf.mxu0
        %7152 = vdwg.mxu0
        %7153 = vmatprep.subr.bf16.mxu0 0
        %7154 = vmatpush1.bf16.msra.mxu0 %v6895
        %7155 = vmatprep.subr.bf16.mxu0 0
        %7156 = vmatpush1.bf16.msra.mxu0 %v6894
        %7157 = vmatprep.subr.bf16.mxu0 0
        %7158 = vmatpush1.bf16.msra.mxu0 %v6893
        %7159 = vmatprep.subr.bf16.mxu0 0
        %7160 = vmatpush1.bf16.msra.mxu0 %v6892
        %7161 = vmatprep.subr.bf16.mxu0 0
        %7162 = vmatpush1.bf16.msra.mxu0 %v6891
        %7163 = vmatprep.subr.bf16.mxu0 0
        %7164 = vmatpush1.bf16.msra.mxu0 %v6890
        %7165 = vmatprep.subr.bf16.mxu0 0
        %7166 = vmatpush1.bf16.msra.mxu0 %v6889
        %7167 = vmatprep.subr.bf16.mxu0 0
        %7168 = vmatpush1.bf16.msra.mxu0 %v6888
        %7169 = vmatprep.subr.bf16.mxu0 0
        %7170 = vmatpush2.bf16.msra.mxu0 %v6903
        %7171 = vmatprep.subr.bf16.mxu0 0
        %7172 = vmatpush2.bf16.msra.mxu0 %v6902
        %7173 = vmatprep.subr.bf16.mxu0 0
        %7174 = vmatpush2.bf16.msra.mxu0 %v6901
        %7175 = vmatprep.subr.bf16.mxu0 0
        %7176 = vmatpush2.bf16.msra.mxu0 %v6900
        %7177 = vmatprep.subr.bf16.mxu0 0
        %7178 = vmatpush2.bf16.msra.mxu0 %v6899
        %7179 = vmatprep.subr.bf16.mxu0 0
        %7180 = vmatpush2.bf16.msra.mxu0 %v6898
        %7181 = vmatprep.subr.bf16.mxu0 0
        %7182 = vmatpush2.bf16.msra.mxu0 %v6897
        %7183 = vmatprep.subr.bf16.mxu0 0
        %7184 = vmatpush2.bf16.msra.mxu0 %v6896
        %7185 = vmatprep.mubr.bf16.mxu0 %v6587
        %7186 = vmatmul.mubr.bf16.gmra.mxu0 %v6586
        %v7187 = vpop.f32.mrf.mxu0
        %v7188 = vadd.f32 %v7027, %v7187
        %v7189 = vpop.f32.mrf.mxu0
        %v7190 = vpop.f32.mrf.mxu0
        %v7191 = vadd.f32 %v7030, %v7190
        %v7192 = vpop.f32.mrf.mxu0
        %7193 = vmatprep.mubr.bf16.mxu0 %v6592
        %7194 = vmatmul.mubr.bf16.gmra.mxu0 %v6591
        %v7195 = vpop.f32.mrf.mxu0
        %v7196 = vadd.f32 %v7035, %v7195
        %v7197 = vpop.f32.mrf.mxu0
        %v7198 = vpop.f32.mrf.mxu0
        %v7199 = vadd.f32 %v7038, %v7198
        %v7200 = vpop.f32.mrf.mxu0
        %7201 = vmatprep.mubr.bf16.mxu0 %v6597
        %7202 = vmatmul.mubr.bf16.gmra.mxu0 %v6596
        %v7203 = vpop.f32.mrf.mxu0
        %v7204 = vadd.f32 %v7043, %v7203
        %v7205 = vpop.f32.mrf.mxu0
        %v7206 = vpop.f32.mrf.mxu0
        %v7207 = vadd.f32 %v7046, %v7206
        %v7208 = vpop.f32.mrf.mxu0
        %7209 = vmatprep.mubr.bf16.mxu0 %v6602
        %7210 = vmatmul.mubr.bf16.gmra.mxu0 %v6601
        %v7211 = vpop.f32.mrf.mxu0
        %v7212 = vadd.f32 %v7051, %v7211
        %v7213 = vpop.f32.mrf.mxu0
        %v7214 = vpop.f32.mrf.mxu0
        %v7215 = vadd.f32 %v7054, %v7214
        %v7216 = vpop.f32.mrf.mxu0
        %7217 = vmatprep.mubr.bf16.mxu0 %v6607
        %7218 = vmatmul.mubr.bf16.gmra.mxu0 %v6606
        %v7219 = vpop.f32.mrf.mxu0
        %v7220 = vadd.f32 %v7059, %v7219
        %v7221 = vpop.f32.mrf.mxu0
        %v7222 = vpop.f32.mrf.mxu0
        %v7223 = vadd.f32 %v7062, %v7222
        %v7224 = vpop.f32.mrf.mxu0
        %7225 = vmatprep.mubr.bf16.mxu0 %v6612
        %7226 = vmatmul.mubr.bf16.gmra.mxu0 %v6611
        %v7227 = vpop.f32.mrf.mxu0
        %v7228 = vadd.f32 %v7067, %v7227
        %v7229 = vpop.f32.mrf.mxu0
        %v7230 = vpop.f32.mrf.mxu0
        %v7231 = vadd.f32 %v7070, %v7230
        %v7232 = vpop.f32.mrf.mxu0
        %7233 = vmatprep.mubr.bf16.mxu0 %v6617
        %7234 = vmatmul.mubr.bf16.gmra.mxu0 %v6616
        %v7235 = vpop.f32.mrf.mxu0
        %v7236 = vadd.f32 %v7075, %v7235
        %v7237 = vpop.f32.mrf.mxu0
        %v7238 = vpop.f32.mrf.mxu0
        %v7239 = vadd.f32 %v7078, %v7238
        %v7240 = vpop.f32.mrf.mxu0
        %7241 = vmatprep.mubr.bf16.mxu0 %v6622
        %7242 = vmatmul.mubr.bf16.gmra.mxu0 %v6621
        %v7243 = vpop.f32.mrf.mxu0
        %v7244 = vadd.f32 %v7083, %v7243
        %v7245 = vpop.f32.mrf.mxu0
        %v7246 = vpop.f32.mrf.mxu0
        %v7247 = vadd.f32 %v7086, %v7246
        %v7248 = vpop.f32.mrf.mxu0
        %7249 = vmatprep.mubr.bf16.mxu0 %v6627
        %7250 = vmatmul.mubr.bf16.gmra.mxu0 %v6626
        %v7251 = vpop.f32.mrf.mxu0
        %v7252 = vadd.f32 %v7091, %v7251
        %v7253 = vpop.f32.mrf.mxu0
        %v7254 = vpop.f32.mrf.mxu0
        %v7255 = vadd.f32 %v7094, %v7254
        %v7256 = vpop.f32.mrf.mxu0
        %7257 = vmatprep.mubr.bf16.mxu0 %v6632
        %7258 = vmatmul.mubr.bf16.gmra.mxu0 %v6631
        %v7259 = vpop.f32.mrf.mxu0
        %v7260 = vadd.f32 %v7099, %v7259
        %v7261 = vpop.f32.mrf.mxu0
        %v7262 = vpop.f32.mrf.mxu0
        %v7263 = vadd.f32 %v7102, %v7262
        %v7264 = vpop.f32.mrf.mxu0
        %7265 = vmatprep.mubr.bf16.mxu0 %v6637
        %7266 = vmatmul.mubr.bf16.gmra.mxu0 %v6636
        %v7267 = vpop.f32.mrf.mxu0
        %v7268 = vadd.f32 %v7107, %v7267
        %v7269 = vpop.f32.mrf.mxu0
        %v7270 = vpop.f32.mrf.mxu0
        %v7271 = vadd.f32 %v7110, %v7270
        %v7272 = vpop.f32.mrf.mxu0
        %7273 = vmatprep.mubr.bf16.mxu0 %v6642
        %7274 = vmatmul.mubr.bf16.gmra.mxu0 %v6641
        %v7275 = vpop.f32.mrf.mxu0
        %v7276 = vadd.f32 %v7115, %v7275
        %v7277 = vpop.f32.mrf.mxu0
        %v7278 = vpop.f32.mrf.mxu0
        %v7279 = vadd.f32 %v7118, %v7278
        %v7280 = vpop.f32.mrf.mxu0
        %7281 = vmatprep.mubr.bf16.mxu0 %v6647
        %7282 = vmatmul.mubr.bf16.gmra.mxu0 %v6646
        %v7283 = vpop.f32.mrf.mxu0
        %v7284 = vadd.f32 %v7123, %v7283
        %v7285 = vpop.f32.mrf.mxu0
        %v7286 = vpop.f32.mrf.mxu0
        %v7287 = vadd.f32 %v7126, %v7286
        %v7288 = vpop.f32.mrf.mxu0
        %7289 = vmatprep.mubr.bf16.mxu0 %v6652
        %7290 = vmatmul.mubr.bf16.gmra.mxu0 %v6651
        %v7291 = vpop.f32.mrf.mxu0
        %v7292 = vadd.f32 %v7131, %v7291
        %v7293 = vpop.f32.mrf.mxu0
        %v7294 = vpop.f32.mrf.mxu0
        %v7295 = vadd.f32 %v7134, %v7294
        %v7296 = vpop.f32.mrf.mxu0
        %7297 = vmatprep.mubr.bf16.mxu0 %v6657
        %7298 = vmatmul.mubr.bf16.gmra.mxu0 %v6656
        %v7299 = vpop.f32.mrf.mxu0
        %v7300 = vadd.f32 %v7139, %v7299
        %v7301 = vpop.f32.mrf.mxu0
        %v7302 = vpop.f32.mrf.mxu0
        %v7303 = vadd.f32 %v7142, %v7302
        %v7304 = vpop.f32.mrf.mxu0
        %7305 = vmatprep.mubr.bf16.mxu0 %v6662
        %7306 = vmatmul.mubr.bf16.gmra.mxu0 %v6661
        %v7307 = vpop.f32.mrf.mxu0
        %v7308 = vadd.f32 %v7147, %v7307
        %v7309 = vpop.f32.mrf.mxu0
        %v7310 = vpop.f32.mrf.mxu0
        %v7311 = vadd.f32 %v7150, %v7310
        %v7312 = vpop.f32.mrf.mxu0
        %7313 = vdwg.mxu0
        %7314 = vmatprep.subr.bf16.mxu0 0
        %7315 = vmatpush1.bf16.msra.mxu0 0
        %7316 = vmatprep.subr.bf16.mxu0 0
        %7317 = vmatpush1.bf16.msra.mxu0 0
        %7318 = vmatprep.subr.bf16.mxu0 0
        %7319 = vmatpush1.bf16.msra.mxu0 0
        %7320 = vmatprep.subr.bf16.mxu0 0
        %7321 = vmatpush1.bf16.msra.mxu0 0
        %7322 = vmatprep.subr.bf16.mxu0 0
        %7323 = vmatpush1.bf16.msra.mxu0 %v6907
        %7324 = vmatprep.subr.bf16.mxu0 0
        %7325 = vmatpush1.bf16.msra.mxu0 %v6906
        %7326 = vmatprep.subr.bf16.mxu0 0
        %7327 = vmatpush1.bf16.msra.mxu0 %v6905
        %7328 = vmatprep.subr.bf16.mxu0 0
        %7329 = vmatpush1.bf16.msra.mxu0 %v6904
        %7330 = vmatprep.subr.bf16.mxu0 0
        %7331 = vmatpush2.bf16.msra.mxu0 0
        %7332 = vmatprep.subr.bf16.mxu0 0
        %7333 = vmatpush2.bf16.msra.mxu0 0
        %7334 = vmatprep.subr.bf16.mxu0 0
        %7335 = vmatpush2.bf16.msra.mxu0 0
        %7336 = vmatprep.subr.bf16.mxu0 0
        %7337 = vmatpush2.bf16.msra.mxu0 0
        %7338 = vmatprep.subr.bf16.mxu0 0
        %7339 = vmatpush2.bf16.msra.mxu0 0
        %7340 = vmatprep.subr.bf16.mxu0 0
        %7341 = vmatpush2.bf16.msra.mxu0 0
        %7342 = vmatprep.subr.bf16.mxu0 0
        %7343 = vmatpush2.bf16.msra.mxu0 0
        %7344 = vmatprep.subr.bf16.mxu0 0
        %7345 = vmatpush2.bf16.msra.mxu0 0
        %7346 = vmatprep.mubr.bf16.mxu0 0
        %7347 = vmatmul.mubr.bf16.gmra.mxu0 %v6945
        %v7348 = vpop.f32.mrf.mxu0
        %v7349 = vadd.f32 %v7188, %v7348
        %v7350 = vpop.f32.mrf.mxu0
        %v7351 = vpop.f32.mrf.mxu0
        %v7352 = vadd.f32 %v7191, %v7351
        %v7353 = vpop.f32.mrf.mxu0
        %7354 = vmatprep.mubr.bf16.mxu0 0
        %7355 = vmatmul.mubr.bf16.gmra.mxu0 %v6948
        %v7356 = vpop.f32.mrf.mxu0
        %v7357 = vadd.f32 %v7196, %v7356
        %v7358 = vpop.f32.mrf.mxu0
        %v7359 = vpop.f32.mrf.mxu0
        %v7360 = vadd.f32 %v7199, %v7359
        %v7361 = vpop.f32.mrf.mxu0
        %7362 = vmatprep.mubr.bf16.mxu0 0
        %7363 = vmatmul.mubr.bf16.gmra.mxu0 %v6951
        %v7364 = vpop.f32.mrf.mxu0
        %v7365 = vadd.f32 %v7204, %v7364
        %v7366 = vpop.f32.mrf.mxu0
        %v7367 = vpop.f32.mrf.mxu0
        %v7368 = vadd.f32 %v7207, %v7367
        %v7369 = vpop.f32.mrf.mxu0
        %7370 = vmatprep.mubr.bf16.mxu0 0
        %7371 = vmatmul.mubr.bf16.gmra.mxu0 %v6954
        %v7372 = vpop.f32.mrf.mxu0
        %v7373 = vadd.f32 %v7212, %v7372
        %v7374 = vpop.f32.mrf.mxu0
        %v7375 = vpop.f32.mrf.mxu0
        %v7376 = vadd.f32 %v7215, %v7375
        %v7377 = vpop.f32.mrf.mxu0
        %7378 = vmatprep.mubr.bf16.mxu0 0
        %7379 = vmatmul.mubr.bf16.gmra.mxu0 %v6957
        %v7380 = vpop.f32.mrf.mxu0
        %v7381 = vadd.f32 %v7220, %v7380
        %v7382 = vpop.f32.mrf.mxu0
        %v7383 = vpop.f32.mrf.mxu0
        %v7384 = vadd.f32 %v7223, %v7383
        %v7385 = vpop.f32.mrf.mxu0
        %7386 = vmatprep.mubr.bf16.mxu0 0
        %7387 = vmatmul.mubr.bf16.gmra.mxu0 %v6960
        %v7388 = vpop.f32.mrf.mxu0
        %v7389 = vadd.f32 %v7228, %v7388
        %v7390 = vpop.f32.mrf.mxu0
        %v7391 = vpop.f32.mrf.mxu0
        %v7392 = vadd.f32 %v7231, %v7391
        %v7393 = vpop.f32.mrf.mxu0
        %7394 = vmatprep.mubr.bf16.mxu0 0
        %7395 = vmatmul.mubr.bf16.gmra.mxu0 %v6963
        %v7396 = vpop.f32.mrf.mxu0
        %v7397 = vadd.f32 %v7236, %v7396
        %v7398 = vpop.f32.mrf.mxu0
        %v7399 = vpop.f32.mrf.mxu0
        %v7400 = vadd.f32 %v7239, %v7399
        %v7401 = vpop.f32.mrf.mxu0
        %7402 = vmatprep.mubr.bf16.mxu0 0
        %7403 = vmatmul.mubr.bf16.gmra.mxu0 %v6966
        %v7404 = vpop.f32.mrf.mxu0
        %v7405 = vadd.f32 %v7244, %v7404
        %v7406 = vpop.f32.mrf.mxu0
        %v7407 = vpop.f32.mrf.mxu0
        %v7408 = vadd.f32 %v7247, %v7407
        %v7409 = vpop.f32.mrf.mxu0
        %7410 = vmatprep.mubr.bf16.mxu0 0
        %7411 = vmatmul.mubr.bf16.gmra.mxu0 %v6969
        %v7412 = vpop.f32.mrf.mxu0
        %v7413 = vadd.f32 %v7252, %v7412
        %v7414 = vpop.f32.mrf.mxu0
        %v7415 = vpop.f32.mrf.mxu0
        %v7416 = vadd.f32 %v7255, %v7415
        %v7417 = vpop.f32.mrf.mxu0
        %7418 = vmatprep.mubr.bf16.mxu0 0
        %7419 = vmatmul.mubr.bf16.gmra.mxu0 %v6972
        %v7420 = vpop.f32.mrf.mxu0
        %v7421 = vadd.f32 %v7260, %v7420
        %v7422 = vpop.f32.mrf.mxu0
        %v7423 = vpop.f32.mrf.mxu0
        %v7424 = vadd.f32 %v7263, %v7423
        %v7425 = vpop.f32.mrf.mxu0
        %7426 = vmatprep.mubr.bf16.mxu0 0
        %7427 = vmatmul.mubr.bf16.gmra.mxu0 %v6975
        %v7428 = vpop.f32.mrf.mxu0
        %v7429 = vadd.f32 %v7268, %v7428
        %v7430 = vpop.f32.mrf.mxu0
        %v7431 = vpop.f32.mrf.mxu0
        %v7432 = vadd.f32 %v7271, %v7431
        %v7433 = vpop.f32.mrf.mxu0
        %7434 = vmatprep.mubr.bf16.mxu0 0
        %7435 = vmatmul.mubr.bf16.gmra.mxu0 %v6978
        %v7436 = vpop.f32.mrf.mxu0
        %v7437 = vadd.f32 %v7276, %v7436
        %v7438 = vpop.f32.mrf.mxu0
        %v7439 = vpop.f32.mrf.mxu0
        %v7440 = vadd.f32 %v7279, %v7439
        %v7441 = vpop.f32.mrf.mxu0
        %7442 = vmatprep.mubr.bf16.mxu0 0
        %7443 = vmatmul.mubr.bf16.gmra.mxu0 %v6981
        %v7444 = vpop.f32.mrf.mxu0
        %v7445 = vadd.f32 %v7284, %v7444
        %v7446 = vpop.f32.mrf.mxu0
        %v7447 = vpop.f32.mrf.mxu0
        %v7448 = vadd.f32 %v7287, %v7447
        %v7449 = vpop.f32.mrf.mxu0
        %7450 = vmatprep.mubr.bf16.mxu0 0
        %7451 = vmatmul.mubr.bf16.gmra.mxu0 %v6984
        %v7452 = vpop.f32.mrf.mxu0
        %v7453 = vadd.f32 %v7292, %v7452
        %v7454 = vpop.f32.mrf.mxu0
        %v7455 = vpop.f32.mrf.mxu0
        %v7456 = vadd.f32 %v7295, %v7455
        %v7457 = vpop.f32.mrf.mxu0
        %7458 = vmatprep.mubr.bf16.mxu0 0
        %7459 = vmatmul.mubr.bf16.gmra.mxu0 %v6987
        %v7460 = vpop.f32.mrf.mxu0
        %v7461 = vadd.f32 %v7300, %v7460
        %v7462 = vpop.f32.mrf.mxu0
        %v7463 = vpop.f32.mrf.mxu0
        %v7464 = vadd.f32 %v7303, %v7463
        %v7465 = vpop.f32.mrf.mxu0
        %7466 = vmatprep.mubr.bf16.mxu0 0
        %7467 = vmatmul.mubr.bf16.gmra.mxu0 %v6990
        %v7468 = vpop.f32.mrf.mxu0
        %v7469 = vadd.f32 %v7308, %v7468
        %v7470 = vpop.f32.mrf.mxu0
        %v7471 = vpop.f32.mrf.mxu0
        %v7472 = vadd.f32 %v7311, %v7471
        %v7473 = vpop.f32.mrf.mxu0
        %7474 = vdwg.mxu0
        %v7475 = vmax.f32 %v7349, 0.0
        %v7476 = vmax.f32 %v7352, 0.0
        %v7477 = vmax.f32 %v7357, 0.0
        %v7478 = vmax.f32 %v7360, 0.0
        %v7479 = vmax.f32 %v7365, 0.0
        %v7480 = vmax.f32 %v7368, 0.0
        %v7481 = vmax.f32 %v7373, 0.0
        %v7482 = vmax.f32 %v7376, 0.0
        %v7483 = vmax.f32 %v7381, 0.0
        %v7484 = vmax.f32 %v7384, 0.0
        %v7485 = vmax.f32 %v7389, 0.0
        %v7486 = vmax.f32 %v7392, 0.0
        %v7487 = vmax.f32 %v7397, 0.0
        %v7488 = vmax.f32 %v7400, 0.0
        %v7489 = vmax.f32 %v7405, 0.0
        %v7490 = vmax.f32 %v7408, 0.0
        %v7491 = vmax.f32 %v7413, 0.0
        %v7492 = vmax.f32 %v7416, 0.0
        %v7493 = vmax.f32 %v7421, 0.0
        %v7494 = vmax.f32 %v7424, 0.0
        %v7495 = vmax.f32 %v7429, 0.0
        %v7496 = vmax.f32 %v7432, 0.0
        %v7497 = vmax.f32 %v7437, 0.0
        %v7498 = vmax.f32 %v7440, 0.0
        %v7499 = vmax.f32 %v7445, 0.0
        %v7500 = vmax.f32 %v7448, 0.0
        %v7501 = vmax.f32 %v7453, 0.0
        %v7502 = vmax.f32 %v7456, 0.0
        %v7503 = vmax.f32 %v7461, 0.0
        %v7504 = vmax.f32 %v7464, 0.0
        %v7505 = vmax.f32 %v7469, 0.0
        %v7506 = vmax.f32 %v7472, 0.0
        %v7507 = vld [vmem:[%s7] sm:$0xff]
        %v7508 = vld [vmem:[%s7 + $0x8] sm:$0xff]
        %v7509 = vpack.c.bf16 %v7476, %v7475
        %v7510 = vpack.c.bf16 %v7478, %v7477
        %v7511 = vpack.c.bf16 %v7480, %v7479
        %v7512 = vpack.c.bf16 %v7482, %v7481
        %v7513 = vpack.c.bf16 %v7484, %v7483
        %v7514 = vpack.c.bf16 %v7486, %v7485
        %v7515 = vpack.c.bf16 %v7488, %v7487
        %v7516 = vpack.c.bf16 %v7490, %v7489
        %v7517 = vpack.c.bf16 %v7492, %v7491
        %v7518 = vpack.c.bf16 %v7494, %v7493
        %v7519 = vpack.c.bf16 %v7496, %v7495
        %v7520 = vpack.c.bf16 %v7498, %v7497
        %v7521 = vpack.c.bf16 %v7500, %v7499
        %v7522 = vpack.c.bf16 %v7502, %v7501
        %v7523 = vpack.c.bf16 %v7504, %v7503
        %v7524 = vpack.c.bf16 %v7506, %v7505
        %v7527 = vunpack.c.l.b16 %v7507
        %v7528 = vunpack.c.h.b16 %v7507
        %v7529 = vunpack.c.l.b16 %v7508
        %v7530 = vunpack.c.h.b16 %v7508
        %v7531 = vpack.c.b16 %v7529, %v7527
        %v7532 = vpack.c.b16 %v7530, %v7528
        %7535 = vmatprep.subr.bf16.mxu0 0
        %7536 = vmatpush1.bf16.msra.mxu0 %v7516
        %7537 = vmatprep.subr.bf16.mxu0 0
        %7538 = vmatpush1.bf16.msra.mxu0 %v7515
        %7539 = vmatprep.subr.bf16.mxu0 0
        %7540 = vmatpush1.bf16.msra.mxu0 %v7514
        %7541 = vmatprep.subr.bf16.mxu0 0
        %7542 = vmatpush1.bf16.msra.mxu0 %v7513
        %7543 = vmatprep.subr.bf16.mxu0 0
        %7544 = vmatpush1.bf16.msra.mxu0 %v7512
        %7545 = vmatprep.subr.bf16.mxu0 0
        %7546 = vmatpush1.bf16.msra.mxu0 %v7511
        %7547 = vmatprep.subr.bf16.mxu0 0
        %7548 = vmatpush1.bf16.msra.mxu0 %v7510
        %7549 = vmatprep.subr.bf16.mxu0 0
        %7550 = vmatpush1.bf16.msra.mxu0 %v7509
        %7551 = vmatprep.subr.bf16.mxu0 0
        %7552 = vmatpush2.bf16.msra.mxu0 %v7524
        %7553 = vmatprep.subr.bf16.mxu0 0
        %7554 = vmatpush2.bf16.msra.mxu0 %v7523
        %7555 = vmatprep.subr.bf16.mxu0 0
        %7556 = vmatpush2.bf16.msra.mxu0 %v7522
        %7557 = vmatprep.subr.bf16.mxu0 0
        %7558 = vmatpush2.bf16.msra.mxu0 %v7521
        %7559 = vmatprep.subr.bf16.mxu0 0
        %7560 = vmatpush2.bf16.msra.mxu0 %v7520
        %7561 = vmatprep.subr.bf16.mxu0 0
        %7562 = vmatpush2.bf16.msra.mxu0 %v7519
        %7563 = vmatprep.subr.bf16.mxu0 0
        %7564 = vmatpush2.bf16.msra.mxu0 %v7518
        %7565 = vmatprep.subr.bf16.mxu0 0
        %7566 = vmatpush2.bf16.msra.mxu0 %v7517
        %7567 = vmatprep.mubr.bf16.mxu0 %v7532
        %7568 = vmatmul.mubr.bf16.gmra.mxu0 %v7531
        %v7569 = vpop.f32.mrf.mxu0
        %v7570 = vadd.f32 0.0, %v7569
        %v7571 = vpop.f32.mrf.mxu0
        %v7572 = vpop.f32.mrf.mxu0
        %v7573 = vadd.f32 0.0, %v7572
        %v7574 = vpop.f32.mrf.mxu0
        %7575 = vdwg.mxu0
        %v7576 = vpack.c.bf16 %v7570, %v7570
        %vm7577 = vcmask 253952
        %vm7578 = vsmask.f32 256
        %vm7579 = vmand %vm7577, %vm7578
        %v7580 = vld [vmem:[#allocation4] sm:$0x1]
        %v7581 = vsel %vm7579, %v7576, %v7580
        %7582 = vst [vmem:[#allocation4] sm:$0x1] %v7581
        %v7585 = vunpack.c.l.s4 1966171168
        %v7586 = vunpack.c.0.s8 %v7585
        %v7587 = vlaneseq
        %v7588 = vshrl.u32 %v7587, 7
        %v7589 = vsub.s32 %v7586, %v7588
        %v7590 = vrot.slane %v7576, %v7589
        %v7592 = vunpack.c.l.s4 1966171168
        %v7593 = vunpack.c.0.s8 %v7592
        %v7594 = vlaneseq
        %v7595 = vshrl.u32 %v7594, 7
        %v7596 = vsub.s32 %v7593, %v7595
        %v7597 = vrot.slane %v7590, %v7596
        %v7599 = vshrl.u32 %v7597, 16
        %v7601 = vrot.slane %v7599, 7
        %v7602 = vrot.slane %v7601, 1
        %7603 = vrot.lane.b32.xlu0 %v7602, 32
        %v7604 = vpop.permute.xlu0 %7603
        %vm7606 = vcmask 516352
        %vm7607 = vmand %vm7606, %vm7578
        %v7608 = vld [vmem:[#allocation4] sm:$0x1]
        %v7609 = vsel %vm7607, %v7604, %v7608
        %7610 = vst [vmem:[#allocation4] sm:$0x1] %v7609
        %v7611 = vcombine.high %v7590, %v7590
        %v7613 = vunpack.c.l.s4 1966171168
        %v7614 = vunpack.c.0.s8 %v7613
        %v7615 = vlaneseq
        %v7616 = vshrl.u32 %v7615, 7
        %v7617 = vsub.s32 %v7614, %v7616
        %v7618 = vrot.slane %v7611, %v7617
        %7619 = vrot.lane.b32.xlu0 %v7618, 64
        %v7620 = vpop.permute.xlu0 %7619
        %vm7622 = vcmask 778752
        %vm7623 = vmand %vm7622, %vm7578
        %v7624 = vld [vmem:[#allocation4] sm:$0x1]
        %v7625 = vsel %vm7623, %v7620, %v7624
        %7626 = vst [vmem:[#allocation4] sm:$0x1] %v7625
        %v7628 = vshrl.u32 %v7618, 16
        %v7630 = vrot.slane %v7628, 7
        %v7631 = vrot.slane %v7630, 1
        %7632 = vrot.lane.b32.xlu0 %v7631, 96
        %v7633 = vpop.permute.xlu0 %7632
        %vm7635 = vcmask 1041152
        %vm7636 = vmand %vm7635, %vm7578
        %v7637 = vld [vmem:[#allocation4] sm:$0x1]
        %v7638 = vsel %vm7636, %v7633, %v7637
        %7639 = vst [vmem:[#allocation4] sm:$0x1] %v7638
        %v7640 = vcombine.high %v7597, %v7597
        %v7642 = vld [vmem:[#allocation4 + $0x1] sm:$0x1]
        %v7643 = vsel %vm7579, %v7640, %v7642
        %7644 = vst [vmem:[#allocation4 + $0x1] sm:$0x1] %v7643
        %v7646 = vshrl.u32 %v7640, 16
        %v7648 = vrot.slane %v7646, 7
        %v7649 = vrot.slane %v7648, 1
        %7650 = vrot.lane.b32.xlu0 %v7649, 32
        %v7651 = vpop.permute.xlu0 %7650
        %v7653 = vld [vmem:[#allocation4 + $0x1] sm:$0x1]
        %v7654 = vsel %vm7607, %v7651, %v7653
        %7655 = vst [vmem:[#allocation4 + $0x1] sm:$0x1] %v7654
        %v7656 = vcombine.high %v7618, %v7618
        %7657 = vrot.lane.b32.xlu0 %v7656, 64
        %v7658 = vpop.permute.xlu0 %7657
        %v7660 = vld [vmem:[#allocation4 + $0x1] sm:$0x1]
        %v7661 = vsel %vm7623, %v7658, %v7660
        %7662 = vst [vmem:[#allocation4 + $0x1] sm:$0x1] %v7661
        %v7664 = vshrl.u32 %v7656, 16
        %v7666 = vrot.slane %v7664, 7
        %v7667 = vrot.slane %v7666, 1
        %7668 = vrot.lane.b32.xlu0 %v7667, 96
        %v7669 = vpop.permute.xlu0 %7668
        %v7671 = vld [vmem:[#allocation4 + $0x1] sm:$0x1]
        %v7672 = vsel %vm7636, %v7669, %v7671
        %7673 = vst [vmem:[#allocation4 + $0x1] sm:$0x1] %v7672
        %v7674 = vpack.c.bf16 %v7573, %v7573
        %v7675 = vld [vmem:[#allocation4 + $0x2] sm:$0x1]
        %v7676 = vsel %vm7579, %v7674, %v7675
        %7677 = vst [vmem:[#allocation4 + $0x2] sm:$0x1] %v7676
        %v7680 = vunpack.c.l.s4 1966171168
        %v7681 = vunpack.c.0.s8 %v7680
        %v7682 = vlaneseq
        %v7683 = vshrl.u32 %v7682, 7
        %v7684 = vsub.s32 %v7681, %v7683
        %v7685 = vrot.slane %v7674, %v7684
        %v7687 = vunpack.c.l.s4 1966171168
        %v7688 = vunpack.c.0.s8 %v7687
        %v7689 = vlaneseq
        %v7690 = vshrl.u32 %v7689, 7
        %v7691 = vsub.s32 %v7688, %v7690
        %v7692 = vrot.slane %v7685, %v7691
        %v7694 = vshrl.u32 %v7692, 16
        %v7696 = vrot.slane %v7694, 7
        %v7697 = vrot.slane %v7696, 1
        %7698 = vrot.lane.b32.xlu0 %v7697, 32
        %v7699 = vpop.permute.xlu0 %7698
        %v7701 = vld [vmem:[#allocation4 + $0x2] sm:$0x1]
        %v7702 = vsel %vm7607, %v7699, %v7701
        %7703 = vst [vmem:[#allocation4 + $0x2] sm:$0x1] %v7702
        %v7704 = vcombine.high %v7685, %v7685
        %v7706 = vunpack.c.l.s4 1966171168
        %v7707 = vunpack.c.0.s8 %v7706
        %v7708 = vlaneseq
        %v7709 = vshrl.u32 %v7708, 7
        %v7710 = vsub.s32 %v7707, %v7709
        %v7711 = vrot.slane %v7704, %v7710
        %7712 = vrot.lane.b32.xlu0 %v7711, 64
        %v7713 = vpop.permute.xlu0 %7712
        %v7715 = vld [vmem:[#allocation4 + $0x2] sm:$0x1]
        %v7716 = vsel %vm7623, %v7713, %v7715
        %7717 = vst [vmem:[#allocation4 + $0x2] sm:$0x1] %v7716
        %v7719 = vshrl.u32 %v7711, 16
        %v7721 = vrot.slane %v7719, 7
        %v7722 = vrot.slane %v7721, 1
        %7723 = vrot.lane.b32.xlu0 %v7722, 96
        %v7724 = vpop.permute.xlu0 %7723
        %v7726 = vld [vmem:[#allocation4 + $0x2] sm:$0x1]
        %v7727 = vsel %vm7636, %v7724, %v7726
        %7728 = vst [vmem:[#allocation4 + $0x2] sm:$0x1] %v7727
        %v7729 = vcombine.high %v7692, %v7692
        %v7731 = vld [vmem:[#allocation4 + $0x3] sm:$0x1]
        %v7732 = vsel %vm7579, %v7729, %v7731
        %7733 = vst [vmem:[#allocation4 + $0x3] sm:$0x1] %v7732
        %v7735 = vshrl.u32 %v7729, 16
        %v7737 = vrot.slane %v7735, 7
        %v7738 = vrot.slane %v7737, 1
        %7739 = vrot.lane.b32.xlu0 %v7738, 32
        %v7740 = vpop.permute.xlu0 %7739
        %v7742 = vld [vmem:[#allocation4 + $0x3] sm:$0x1]
        %v7743 = vsel %vm7607, %v7740, %v7742
        %7744 = vst [vmem:[#allocation4 + $0x3] sm:$0x1] %v7743
        %v7745 = vcombine.high %v7711, %v7711
        %7746 = vrot.lane.b32.xlu0 %v7745, 64
        %v7747 = vpop.permute.xlu0 %7746
        %v7749 = vld [vmem:[#allocation4 + $0x3] sm:$0x1]
        %v7750 = vsel %vm7623, %v7747, %v7749
        %7751 = vst [vmem:[#allocation4 + $0x3] sm:$0x1] %v7750
        %v7753 = vshrl.u32 %v7745, 16
        %v7755 = vrot.slane %v7753, 7
        %v7756 = vrot.slane %v7755, 1
        %7757 = vrot.lane.b32.xlu0 %v7756, 96
        %v7758 = vpop.permute.xlu0 %7757
        %v7760 = vld [vmem:[#allocation4 + $0x3] sm:$0x1]
        %v7761 = vsel %vm7636, %v7758, %v7760
        %7762 = vst [vmem:[#allocation4 + $0x3] sm:$0x1] %v7761
        %v7763 = vld [vmem:[#allocation4] sm:$0xf]
        %v7764 = vld [vmem:[%s8] sm:$0xf]
        %v7765 = vld [vmem:[%s8 + $0x4] sm:$0xf]
        %v7766 = vld [vmem:[%s8 + $0x8] sm:$0xf]
        %v7767 = vld [vmem:[%s8 + $0xc] sm:$0xf]
        %v7768 = vld [vmem:[%s8 + $0x10] sm:$0xf]
        %v7769 = vld [vmem:[%s8 + $0x14] sm:$0xf]
        %v7770 = vld [vmem:[%s8 + $0x18] sm:$0xf]
        %v7771 = vld [vmem:[%s8 + $0x1c] sm:$0xf]
        %v7772 = vld [vmem:[%s8 + $0x20] sm:$0xf]
        %v7773 = vld [vmem:[%s8 + $0x24] sm:$0xf]
        %v7774 = vld [vmem:[%s8 + $0x28] sm:$0xf]
        %v7775 = vld [vmem:[%s8 + $0x2c] sm:$0xf]
        %v7776 = vld [vmem:[%s8 + $0x30] sm:$0xf]
        %v7777 = vld [vmem:[%s8 + $0x34] sm:$0xf]
        %v7778 = vld [vmem:[%s8 + $0x38] sm:$0xf]
        %v7779 = vld [vmem:[%s8 + $0x3c] sm:$0xf]
        %v7780 = vld [vmem:[%s8 + $0x40] sm:$0xf]
        %v7781 = vld [vmem:[%s8 + $0x44] sm:$0xf]
        %v7782 = vld [vmem:[%s8 + $0x48] sm:$0xf]
        %v7783 = vld [vmem:[%s8 + $0x4c] sm:$0xf]
        %v7784 = vld [vmem:[%s8 + $0x50] sm:$0xf]
        %v7785 = vld [vmem:[%s8 + $0x54] sm:$0xf]
        %v7786 = vld [vmem:[%s8 + $0x58] sm:$0xf]
        %v7787 = vld [vmem:[%s8 + $0x5c] sm:$0xf]
        %v7788 = vld [vmem:[%s8 + $0x60] sm:$0xf]
        %v7789 = vld [vmem:[%s8 + $0x64] sm:$0xf]
        %v7790 = vld [vmem:[%s8 + $0x68] sm:$0xf]
        %v7791 = vld [vmem:[%s8 + $0x6c] sm:$0xf]
        %v7792 = vld [vmem:[%s8 + $0x70] sm:$0xf]
        %v7793 = vld [vmem:[%s8 + $0x74] sm:$0xf]
        %v7794 = vld [vmem:[%s8 + $0x78] sm:$0xf]
        %v7795 = vld [vmem:[%s8 + $0x7c] sm:$0xf]
        %v7796 = vld [vmem:[%s8 + $0x80] sm:$0xf]
        %v7797 = vld [vmem:[%s8 + $0x84] sm:$0xf]
        %v7798 = vld [vmem:[%s8 + $0x88] sm:$0xf]
        %v7799 = vld [vmem:[%s8 + $0x8c] sm:$0xf]
        %v7800 = vld [vmem:[%s8 + $0x90] sm:$0xf]
        %v7801 = vld [vmem:[%s8 + $0x94] sm:$0xf]
        %v7802 = vld [vmem:[%s8 + $0x98] sm:$0xf]
        %v7803 = vld [vmem:[%s8 + $0x9c] sm:$0xf]
        %v7804 = vld [vmem:[%s8 + $0xa0] sm:$0xf]
        %v7805 = vld [vmem:[%s8 + $0xa4] sm:$0xf]
        %v7806 = vld [vmem:[%s8 + $0xa8] sm:$0xf]
        %v7807 = vld [vmem:[%s8 + $0xac] sm:$0xf]
        %v7808 = vld [vmem:[%s8 + $0xb0] sm:$0xf]
        %v7809 = vld [vmem:[%s8 + $0xb4] sm:$0xf]
        %v7810 = vld [vmem:[%s8 + $0xb8] sm:$0xf]
        %v7811 = vld [vmem:[%s8 + $0xbc] sm:$0xf]
        %v7812 = vld [vmem:[%s8 + $0xc0] sm:$0xf]
        %v7813 = vld [vmem:[%s8 + $0xc4] sm:$0xf]
        %v7814 = vld [vmem:[%s8 + $0xc8] sm:$0xf]
        %v7815 = vld [vmem:[%s8 + $0xcc] sm:$0xf]
        %v7816 = vld [vmem:[%s8 + $0xd0] sm:$0xf]
        %v7817 = vld [vmem:[%s8 + $0xd4] sm:$0xf]
        %v7818 = vld [vmem:[%s8 + $0xd8] sm:$0xf]
        %v7819 = vld [vmem:[%s8 + $0xdc] sm:$0xf]
        %v7820 = vld [vmem:[%s8 + $0xe0] sm:$0xf]
        %v7821 = vld [vmem:[%s8 + $0xe4] sm:$0xf]
        %v7822 = vld [vmem:[%s8 + $0xe8] sm:$0xf]
        %v7823 = vld [vmem:[%s8 + $0xec] sm:$0xf]
        %v7824 = vld [vmem:[%s8 + $0xf0] sm:$0xf]
        %v7825 = vld [vmem:[%s8 + $0xf4] sm:$0xf]
        %v7826 = vld [vmem:[%s8 + $0xf8] sm:$0xf]
        %v7827 = vld [vmem:[%s8 + $0xfc] sm:$0xf]
        %v7828 = vld [vmem:[%s9] sm:$0x1]
        %v7831 = vunpack.c.l.s4 1966171168
        %v7832 = vunpack.c.0.s8 %v7831
        %v7833 = vlaneseq
        %v7834 = vshrl.u32 %v7833, 7
        %v7835 = vsub.s32 %v7832, %v7834
        %v7836 = vrot.slane %v7763, %v7835
        %v7837 = vcombine.high %v7836, %v7836
        %v7839 = vunpack.c.l.s4 1966171168
        %v7840 = vunpack.c.0.s8 %v7839
        %v7841 = vlaneseq
        %v7842 = vshrl.u32 %v7841, 7
        %v7843 = vsub.s32 %v7840, %v7842
        %v7844 = vrot.slane %v7836, %v7843
        %v7846 = vunpack.c.l.s4 1966171168
        %v7847 = vunpack.c.0.s8 %v7846
        %v7848 = vlaneseq
        %v7849 = vshrl.u32 %v7848, 7
        %v7850 = vsub.s32 %v7847, %v7849
        %v7851 = vrot.slane %v7837, %v7850
        %v7852 = vcombine.high %v7844, %v7844
        %v7853 = vcombine.high %v7851, %v7851
        %v7922 = vunpack.c.l.b16 %v7764
        %v7923 = vunpack.c.l.b16 %v7765
        %v7924 = vunpack.c.l.b16 %v7766
        %v7925 = vunpack.c.l.b16 %v7767
        %v7926 = vunpack.c.l.b16 %v7768
        %v7927 = vunpack.c.l.b16 %v7769
        %v7928 = vunpack.c.l.b16 %v7770
        %v7929 = vunpack.c.l.b16 %v7771
        %v7930 = vunpack.c.l.b16 %v7772
        %v7931 = vunpack.c.l.b16 %v7773
        %v7932 = vunpack.c.l.b16 %v7774
        %v7933 = vunpack.c.l.b16 %v7775
        %v7934 = vunpack.c.l.b16 %v7776
        %v7935 = vunpack.c.l.b16 %v7777
        %v7936 = vunpack.c.l.b16 %v7778
        %v7937 = vunpack.c.l.b16 %v7779
        %v7938 = vunpack.c.l.b16 %v7780
        %v7939 = vunpack.c.l.b16 %v7781
        %v7940 = vunpack.c.l.b16 %v7782
        %v7941 = vunpack.c.l.b16 %v7783
        %v7942 = vunpack.c.l.b16 %v7784
        %v7943 = vunpack.c.l.b16 %v7785
        %v7944 = vunpack.c.l.b16 %v7786
        %v7945 = vunpack.c.l.b16 %v7787
        %v7946 = vunpack.c.l.b16 %v7788
        %v7947 = vunpack.c.l.b16 %v7789
        %v7948 = vunpack.c.l.b16 %v7790
        %v7949 = vunpack.c.l.b16 %v7791
        %v7950 = vunpack.c.l.b16 %v7792
        %v7951 = vunpack.c.l.b16 %v7793
        %v7952 = vunpack.c.l.b16 %v7794
        %v7953 = vunpack.c.l.b16 %v7795
        %v7954 = vunpack.c.l.b16 %v7796
        %v7955 = vunpack.c.l.b16 %v7797
        %v7956 = vunpack.c.l.b16 %v7798
        %v7957 = vunpack.c.l.b16 %v7799
        %v7958 = vunpack.c.l.b16 %v7800
        %v7959 = vunpack.c.l.b16 %v7801
        %v7960 = vunpack.c.l.b16 %v7802
        %v7961 = vunpack.c.l.b16 %v7803
        %v7962 = vunpack.c.l.b16 %v7804
        %v7963 = vunpack.c.l.b16 %v7805
        %v7964 = vunpack.c.l.b16 %v7806
        %v7965 = vunpack.c.l.b16 %v7807
        %v7966 = vunpack.c.l.b16 %v7808
        %v7967 = vunpack.c.l.b16 %v7809
        %v7968 = vunpack.c.l.b16 %v7810
        %v7969 = vunpack.c.l.b16 %v7811
        %v7970 = vunpack.c.l.b16 %v7812
        %v7971 = vunpack.c.l.b16 %v7813
        %v7972 = vunpack.c.l.b16 %v7814
        %v7973 = vunpack.c.l.b16 %v7815
        %v7974 = vunpack.c.l.b16 %v7816
        %v7975 = vunpack.c.l.b16 %v7817
        %v7976 = vunpack.c.l.b16 %v7818
        %v7977 = vunpack.c.l.b16 %v7819
        %v7978 = vunpack.c.l.b16 %v7820
        %v7979 = vunpack.c.l.b16 %v7821
        %v7980 = vunpack.c.l.b16 %v7822
        %v7981 = vunpack.c.l.b16 %v7823
        %v7982 = vunpack.c.l.b16 %v7824
        %v7983 = vunpack.c.l.b16 %v7825
        %v7984 = vunpack.c.l.b16 %v7826
        %v7985 = vunpack.c.l.b16 %v7827
        %v7986 = vpack.c.b16 %v7923, %v7922
        %v7987 = vpack.c.b16 %v7925, %v7924
        %v7988 = vpack.c.b16 %v7927, %v7926
        %v7989 = vpack.c.b16 %v7929, %v7928
        %v7990 = vpack.c.b16 %v7931, %v7930
        %v7991 = vpack.c.b16 %v7933, %v7932
        %v7992 = vpack.c.b16 %v7935, %v7934
        %v7993 = vpack.c.b16 %v7937, %v7936
        %v7994 = vpack.c.b16 %v7939, %v7938
        %v7995 = vpack.c.b16 %v7941, %v7940
        %v7996 = vpack.c.b16 %v7943, %v7942
        %v7997 = vpack.c.b16 %v7945, %v7944
        %v7998 = vpack.c.b16 %v7947, %v7946
        %v7999 = vpack.c.b16 %v7949, %v7948
        %v8000 = vpack.c.b16 %v7951, %v7950
        %v8001 = vpack.c.b16 %v7953, %v7952
        %v8002 = vpack.c.b16 %v7955, %v7954
        %v8003 = vpack.c.b16 %v7957, %v7956
        %v8004 = vpack.c.b16 %v7959, %v7958
        %v8005 = vpack.c.b16 %v7961, %v7960
        %v8006 = vpack.c.b16 %v7963, %v7962
        %v8007 = vpack.c.b16 %v7965, %v7964
        %v8008 = vpack.c.b16 %v7967, %v7966
        %v8009 = vpack.c.b16 %v7969, %v7968
        %v8010 = vpack.c.b16 %v7971, %v7970
        %v8011 = vpack.c.b16 %v7973, %v7972
        %v8012 = vpack.c.b16 %v7975, %v7974
        %v8013 = vpack.c.b16 %v7977, %v7976
        %v8014 = vpack.c.b16 %v7979, %v7978
        %v8015 = vpack.c.b16 %v7981, %v7980
        %v8016 = vpack.c.b16 %v7983, %v7982
        %v8017 = vpack.c.b16 %v7985, %v7984
        %8050 = vmatprep.subr.bf16.mxu0 0
        %8051 = vmatpush1.bf16.msra.mxu0 %v7993
        %8052 = vmatprep.subr.bf16.mxu0 0
        %8053 = vmatpush1.bf16.msra.mxu0 %v7992
        %8054 = vmatprep.subr.bf16.mxu0 0
        %8055 = vmatpush1.bf16.msra.mxu0 %v7991
        %8056 = vmatprep.subr.bf16.mxu0 0
        %8057 = vmatpush1.bf16.msra.mxu0 %v7990
        %8058 = vmatprep.subr.bf16.mxu0 0
        %8059 = vmatpush1.bf16.msra.mxu0 %v7989
        %8060 = vmatprep.subr.bf16.mxu0 0
        %8061 = vmatpush1.bf16.msra.mxu0 %v7988
        %8062 = vmatprep.subr.bf16.mxu0 0
        %8063 = vmatpush1.bf16.msra.mxu0 %v7987
        %8064 = vmatprep.subr.bf16.mxu0 0
        %8065 = vmatpush1.bf16.msra.mxu0 %v7986
        %8066 = vmatprep.subr.bf16.mxu0 0
        %8067 = vmatpush2.bf16.msra.mxu0 %v8001
        %8068 = vmatprep.subr.bf16.mxu0 0
        %8069 = vmatpush2.bf16.msra.mxu0 %v8000
        %8070 = vmatprep.subr.bf16.mxu0 0
        %8071 = vmatpush2.bf16.msra.mxu0 %v7999
        %8072 = vmatprep.subr.bf16.mxu0 0
        %8073 = vmatpush2.bf16.msra.mxu0 %v7998
        %8074 = vmatprep.subr.bf16.mxu0 0
        %8075 = vmatpush2.bf16.msra.mxu0 %v7997
        %8076 = vmatprep.subr.bf16.mxu0 0
        %8077 = vmatpush2.bf16.msra.mxu0 %v7996
        %8078 = vmatprep.subr.bf16.mxu0 0
        %8079 = vmatpush2.bf16.msra.mxu0 %v7995
        %8080 = vmatprep.subr.bf16.mxu0 0
        %8081 = vmatpush2.bf16.msra.mxu0 %v7994
        %8082 = vmatprep.mubr.bf16.mxu0 %v7851
        %8083 = vmatmul.mubr.bf16.gmra.mxu0 %v7844
        %v8084 = vpop.f32.mrf.mxu0
        %v8085 = vadd.f32 %v7828, %v8084
        %v8086 = vpop.f32.mrf.mxu0
        %v8087 = vpop.f32.mrf.mxu0
        %v8088 = vpop.f32.mrf.mxu0
        %8089 = vdwg.mxu0
        %8090 = vmatprep.subr.bf16.mxu0 0
        %8091 = vmatpush1.bf16.msra.mxu0 %v8009
        %8092 = vmatprep.subr.bf16.mxu0 0
        %8093 = vmatpush1.bf16.msra.mxu0 %v8008
        %8094 = vmatprep.subr.bf16.mxu0 0
        %8095 = vmatpush1.bf16.msra.mxu0 %v8007
        %8096 = vmatprep.subr.bf16.mxu0 0
        %8097 = vmatpush1.bf16.msra.mxu0 %v8006
        %8098 = vmatprep.subr.bf16.mxu0 0
        %8099 = vmatpush1.bf16.msra.mxu0 %v8005
        %8100 = vmatprep.subr.bf16.mxu0 0
        %8101 = vmatpush1.bf16.msra.mxu0 %v8004
        %8102 = vmatprep.subr.bf16.mxu0 0
        %8103 = vmatpush1.bf16.msra.mxu0 %v8003
        %8104 = vmatprep.subr.bf16.mxu0 0
        %8105 = vmatpush1.bf16.msra.mxu0 %v8002
        %8106 = vmatprep.subr.bf16.mxu0 0
        %8107 = vmatpush2.bf16.msra.mxu0 %v8017
        %8108 = vmatprep.subr.bf16.mxu0 0
        %8109 = vmatpush2.bf16.msra.mxu0 %v8016
        %8110 = vmatprep.subr.bf16.mxu0 0
        %8111 = vmatpush2.bf16.msra.mxu0 %v8015
        %8112 = vmatprep.subr.bf16.mxu0 0
        %8113 = vmatpush2.bf16.msra.mxu0 %v8014
        %8114 = vmatprep.subr.bf16.mxu0 0
        %8115 = vmatpush2.bf16.msra.mxu0 %v8013
        %8116 = vmatprep.subr.bf16.mxu0 0
        %8117 = vmatpush2.bf16.msra.mxu0 %v8012
        %8118 = vmatprep.subr.bf16.mxu0 0
        %8119 = vmatpush2.bf16.msra.mxu0 %v8011
        %8120 = vmatprep.subr.bf16.mxu0 0
        %8121 = vmatpush2.bf16.msra.mxu0 %v8010
        %8122 = vmatprep.mubr.bf16.mxu0 %v7853
        %8123 = vmatmul.mubr.bf16.gmra.mxu0 %v7852
        %v8124 = vpop.f32.mrf.mxu0
        %v8125 = vadd.f32 %v8085, %v8124
        %v8126 = vpop.f32.mrf.mxu0
        %v8127 = vpop.f32.mrf.mxu0
        %v8128 = vpop.f32.mrf.mxu0
        %8129 = vdwg.mxu0
        %8130 = vst [vmem:[%s352] sm:$0x1] %v8125
        %s8131 = sand.u32 %s247, 1
        %s8132 = scalar_lea.sflag [#allocation6], %s8131
        %s8133 = sand.u32 %s247, 1
        %s8134 = scalar_lea.vmem [#allocation5], %s8133
        // Predicated region
        $region61: #{tpu_custom_call.1} parent=59 // pred_check
          %p8135 = pneg %p257
        $region62: #{tpu_custom_call.1} parent=59 // pred_check_branch
          %8137 = sbr.rel (%p8135) target = $region64
        $region63: #{tpu_custom_call.1} parent=59 // pred_region
          %s8139 = ssub.s32 16, 16
          %8140 = vsyncadd %s8132, %s8139
          %s8141 = smul.addr %s24, 16
          %s8142 = scalar_lea.hbm %s10, %s8141
          %s8144 = sshll.u32 %s8134, 4
          %s8145 = int_to_ptr.vmem [resolvable:$true] %s8144
          %8147 = dma.vmem_to_hbm [thread:$0]  %s8145, 16, %s8142, %s8132
        $region64: #{tpu_custom_call.1} parent=59 // pred_fallthru
          _
      $region60: #{tpu_custom_call.1} parent=5 // pred_fallthru
        _
      %p8148 = scmp.le.s32.totalorder 2, %s19
      // Predicated region
      $region65: #{tpu_custom_call.1} parent=5 // pred_check
        %p8149 = pneg %p8148
      $region66: #{tpu_custom_call.1} parent=5 // pred_check_branch
        %8151 = sbr.rel (%p8149) target = $region68
      $region67: #{tpu_custom_call.1} parent=5 // pred_region
        %s8152 = ssub.s32 %s19, 2
        // Predicated region
        $region69: #{tpu_custom_call.1} parent=67 // pred_check
          %p8153 = pneg %p263
        $region70: #{tpu_custom_call.1} parent=67 // pred_check_branch
          %8155 = sbr.rel (%p8153) target = $region72
        $region71: #{tpu_custom_call.1} parent=67 // pred_region
          %s8156 = sand.u32 %s248, 1
          %s8157 = scalar_lea.sflag [#allocation6], %s8156
          %s8158 = sand.u32 %s248, 1
          %s8159 = scalar_lea.vmem [#allocation5], %s8158
          %8160 = dma.done %s8157, 16
        $region72: #{tpu_custom_call.1} parent=67 // pred_fallthru
          _
      $region68: #{tpu_custom_call.1} parent=5 // pred_fallthru
        _
    $region6: #{tpu_custom_call.1} parent=1 // loop_footer
      %s23 = sadd.s32 1, %s19
    $region7: #{tpu_custom_call.1} parent=1 // loop_footer_branch
      %18 = sbr.rel target = $region3
    $region8: #{tpu_custom_call.1} parent=1 // loop_exit
      _
    %8161 = vsyncpa [#allocation6], 1
    %s8162 = scalar_lea.sflag [#allocation6], 1
    %8163 = vsyncpa %s8162, 1

</llo_original>
